<compile_context>
chip_gen: v6e
topology: v6e:2x2x1
jax: 0.10.0
libtpu: 0.0.40
codegen_flags: <defaults>
</compile_context>

<pallas_src>
import functools

import jax
import jax.numpy as jnp
from jax import lax
from jax.experimental import pallas as pl
from jax.experimental.pallas import tpu as pltpu


# ----------------------------------------------------------------------------
# small helpers
# ----------------------------------------------------------------------------
def _round_up(x, m):
    return (x + m - 1) // m * m


def _pad_rows(x, tm):
    M = x.shape[0]
    M_p = _round_up(M, tm)
    if M_p != M:
        x = jnp.pad(x, ((0, M_p - M), (0, 0)))
    return x, M_p


def fold_bn(gamma, beta, mean, var, eps=1e-5):
    scale = gamma / jnp.sqrt(var + eps)
    bias = beta - mean * scale
    return scale, bias


# ----------------------------------------------------------------------------
# Pallas kernels
# ----------------------------------------------------------------------------
def _dual_bn_relu_matmul_kernel(s1_ref, b1_ref, s2_ref, b2_ref,
                                x_ref, w1_ref, w2_ref, o1_ref, o2_ref):
    # Two fused BN(eval)+ReLU+1x1x1 convs sharing one read of x.
    x = x_ref[...]
    h1 = jnp.maximum(x * s1_ref[...] + b1_ref[...], 0.0)
    o1_ref[...] = jnp.dot(h1, w1_ref[...], preferred_element_type=jnp.float32)
    h2 = jnp.maximum(x * s2_ref[...] + b2_ref[...], 0.0)
    o2_ref[...] = jnp.dot(h2, w2_ref[...], preferred_element_type=jnp.float32)


def dual_bn_relu_matmul(x, s1, b1, w1, s2, b2, w2, tm=512):
    """(M,K) -> ((M,N1), (M,N2)); two BN+ReLU+1x1 convs, x read once."""
    M, K = x.shape
    N1, N2 = w1.shape[1], w2.shape[1]
    tm = min(tm, _round_up(M, 8))
    x_p, M_p = _pad_rows(x, tm)
    o1, o2 = pl.pallas_call(
        _dual_bn_relu_matmul_kernel,
        out_shape=(jax.ShapeDtypeStruct((M_p, N1), jnp.float32),
                   jax.ShapeDtypeStruct((M_p, N2), jnp.float32)),
        grid=(M_p // tm,),
        in_specs=[
            pl.BlockSpec((1, K), lambda i: (0, 0)),
            pl.BlockSpec((1, K), lambda i: (0, 0)),
            pl.BlockSpec((1, K), lambda i: (0, 0)),
            pl.BlockSpec((1, K), lambda i: (0, 0)),
            pl.BlockSpec((tm, K), lambda i: (i, 0)),
            pl.BlockSpec((K, N1), lambda i: (0, 0)),
            pl.BlockSpec((K, N2), lambda i: (0, 0)),
        ],
        out_specs=(pl.BlockSpec((tm, N1), lambda i: (i, 0)),
                   pl.BlockSpec((tm, N2), lambda i: (i, 0))),
        compiler_params=pltpu.CompilerParams(dimension_semantics=("parallel",)),
    )(s1.reshape(1, K), b1.reshape(1, K), s2.reshape(1, K), b2.reshape(1, K),
      x_p, w1, w2)
    return o1[:M], o2[:M]


def _bn_relu_matmul_kernel(s_ref, b_ref, x_ref, w_ref, o_ref):
    h = jnp.maximum(x_ref[...] * s_ref[...] + b_ref[...], 0.0)
    o_ref[...] = jnp.dot(h, w_ref[...], preferred_element_type=jnp.float32)


def bn_relu_matmul(x, s, b, w, tm=512):
    """Fused BatchNorm(eval) + ReLU + 1x1x1 conv:  (M,K) -> (M,N)."""
    M, K = x.shape
    N = w.shape[1]
    tm = min(tm, _round_up(M, 8))
    x_p, M_p = _pad_rows(x, tm)
    out = pl.pallas_call(
        _bn_relu_matmul_kernel,
        out_shape=jax.ShapeDtypeStruct((M_p, N), jnp.float32),
        grid=(M_p // tm,),
        in_specs=[
            pl.BlockSpec((1, K), lambda i: (0, 0)),
            pl.BlockSpec((1, K), lambda i: (0, 0)),
            pl.BlockSpec((tm, K), lambda i: (i, 0)),
            pl.BlockSpec((K, N), lambda i: (0, 0)),
        ],
        out_specs=pl.BlockSpec((tm, N), lambda i: (i, 0)),
        compiler_params=pltpu.CompilerParams(dimension_semantics=("parallel",)),
    )(s.reshape(1, K), b.reshape(1, K), x_p, w)
    return out[:M]


def _ktiled_matmul_kernel(init_ref, x_ref, w_ref, o_ref):
    # out = init + x @ w with the K (tap*channel) axis as the reduction grid
    # axis; accumulate directly in the resident f32 output block.
    k = pl.program_id(1)

    @pl.when(k == 0)
    def _():
        o_ref[...] = init_ref[...]

    o_ref[...] += jnp.dot(x_ref[...], w_ref[...],
                          preferred_element_type=jnp.float32)


def _choose_tk(k_pad, max_tk=2048):
    # largest multiple of 128 that divides k_pad (k_pad itself is a multiple
    # of 128) and is <= max_tk
    best = 128
    cand = 128
    while cand <= min(k_pad, max_tk):
        if k_pad % cand == 0:
            best = cand
        cand += 128
    return best


def ktiled_matmul_add(x, w, init, tm=512, max_tk=2048):
    """out = init + x @ w.  x: (M,K) bf16 im2col taps stacked along K,
    w: (K,N) bf16, init: (M,N) f32.  K is zero-padded to a multiple of 128
    and tiled in lane-dense chunks."""
    M, K = x.shape
    N = w.shape[1]
    K_p = _round_up(K, 128)
    if K_p != K:
        x = jnp.pad(x, ((0, 0), (0, K_p - K)))
        w = jnp.pad(w, ((0, K_p - K), (0, 0)))
    tm = min(tm, _round_up(M, 8))
    x_p, M_p = _pad_rows(x, tm)
    init_p, _ = _pad_rows(init, tm)
    tk = _choose_tk(K_p, max_tk)
    out = pl.pallas_call(
        _ktiled_matmul_kernel,
        out_shape=jax.ShapeDtypeStruct((M_p, N), jnp.float32),
        grid=(M_p // tm, K_p // tk),
        in_specs=[
            pl.BlockSpec((tm, N), lambda i, k: (i, 0)),   # init (fetched once per i)
            pl.BlockSpec((tm, tk), lambda i, k: (i, k)),  # taps
            pl.BlockSpec((tk, N), lambda i, k: (k, 0)),   # weights
        ],
        out_specs=pl.BlockSpec((tm, N), lambda i, k: (i, 0)),
        compiler_params=pltpu.CompilerParams(
            dimension_semantics=("parallel", "arbitrary")),
    )(init_p, x_p, w)
    return out[:M]


# ----------------------------------------------------------------------------
# Plain-JAX glue: fused BN+ReLU + tap extraction (fuses into one XLA pass),
# weight reshaping, parameter setup
# ----------------------------------------------------------------------------
def bn_relu_tap_list(h_flat, bn_params, spatial, ksize, dilation,
                     out_dtype=jnp.bfloat16):
    """relu(bn(h)) computed in f32, cast to out_dtype, zero-padded, then
    kd*kh*kw shifted slices, each (M, C).  BN+ReLU is applied BEFORE the zero
    padding, so halo contributions are exactly zero (matches PyTorch conv)."""
    Nb, D, H, W = spatial
    C = h_flat.shape[-1]
    s, b = fold_bn(*bn_params)
    h = jnp.maximum(h_flat * s + b, 0.0).astype(out_dtype)
    kd, kh, kw = ksize
    dd, dh, dw = dilation
    pd, ph, pw = (kd - 1) // 2 * dd, (kh - 1) // 2 * dh, (kw - 1) // 2 * dw
    hv = h.reshape(Nb, D, H, W, C)
    hp = jnp.pad(hv, ((0, 0), (pd, pd), (ph, ph), (pw, pw), (0, 0)))
    taps = []
    for a in range(kd):
        for bb in range(kh):
            for c in range(kw):
                sl = hp[:, a * dd:a * dd + D, bb * dh:bb * dh + H,
                        c * dw:c * dw + W, :]
                taps.append(sl.reshape(-1, C))
    return taps


def weight_taps_k(w, dtype=jnp.bfloat16):
    """PyTorch conv weight (O, I, kd, kh, kw) -> (kd*kh*kw*I, O), tap-major /
    channel-minor rows (matches bn_relu_tap_list column ordering)."""
    O, I, kd, kh, kw = w.shape
    return jnp.transpose(w, (2, 3, 4, 1, 0)).reshape(kd * kh * kw * I,
                                                     O).astype(dtype)


def init_bn(key, c):
    k1, k2, k3, k4 = jax.random.split(key, 4)
    gamma = jax.random.uniform(k1, (c,), jnp.float32, 0.5, 1.5)
    beta = 0.1 * jax.random.normal(k2, (c,), jnp.float32)
    mean = 0.1 * jax.random.normal(k3, (c,), jnp.float32)
    var = jax.random.uniform(k4, (c,), jnp.float32, 0.5, 1.5)
    return (gamma, beta, mean, var)


def init_conv(key, cout, cin, ksize):
    fan_in = cin * ksize[0] * ksize[1] * ksize[2]
    return jax.random.normal(key, (cout, cin) + ksize, jnp.float32) / jnp.sqrt(
        float(fan_in))


def make_params(key, num_in, num_out):
    num_mid = num_in if num_in <= num_out else num_out
    keys = jax.random.split(key, 16)
    p = {
        "bn_in1": init_bn(keys[0], num_in),
        "w_in1": init_conv(keys[1], num_in // 4, num_in, (1, 1, 1)),
        "bn_in2": init_bn(keys[2], num_in // 4),
        "w_in2": init_conv(keys[3], num_mid, num_in // 4, (1, 1, 1)),
        "bn_m1": [init_bn(keys[4 + i], num_mid) for i in range(3)],
        "w_m1": [init_conv(keys[7 + i], num_out, num_mid, (3, 3, 3))
                 for i in range(3)],
        "bn_m2": init_bn(keys[10], num_out),
        "w_m2": init_conv(keys[11], num_out, num_out, (3, 3, 1)),
        "bn_sc": init_bn(keys[12], num_in),
        "w_sc": init_conv(keys[13], num_out, num_in, (1, 1, 1)),
    }
    return p, num_mid


# ----------------------------------------------------------------------------
# MFUnit_add1 forward (Pallas version).  norm='bn' in eval mode, stride=1, g=1.
# ----------------------------------------------------------------------------
@functools.partial(jax.jit, static_argnums=(2, 3))
def mfunit_add1_forward(x_ncdhw, params, num_out, dilations=(1, 2, 3)):
    Nb, Cin, D, H, W = x_ncdhw.shape
    x = jnp.transpose(x_ncdhw, (0, 2, 3, 4, 1)).reshape(-1, Cin)
    spatial = (Nb, D, H, W)
    M = x.shape[0]

    # conv1x1x1_in1 and the 1x1x1 shortcut fused: x is read from HBM once.
    s1, b1 = fold_bn(*params["bn_in1"])
    ssc, bsc = fold_bn(*params["bn_sc"])
    x1, shortcut = dual_bn_relu_matmul(
        x, s1, b1, params["w_in1"][:, :, 0, 0, 0].T,
        ssc, bsc, params["w_sc"][:, :, 0, 0, 0].T)

    # conv1x1x1_in2
    s2, b2 = fold_bn(*params["bn_in2"])
    x2 = bn_relu_matmul(x1, s2, b2, params["w_in2"][:, :, 0, 0, 0].T)

    # three dilated 3x3x3 branches summed: 81 bf16 taps stacked along the
    # contraction axis -> single K-tiled matmul.
    tap_cols, w_rows = [], []
    for i, dil in enumerate(dilations):
        tap_cols += bn_relu_tap_list(x2, params["bn_m1"][i], spatial,
                                     (3, 3, 3), (dil, dil, dil))
        w_rows.append(weight_taps_k(params["w_m1"][i]))
    x3 = ktiled_matmul_add(jnp.concatenate(tap_cols, axis=-1),
                           jnp.concatenate(w_rows, axis=0),
                           jnp.zeros((M, num_out), jnp.float32))

    # conv3x3x3_m2 (kernel (3,3,1)); the residual shortcut is folded in as the
    # accumulator's initial value, so the final add is free.
    t9x = jnp.concatenate(
        bn_relu_tap_list(x3, params["bn_m2"], spatial, (3, 3, 1), (1, 1, 1)),
        axis=-1)
    t9w = weight_taps_k(params["w_m2"])
    out = ktiled_matmul_add(t9x, t9w, shortcut)

    out = out.reshape(Nb, D, H, W, num_out)
    return jnp.transpose(out, (0, 4, 1, 2, 3))  # back to NCDHW


# ----------------------------------------------------------------------------
# Pure-JAX reference (lax.conv_general_dilated) for verification
# ----------------------------------------------------------------------------
def ref_forward(x_ncdhw, params, dilations=(1, 2, 3)):
    x = jnp.transpose(x_ncdhw, (0, 2, 3, 4, 1))  # NDHWC

    def bnr(v, bnp):
        s, b = fold_bn(*bnp)
        return jnp.maximum(v * s + b, 0.0)

    def conv(v, w, dil):
        wt = jnp.transpose(w, (2, 3, 4, 1, 0))  # DHWIO
        pad = tuple(((k - 1) // 2 * d,) * 2 for k, d in zip(w.shape[2:], dil))
        return lax.conv_general_dilated(
            v, wt, (1, 1, 1), pad, rhs_dilation=dil,
            dimension_numbers=("NDHWC", "DHWIO", "NDHWC"))

    x1 = conv(bnr(x, params["bn_in1"]), params["w_in1"], (1, 1, 1))
    x2 = conv(bnr(x1, params["bn_in2"]), params["w_in2"], (1, 1, 1))
    x3 = conv(bnr(x2, params["bn_m1"][0]), params["w_m1"][0], (dilations[0],) * 3)
    x3 = x3 + conv(bnr(x2, params["bn_m1"][1]), params["w_m1"][1], (dilations[1],) * 3)
    x3 = x3 + conv(bnr(x2, params["bn_m1"][2]), params["w_m1"][2], (dilations[2],) * 3)
    x4 = conv(bnr(x3, params["bn_m2"]), params["w_m2"], (1, 1, 1))
    sc = conv(bnr(x, params["bn_sc"]), params["w_sc"], (1, 1, 1))
    return jnp.transpose(x4 + sc, (0, 4, 1, 2, 3))


# ----------------------------------------------------------------------------
if __name__ == "__main__":
    key = jax.random.PRNGKey(0)
    kx, kp = jax.random.split(key)

    # small shapes: batch=2, num_in=16, num_out=32, spatial 8x8x8
    Nb, num_in, num_out = 2, 16, 32
    D = H = W = 8
    x = jax.random.normal(kx, (Nb, num_in, D, H, W), jnp.float32)
    params, _ = make_params(kp, num_in, num_out)

    out = mfunit_add1_forward(x, params, num_out)
    out = jax.block_until_ready(out)

    ref = ref_forward(x, params)
    assert out.shape == (Nb, num_out, D, H, W)
    # bf16 tap storage (f32 accumulation) -> allow ~1e-2-level relative error.
    assert jnp.allclose(out, ref, rtol=3e-2, atol=3e-2), float(
        jnp.max(jnp.abs(out - ref)))

    print("KERNEL_OK")
</pallas_src>

<mosaic_0001>
module attributes {stable_mosaic.version = 11 : i64} {
  func.func @_dual_bn_relu_matmul_kernel(%arg0: i32, %arg1: memref<1x16xf32, #tpu.memory_space<vmem>>, %arg2: memref<1x16xf32, #tpu.memory_space<vmem>>, %arg3: memref<1x16xf32, #tpu.memory_space<vmem>>, %arg4: memref<1x16xf32, #tpu.memory_space<vmem>>, %arg5: memref<512x16xf32, #tpu.memory_space<vmem>>, %arg6: memref<16x4xf32, #tpu.memory_space<vmem>>, %arg7: memref<16x32xf32, #tpu.memory_space<vmem>>, %arg8: memref<512x4xf32, #tpu.memory_space<vmem>>, %arg9: memref<512x32xf32, #tpu.memory_space<vmem>>) attributes {dimension_semantics = [#tpu.dimension_semantics<parallel>], iteration_bounds = array<i64: 2>, scalar_prefetch = 0 : i64, scratch_operands = 0 : i64, tpu.core_type = #tpu.core_type<tc>, window_params = [{pipeline_mode = #tpu.pipeline_mode<synchronous>, transform_indices = @transform_0, window_bounds = array<i64: 1, 16>}, {pipeline_mode = #tpu.pipeline_mode<synchronous>, transform_indices = @transform_1, window_bounds = array<i64: 1, 16>}, {pipeline_mode = #tpu.pipeline_mode<synchronous>, transform_indices = @transform_2, window_bounds = array<i64: 1, 16>}, {pipeline_mode = #tpu.pipeline_mode<synchronous>, transform_indices = @transform_3, window_bounds = array<i64: 1, 16>}, {transform_indices = @transform_4, window_bounds = array<i64: 512, 16>}, {pipeline_mode = #tpu.pipeline_mode<synchronous>, transform_indices = @transform_5, window_bounds = array<i64: 16, 4>}, {pipeline_mode = #tpu.pipeline_mode<synchronous>, transform_indices = @transform_6, window_bounds = array<i64: 16, 32>}, {transform_indices = @transform_7, window_bounds = array<i64: 512, 4>}, {transform_indices = @transform_8, window_bounds = array<i64: 512, 32>}]} {
    %c0 = arith.constant 0 : index
    %c0_0 = arith.constant 0 : index
    %0 = vector.load %arg5[%c0, %c0_0] : memref<512x16xf32, #tpu.memory_space<vmem>>, vector<512x16xf32>
    %c0_1 = arith.constant 0 : index
    %c0_2 = arith.constant 0 : index
    %1 = vector.load %arg1[%c0_1, %c0_2] : memref<1x16xf32, #tpu.memory_space<vmem>>, vector<1x16xf32>
    %2 = vector.broadcast %1 : vector<1x16xf32> to vector<512x16xf32>
    %3 = arith.mulf %0, %2 : vector<512x16xf32>
    %c0_3 = arith.constant 0 : index
    %c0_4 = arith.constant 0 : index
    %4 = vector.load %arg2[%c0_3, %c0_4] : memref<1x16xf32, #tpu.memory_space<vmem>>, vector<1x16xf32>
    %5 = vector.broadcast %4 : vector<1x16xf32> to vector<512x16xf32>
    %6 = arith.addf %3, %5 : vector<512x16xf32>
    %cst = arith.constant 0.000000e+00 : f32
    %7 = vector.broadcast %cst : f32 to vector<512x16xf32>
    %8 = arith.maximumf %6, %7 : vector<512x16xf32>
    %c0_5 = arith.constant 0 : index
    %c0_6 = arith.constant 0 : index
    %9 = vector.load %arg6[%c0_5, %c0_6] : memref<16x4xf32, #tpu.memory_space<vmem>>, vector<16x4xf32>
    %cst_7 = arith.constant dense<0.000000e+00> : vector<512x4xf32>
    %10 = tpu.matmul %8, %9, %cst_7 {dimension_numbers = #tpu.dot_dimension_numbers<[1], [0], [0], [1], [0, 0, 1, 1], [], []>} : vector<512x16xf32>, vector<16x4xf32>, vector<512x4xf32> -> vector<512x4xf32>
    %c0_8 = arith.constant 0 : index
    %c0_9 = arith.constant 0 : index
    %11 = vector.load %arg8[%c0_8, %c0_9] : memref<512x4xf32, #tpu.memory_space<vmem>>, vector<512x4xf32>
    tpu.vector_store %arg8[%c0_8, %c0_9], %10 {strides = array<i32>} : memref<512x4xf32, #tpu.memory_space<vmem>>, vector<512x4xf32>,
    %c0_10 = arith.constant 0 : index
    %c0_11 = arith.constant 0 : index
    %12 = vector.load %arg3[%c0_10, %c0_11] : memref<1x16xf32, #tpu.memory_space<vmem>>, vector<1x16xf32>
    %13 = vector.broadcast %12 : vector<1x16xf32> to vector<512x16xf32>
    %14 = arith.mulf %0, %13 : vector<512x16xf32>
    %c0_12 = arith.constant 0 : index
    %c0_13 = arith.constant 0 : index
    %15 = vector.load %arg4[%c0_12, %c0_13] : memref<1x16xf32, #tpu.memory_space<vmem>>, vector<1x16xf32>
    %16 = vector.broadcast %15 : vector<1x16xf32> to vector<512x16xf32>
    %17 = arith.addf %14, %16 : vector<512x16xf32>
    %cst_14 = arith.constant 0.000000e+00 : f32
    %18 = vector.broadcast %cst_14 : f32 to vector<512x16xf32>
    %19 = arith.maximumf %17, %18 : vector<512x16xf32>
    %c0_15 = arith.constant 0 : index
    %c0_16 = arith.constant 0 : index
    %20 = vector.load %arg7[%c0_15, %c0_16] : memref<16x32xf32, #tpu.memory_space<vmem>>, vector<16x32xf32>
    %cst_17 = arith.constant dense<0.000000e+00> : vector<512x32xf32>
    %21 = tpu.matmul %19, %20, %cst_17 {dimension_numbers = #tpu.dot_dimension_numbers<[1], [0], [0], [1], [0, 0, 1, 1], [], []>} : vector<512x16xf32>, vector<16x32xf32>, vector<512x32xf32> -> vector<512x32xf32>
    %c0_18 = arith.constant 0 : index
    %c0_19 = arith.constant 0 : index
    %22 = vector.load %arg9[%c0_18, %c0_19] : memref<512x32xf32, #tpu.memory_space<vmem>>, vector<512x32xf32>
    tpu.vector_store %arg9[%c0_18, %c0_19], %21 {strides = array<i32>} : memref<512x32xf32, #tpu.memory_space<vmem>>, vector<512x32xf32>,
    return
  }
  func.func @transform_0(%arg0: i32) -> (i32, i32) {
    %c0_i32 = arith.constant 0 : i32
    %c0_i32_0 = arith.constant 0 : i32
    %c0_i32_1 = arith.constant 0 : i32
    return %c0_i32, %c0_i32_0 : i32, i32
  }
  func.func @transform_1(%arg0: i32) -> (i32, i32) {
    %c0_i32 = arith.constant 0 : i32
    %c0_i32_0 = arith.constant 0 : i32
    %c0_i32_1 = arith.constant 0 : i32
    return %c0_i32, %c0_i32_0 : i32, i32
  }
  func.func @transform_2(%arg0: i32) -> (i32, i32) {
    %c0_i32 = arith.constant 0 : i32
    %c0_i32_0 = arith.constant 0 : i32
    %c0_i32_1 = arith.constant 0 : i32
    return %c0_i32, %c0_i32_0 : i32, i32
  }
  func.func @transform_3(%arg0: i32) -> (i32, i32) {
    %c0_i32 = arith.constant 0 : i32
    %c0_i32_0 = arith.constant 0 : i32
    %c0_i32_1 = arith.constant 0 : i32
    return %c0_i32, %c0_i32_0 : i32, i32
  }
  func.func @transform_4(%arg0: i32) -> (i32, i32) {
    %c0_i32 = arith.constant 0 : i32
    %c0_i32_0 = arith.constant 0 : i32
    return %arg0, %c0_i32 : i32, i32
  }
  func.func @transform_5(%arg0: i32) -> (i32, i32) {
    %c0_i32 = arith.constant 0 : i32
    %c0_i32_0 = arith.constant 0 : i32
    %c0_i32_1 = arith.constant 0 : i32
    return %c0_i32, %c0_i32_0 : i32, i32
  }
  func.func @transform_6(%arg0: i32) -> (i32, i32) {
    %c0_i32 = arith.constant 0 : i32
    %c0_i32_0 = arith.constant 0 : i32
    %c0_i32_1 = arith.constant 0 : i32
    return %c0_i32, %c0_i32_0 : i32, i32
  }
  func.func @transform_7(%arg0: i32) -> (i32, i32) {
    %c0_i32 = arith.constant 0 : i32
    %c0_i32_0 = arith.constant 0 : i32
    return %arg0, %c0_i32 : i32, i32
  }
  func.func @transform_8(%arg0: i32) -> (i32, i32) {
    %c0_i32 = arith.constant 0 : i32
    %c0_i32_0 = arith.constant 0 : i32
    return %arg0, %c0_i32 : i32, i32
  }
}

module attributes {stable_mosaic.version = 11 : i64} {
  func.func @_bn_relu_matmul_kernel(%arg0: i32, %arg1: memref<1x4xf32, #tpu.memory_space<vmem>>, %arg2: memref<1x4xf32, #tpu.memory_space<vmem>>, %arg3: memref<512x4xf32, #tpu.memory_space<vmem>>, %arg4: memref<4x16xf32, #tpu.memory_space<vmem>>, %arg5: memref<512x16xf32, #tpu.memory_space<vmem>>) attributes {dimension_semantics = [#tpu.dimension_semantics<parallel>], iteration_bounds = array<i64: 2>, scalar_prefetch = 0 : i64, scratch_operands = 0 : i64, tpu.core_type = #tpu.core_type<tc>, window_params = [{pipeline_mode = #tpu.pipeline_mode<synchronous>, transform_indices = @transform_0, window_bounds = array<i64: 1, 4>}, {pipeline_mode = #tpu.pipeline_mode<synchronous>, transform_indices = @transform_1, window_bounds = array<i64: 1, 4>}, {transform_indices = @transform_2, window_bounds = array<i64: 512, 4>}, {pipeline_mode = #tpu.pipeline_mode<synchronous>, transform_indices = @transform_3, window_bounds = array<i64: 4, 16>}, {transform_indices = @transform_4, window_bounds = array<i64: 512, 16>}]} {
    %c0 = arith.constant 0 : index
    %c0_0 = arith.constant 0 : index
    %0 = vector.load %arg3[%c0, %c0_0] : memref<512x4xf32, #tpu.memory_space<vmem>>, vector<512x4xf32>
    %c0_1 = arith.constant 0 : index
    %c0_2 = arith.constant 0 : index
    %1 = vector.load %arg1[%c0_1, %c0_2] : memref<1x4xf32, #tpu.memory_space<vmem>>, vector<1x4xf32>
    %2 = vector.broadcast %1 : vector<1x4xf32> to vector<512x4xf32>
    %3 = arith.mulf %0, %2 : vector<512x4xf32>
    %c0_3 = arith.constant 0 : index
    %c0_4 = arith.constant 0 : index
    %4 = vector.load %arg2[%c0_3, %c0_4] : memref<1x4xf32, #tpu.memory_space<vmem>>, vector<1x4xf32>
    %5 = vector.broadcast %4 : vector<1x4xf32> to vector<512x4xf32>
    %6 = arith.addf %3, %5 : vector<512x4xf32>
    %cst = arith.constant 0.000000e+00 : f32
    %7 = vector.broadcast %cst : f32 to vector<512x4xf32>
    %8 = arith.maximumf %6, %7 : vector<512x4xf32>
    %c0_5 = arith.constant 0 : index
    %c0_6 = arith.constant 0 : index
    %9 = vector.load %arg4[%c0_5, %c0_6] : memref<4x16xf32, #tpu.memory_space<vmem>>, vector<4x16xf32>
    %cst_7 = arith.constant dense<0.000000e+00> : vector<512x16xf32>
    %10 = tpu.matmul %8, %9, %cst_7 {dimension_numbers = #tpu.dot_dimension_numbers<[1], [0], [0], [1], [0, 0, 1, 1], [], []>} : vector<512x4xf32>, vector<4x16xf32>, vector<512x16xf32> -> vector<512x16xf32>
    %c0_8 = arith.constant 0 : index
    %c0_9 = arith.constant 0 : index
    %11 = vector.load %arg5[%c0_8, %c0_9] : memref<512x16xf32, #tpu.memory_space<vmem>>, vector<512x16xf32>
    tpu.vector_store %arg5[%c0_8, %c0_9], %10 {strides = array<i32>} : memref<512x16xf32, #tpu.memory_space<vmem>>, vector<512x16xf32>,
    return
  }
  func.func @transform_0(%arg0: i32) -> (i32, i32) {
    %c0_i32 = arith.constant 0 : i32
    %c0_i32_0 = arith.constant 0 : i32
    %c0_i32_1 = arith.constant 0 : i32
    return %c0_i32, %c0_i32_0 : i32, i32
  }
  func.func @transform_1(%arg0: i32) -> (i32, i32) {
    %c0_i32 = arith.constant 0 : i32
    %c0_i32_0 = arith.constant 0 : i32
    %c0_i32_1 = arith.constant 0 : i32
    return %c0_i32, %c0_i32_0 : i32, i32
  }
  func.func @transform_2(%arg0: i32) -> (i32, i32) {
    %c0_i32 = arith.constant 0 : i32
    %c0_i32_0 = arith.constant 0 : i32
    return %arg0, %c0_i32 : i32, i32
  }
  func.func @transform_3(%arg0: i32) -> (i32, i32) {
    %c0_i32 = arith.constant 0 : i32
    %c0_i32_0 = arith.constant 0 : i32
    %c0_i32_1 = arith.constant 0 : i32
    return %c0_i32, %c0_i32_0 : i32, i32
  }
  func.func @transform_4(%arg0: i32) -> (i32, i32) {
    %c0_i32 = arith.constant 0 : i32
    %c0_i32_0 = arith.constant 0 : i32
    return %arg0, %c0_i32 : i32, i32
  }
}

module attributes {stable_mosaic.version = 11 : i64} {
  func.func @_ktiled_matmul_kernel(%arg0: i32, %arg1: i32, %arg2: memref<512x32xf32, #tpu.memory_space<vmem>>, %arg3: memref<512x1408xbf16, #tpu.memory_space<vmem>>, %arg4: memref<1408x32xbf16, #tpu.memory_space<vmem>>, %arg5: memref<512x32xf32, #tpu.memory_space<vmem>>) attributes {dimension_semantics = [#tpu.dimension_semantics<parallel>, #tpu.dimension_semantics<arbitrary>], iteration_bounds = array<i64: 2, 1>, scalar_prefetch = 0 : i64, scratch_operands = 0 : i64, tpu.core_type = #tpu.core_type<tc>, window_params = [{transform_indices = @transform_0, window_bounds = array<i64: 512, 32>}, {transform_indices = @transform_1, window_bounds = array<i64: 512, 1408>}, {transform_indices = @transform_2, window_bounds = array<i64: 1408, 32>}, {transform_indices = @transform_3, window_bounds = array<i64: 512, 32>}]} {
    %c0_i32 = arith.constant 0 : i32
    %0 = arith.cmpi eq, %arg1, %c0_i32 : i32
    %1 = arith.extui %0 : i1 to i32
    %c0_i32_0 = arith.constant 0 : i32
    %2 = arith.cmpi ne, %1, %c0_i32_0 : i32
    scf.if %2 {
      %c0_8 = arith.constant 0 : index
      %c0_9 = arith.constant 0 : index
      %9 = vector.load %arg2[%c0_8, %c0_9] : memref<512x32xf32, #tpu.memory_space<vmem>>, vector<512x32xf32>
      %c0_10 = arith.constant 0 : index
      %c0_11 = arith.constant 0 : index
      %10 = vector.load %arg5[%c0_10, %c0_11] : memref<512x32xf32, #tpu.memory_space<vmem>>, vector<512x32xf32>
      tpu.vector_store %arg5[%c0_10, %c0_11], %9 {strides = array<i32>} : memref<512x32xf32, #tpu.memory_space<vmem>>, vector<512x32xf32>,
    } else {
    }
    %c0 = arith.constant 0 : index
    %c0_1 = arith.constant 0 : index
    %3 = vector.load %arg5[%c0, %c0_1] : memref<512x32xf32, #tpu.memory_space<vmem>>, vector<512x32xf32>
    %c0_2 = arith.constant 0 : index
    %c0_3 = arith.constant 0 : index
    %4 = vector.load %arg3[%c0_2, %c0_3] : memref<512x1408xbf16, #tpu.memory_space<vmem>>, vector<512x1408xbf16>
    %c0_4 = arith.constant 0 : index
    %c0_5 = arith.constant 0 : index
    %5 = vector.load %arg4[%c0_4, %c0_5] : memref<1408x32xbf16, #tpu.memory_space<vmem>>, vector<1408x32xbf16>
    %cst = arith.constant dense<0.000000e+00> : vector<512x32xf32>
    %6 = tpu.matmul %4, %5, %cst {dimension_numbers = #tpu.dot_dimension_numbers<[1], [0], [0], [1], [0, 0, 1, 1], [], []>} : vector<512x1408xbf16>, vector<1408x32xbf16>, vector<512x32xf32> -> vector<512x32xf32>
    %7 = arith.addf %3, %6 : vector<512x32xf32>
    %c0_6 = arith.constant 0 : index
    %c0_7 = arith.constant 0 : index
    %8 = vector.load %arg5[%c0_6, %c0_7] : memref<512x32xf32, #tpu.memory_space<vmem>>, vector<512x32xf32>
    tpu.vector_store %arg5[%c0_6, %c0_7], %7 {strides = array<i32>} : memref<512x32xf32, #tpu.memory_space<vmem>>, vector<512x32xf32>,
    return
  }
  func.func @transform_0(%arg0: i32, %arg1: i32) -> (i32, i32) {
    %c0_i32 = arith.constant 0 : i32
    %c0_i32_0 = arith.constant 0 : i32
    return %arg0, %c0_i32 : i32, i32
  }
  func.func @transform_1(%arg0: i32, %arg1: i32) -> (i32, i32) {
    %c0_i32 = arith.constant 0 : i32
    return %arg0, %arg1 : i32, i32
  }
  func.func @transform_2(%arg0: i32, %arg1: i32) -> (i32, i32) {
    %c0_i32 = arith.constant 0 : i32
    %c0_i32_0 = arith.constant 0 : i32
    return %arg1, %c0_i32 : i32, i32
  }
  func.func @transform_3(%arg0: i32, %arg1: i32) -> (i32, i32) {
    %c0_i32 = arith.constant 0 : i32
    %c0_i32_0 = arith.constant 0 : i32
    return %arg0, %c0_i32 : i32, i32
  }
}

module attributes {stable_mosaic.version = 11 : i64} {
  func.func @_ktiled_matmul_kernel(%arg0: i32, %arg1: i32, %arg2: memref<512x32xf32, #tpu.memory_space<vmem>>, %arg3: memref<512x384xbf16, #tpu.memory_space<vmem>>, %arg4: memref<384x32xbf16, #tpu.memory_space<vmem>>, %arg5: memref<512x32xf32, #tpu.memory_space<vmem>>) attributes {dimension_semantics = [#tpu.dimension_semantics<parallel>, #tpu.dimension_semantics<arbitrary>], iteration_bounds = array<i64: 2, 1>, scalar_prefetch = 0 : i64, scratch_operands = 0 : i64, tpu.core_type = #tpu.core_type<tc>, window_params = [{transform_indices = @transform_0, window_bounds = array<i64: 512, 32>}, {transform_indices = @transform_1, window_bounds = array<i64: 512, 384>}, {transform_indices = @transform_2, window_bounds = array<i64: 384, 32>}, {transform_indices = @transform_3, window_bounds = array<i64: 512, 32>}]} {
    %c0_i32 = arith.constant 0 : i32
    %0 = arith.cmpi eq, %arg1, %c0_i32 : i32
    %1 = arith.extui %0 : i1 to i32
    %c0_i32_0 = arith.constant 0 : i32
    %2 = arith.cmpi ne, %1, %c0_i32_0 : i32
    scf.if %2 {
      %c0_8 = arith.constant 0 : index
      %c0_9 = arith.constant 0 : index
      %9 = vector.load %arg2[%c0_8, %c0_9] : memref<512x32xf32, #tpu.memory_space<vmem>>, vector<512x32xf32>
      %c0_10 = arith.constant 0 : index
      %c0_11 = arith.constant 0 : index
      %10 = vector.load %arg5[%c0_10, %c0_11] : memref<512x32xf32, #tpu.memory_space<vmem>>, vector<512x32xf32>
      tpu.vector_store %arg5[%c0_10, %c0_11], %9 {strides = array<i32>} : memref<512x32xf32, #tpu.memory_space<vmem>>, vector<512x32xf32>,
    } else {
    }
    %c0 = arith.constant 0 : index
    %c0_1 = arith.constant 0 : index
    %3 = vector.load %arg5[%c0, %c0_1] : memref<512x32xf32, #tpu.memory_space<vmem>>, vector<512x32xf32>
    %c0_2 = arith.constant 0 : index
    %c0_3 = arith.constant 0 : index
    %4 = vector.load %arg3[%c0_2, %c0_3] : memref<512x384xbf16, #tpu.memory_space<vmem>>, vector<512x384xbf16>
    %c0_4 = arith.constant 0 : index
    %c0_5 = arith.constant 0 : index
    %5 = vector.load %arg4[%c0_4, %c0_5] : memref<384x32xbf16, #tpu.memory_space<vmem>>, vector<384x32xbf16>
    %cst = arith.constant dense<0.000000e+00> : vector<512x32xf32>
    %6 = tpu.matmul %4, %5, %cst {dimension_numbers = #tpu.dot_dimension_numbers<[1], [0], [0], [1], [0, 0, 1, 1], [], []>} : vector<512x384xbf16>, vector<384x32xbf16>, vector<512x32xf32> -> vector<512x32xf32>
    %7 = arith.addf %3, %6 : vector<512x32xf32>
    %c0_6 = arith.constant 0 : index
    %c0_7 = arith.constant 0 : index
    %8 = vector.load %arg5[%c0_6, %c0_7] : memref<512x32xf32, #tpu.memory_space<vmem>>, vector<512x32xf32>
    tpu.vector_store %arg5[%c0_6, %c0_7], %7 {strides = array<i32>} : memref<512x32xf32, #tpu.memory_space<vmem>>, vector<512x32xf32>,
    return
  }
  func.func @transform_0(%arg0: i32, %arg1: i32) -> (i32, i32) {
    %c0_i32 = arith.constant 0 : i32
    %c0_i32_0 = arith.constant 0 : i32
    return %arg0, %c0_i32 : i32, i32
  }
  func.func @transform_1(%arg0: i32, %arg1: i32) -> (i32, i32) {
    %c0_i32 = arith.constant 0 : i32
    return %arg0, %arg1 : i32, i32
  }
  func.func @transform_2(%arg0: i32, %arg1: i32) -> (i32, i32) {
    %c0_i32 = arith.constant 0 : i32
    %c0_i32_0 = arith.constant 0 : i32
    return %arg1, %c0_i32 : i32, i32
  }
  func.func @transform_3(%arg0: i32, %arg1: i32) -> (i32, i32) {
    %c0_i32 = arith.constant 0 : i32
    %c0_i32_0 = arith.constant 0 : i32
    return %arg0, %c0_i32 : i32, i32
  }
}

</mosaic_0001>

<llo_original>
// kernel: mfunit_add1_forward.5
$region0: #{mfunit_add1_forward.5}
  #allocation0 [shape = 'u32[]', space=smem, size = 0x4, offset = 0x4, fixed_abs, tag = 'smem constant byte address 0x4 - core index']
  #allocation1 [shape = 'u32[144,128]{1,0:T(1,128)}', space=vmem, size = 0x12000, scoped, tag = 'internal scratch']
  %s0 = inlined_call_operand.vmem [shape: f32[1,4], index: 0, kind: input, shape index: {}]
  %s1 = inlined_call_operand.vmem [shape: f32[1,4], index: 1, kind: input, shape index: {}]
  %s2 = inlined_call_operand.vmem [shape: f32[1024,4], index: 2, kind: input, shape index: {}]
  %s3 = inlined_call_operand.hbm [shape: f32[4,16], index: 3, kind: input, shape index: {}]
  %s4 = inlined_call_operand.vmem [shape: f32[1024,16], index: 4, kind: output, shape index: {}]
  %s5 = sld [smem:[#allocation0]]
  $region53: #{mfunit_add1_forward.5} parent=0
    _
  %s7 = ssub.s32 1, %s5
  %s8 = scalar_select 0, %s7, %s5
  $region1: #{mfunit_add1_forward.5} parent=0
    #allocation2 [shape = 'u8[2048]{0}', space=vmem, size = 0x800, scoped, tag = 'input window, operand 3, single buffered']
    #allocation3 [shape = 's32[2]{0}', space=sflag, size = 0x8, scoped, tag = 'scoped memory for mfunit_add1_forward.5']
    %9 = vsyncpa [#allocation3], 0
    loop: start=0, step=1, limit=4
    $region2: #{mfunit_add1_forward.5} parent=1 // loop_pre_header
      _
    $region3: #{mfunit_add1_forward.5} parent=1 // loop_header
      %s11 = sphi 0, %s15
      %p12 = scmp.ge.s32.totalorder %s11, 4
      %s19 = sphi 0, %s19
      %s21 = sphi 0, %s19
      %s22 = sphi 0, %s21
      %s36 = sphi 0, %s22
      %s40 = sphi 0, %s40
      %s42 = sphi 0, %s40
      %s43 = sphi 0, %s42
      %s57 = sphi 0, %s43
      %s63 = sphi 0, %s65
      %s66 = sphi 0, %s63
      %s67 = sphi 0, %s66
      %s83 = sphi 0, %s67
      %s87 = sphi 0, %s87
      %s89 = sphi 0, %s87
      %s90 = sphi 0, %s89
      %s104 = sphi 0, %s90
      %s110 = sphi 0, %s112
      %s113 = sphi 0, %s110
      %s114 = sphi 0, %s113
      %s130 = sphi 0, %s114
    $region4: #{mfunit_add1_forward.5} parent=1 // loop_header_branch
      %14 = sbr.rel (%p12) target = $region8
    $region5: #{mfunit_add1_forward.5} parent=1 // loop_body
      %s16 = ssub.s32 %s11, 1
      %s17 = ssub.s32 %s11, 2
      %s18 = sadd.s32 %s11, 1
      %s20 = sadd.s32 %s19, 1
      %p23 = scmp.eq.s32.totalorder %s11, 1
      %p24 = scmp.ne.s32.totalorder %s19, %s21
      %p25 = scmp.eq.s32.totalorder %s11, 0
      %p26 = por %p24, %p25
      %p27 = scmp.ne.s32.totalorder %s19, %s21
      %p28 = scmp.eq.s32.totalorder %s16, 1
      %p29 = por %p27, %p28
      %p30 = scmp.ne.s32.totalorder %s21, %s22
      %p31 = scmp.eq.s32.totalorder %s16, 0
      %p32 = por %p30, %p31
      %p33 = scmp.ne.s32.totalorder %s21, %s22
      %p34 = scmp.eq.s32.totalorder %s17, 1
      %p35 = por %p33, %p34
      %p37 = scmp.ne.s32.totalorder %s22, %s36
      %p38 = scmp.eq.s32.totalorder %s17, 0
      %p39 = por %p37, %p38
      %s41 = sadd.s32 %s40, 1
      %p44 = scmp.eq.s32.totalorder %s11, 1
      %p45 = scmp.ne.s32.totalorder %s40, %s42
      %p46 = scmp.eq.s32.totalorder %s11, 0
      %p47 = por %p45, %p46
      %p48 = scmp.ne.s32.totalorder %s40, %s42
      %p49 = scmp.eq.s32.totalorder %s16, 1
      %p50 = por %p48, %p49
      %p51 = scmp.ne.s32.totalorder %s42, %s43
      %p52 = scmp.eq.s32.totalorder %s16, 0
      %p53 = por %p51, %p52
      %p54 = scmp.ne.s32.totalorder %s42, %s43
      %p55 = scmp.eq.s32.totalorder %s17, 1
      %p56 = por %p54, %p55
      %p58 = scmp.ne.s32.totalorder %s43, %s57
      %p59 = scmp.eq.s32.totalorder %s17, 0
      %p60 = por %p58, %p59
      %s61 = ssub.s32 %s11, %s18
      %p62 = scmp.eq.s32.totalorder %s61, 0
      %s64 = sadd.s32 %s63, 1
      %s65 = scalar_select %p62, %s63, %s64
      %p68 = pneg %p62
      %p69 = scmp.eq.s32.totalorder %s11, 1
      %p70 = por %p68, %p69
      %p71 = scmp.ne.s32.totalorder %s63, %s66
      %p72 = scmp.eq.s32.totalorder %s11, 0
      %p73 = por %p71, %p72
      %p74 = scmp.ne.s32.totalorder %s63, %s66
      %p75 = scmp.eq.s32.totalorder %s16, 1
      %p76 = por %p74, %p75
      %p77 = scmp.ne.s32.totalorder %s66, %s67
      %p78 = scmp.eq.s32.totalorder %s16, 0
      %p79 = por %p77, %p78
      %p80 = scmp.ne.s32.totalorder %s66, %s67
      %p81 = scmp.eq.s32.totalorder %s17, 1
      %p82 = por %p80, %p81
      %p84 = scmp.ne.s32.totalorder %s67, %s83
      %p85 = scmp.eq.s32.totalorder %s17, 0
      %p86 = por %p84, %p85
      %s88 = sadd.s32 %s87, 1
      %p91 = scmp.eq.s32.totalorder %s11, 1
      %p92 = scmp.ne.s32.totalorder %s87, %s89
      %p93 = scmp.eq.s32.totalorder %s11, 0
      %p94 = por %p92, %p93
      %p95 = scmp.ne.s32.totalorder %s87, %s89
      %p96 = scmp.eq.s32.totalorder %s16, 1
      %p97 = por %p95, %p96
      %p98 = scmp.ne.s32.totalorder %s89, %s90
      %p99 = scmp.eq.s32.totalorder %s16, 0
      %p100 = por %p98, %p99
      %p101 = scmp.ne.s32.totalorder %s89, %s90
      %p102 = scmp.eq.s32.totalorder %s17, 1
      %p103 = por %p101, %p102
      %p105 = scmp.ne.s32.totalorder %s90, %s104
      %p106 = scmp.eq.s32.totalorder %s17, 0
      %p107 = por %p105, %p106
      %s108 = ssub.s32 %s11, %s18
      %p109 = scmp.eq.s32.totalorder %s108, 0
      %s111 = sadd.s32 %s110, 1
      %s112 = scalar_select %p109, %s110, %s111
      %p115 = pneg %p109
      %p116 = scmp.eq.s32.totalorder %s11, 1
      %p117 = por %p115, %p116
      %p118 = scmp.ne.s32.totalorder %s110, %s113
      %p119 = scmp.eq.s32.totalorder %s11, 0
      %p120 = por %p118, %p119
      %p121 = scmp.ne.s32.totalorder %s110, %s113
      %p122 = scmp.eq.s32.totalorder %s16, 1
      %p123 = por %p121, %p122
      %p124 = scmp.ne.s32.totalorder %s113, %s114
      %p125 = scmp.eq.s32.totalorder %s16, 0
      %p126 = por %p124, %p125
      %p127 = scmp.ne.s32.totalorder %s113, %s114
      %p128 = scmp.eq.s32.totalorder %s17, 1
      %p129 = por %p127, %p128
      %p131 = scmp.ne.s32.totalorder %s114, %s130
      %p132 = scmp.eq.s32.totalorder %s17, 0
      %p133 = por %p131, %p132
      %p134 = scmp.le.s32.totalorder 1, %s11
      %p135 = scmp.lt.s32.totalorder %s11, 3
      %p136 = pnand %p134, %p135
      %p137 = pneg %p136
      // Predicated region
      $region9: #{mfunit_add1_forward.5} parent=5 // pred_check
        _
      $region10: #{mfunit_add1_forward.5} parent=5 // pred_check_branch
        %139 = sbr.rel (%p136) target = $region12
      $region11: #{mfunit_add1_forward.5} parent=5 // pred_region
        %s140 = ssub.s32 %s11, 1
        // Predicated region
        $region13: #{mfunit_add1_forward.5} parent=11 // pred_check
          %p141 = pneg %p32
        $region14: #{mfunit_add1_forward.5} parent=11 // pred_check_branch
          %143 = sbr.rel (%p141) target = $region16
        $region15: #{mfunit_add1_forward.5} parent=11 // pred_region
          _
        $region16: #{mfunit_add1_forward.5} parent=11 // pred_fallthru
          _
        // Predicated region
        $region17: #{mfunit_add1_forward.5} parent=11 // pred_check
          %p144 = pneg %p53
        $region18: #{mfunit_add1_forward.5} parent=11 // pred_check_branch
          %146 = sbr.rel (%p144) target = $region20
        $region19: #{mfunit_add1_forward.5} parent=11 // pred_region
          _
        $region20: #{mfunit_add1_forward.5} parent=11 // pred_fallthru
          _
        // Predicated region
        $region21: #{mfunit_add1_forward.5} parent=11 // pred_check
          %p147 = pneg %p100
        $region22: #{mfunit_add1_forward.5} parent=11 // pred_check_branch
          %149 = sbr.rel (%p147) target = $region24
        $region23: #{mfunit_add1_forward.5} parent=11 // pred_region
          %s151 = ssub.s32 64, 64
          %152 = vsyncadd [#allocation3], %s151
          %s154 = sshll.u32 [#allocation2], 4
          %s155 = int_to_ptr.vmem [resolvable:$true] %s154
          %157 = dma.hbm_to_vmem [thread:$0]  %s3, 64, %s155, [#allocation3]
        $region24: #{mfunit_add1_forward.5} parent=11 // pred_fallthru
          _
      $region12: #{mfunit_add1_forward.5} parent=5 // pred_fallthru
        _
      %p158 = scmp.lt.s32.totalorder %s11, 2
      // Predicated region
      $region25: #{mfunit_add1_forward.5} parent=5 // pred_check
        %p159 = pneg %p158
      $region26: #{mfunit_add1_forward.5} parent=5 // pred_check_branch
        %161 = sbr.rel (%p159) target = $region28
      $region27: #{mfunit_add1_forward.5} parent=5 // pred_region
        // Predicated region
        $region29: #{mfunit_add1_forward.5} parent=27 // pred_check
          %p162 = pneg %p73
        $region30: #{mfunit_add1_forward.5} parent=27 // pred_check_branch
          %164 = sbr.rel (%p162) target = $region32
        $region31: #{mfunit_add1_forward.5} parent=27 // pred_region
          %s165 = smul.u32 64, %s11
          %p166 = scmp.lt.s32.totalorder %s165, 127
          %s167 = scalar_select %p166, %s165, 127
          %s168 = smul.addr %s167, 8
          %s169 = scalar_lea.vmem %s2, %s168
          %s170 = smul.u32 64, %s11
        $region32: #{mfunit_add1_forward.5} parent=27 // pred_fallthru
          _
      $region28: #{mfunit_add1_forward.5} parent=5 // pred_fallthru
        _
      %p171 = scmp.le.s32.totalorder 1, %s11
      %p172 = scmp.lt.s32.totalorder %s11, 3
      %p173 = pnand %p171, %p172
      %p174 = pneg %p173
      // Predicated region
      $region33: #{mfunit_add1_forward.5} parent=5 // pred_check
        _
      $region34: #{mfunit_add1_forward.5} parent=5 // pred_check_branch
        %176 = sbr.rel (%p173) target = $region36
      $region35: #{mfunit_add1_forward.5} parent=5 // pred_region
        %s177 = ssub.s32 %s11, 1
        // Predicated region
        $region37: #{mfunit_add1_forward.5} parent=35 // pred_check
          %p178 = pneg %p100
        $region38: #{mfunit_add1_forward.5} parent=35 // pred_check_branch
          %180 = sbr.rel (%p178) target = $region40
        $region39: #{mfunit_add1_forward.5} parent=35 // pred_region
          %181 = dma.done [#allocation3], 64
        $region40: #{mfunit_add1_forward.5} parent=35 // pred_fallthru
          _
        %p182 = pneg %p32
        %p183 = pneg %p29
        %p184 = pneg %p53
        %p185 = pneg %p50
        %s186 = smul.u32 64, %s16
        %p187 = scmp.lt.s32.totalorder %s186, 127
        %s188 = scalar_select %p187, %s186, 127
        %s189 = smul.addr %s188, 8
        %s190 = scalar_lea.vmem %s2, %s189
        %p191 = pneg %p79
        %p192 = pneg %p76
        %p193 = pneg %p100
        %p194 = pneg %p97
        %p195 = pneg %p126
        %p196 = pneg %p123
        %s197 = smul.u32 64, %s16
        %p198 = scmp.lt.s32.totalorder %s197, 127
        %s199 = scalar_select %p198, %s197, 127
        %s200 = smul.addr %s199, 8
        %s201 = scalar_lea.vmem %s4, %s200
        %s202 = smul.u32 64, %s16
        %p203 = scmp.lt.s32.totalorder %s202, 127
        %s204 = scalar_select %p203, %s202, 127
        %s205 = smul.addr %s204, 8
        %s206 = scalar_lea.vmem %s2, %s205
        %s207 = smul.u32 64, %s16
        %s208 = smul.u32 64, %s16
        %p209 = scmp.lt.s32.totalorder %s208, 127
        %s210 = scalar_select %p209, %s208, 127
        %s211 = smul.addr %s210, 8
        %s212 = scalar_lea.vmem %s4, %s211
        %s213 = smul.u32 64, %s16
        %v214 = vld [vmem:[%s206] sm:$0xff]
        %v215 = vld [vmem:[%s206 + $0x8] sm:$0xff]
        %v216 = vld [vmem:[%s206 + $0x10] sm:$0xff]
        %v217 = vld [vmem:[%s206 + $0x18] sm:$0xff]
        %v218 = vld [vmem:[%s206 + $0x20] sm:$0xff]
        %v219 = vld [vmem:[%s206 + $0x28] sm:$0xff]
        %v220 = vld [vmem:[%s206 + $0x30] sm:$0xff]
        %v221 = vld [vmem:[%s206 + $0x38] sm:$0xff]
        %v222 = vld [vmem:[%s206 + $0x40] sm:$0xff]
        %v223 = vld [vmem:[%s206 + $0x48] sm:$0xff]
        %v224 = vld [vmem:[%s206 + $0x50] sm:$0xff]
        %v225 = vld [vmem:[%s206 + $0x58] sm:$0xff]
        %v226 = vld [vmem:[%s206 + $0x60] sm:$0xff]
        %v227 = vld [vmem:[%s206 + $0x68] sm:$0xff]
        %v228 = vld [vmem:[%s206 + $0x70] sm:$0xff]
        %v229 = vld [vmem:[%s206 + $0x78] sm:$0xff]
        %v230 = vld [vmem:[%s206 + $0x80] sm:$0xff]
        %v231 = vld [vmem:[%s206 + $0x88] sm:$0xff]
        %v232 = vld [vmem:[%s206 + $0x90] sm:$0xff]
        %v233 = vld [vmem:[%s206 + $0x98] sm:$0xff]
        %v234 = vld [vmem:[%s206 + $0xa0] sm:$0xff]
        %v235 = vld [vmem:[%s206 + $0xa8] sm:$0xff]
        %v236 = vld [vmem:[%s206 + $0xb0] sm:$0xff]
        %v237 = vld [vmem:[%s206 + $0xb8] sm:$0xff]
        %v238 = vld [vmem:[%s206 + $0xc0] sm:$0xff]
        %v239 = vld [vmem:[%s206 + $0xc8] sm:$0xff]
        %v240 = vld [vmem:[%s206 + $0xd0] sm:$0xff]
        %v241 = vld [vmem:[%s206 + $0xd8] sm:$0xff]
        %v242 = vld [vmem:[%s206 + $0xe0] sm:$0xff]
        %v243 = vld [vmem:[%s206 + $0xe8] sm:$0xff]
        %v244 = vld [vmem:[%s206 + $0xf0] sm:$0xff]
        %v245 = vld [vmem:[%s206 + $0xf8] sm:$0xff]
        %v246 = vld [vmem:[%s206 + $0x100] sm:$0xff]
        %v247 = vld [vmem:[%s206 + $0x108] sm:$0xff]
        %v248 = vld [vmem:[%s206 + $0x110] sm:$0xff]
        %v249 = vld [vmem:[%s206 + $0x118] sm:$0xff]
        %v250 = vld [vmem:[%s206 + $0x120] sm:$0xff]
        %v251 = vld [vmem:[%s206 + $0x128] sm:$0xff]
        %v252 = vld [vmem:[%s206 + $0x130] sm:$0xff]
        %v253 = vld [vmem:[%s206 + $0x138] sm:$0xff]
        %v254 = vld [vmem:[%s206 + $0x140] sm:$0xff]
        %v255 = vld [vmem:[%s206 + $0x148] sm:$0xff]
        %v256 = vld [vmem:[%s206 + $0x150] sm:$0xff]
        %v257 = vld [vmem:[%s206 + $0x158] sm:$0xff]
        %v258 = vld [vmem:[%s206 + $0x160] sm:$0xff]
        %v259 = vld [vmem:[%s206 + $0x168] sm:$0xff]
        %v260 = vld [vmem:[%s206 + $0x170] sm:$0xff]
        %v261 = vld [vmem:[%s206 + $0x178] sm:$0xff]
        %v262 = vld [vmem:[%s206 + $0x180] sm:$0xff]
        %v263 = vld [vmem:[%s206 + $0x188] sm:$0xff]
        %v264 = vld [vmem:[%s206 + $0x190] sm:$0xff]
        %v265 = vld [vmem:[%s206 + $0x198] sm:$0xff]
        %v266 = vld [vmem:[%s206 + $0x1a0] sm:$0xff]
        %v267 = vld [vmem:[%s206 + $0x1a8] sm:$0xff]
        %v268 = vld [vmem:[%s206 + $0x1b0] sm:$0xff]
        %v269 = vld [vmem:[%s206 + $0x1b8] sm:$0xff]
        %v270 = vld [vmem:[%s206 + $0x1c0] sm:$0xff]
        %v271 = vld [vmem:[%s206 + $0x1c8] sm:$0xff]
        %v272 = vld [vmem:[%s206 + $0x1d0] sm:$0xff]
        %v273 = vld [vmem:[%s206 + $0x1d8] sm:$0xff]
        %v274 = vld [vmem:[%s206 + $0x1e0] sm:$0xff]
        %v275 = vld [vmem:[%s206 + $0x1e8] sm:$0xff]
        %v276 = vld [vmem:[%s206 + $0x1f0] sm:$0xff]
        %v277 = vld [vmem:[%s206 + $0x1f8] sm:$0xff]
        %v278 = vld [vmem:[%s0] sm:$0x1]
        %v280 = vlaneseq
        %v281 = vshrl.u32 %v280, 7
        %v282 = vsub.s32 0, %v281
        %v283 = vrot.slane %v278, %v282
        %v285 = vmul.f32 %v214, %v283
        %v286 = vmul.f32 %v215, %v283
        %v287 = vmul.f32 %v216, %v283
        %v288 = vmul.f32 %v217, %v283
        %v289 = vmul.f32 %v218, %v283
        %v290 = vmul.f32 %v219, %v283
        %v291 = vmul.f32 %v220, %v283
        %v292 = vmul.f32 %v221, %v283
        %v293 = vmul.f32 %v222, %v283
        %v294 = vmul.f32 %v223, %v283
        %v295 = vmul.f32 %v224, %v283
        %v296 = vmul.f32 %v225, %v283
        %v297 = vmul.f32 %v226, %v283
        %v298 = vmul.f32 %v227, %v283
        %v299 = vmul.f32 %v228, %v283
        %v300 = vmul.f32 %v229, %v283
        %v301 = vmul.f32 %v230, %v283
        %v302 = vmul.f32 %v231, %v283
        %v303 = vmul.f32 %v232, %v283
        %v304 = vmul.f32 %v233, %v283
        %v305 = vmul.f32 %v234, %v283
        %v306 = vmul.f32 %v235, %v283
        %v307 = vmul.f32 %v236, %v283
        %v308 = vmul.f32 %v237, %v283
        %v309 = vmul.f32 %v238, %v283
        %v310 = vmul.f32 %v239, %v283
        %v311 = vmul.f32 %v240, %v283
        %v312 = vmul.f32 %v241, %v283
        %v313 = vmul.f32 %v242, %v283
        %v314 = vmul.f32 %v243, %v283
        %v315 = vmul.f32 %v244, %v283
        %v316 = vmul.f32 %v245, %v283
        %v317 = vmul.f32 %v246, %v283
        %v318 = vmul.f32 %v247, %v283
        %v319 = vmul.f32 %v248, %v283
        %v320 = vmul.f32 %v249, %v283
        %v321 = vmul.f32 %v250, %v283
        %v322 = vmul.f32 %v251, %v283
        %v323 = vmul.f32 %v252, %v283
        %v324 = vmul.f32 %v253, %v283
        %v325 = vmul.f32 %v254, %v283
        %v326 = vmul.f32 %v255, %v283
        %v327 = vmul.f32 %v256, %v283
        %v328 = vmul.f32 %v257, %v283
        %v329 = vmul.f32 %v258, %v283
        %v330 = vmul.f32 %v259, %v283
        %v331 = vmul.f32 %v260, %v283
        %v332 = vmul.f32 %v261, %v283
        %v333 = vmul.f32 %v262, %v283
        %v334 = vmul.f32 %v263, %v283
        %v335 = vmul.f32 %v264, %v283
        %v336 = vmul.f32 %v265, %v283
        %v337 = vmul.f32 %v266, %v283
        %v338 = vmul.f32 %v267, %v283
        %v339 = vmul.f32 %v268, %v283
        %v340 = vmul.f32 %v269, %v283
        %v341 = vmul.f32 %v270, %v283
        %v342 = vmul.f32 %v271, %v283
        %v343 = vmul.f32 %v272, %v283
        %v344 = vmul.f32 %v273, %v283
        %v345 = vmul.f32 %v274, %v283
        %v346 = vmul.f32 %v275, %v283
        %v347 = vmul.f32 %v276, %v283
        %v348 = vmul.f32 %v277, %v283
        %v349 = vld [vmem:[%s1] sm:$0x1]
        %v351 = vlaneseq
        %v352 = vshrl.u32 %v351, 7
        %v353 = vsub.s32 0, %v352
        %v354 = vrot.slane %v349, %v353
        %v356 = vadd.f32 %v285, %v354
        %v357 = vadd.f32 %v286, %v354
        %v358 = vadd.f32 %v287, %v354
        %v359 = vadd.f32 %v288, %v354
        %v360 = vadd.f32 %v289, %v354
        %v361 = vadd.f32 %v290, %v354
        %v362 = vadd.f32 %v291, %v354
        %v363 = vadd.f32 %v292, %v354
        %v364 = vadd.f32 %v293, %v354
        %v365 = vadd.f32 %v294, %v354
        %v366 = vadd.f32 %v295, %v354
        %v367 = vadd.f32 %v296, %v354
        %v368 = vadd.f32 %v297, %v354
        %v369 = vadd.f32 %v298, %v354
        %v370 = vadd.f32 %v299, %v354
        %v371 = vadd.f32 %v300, %v354
        %v372 = vadd.f32 %v301, %v354
        %v373 = vadd.f32 %v302, %v354
        %v374 = vadd.f32 %v303, %v354
        %v375 = vadd.f32 %v304, %v354
        %v376 = vadd.f32 %v305, %v354
        %v377 = vadd.f32 %v306, %v354
        %v378 = vadd.f32 %v307, %v354
        %v379 = vadd.f32 %v308, %v354
        %v380 = vadd.f32 %v309, %v354
        %v381 = vadd.f32 %v310, %v354
        %v382 = vadd.f32 %v311, %v354
        %v383 = vadd.f32 %v312, %v354
        %v384 = vadd.f32 %v313, %v354
        %v385 = vadd.f32 %v314, %v354
        %v386 = vadd.f32 %v315, %v354
        %v387 = vadd.f32 %v316, %v354
        %v388 = vadd.f32 %v317, %v354
        %v389 = vadd.f32 %v318, %v354
        %v390 = vadd.f32 %v319, %v354
        %v391 = vadd.f32 %v320, %v354
        %v392 = vadd.f32 %v321, %v354
        %v393 = vadd.f32 %v322, %v354
        %v394 = vadd.f32 %v323, %v354
        %v395 = vadd.f32 %v324, %v354
        %v396 = vadd.f32 %v325, %v354
        %v397 = vadd.f32 %v326, %v354
        %v398 = vadd.f32 %v327, %v354
        %v399 = vadd.f32 %v328, %v354
        %v400 = vadd.f32 %v329, %v354
        %v401 = vadd.f32 %v330, %v354
        %v402 = vadd.f32 %v331, %v354
        %v403 = vadd.f32 %v332, %v354
        %v404 = vadd.f32 %v333, %v354
        %v405 = vadd.f32 %v334, %v354
        %v406 = vadd.f32 %v335, %v354
        %v407 = vadd.f32 %v336, %v354
        %v408 = vadd.f32 %v337, %v354
        %v409 = vadd.f32 %v338, %v354
        %v410 = vadd.f32 %v339, %v354
        %v411 = vadd.f32 %v340, %v354
        %v412 = vadd.f32 %v341, %v354
        %v413 = vadd.f32 %v342, %v354
        %v414 = vadd.f32 %v343, %v354
        %v415 = vadd.f32 %v344, %v354
        %v416 = vadd.f32 %v345, %v354
        %v417 = vadd.f32 %v346, %v354
        %v418 = vadd.f32 %v347, %v354
        %v419 = vadd.f32 %v348, %v354
        %v420 = vmax.f32 %v356, 0.0
        %v421 = vmax.f32 %v357, 0.0
        %v422 = vmax.f32 %v358, 0.0
        %v423 = vmax.f32 %v359, 0.0
        %v424 = vmax.f32 %v360, 0.0
        %v425 = vmax.f32 %v361, 0.0
        %v426 = vmax.f32 %v362, 0.0
        %v427 = vmax.f32 %v363, 0.0
        %v428 = vmax.f32 %v364, 0.0
        %v429 = vmax.f32 %v365, 0.0
        %v430 = vmax.f32 %v366, 0.0
        %v431 = vmax.f32 %v367, 0.0
        %v432 = vmax.f32 %v368, 0.0
        %v433 = vmax.f32 %v369, 0.0
        %v434 = vmax.f32 %v370, 0.0
        %v435 = vmax.f32 %v371, 0.0
        %v436 = vmax.f32 %v372, 0.0
        %v437 = vmax.f32 %v373, 0.0
        %v438 = vmax.f32 %v374, 0.0
        %v439 = vmax.f32 %v375, 0.0
        %v440 = vmax.f32 %v376, 0.0
        %v441 = vmax.f32 %v377, 0.0
        %v442 = vmax.f32 %v378, 0.0
        %v443 = vmax.f32 %v379, 0.0
        %v444 = vmax.f32 %v380, 0.0
        %v445 = vmax.f32 %v381, 0.0
        %v446 = vmax.f32 %v382, 0.0
        %v447 = vmax.f32 %v383, 0.0
        %v448 = vmax.f32 %v384, 0.0
        %v449 = vmax.f32 %v385, 0.0
        %v450 = vmax.f32 %v386, 0.0
        %v451 = vmax.f32 %v387, 0.0
        %v452 = vmax.f32 %v388, 0.0
        %v453 = vmax.f32 %v389, 0.0
        %v454 = vmax.f32 %v390, 0.0
        %v455 = vmax.f32 %v391, 0.0
        %v456 = vmax.f32 %v392, 0.0
        %v457 = vmax.f32 %v393, 0.0
        %v458 = vmax.f32 %v394, 0.0
        %v459 = vmax.f32 %v395, 0.0
        %v460 = vmax.f32 %v396, 0.0
        %v461 = vmax.f32 %v397, 0.0
        %v462 = vmax.f32 %v398, 0.0
        %v463 = vmax.f32 %v399, 0.0
        %v464 = vmax.f32 %v400, 0.0
        %v465 = vmax.f32 %v401, 0.0
        %v466 = vmax.f32 %v402, 0.0
        %v467 = vmax.f32 %v403, 0.0
        %v468 = vmax.f32 %v404, 0.0
        %v469 = vmax.f32 %v405, 0.0
        %v470 = vmax.f32 %v406, 0.0
        %v471 = vmax.f32 %v407, 0.0
        %v472 = vmax.f32 %v408, 0.0
        %v473 = vmax.f32 %v409, 0.0
        %v474 = vmax.f32 %v410, 0.0
        %v475 = vmax.f32 %v411, 0.0
        %v476 = vmax.f32 %v412, 0.0
        %v477 = vmax.f32 %v413, 0.0
        %v478 = vmax.f32 %v414, 0.0
        %v479 = vmax.f32 %v415, 0.0
        %v480 = vmax.f32 %v416, 0.0
        %v481 = vmax.f32 %v417, 0.0
        %v482 = vmax.f32 %v418, 0.0
        %v483 = vmax.f32 %v419, 0.0
        %v484 = vld [vmem:[#allocation2] sm:$0xf]
        %vm485 = vcmask 31744
        %v487 = vsel %vm485, %v420, 0
        %v490 = vsel %vm485, %v421, 0
        %v493 = vsel %vm485, %v422, 0
        %v496 = vsel %vm485, %v423, 0
        %v499 = vsel %vm485, %v424, 0
        %v502 = vsel %vm485, %v425, 0
        %v505 = vsel %vm485, %v426, 0
        %v508 = vsel %vm485, %v427, 0
        %v511 = vsel %vm485, %v428, 0
        %v514 = vsel %vm485, %v429, 0
        %v517 = vsel %vm485, %v430, 0
        %v520 = vsel %vm485, %v431, 0
        %v523 = vsel %vm485, %v432, 0
        %v526 = vsel %vm485, %v433, 0
        %v529 = vsel %vm485, %v434, 0
        %v532 = vsel %vm485, %v435, 0
        %v535 = vsel %vm485, %v436, 0
        %v538 = vsel %vm485, %v437, 0
        %v541 = vsel %vm485, %v438, 0
        %v544 = vsel %vm485, %v439, 0
        %v547 = vsel %vm485, %v440, 0
        %v550 = vsel %vm485, %v441, 0
        %v553 = vsel %vm485, %v442, 0
        %v556 = vsel %vm485, %v443, 0
        %v559 = vsel %vm485, %v444, 0
        %v562 = vsel %vm485, %v445, 0
        %v565 = vsel %vm485, %v446, 0
        %v568 = vsel %vm485, %v447, 0
        %v571 = vsel %vm485, %v448, 0
        %v574 = vsel %vm485, %v449, 0
        %v577 = vsel %vm485, %v450, 0
        %v580 = vsel %vm485, %v451, 0
        %v583 = vsel %vm485, %v452, 0
        %v586 = vsel %vm485, %v453, 0
        %v589 = vsel %vm485, %v454, 0
        %v592 = vsel %vm485, %v455, 0
        %v595 = vsel %vm485, %v456, 0
        %v598 = vsel %vm485, %v457, 0
        %v601 = vsel %vm485, %v458, 0
        %v604 = vsel %vm485, %v459, 0
        %v607 = vsel %vm485, %v460, 0
        %v610 = vsel %vm485, %v461, 0
        %v613 = vsel %vm485, %v462, 0
        %v616 = vsel %vm485, %v463, 0
        %v619 = vsel %vm485, %v464, 0
        %v622 = vsel %vm485, %v465, 0
        %v625 = vsel %vm485, %v466, 0
        %v628 = vsel %vm485, %v467, 0
        %v631 = vsel %vm485, %v468, 0
        %v634 = vsel %vm485, %v469, 0
        %v637 = vsel %vm485, %v470, 0
        %v640 = vsel %vm485, %v471, 0
        %v643 = vsel %vm485, %v472, 0
        %v646 = vsel %vm485, %v473, 0
        %v649 = vsel %vm485, %v474, 0
        %v652 = vsel %vm485, %v475, 0
        %v655 = vsel %vm485, %v476, 0
        %v658 = vsel %vm485, %v477, 0
        %v661 = vsel %vm485, %v478, 0
        %v664 = vsel %vm485, %v479, 0
        %v667 = vsel %vm485, %v480, 0
        %v670 = vsel %vm485, %v481, 0
        %v673 = vsel %vm485, %v482, 0
        %v676 = vsel %vm485, %v483, 0
        %vm678 = vcmask 1043456
        %v680 = vsel %vm678, %v484, 0
        %682 = vmatprep.subr.mxu0 0.0
        %683 = vmatpush1.msra.mxu0 0.0
        %684 = vmatprep.subr.mxu0 0.0
        %685 = vmatpush1.msra.mxu0 0.0
        %686 = vmatprep.subr.mxu0 0.0
        %687 = vmatpush1.msra.mxu0 0.0
        %688 = vmatprep.subr.mxu0 0.0
        %689 = vmatpush1.msra.mxu0 0.0
        %690 = vmatprep.subr.mxu0 0.0
        %691 = vmatpush1.msra.mxu0 0.0
        %692 = vmatprep.subr.mxu0 0.0
        %693 = vmatpush1.msra.mxu0 0.0
        %694 = vmatprep.subr.mxu0 0.0
        %695 = vmatpush1.msra.mxu0 0.0
        %696 = vmatprep.subr.mxu0 0.0
        %697 = vmatpush1.msra.mxu0 0.0
        %698 = vmatprep.subr.mxu0 0.0
        %699 = vmatpush1.msra.mxu0 0.0
        %700 = vmatprep.subr.mxu0 0.0
        %701 = vmatpush1.msra.mxu0 0.0
        %702 = vmatprep.subr.mxu0 0.0
        %703 = vmatpush1.msra.mxu0 0.0
        %704 = vmatprep.subr.mxu0 0.0
        %705 = vmatpush1.msra.mxu0 0.0
        %706 = vmatprep.subr.mxu0 0.0
        %707 = vmatpush1.msra.mxu0 0.0
        %708 = vmatprep.subr.mxu0 0.0
        %709 = vmatpush1.msra.mxu0 0.0
        %710 = vmatprep.subr.mxu0 0.0
        %711 = vmatpush1.msra.mxu0 0.0
        %712 = vmatprep.subr.mxu0 0.0
        %713 = vmatpush1.msra.mxu0 %v680
        %714 = vmatprep.subr.mxu0 0.0
        %715 = vmatpush2.msra.mxu0 0.0
        %716 = vmatprep.subr.mxu0 0.0
        %717 = vmatpush2.msra.mxu0 0.0
        %718 = vmatprep.subr.mxu0 0.0
        %719 = vmatpush2.msra.mxu0 0.0
        %720 = vmatprep.subr.mxu0 0.0
        %721 = vmatpush2.msra.mxu0 0.0
        %722 = vmatprep.subr.mxu0 0.0
        %723 = vmatpush2.msra.mxu0 0.0
        %724 = vmatprep.subr.mxu0 0.0
        %725 = vmatpush2.msra.mxu0 0.0
        %726 = vmatprep.subr.mxu0 0.0
        %727 = vmatpush2.msra.mxu0 0.0
        %728 = vmatprep.subr.mxu0 0.0
        %729 = vmatpush2.msra.mxu0 0.0
        %730 = vmatprep.subr.mxu0 0.0
        %731 = vmatpush2.msra.mxu0 0.0
        %732 = vmatprep.subr.mxu0 0.0
        %733 = vmatpush2.msra.mxu0 0.0
        %734 = vmatprep.subr.mxu0 0.0
        %735 = vmatpush2.msra.mxu0 0.0
        %736 = vmatprep.subr.mxu0 0.0
        %737 = vmatpush2.msra.mxu0 0.0
        %738 = vmatprep.subr.mxu0 0.0
        %739 = vmatpush2.msra.mxu0 0.0
        %740 = vmatprep.subr.mxu0 0.0
        %741 = vmatpush2.msra.mxu0 0.0
        %742 = vmatprep.subr.mxu0 0.0
        %743 = vmatpush2.msra.mxu0 0.0
        %744 = vmatprep.subr.mxu0 0.0
        %745 = vmatpush2.msra.mxu0 0.0
        %746 = vmatprep.mubr.f32.mxu0 0.0
        %747 = vmatmul.mubr.f32.gmra.mxu0 %v487
        %v748 = vpop.f32.mrf.mxu0
        %v749 = vadd.f32 0.0, %v748
        %v750 = vpop.f32.mrf.mxu0
        %751 = vmatprep.mubr.f32.mxu0 0.0
        %752 = vmatmul.mubr.f32.gmra.mxu0 %v490
        %v753 = vpop.f32.mrf.mxu0
        %v754 = vadd.f32 0.0, %v753
        %v755 = vpop.f32.mrf.mxu0
        %756 = vmatprep.mubr.f32.mxu0 0.0
        %757 = vmatmul.mubr.f32.gmra.mxu0 %v493
        %v758 = vpop.f32.mrf.mxu0
        %v759 = vadd.f32 0.0, %v758
        %v760 = vpop.f32.mrf.mxu0
        %761 = vmatprep.mubr.f32.mxu0 0.0
        %762 = vmatmul.mubr.f32.gmra.mxu0 %v496
        %v763 = vpop.f32.mrf.mxu0
        %v764 = vadd.f32 0.0, %v763
        %v765 = vpop.f32.mrf.mxu0
        %766 = vmatprep.mubr.f32.mxu0 0.0
        %767 = vmatmul.mubr.f32.gmra.mxu0 %v499
        %v768 = vpop.f32.mrf.mxu0
        %v769 = vadd.f32 0.0, %v768
        %v770 = vpop.f32.mrf.mxu0
        %771 = vmatprep.mubr.f32.mxu0 0.0
        %772 = vmatmul.mubr.f32.gmra.mxu0 %v502
        %v773 = vpop.f32.mrf.mxu0
        %v774 = vadd.f32 0.0, %v773
        %v775 = vpop.f32.mrf.mxu0
        %776 = vmatprep.mubr.f32.mxu0 0.0
        %777 = vmatmul.mubr.f32.gmra.mxu0 %v505
        %v778 = vpop.f32.mrf.mxu0
        %v779 = vadd.f32 0.0, %v778
        %v780 = vpop.f32.mrf.mxu0
        %781 = vmatprep.mubr.f32.mxu0 0.0
        %782 = vmatmul.mubr.f32.gmra.mxu0 %v508
        %v783 = vpop.f32.mrf.mxu0
        %v784 = vadd.f32 0.0, %v783
        %v785 = vpop.f32.mrf.mxu0
        %786 = vmatprep.mubr.f32.mxu0 0.0
        %787 = vmatmul.mubr.f32.gmra.mxu0 %v511
        %v788 = vpop.f32.mrf.mxu0
        %v789 = vadd.f32 0.0, %v788
        %v790 = vpop.f32.mrf.mxu0
        %791 = vmatprep.mubr.f32.mxu0 0.0
        %792 = vmatmul.mubr.f32.gmra.mxu0 %v514
        %v793 = vpop.f32.mrf.mxu0
        %v794 = vadd.f32 0.0, %v793
        %v795 = vpop.f32.mrf.mxu0
        %796 = vmatprep.mubr.f32.mxu0 0.0
        %797 = vmatmul.mubr.f32.gmra.mxu0 %v517
        %v798 = vpop.f32.mrf.mxu0
        %v799 = vadd.f32 0.0, %v798
        %v800 = vpop.f32.mrf.mxu0
        %801 = vmatprep.mubr.f32.mxu0 0.0
        %802 = vmatmul.mubr.f32.gmra.mxu0 %v520
        %v803 = vpop.f32.mrf.mxu0
        %v804 = vadd.f32 0.0, %v803
        %v805 = vpop.f32.mrf.mxu0
        %806 = vmatprep.mubr.f32.mxu0 0.0
        %807 = vmatmul.mubr.f32.gmra.mxu0 %v523
        %v808 = vpop.f32.mrf.mxu0
        %v809 = vadd.f32 0.0, %v808
        %v810 = vpop.f32.mrf.mxu0
        %811 = vmatprep.mubr.f32.mxu0 0.0
        %812 = vmatmul.mubr.f32.gmra.mxu0 %v526
        %v813 = vpop.f32.mrf.mxu0
        %v814 = vadd.f32 0.0, %v813
        %v815 = vpop.f32.mrf.mxu0
        %816 = vmatprep.mubr.f32.mxu0 0.0
        %817 = vmatmul.mubr.f32.gmra.mxu0 %v529
        %v818 = vpop.f32.mrf.mxu0
        %v819 = vadd.f32 0.0, %v818
        %v820 = vpop.f32.mrf.mxu0
        %821 = vmatprep.mubr.f32.mxu0 0.0
        %822 = vmatmul.mubr.f32.gmra.mxu0 %v532
        %v823 = vpop.f32.mrf.mxu0
        %v824 = vadd.f32 0.0, %v823
        %v825 = vpop.f32.mrf.mxu0
        %826 = vmatprep.mubr.f32.mxu0 0.0
        %827 = vmatmul.mubr.f32.gmra.mxu0 %v535
        %v828 = vpop.f32.mrf.mxu0
        %v829 = vadd.f32 0.0, %v828
        %v830 = vpop.f32.mrf.mxu0
        %831 = vmatprep.mubr.f32.mxu0 0.0
        %832 = vmatmul.mubr.f32.gmra.mxu0 %v538
        %v833 = vpop.f32.mrf.mxu0
        %v834 = vadd.f32 0.0, %v833
        %v835 = vpop.f32.mrf.mxu0
        %836 = vmatprep.mubr.f32.mxu0 0.0
        %837 = vmatmul.mubr.f32.gmra.mxu0 %v541
        %v838 = vpop.f32.mrf.mxu0
        %v839 = vadd.f32 0.0, %v838
        %v840 = vpop.f32.mrf.mxu0
        %841 = vmatprep.mubr.f32.mxu0 0.0
        %842 = vmatmul.mubr.f32.gmra.mxu0 %v544
        %v843 = vpop.f32.mrf.mxu0
        %v844 = vadd.f32 0.0, %v843
        %v845 = vpop.f32.mrf.mxu0
        %846 = vmatprep.mubr.f32.mxu0 0.0
        %847 = vmatmul.mubr.f32.gmra.mxu0 %v547
        %v848 = vpop.f32.mrf.mxu0
        %v849 = vadd.f32 0.0, %v848
        %v850 = vpop.f32.mrf.mxu0
        %851 = vmatprep.mubr.f32.mxu0 0.0
        %852 = vmatmul.mubr.f32.gmra.mxu0 %v550
        %v853 = vpop.f32.mrf.mxu0
        %v854 = vadd.f32 0.0, %v853
        %v855 = vpop.f32.mrf.mxu0
        %856 = vmatprep.mubr.f32.mxu0 0.0
        %857 = vmatmul.mubr.f32.gmra.mxu0 %v553
        %v858 = vpop.f32.mrf.mxu0
        %v859 = vadd.f32 0.0, %v858
        %v860 = vpop.f32.mrf.mxu0
        %861 = vmatprep.mubr.f32.mxu0 0.0
        %862 = vmatmul.mubr.f32.gmra.mxu0 %v556
        %v863 = vpop.f32.mrf.mxu0
        %v864 = vadd.f32 0.0, %v863
        %v865 = vpop.f32.mrf.mxu0
        %866 = vmatprep.mubr.f32.mxu0 0.0
        %867 = vmatmul.mubr.f32.gmra.mxu0 %v559
        %v868 = vpop.f32.mrf.mxu0
        %v869 = vadd.f32 0.0, %v868
        %v870 = vpop.f32.mrf.mxu0
        %871 = vmatprep.mubr.f32.mxu0 0.0
        %872 = vmatmul.mubr.f32.gmra.mxu0 %v562
        %v873 = vpop.f32.mrf.mxu0
        %v874 = vadd.f32 0.0, %v873
        %v875 = vpop.f32.mrf.mxu0
        %876 = vmatprep.mubr.f32.mxu0 0.0
        %877 = vmatmul.mubr.f32.gmra.mxu0 %v565
        %v878 = vpop.f32.mrf.mxu0
        %v879 = vadd.f32 0.0, %v878
        %v880 = vpop.f32.mrf.mxu0
        %881 = vmatprep.mubr.f32.mxu0 0.0
        %882 = vmatmul.mubr.f32.gmra.mxu0 %v568
        %v883 = vpop.f32.mrf.mxu0
        %v884 = vadd.f32 0.0, %v883
        %v885 = vpop.f32.mrf.mxu0
        %886 = vmatprep.mubr.f32.mxu0 0.0
        %887 = vmatmul.mubr.f32.gmra.mxu0 %v571
        %v888 = vpop.f32.mrf.mxu0
        %v889 = vadd.f32 0.0, %v888
        %v890 = vpop.f32.mrf.mxu0
        %891 = vmatprep.mubr.f32.mxu0 0.0
        %892 = vmatmul.mubr.f32.gmra.mxu0 %v574
        %v893 = vpop.f32.mrf.mxu0
        %v894 = vadd.f32 0.0, %v893
        %v895 = vpop.f32.mrf.mxu0
        %896 = vmatprep.mubr.f32.mxu0 0.0
        %897 = vmatmul.mubr.f32.gmra.mxu0 %v577
        %v898 = vpop.f32.mrf.mxu0
        %v899 = vadd.f32 0.0, %v898
        %v900 = vpop.f32.mrf.mxu0
        %901 = vmatprep.mubr.f32.mxu0 0.0
        %902 = vmatmul.mubr.f32.gmra.mxu0 %v580
        %v903 = vpop.f32.mrf.mxu0
        %v904 = vadd.f32 0.0, %v903
        %v905 = vpop.f32.mrf.mxu0
        %906 = vmatprep.mubr.f32.mxu0 0.0
        %907 = vmatmul.mubr.f32.gmra.mxu0 %v583
        %v908 = vpop.f32.mrf.mxu0
        %v909 = vadd.f32 0.0, %v908
        %v910 = vpop.f32.mrf.mxu0
        %911 = vmatprep.mubr.f32.mxu0 0.0
        %912 = vmatmul.mubr.f32.gmra.mxu0 %v586
        %v913 = vpop.f32.mrf.mxu0
        %v914 = vadd.f32 0.0, %v913
        %v915 = vpop.f32.mrf.mxu0
        %916 = vmatprep.mubr.f32.mxu0 0.0
        %917 = vmatmul.mubr.f32.gmra.mxu0 %v589
        %v918 = vpop.f32.mrf.mxu0
        %v919 = vadd.f32 0.0, %v918
        %v920 = vpop.f32.mrf.mxu0
        %921 = vmatprep.mubr.f32.mxu0 0.0
        %922 = vmatmul.mubr.f32.gmra.mxu0 %v592
        %v923 = vpop.f32.mrf.mxu0
        %v924 = vadd.f32 0.0, %v923
        %v925 = vpop.f32.mrf.mxu0
        %926 = vmatprep.mubr.f32.mxu0 0.0
        %927 = vmatmul.mubr.f32.gmra.mxu0 %v595
        %v928 = vpop.f32.mrf.mxu0
        %v929 = vadd.f32 0.0, %v928
        %v930 = vpop.f32.mrf.mxu0
        %931 = vmatprep.mubr.f32.mxu0 0.0
        %932 = vmatmul.mubr.f32.gmra.mxu0 %v598
        %v933 = vpop.f32.mrf.mxu0
        %v934 = vadd.f32 0.0, %v933
        %v935 = vpop.f32.mrf.mxu0
        %936 = vmatprep.mubr.f32.mxu0 0.0
        %937 = vmatmul.mubr.f32.gmra.mxu0 %v601
        %v938 = vpop.f32.mrf.mxu0
        %v939 = vadd.f32 0.0, %v938
        %v940 = vpop.f32.mrf.mxu0
        %941 = vmatprep.mubr.f32.mxu0 0.0
        %942 = vmatmul.mubr.f32.gmra.mxu0 %v604
        %v943 = vpop.f32.mrf.mxu0
        %v944 = vadd.f32 0.0, %v943
        %v945 = vpop.f32.mrf.mxu0
        %946 = vmatprep.mubr.f32.mxu0 0.0
        %947 = vmatmul.mubr.f32.gmra.mxu0 %v607
        %v948 = vpop.f32.mrf.mxu0
        %v949 = vadd.f32 0.0, %v948
        %v950 = vpop.f32.mrf.mxu0
        %951 = vmatprep.mubr.f32.mxu0 0.0
        %952 = vmatmul.mubr.f32.gmra.mxu0 %v610
        %v953 = vpop.f32.mrf.mxu0
        %v954 = vadd.f32 0.0, %v953
        %v955 = vpop.f32.mrf.mxu0
        %956 = vmatprep.mubr.f32.mxu0 0.0
        %957 = vmatmul.mubr.f32.gmra.mxu0 %v613
        %v958 = vpop.f32.mrf.mxu0
        %v959 = vadd.f32 0.0, %v958
        %v960 = vpop.f32.mrf.mxu0
        %961 = vmatprep.mubr.f32.mxu0 0.0
        %962 = vmatmul.mubr.f32.gmra.mxu0 %v616
        %v963 = vpop.f32.mrf.mxu0
        %v964 = vadd.f32 0.0, %v963
        %v965 = vpop.f32.mrf.mxu0
        %966 = vmatprep.mubr.f32.mxu0 0.0
        %967 = vmatmul.mubr.f32.gmra.mxu0 %v619
        %v968 = vpop.f32.mrf.mxu0
        %v969 = vadd.f32 0.0, %v968
        %v970 = vpop.f32.mrf.mxu0
        %971 = vmatprep.mubr.f32.mxu0 0.0
        %972 = vmatmul.mubr.f32.gmra.mxu0 %v622
        %v973 = vpop.f32.mrf.mxu0
        %v974 = vadd.f32 0.0, %v973
        %v975 = vpop.f32.mrf.mxu0
        %976 = vmatprep.mubr.f32.mxu0 0.0
        %977 = vmatmul.mubr.f32.gmra.mxu0 %v625
        %v978 = vpop.f32.mrf.mxu0
        %v979 = vadd.f32 0.0, %v978
        %v980 = vpop.f32.mrf.mxu0
        %981 = vmatprep.mubr.f32.mxu0 0.0
        %982 = vmatmul.mubr.f32.gmra.mxu0 %v628
        %v983 = vpop.f32.mrf.mxu0
        %v984 = vadd.f32 0.0, %v983
        %v985 = vpop.f32.mrf.mxu0
        %986 = vmatprep.mubr.f32.mxu0 0.0
        %987 = vmatmul.mubr.f32.gmra.mxu0 %v631
        %v988 = vpop.f32.mrf.mxu0
        %v989 = vadd.f32 0.0, %v988
        %v990 = vpop.f32.mrf.mxu0
        %991 = vmatprep.mubr.f32.mxu0 0.0
        %992 = vmatmul.mubr.f32.gmra.mxu0 %v634
        %v993 = vpop.f32.mrf.mxu0
        %v994 = vadd.f32 0.0, %v993
        %v995 = vpop.f32.mrf.mxu0
        %996 = vmatprep.mubr.f32.mxu0 0.0
        %997 = vmatmul.mubr.f32.gmra.mxu0 %v637
        %v998 = vpop.f32.mrf.mxu0
        %v999 = vadd.f32 0.0, %v998
        %v1000 = vpop.f32.mrf.mxu0
        %1001 = vmatprep.mubr.f32.mxu0 0.0
        %1002 = vmatmul.mubr.f32.gmra.mxu0 %v640
        %v1003 = vpop.f32.mrf.mxu0
        %v1004 = vadd.f32 0.0, %v1003
        %v1005 = vpop.f32.mrf.mxu0
        %1006 = vmatprep.mubr.f32.mxu0 0.0
        %1007 = vmatmul.mubr.f32.gmra.mxu0 %v643
        %v1008 = vpop.f32.mrf.mxu0
        %v1009 = vadd.f32 0.0, %v1008
        %v1010 = vpop.f32.mrf.mxu0
        %1011 = vmatprep.mubr.f32.mxu0 0.0
        %1012 = vmatmul.mubr.f32.gmra.mxu0 %v646
        %v1013 = vpop.f32.mrf.mxu0
        %v1014 = vadd.f32 0.0, %v1013
        %v1015 = vpop.f32.mrf.mxu0
        %1016 = vmatprep.mubr.f32.mxu0 0.0
        %1017 = vmatmul.mubr.f32.gmra.mxu0 %v649
        %v1018 = vpop.f32.mrf.mxu0
        %v1019 = vadd.f32 0.0, %v1018
        %v1020 = vpop.f32.mrf.mxu0
        %1021 = vmatprep.mubr.f32.mxu0 0.0
        %1022 = vmatmul.mubr.f32.gmra.mxu0 %v652
        %v1023 = vpop.f32.mrf.mxu0
        %v1024 = vadd.f32 0.0, %v1023
        %v1025 = vpop.f32.mrf.mxu0
        %1026 = vmatprep.mubr.f32.mxu0 0.0
        %1027 = vmatmul.mubr.f32.gmra.mxu0 %v655
        %v1028 = vpop.f32.mrf.mxu0
        %v1029 = vadd.f32 0.0, %v1028
        %v1030 = vpop.f32.mrf.mxu0
        %1031 = vmatprep.mubr.f32.mxu0 0.0
        %1032 = vmatmul.mubr.f32.gmra.mxu0 %v658
        %v1033 = vpop.f32.mrf.mxu0
        %v1034 = vadd.f32 0.0, %v1033
        %v1035 = vpop.f32.mrf.mxu0
        %1036 = vmatprep.mubr.f32.mxu0 0.0
        %1037 = vmatmul.mubr.f32.gmra.mxu0 %v661
        %v1038 = vpop.f32.mrf.mxu0
        %v1039 = vadd.f32 0.0, %v1038
        %v1040 = vpop.f32.mrf.mxu0
        %1041 = vmatprep.mubr.f32.mxu0 0.0
        %1042 = vmatmul.mubr.f32.gmra.mxu0 %v664
        %v1043 = vpop.f32.mrf.mxu0
        %v1044 = vadd.f32 0.0, %v1043
        %v1045 = vpop.f32.mrf.mxu0
        %1046 = vmatprep.mubr.f32.mxu0 0.0
        %1047 = vmatmul.mubr.f32.gmra.mxu0 %v667
        %v1048 = vpop.f32.mrf.mxu0
        %v1049 = vadd.f32 0.0, %v1048
        %v1050 = vpop.f32.mrf.mxu0
        %1051 = vmatprep.mubr.f32.mxu0 0.0
        %1052 = vmatmul.mubr.f32.gmra.mxu0 %v670
        %v1053 = vpop.f32.mrf.mxu0
        %v1054 = vadd.f32 0.0, %v1053
        %v1055 = vpop.f32.mrf.mxu0
        %1056 = vmatprep.mubr.f32.mxu0 0.0
        %1057 = vmatmul.mubr.f32.gmra.mxu0 %v673
        %v1058 = vpop.f32.mrf.mxu0
        %v1059 = vadd.f32 0.0, %v1058
        %v1060 = vpop.f32.mrf.mxu0
        %1061 = vmatprep.mubr.f32.mxu0 0.0
        %1062 = vmatmul.mubr.f32.gmra.mxu0 %v676
        %v1063 = vpop.f32.mrf.mxu0
        %v1064 = vadd.f32 0.0, %v1063
        %v1065 = vpop.f32.mrf.mxu0
        %1066 = vdwg.mxu0
        %vm1067 = vcmask 130048
        %1068 = vst.msk [vmem:[%s212] sm:$0xff] %vm1067, %v749
        %1069 = vst.msk [vmem:[%s212 + $0x8] sm:$0xff] %vm1067, %v754
        %1070 = vst.msk [vmem:[%s212 + $0x10] sm:$0xff] %vm1067, %v759
        %1071 = vst.msk [vmem:[%s212 + $0x18] sm:$0xff] %vm1067, %v764
        %1072 = vst.msk [vmem:[%s212 + $0x20] sm:$0xff] %vm1067, %v769
        %1073 = vst.msk [vmem:[%s212 + $0x28] sm:$0xff] %vm1067, %v774
        %1074 = vst.msk [vmem:[%s212 + $0x30] sm:$0xff] %vm1067, %v779
        %1075 = vst.msk [vmem:[%s212 + $0x38] sm:$0xff] %vm1067, %v784
        %1076 = vst.msk [vmem:[%s212 + $0x40] sm:$0xff] %vm1067, %v789
        %1077 = vst.msk [vmem:[%s212 + $0x48] sm:$0xff] %vm1067, %v794
        %1078 = vst.msk [vmem:[%s212 + $0x50] sm:$0xff] %vm1067, %v799
        %1079 = vst.msk [vmem:[%s212 + $0x58] sm:$0xff] %vm1067, %v804
        %1080 = vst.msk [vmem:[%s212 + $0x60] sm:$0xff] %vm1067, %v809
        %1081 = vst.msk [vmem:[%s212 + $0x68] sm:$0xff] %vm1067, %v814
        %1082 = vst.msk [vmem:[%s212 + $0x70] sm:$0xff] %vm1067, %v819
        %1083 = vst.msk [vmem:[%s212 + $0x78] sm:$0xff] %vm1067, %v824
        %1084 = vst.msk [vmem:[%s212 + $0x80] sm:$0xff] %vm1067, %v829
        %1085 = vst.msk [vmem:[%s212 + $0x88] sm:$0xff] %vm1067, %v834
        %1086 = vst.msk [vmem:[%s212 + $0x90] sm:$0xff] %vm1067, %v839
        %1087 = vst.msk [vmem:[%s212 + $0x98] sm:$0xff] %vm1067, %v844
        %1088 = vst.msk [vmem:[%s212 + $0xa0] sm:$0xff] %vm1067, %v849
        %1089 = vst.msk [vmem:[%s212 + $0xa8] sm:$0xff] %vm1067, %v854
        %1090 = vst.msk [vmem:[%s212 + $0xb0] sm:$0xff] %vm1067, %v859
        %1091 = vst.msk [vmem:[%s212 + $0xb8] sm:$0xff] %vm1067, %v864
        %1092 = vst.msk [vmem:[%s212 + $0xc0] sm:$0xff] %vm1067, %v869
        %1093 = vst.msk [vmem:[%s212 + $0xc8] sm:$0xff] %vm1067, %v874
        %1094 = vst.msk [vmem:[%s212 + $0xd0] sm:$0xff] %vm1067, %v879
        %1095 = vst.msk [vmem:[%s212 + $0xd8] sm:$0xff] %vm1067, %v884
        %1096 = vst.msk [vmem:[%s212 + $0xe0] sm:$0xff] %vm1067, %v889
        %1097 = vst.msk [vmem:[%s212 + $0xe8] sm:$0xff] %vm1067, %v894
        %1098 = vst.msk [vmem:[%s212 + $0xf0] sm:$0xff] %vm1067, %v899
        %1099 = vst.msk [vmem:[%s212 + $0xf8] sm:$0xff] %vm1067, %v904
        %1100 = vst.msk [vmem:[%s212 + $0x100] sm:$0xff] %vm1067, %v909
        %1101 = vst.msk [vmem:[%s212 + $0x108] sm:$0xff] %vm1067, %v914
        %1102 = vst.msk [vmem:[%s212 + $0x110] sm:$0xff] %vm1067, %v919
        %1103 = vst.msk [vmem:[%s212 + $0x118] sm:$0xff] %vm1067, %v924
        %1104 = vst.msk [vmem:[%s212 + $0x120] sm:$0xff] %vm1067, %v929
        %1105 = vst.msk [vmem:[%s212 + $0x128] sm:$0xff] %vm1067, %v934
        %1106 = vst.msk [vmem:[%s212 + $0x130] sm:$0xff] %vm1067, %v939
        %1107 = vst.msk [vmem:[%s212 + $0x138] sm:$0xff] %vm1067, %v944
        %1108 = vst.msk [vmem:[%s212 + $0x140] sm:$0xff] %vm1067, %v949
        %1109 = vst.msk [vmem:[%s212 + $0x148] sm:$0xff] %vm1067, %v954
        %1110 = vst.msk [vmem:[%s212 + $0x150] sm:$0xff] %vm1067, %v959
        %1111 = vst.msk [vmem:[%s212 + $0x158] sm:$0xff] %vm1067, %v964
        %1112 = vst.msk [vmem:[%s212 + $0x160] sm:$0xff] %vm1067, %v969
        %1113 = vst.msk [vmem:[%s212 + $0x168] sm:$0xff] %vm1067, %v974
        %1114 = vst.msk [vmem:[%s212 + $0x170] sm:$0xff] %vm1067, %v979
        %1115 = vst.msk [vmem:[%s212 + $0x178] sm:$0xff] %vm1067, %v984
        %1116 = vst.msk [vmem:[%s212 + $0x180] sm:$0xff] %vm1067, %v989
        %1117 = vst.msk [vmem:[%s212 + $0x188] sm:$0xff] %vm1067, %v994
        %1118 = vst.msk [vmem:[%s212 + $0x190] sm:$0xff] %vm1067, %v999
        %1119 = vst.msk [vmem:[%s212 + $0x198] sm:$0xff] %vm1067, %v1004
        %1120 = vst.msk [vmem:[%s212 + $0x1a0] sm:$0xff] %vm1067, %v1009
        %1121 = vst.msk [vmem:[%s212 + $0x1a8] sm:$0xff] %vm1067, %v1014
        %1122 = vst.msk [vmem:[%s212 + $0x1b0] sm:$0xff] %vm1067, %v1019
        %1123 = vst.msk [vmem:[%s212 + $0x1b8] sm:$0xff] %vm1067, %v1024
        %1124 = vst.msk [vmem:[%s212 + $0x1c0] sm:$0xff] %vm1067, %v1029
        %1125 = vst.msk [vmem:[%s212 + $0x1c8] sm:$0xff] %vm1067, %v1034
        %1126 = vst.msk [vmem:[%s212 + $0x1d0] sm:$0xff] %vm1067, %v1039
        %1127 = vst.msk [vmem:[%s212 + $0x1d8] sm:$0xff] %vm1067, %v1044
        %1128 = vst.msk [vmem:[%s212 + $0x1e0] sm:$0xff] %vm1067, %v1049
        %1129 = vst.msk [vmem:[%s212 + $0x1e8] sm:$0xff] %vm1067, %v1054
        %1130 = vst.msk [vmem:[%s212 + $0x1f0] sm:$0xff] %vm1067, %v1059
        %1131 = vst.msk [vmem:[%s212 + $0x1f8] sm:$0xff] %vm1067, %v1064
        %s1132 = smul.u32 64, %s16
        %p1133 = scmp.lt.s32.totalorder %s1132, 127
        %s1134 = scalar_select %p1133, %s1132, 127
        %s1135 = smul.addr %s1134, 8
        %s1136 = scalar_lea.vmem %s4, %s1135
        // Predicated region
        $region41: #{mfunit_add1_forward.5} parent=35 // pred_check
          %p1137 = pneg %p123
        $region42: #{mfunit_add1_forward.5} parent=35 // pred_check_branch
          %1139 = sbr.rel (%p1137) target = $region44
        $region43: #{mfunit_add1_forward.5} parent=35 // pred_region
          %s1140 = smul.u32 64, %s16
        $region44: #{mfunit_add1_forward.5} parent=35 // pred_fallthru
          _
      $region36: #{mfunit_add1_forward.5} parent=5 // pred_fallthru
        _
      %p1141 = scmp.le.s32.totalorder 2, %s11
      // Predicated region
      $region45: #{mfunit_add1_forward.5} parent=5 // pred_check
        %p1142 = pneg %p1141
      $region46: #{mfunit_add1_forward.5} parent=5 // pred_check_branch
        %1144 = sbr.rel (%p1142) target = $region48
      $region47: #{mfunit_add1_forward.5} parent=5 // pred_region
        %s1145 = ssub.s32 %s11, 2
        // Predicated region
        $region49: #{mfunit_add1_forward.5} parent=47 // pred_check
          %p1146 = pneg %p129
        $region50: #{mfunit_add1_forward.5} parent=47 // pred_check_branch
          %1148 = sbr.rel (%p1146) target = $region52
        $region51: #{mfunit_add1_forward.5} parent=47 // pred_region
          %s1149 = smul.u32 64, %s17
          %p1150 = scmp.lt.s32.totalorder %s1149, 127
          %s1151 = scalar_select %p1150, %s1149, 127
          %s1152 = smul.addr %s1151, 8
          %s1153 = scalar_lea.vmem %s4, %s1152
        $region52: #{mfunit_add1_forward.5} parent=47 // pred_fallthru
          _
      $region48: #{mfunit_add1_forward.5} parent=5 // pred_fallthru
        _
    $region6: #{mfunit_add1_forward.5} parent=1 // loop_footer
      %s15 = sadd.s32 1, %s11
    $region7: #{mfunit_add1_forward.5} parent=1 // loop_footer_branch
      %10 = sbr.rel target = $region3
    $region8: #{mfunit_add1_forward.5} parent=1 // loop_exit
      _
    %1154 = vsyncpa [#allocation3], 1
    %s1155 = scalar_lea.sflag [#allocation3], 1
    %1156 = vsyncpa %s1155, 1

// kernel: mfunit_add1_forward.4
$region0: #{mfunit_add1_forward.4}
  #allocation0 [shape = 'u32[]', space=smem, size = 0x4, offset = 0x4, fixed_abs, tag = 'smem constant byte address 0x4 - core index']
  #allocation1 [shape = 'u32[144,128]{1,0:T(1,128)}', space=vmem, size = 0x12000, scoped, tag = 'internal scratch']
  %s0 = inlined_call_operand.vmem [shape: f32[1,16], index: 0, kind: input, shape index: {}]
  %s1 = inlined_call_operand.vmem [shape: f32[1,16], index: 1, kind: input, shape index: {}]
  %s2 = inlined_call_operand.vmem [shape: f32[1,16], index: 2, kind: input, shape index: {}]
  %s3 = inlined_call_operand.vmem [shape: f32[1,16], index: 3, kind: input, shape index: {}]
  %s4 = inlined_call_operand.hbm [shape: f32[1024,16], index: 4, kind: input, shape index: {}]
  %s5 = inlined_call_operand.vmem [shape: f32[16,4], index: 5, kind: input, shape index: {}]
  %s6 = inlined_call_operand.hbm [shape: f32[16,32], index: 6, kind: input, shape index: {}]
  %s7 = inlined_call_operand.vmem [shape: f32[1024,4], index: 7, kind: output, shape index: {0}]
  %s8 = inlined_call_operand.vmem [shape: f32[1024,32], index: 8, kind: output, shape index: {1}]
  %9 = xla_tuple %s7, %s8
  %s10 = sld [smem:[#allocation0]]
  $region77: #{mfunit_add1_forward.4} parent=0
    _
  %s12 = ssub.s32 1, %s10
  %s13 = scalar_select 0, %s12, %s10
  $region1: #{mfunit_add1_forward.4} parent=0
    #allocation2 [shape = 'u8[524288]{0}', space=vmem, size = 0x80000, scoped, tag = 'input window, operand 4']
    #allocation3 [shape = 's32[2]{0}', space=sflag, size = 0x8, scoped, tag = 'scoped memory for mfunit_add1_forward.4']
    #allocation4 [shape = 'u8[8192]{0}', space=vmem, size = 0x2000, scoped, tag = 'input window, operand 6, single buffered']
    #allocation5 [shape = 's32[1]{0}', space=sflag, size = 0x4, scoped, tag = 'scoped memory for mfunit_add1_forward.4']
    %14 = vsyncpa [#allocation3], 0
    %s15 = scalar_lea.sflag [#allocation3], 1
    %16 = vsyncpa %s15, 0
    %17 = vsyncpa [#allocation5], 0
    loop: start=0, step=1, limit=4
    $region2: #{mfunit_add1_forward.4} parent=1 // loop_pre_header
      _
    $region3: #{mfunit_add1_forward.4} parent=1 // loop_header
      %s19 = sphi 0, %s23
      %p20 = scmp.ge.s32.totalorder %s19, 4
      %s27 = sphi 0, %s27
      %s29 = sphi 0, %s27
      %s30 = sphi 0, %s29
      %s44 = sphi 0, %s30
      %s48 = sphi 0, %s48
      %s50 = sphi 0, %s48
      %s51 = sphi 0, %s50
      %s65 = sphi 0, %s51
      %s69 = sphi 0, %s69
      %s71 = sphi 0, %s69
      %s72 = sphi 0, %s71
      %s86 = sphi 0, %s72
      %s90 = sphi 0, %s90
      %s92 = sphi 0, %s90
      %s93 = sphi 0, %s92
      %s107 = sphi 0, %s93
      %s113 = sphi 0, %s115
      %s116 = sphi 0, %s113
      %s117 = sphi 0, %s116
      %s133 = sphi 0, %s117
      %s137 = sphi 0, %s137
      %s139 = sphi 0, %s137
      %s140 = sphi 0, %s139
      %s154 = sphi 0, %s140
      %s158 = sphi 0, %s158
      %s160 = sphi 0, %s158
      %s161 = sphi 0, %s160
      %s175 = sphi 0, %s161
      %s181 = sphi 0, %s183
      %s184 = sphi 0, %s181
      %s185 = sphi 0, %s184
      %s201 = sphi 0, %s185
      %s207 = sphi 0, %s209
      %s210 = sphi 0, %s207
      %s211 = sphi 0, %s210
      %s227 = sphi 0, %s211
    $region4: #{mfunit_add1_forward.4} parent=1 // loop_header_branch
      %22 = sbr.rel (%p20) target = $region8
    $region5: #{mfunit_add1_forward.4} parent=1 // loop_body
      %s24 = ssub.s32 %s19, 1
      %s25 = ssub.s32 %s19, 2
      %s26 = sadd.s32 %s19, 1
      %s28 = sadd.s32 %s27, 1
      %p31 = scmp.eq.s32.totalorder %s19, 1
      %p32 = scmp.ne.s32.totalorder %s27, %s29
      %p33 = scmp.eq.s32.totalorder %s19, 0
      %p34 = por %p32, %p33
      %p35 = scmp.ne.s32.totalorder %s27, %s29
      %p36 = scmp.eq.s32.totalorder %s24, 1
      %p37 = por %p35, %p36
      %p38 = scmp.ne.s32.totalorder %s29, %s30
      %p39 = scmp.eq.s32.totalorder %s24, 0
      %p40 = por %p38, %p39
      %p41 = scmp.ne.s32.totalorder %s29, %s30
      %p42 = scmp.eq.s32.totalorder %s25, 1
      %p43 = por %p41, %p42
      %p45 = scmp.ne.s32.totalorder %s30, %s44
      %p46 = scmp.eq.s32.totalorder %s25, 0
      %p47 = por %p45, %p46
      %s49 = sadd.s32 %s48, 1
      %p52 = scmp.eq.s32.totalorder %s19, 1
      %p53 = scmp.ne.s32.totalorder %s48, %s50
      %p54 = scmp.eq.s32.totalorder %s19, 0
      %p55 = por %p53, %p54
      %p56 = scmp.ne.s32.totalorder %s48, %s50
      %p57 = scmp.eq.s32.totalorder %s24, 1
      %p58 = por %p56, %p57
      %p59 = scmp.ne.s32.totalorder %s50, %s51
      %p60 = scmp.eq.s32.totalorder %s24, 0
      %p61 = por %p59, %p60
      %p62 = scmp.ne.s32.totalorder %s50, %s51
      %p63 = scmp.eq.s32.totalorder %s25, 1
      %p64 = por %p62, %p63
      %p66 = scmp.ne.s32.totalorder %s51, %s65
      %p67 = scmp.eq.s32.totalorder %s25, 0
      %p68 = por %p66, %p67
      %s70 = sadd.s32 %s69, 1
      %p73 = scmp.eq.s32.totalorder %s19, 1
      %p74 = scmp.ne.s32.totalorder %s69, %s71
      %p75 = scmp.eq.s32.totalorder %s19, 0
      %p76 = por %p74, %p75
      %p77 = scmp.ne.s32.totalorder %s69, %s71
      %p78 = scmp.eq.s32.totalorder %s24, 1
      %p79 = por %p77, %p78
      %p80 = scmp.ne.s32.totalorder %s71, %s72
      %p81 = scmp.eq.s32.totalorder %s24, 0
      %p82 = por %p80, %p81
      %p83 = scmp.ne.s32.totalorder %s71, %s72
      %p84 = scmp.eq.s32.totalorder %s25, 1
      %p85 = por %p83, %p84
      %p87 = scmp.ne.s32.totalorder %s72, %s86
      %p88 = scmp.eq.s32.totalorder %s25, 0
      %p89 = por %p87, %p88
      %s91 = sadd.s32 %s90, 1
      %p94 = scmp.eq.s32.totalorder %s19, 1
      %p95 = scmp.ne.s32.totalorder %s90, %s92
      %p96 = scmp.eq.s32.totalorder %s19, 0
      %p97 = por %p95, %p96
      %p98 = scmp.ne.s32.totalorder %s90, %s92
      %p99 = scmp.eq.s32.totalorder %s24, 1
      %p100 = por %p98, %p99
      %p101 = scmp.ne.s32.totalorder %s92, %s93
      %p102 = scmp.eq.s32.totalorder %s24, 0
      %p103 = por %p101, %p102
      %p104 = scmp.ne.s32.totalorder %s92, %s93
      %p105 = scmp.eq.s32.totalorder %s25, 1
      %p106 = por %p104, %p105
      %p108 = scmp.ne.s32.totalorder %s93, %s107
      %p109 = scmp.eq.s32.totalorder %s25, 0
      %p110 = por %p108, %p109
      %s111 = ssub.s32 %s19, %s26
      %p112 = scmp.eq.s32.totalorder %s111, 0
      %s114 = sadd.s32 %s113, 1
      %s115 = scalar_select %p112, %s113, %s114
      %p118 = pneg %p112
      %p119 = scmp.eq.s32.totalorder %s19, 1
      %p120 = por %p118, %p119
      %p121 = scmp.ne.s32.totalorder %s113, %s116
      %p122 = scmp.eq.s32.totalorder %s19, 0
      %p123 = por %p121, %p122
      %p124 = scmp.ne.s32.totalorder %s113, %s116
      %p125 = scmp.eq.s32.totalorder %s24, 1
      %p126 = por %p124, %p125
      %p127 = scmp.ne.s32.totalorder %s116, %s117
      %p128 = scmp.eq.s32.totalorder %s24, 0
      %p129 = por %p127, %p128
      %p130 = scmp.ne.s32.totalorder %s116, %s117
      %p131 = scmp.eq.s32.totalorder %s25, 1
      %p132 = por %p130, %p131
      %p134 = scmp.ne.s32.totalorder %s117, %s133
      %p135 = scmp.eq.s32.totalorder %s25, 0
      %p136 = por %p134, %p135
      %s138 = sadd.s32 %s137, 1
      %p141 = scmp.eq.s32.totalorder %s19, 1
      %p142 = scmp.ne.s32.totalorder %s137, %s139
      %p143 = scmp.eq.s32.totalorder %s19, 0
      %p144 = por %p142, %p143
      %p145 = scmp.ne.s32.totalorder %s137, %s139
      %p146 = scmp.eq.s32.totalorder %s24, 1
      %p147 = por %p145, %p146
      %p148 = scmp.ne.s32.totalorder %s139, %s140
      %p149 = scmp.eq.s32.totalorder %s24, 0
      %p150 = por %p148, %p149
      %p151 = scmp.ne.s32.totalorder %s139, %s140
      %p152 = scmp.eq.s32.totalorder %s25, 1
      %p153 = por %p151, %p152
      %p155 = scmp.ne.s32.totalorder %s140, %s154
      %p156 = scmp.eq.s32.totalorder %s25, 0
      %p157 = por %p155, %p156
      %s159 = sadd.s32 %s158, 1
      %p162 = scmp.eq.s32.totalorder %s19, 1
      %p163 = scmp.ne.s32.totalorder %s158, %s160
      %p164 = scmp.eq.s32.totalorder %s19, 0
      %p165 = por %p163, %p164
      %p166 = scmp.ne.s32.totalorder %s158, %s160
      %p167 = scmp.eq.s32.totalorder %s24, 1
      %p168 = por %p166, %p167
      %p169 = scmp.ne.s32.totalorder %s160, %s161
      %p170 = scmp.eq.s32.totalorder %s24, 0
      %p171 = por %p169, %p170
      %p172 = scmp.ne.s32.totalorder %s160, %s161
      %p173 = scmp.eq.s32.totalorder %s25, 1
      %p174 = por %p172, %p173
      %p176 = scmp.ne.s32.totalorder %s161, %s175
      %p177 = scmp.eq.s32.totalorder %s25, 0
      %p178 = por %p176, %p177
      %s179 = ssub.s32 %s19, %s26
      %p180 = scmp.eq.s32.totalorder %s179, 0
      %s182 = sadd.s32 %s181, 1
      %s183 = scalar_select %p180, %s181, %s182
      %p186 = pneg %p180
      %p187 = scmp.eq.s32.totalorder %s19, 1
      %p188 = por %p186, %p187
      %p189 = scmp.ne.s32.totalorder %s181, %s184
      %p190 = scmp.eq.s32.totalorder %s19, 0
      %p191 = por %p189, %p190
      %p192 = scmp.ne.s32.totalorder %s181, %s184
      %p193 = scmp.eq.s32.totalorder %s24, 1
      %p194 = por %p192, %p193
      %p195 = scmp.ne.s32.totalorder %s184, %s185
      %p196 = scmp.eq.s32.totalorder %s24, 0
      %p197 = por %p195, %p196
      %p198 = scmp.ne.s32.totalorder %s184, %s185
      %p199 = scmp.eq.s32.totalorder %s25, 1
      %p200 = por %p198, %p199
      %p202 = scmp.ne.s32.totalorder %s185, %s201
      %p203 = scmp.eq.s32.totalorder %s25, 0
      %p204 = por %p202, %p203
      %s205 = ssub.s32 %s19, %s26
      %p206 = scmp.eq.s32.totalorder %s205, 0
      %s208 = sadd.s32 %s207, 1
      %s209 = scalar_select %p206, %s207, %s208
      %p212 = pneg %p206
      %p213 = scmp.eq.s32.totalorder %s19, 1
      %p214 = por %p212, %p213
      %p215 = scmp.ne.s32.totalorder %s207, %s210
      %p216 = scmp.eq.s32.totalorder %s19, 0
      %p217 = por %p215, %p216
      %p218 = scmp.ne.s32.totalorder %s207, %s210
      %p219 = scmp.eq.s32.totalorder %s24, 1
      %p220 = por %p218, %p219
      %p221 = scmp.ne.s32.totalorder %s210, %s211
      %p222 = scmp.eq.s32.totalorder %s24, 0
      %p223 = por %p221, %p222
      %p224 = scmp.ne.s32.totalorder %s210, %s211
      %p225 = scmp.eq.s32.totalorder %s25, 1
      %p226 = por %p224, %p225
      %p228 = scmp.ne.s32.totalorder %s211, %s227
      %p229 = scmp.eq.s32.totalorder %s25, 0
      %p230 = por %p228, %p229
      %p231 = scmp.le.s32.totalorder 1, %s19
      %p232 = scmp.lt.s32.totalorder %s19, 3
      %p233 = pnand %p231, %p232
      %p234 = pneg %p233
      // Predicated region
      $region9: #{mfunit_add1_forward.4} parent=5 // pred_check
        _
      $region10: #{mfunit_add1_forward.4} parent=5 // pred_check_branch
        %236 = sbr.rel (%p233) target = $region12
      $region11: #{mfunit_add1_forward.4} parent=5 // pred_region
        %s237 = ssub.s32 %s19, 1
        // Predicated region
        $region13: #{mfunit_add1_forward.4} parent=11 // pred_check
          %p238 = pneg %p40
        $region14: #{mfunit_add1_forward.4} parent=11 // pred_check_branch
          %240 = sbr.rel (%p238) target = $region16
        $region15: #{mfunit_add1_forward.4} parent=11 // pred_region
          _
        $region16: #{mfunit_add1_forward.4} parent=11 // pred_fallthru
          _
        // Predicated region
        $region17: #{mfunit_add1_forward.4} parent=11 // pred_check
          %p241 = pneg %p61
        $region18: #{mfunit_add1_forward.4} parent=11 // pred_check_branch
          %243 = sbr.rel (%p241) target = $region20
        $region19: #{mfunit_add1_forward.4} parent=11 // pred_region
          _
        $region20: #{mfunit_add1_forward.4} parent=11 // pred_fallthru
          _
        // Predicated region
        $region21: #{mfunit_add1_forward.4} parent=11 // pred_check
          %p244 = pneg %p82
        $region22: #{mfunit_add1_forward.4} parent=11 // pred_check_branch
          %246 = sbr.rel (%p244) target = $region24
        $region23: #{mfunit_add1_forward.4} parent=11 // pred_region
          _
        $region24: #{mfunit_add1_forward.4} parent=11 // pred_fallthru
          _
        // Predicated region
        $region25: #{mfunit_add1_forward.4} parent=11 // pred_check
          %p247 = pneg %p103
        $region26: #{mfunit_add1_forward.4} parent=11 // pred_check_branch
          %249 = sbr.rel (%p247) target = $region28
        $region27: #{mfunit_add1_forward.4} parent=11 // pred_region
          _
        $region28: #{mfunit_add1_forward.4} parent=11 // pred_fallthru
          _
        // Predicated region
        $region29: #{mfunit_add1_forward.4} parent=11 // pred_check
          %p250 = pneg %p150
        $region30: #{mfunit_add1_forward.4} parent=11 // pred_check_branch
          %252 = sbr.rel (%p250) target = $region32
        $region31: #{mfunit_add1_forward.4} parent=11 // pred_region
          _
        $region32: #{mfunit_add1_forward.4} parent=11 // pred_fallthru
          _
        // Predicated region
        $region33: #{mfunit_add1_forward.4} parent=11 // pred_check
          %p253 = pneg %p171
        $region34: #{mfunit_add1_forward.4} parent=11 // pred_check_branch
          %255 = sbr.rel (%p253) target = $region36
        $region35: #{mfunit_add1_forward.4} parent=11 // pred_region
          %s257 = ssub.s32 256, 256
          %258 = vsyncadd [#allocation5], %s257
          %s259 = sshll.u32 [#allocation4], 4
          %s260 = int_to_ptr.vmem [resolvable:$true] %s259
          %265 = dma.hbm_to_vmem [thread:$0]  %s6, 256, %s260, [#allocation5], 128, 128, 8
        $region36: #{mfunit_add1_forward.4} parent=11 // pred_fallthru
          _
      $region12: #{mfunit_add1_forward.4} parent=5 // pred_fallthru
        _
      %p266 = scmp.lt.s32.totalorder %s19, 2
      // Predicated region
      $region37: #{mfunit_add1_forward.4} parent=5 // pred_check
        %p267 = pneg %p266
      $region38: #{mfunit_add1_forward.4} parent=5 // pred_check_branch
        %269 = sbr.rel (%p267) target = $region40
      $region39: #{mfunit_add1_forward.4} parent=5 // pred_region
        // Predicated region
        $region41: #{mfunit_add1_forward.4} parent=39 // pred_check
          %p270 = pneg %p123
        $region42: #{mfunit_add1_forward.4} parent=39 // pred_check_branch
          %272 = sbr.rel (%p270) target = $region44
        $region43: #{mfunit_add1_forward.4} parent=39 // pred_region
          %s273 = sand.u32 %s113, 1
          %s274 = scalar_lea.sflag [#allocation3], %s273
          %s275 = sand.u32 %s113, 1
          %s276 = smul.addr %s275, 512
          %s277 = scalar_lea.vmem [#allocation2], %s276
          %s278 = smul.u32 64, %s19
          %s280 = ssub.s32 8192, 8192
          %281 = vsyncadd %s274, %s280
          %s282 = smul.addr %s278, 128
          %s283 = scalar_lea.hbm %s4, %s282
          %s284 = sshll.u32 %s277, 4
          %s285 = int_to_ptr.vmem [resolvable:$true] %s284
          %290 = dma.hbm_to_vmem [thread:$0]  %s283, 8192, %s285, %s274, 128, 128, 8
        $region44: #{mfunit_add1_forward.4} parent=39 // pred_fallthru
          _
      $region40: #{mfunit_add1_forward.4} parent=5 // pred_fallthru
        _
      %p291 = scmp.le.s32.totalorder 1, %s19
      %p292 = scmp.lt.s32.totalorder %s19, 3
      %p293 = pnand %p291, %p292
      %p294 = pneg %p293
      // Predicated region
      $region45: #{mfunit_add1_forward.4} parent=5 // pred_check
        _
      $region46: #{mfunit_add1_forward.4} parent=5 // pred_check_branch
        %296 = sbr.rel (%p293) target = $region48
      $region47: #{mfunit_add1_forward.4} parent=5 // pred_region
        %s297 = ssub.s32 %s19, 1
        %s298 = sand.u32 %s116, 1
        %s299 = scalar_lea.sflag [#allocation3], %s298
        %s300 = sand.u32 %s116, 1
        %s301 = smul.addr %s300, 512
        %s302 = scalar_lea.vmem [#allocation2], %s301
        // Predicated region
        $region49: #{mfunit_add1_forward.4} parent=47 // pred_check
          %p303 = pneg %p129
        $region50: #{mfunit_add1_forward.4} parent=47 // pred_check_branch
          %305 = sbr.rel (%p303) target = $region52
        $region51: #{mfunit_add1_forward.4} parent=47 // pred_region
          %306 = dma.done %s299, 8192
        $region52: #{mfunit_add1_forward.4} parent=47 // pred_fallthru
          _
        // Predicated region
        $region53: #{mfunit_add1_forward.4} parent=47 // pred_check
          %p307 = pneg %p171
        $region54: #{mfunit_add1_forward.4} parent=47 // pred_check_branch
          %309 = sbr.rel (%p307) target = $region56
        $region55: #{mfunit_add1_forward.4} parent=47 // pred_region
          %310 = dma.done [#allocation5], 256
        $region56: #{mfunit_add1_forward.4} parent=47 // pred_fallthru
          _
        %p311 = pneg %p40
        %p312 = pneg %p37
        %p313 = pneg %p61
        %p314 = pneg %p58
        %p315 = pneg %p82
        %p316 = pneg %p79
        %p317 = pneg %p103
        %p318 = pneg %p100
        %s319 = sand.u32 %s116, 1
        %s320 = scalar_lea.sflag [#allocation3], %s319
        %s321 = sand.u32 %s116, 1
        %s322 = smul.addr %s321, 512
        %s323 = scalar_lea.vmem [#allocation2], %s322
        %p324 = pneg %p129
        %p325 = pneg %p126
        %p326 = pneg %p150
        %p327 = pneg %p147
        %p328 = pneg %p171
        %p329 = pneg %p168
        %p330 = pneg %p197
        %p331 = pneg %p194
        %s332 = smul.u32 64, %s24
        %p333 = scmp.lt.s32.totalorder %s332, 127
        %s334 = scalar_select %p333, %s332, 127
        %s335 = smul.addr %s334, 8
        %s336 = scalar_lea.vmem %s7, %s335
        %p337 = pneg %p223
        %p338 = pneg %p220
        %s339 = smul.u32 64, %s24
        %p340 = scmp.lt.s32.totalorder %s339, 127
        %s341 = scalar_select %p340, %s339, 127
        %s342 = smul.addr %s341, 8
        %s343 = scalar_lea.vmem %s8, %s342
        %s344 = smul.u32 64, %s24
        %s345 = smul.u32 64, %s24
        %p346 = scmp.lt.s32.totalorder %s345, 127
        %s347 = scalar_select %p346, %s345, 127
        %s348 = smul.addr %s347, 8
        %s349 = scalar_lea.vmem %s7, %s348
        %s350 = smul.u32 64, %s24
        %s351 = smul.u32 64, %s24
        %p352 = scmp.lt.s32.totalorder %s351, 127
        %s353 = scalar_select %p352, %s351, 127
        %s354 = smul.addr %s353, 8
        %s355 = scalar_lea.vmem %s8, %s354
        %s356 = smul.u32 64, %s24
        %v357 = vld [vmem:[%s302] sm:$0xff]
        %v358 = vld [vmem:[%s302 + $0x8] sm:$0xff]
        %v359 = vld [vmem:[%s302 + $0x10] sm:$0xff]
        %v360 = vld [vmem:[%s302 + $0x18] sm:$0xff]
        %v361 = vld [vmem:[%s302 + $0x20] sm:$0xff]
        %v362 = vld [vmem:[%s302 + $0x28] sm:$0xff]
        %v363 = vld [vmem:[%s302 + $0x30] sm:$0xff]
        %v364 = vld [vmem:[%s302 + $0x38] sm:$0xff]
        %v365 = vld [vmem:[%s302 + $0x40] sm:$0xff]
        %v366 = vld [vmem:[%s302 + $0x48] sm:$0xff]
        %v367 = vld [vmem:[%s302 + $0x50] sm:$0xff]
        %v368 = vld [vmem:[%s302 + $0x58] sm:$0xff]
        %v369 = vld [vmem:[%s302 + $0x60] sm:$0xff]
        %v370 = vld [vmem:[%s302 + $0x68] sm:$0xff]
        %v371 = vld [vmem:[%s302 + $0x70] sm:$0xff]
        %v372 = vld [vmem:[%s302 + $0x78] sm:$0xff]
        %v373 = vld [vmem:[%s302 + $0x80] sm:$0xff]
        %v374 = vld [vmem:[%s302 + $0x88] sm:$0xff]
        %v375 = vld [vmem:[%s302 + $0x90] sm:$0xff]
        %v376 = vld [vmem:[%s302 + $0x98] sm:$0xff]
        %v377 = vld [vmem:[%s302 + $0xa0] sm:$0xff]
        %v378 = vld [vmem:[%s302 + $0xa8] sm:$0xff]
        %v379 = vld [vmem:[%s302 + $0xb0] sm:$0xff]
        %v380 = vld [vmem:[%s302 + $0xb8] sm:$0xff]
        %v381 = vld [vmem:[%s302 + $0xc0] sm:$0xff]
        %v382 = vld [vmem:[%s302 + $0xc8] sm:$0xff]
        %v383 = vld [vmem:[%s302 + $0xd0] sm:$0xff]
        %v384 = vld [vmem:[%s302 + $0xd8] sm:$0xff]
        %v385 = vld [vmem:[%s302 + $0xe0] sm:$0xff]
        %v386 = vld [vmem:[%s302 + $0xe8] sm:$0xff]
        %v387 = vld [vmem:[%s302 + $0xf0] sm:$0xff]
        %v388 = vld [vmem:[%s302 + $0xf8] sm:$0xff]
        %v389 = vld [vmem:[%s302 + $0x100] sm:$0xff]
        %v390 = vld [vmem:[%s302 + $0x108] sm:$0xff]
        %v391 = vld [vmem:[%s302 + $0x110] sm:$0xff]
        %v392 = vld [vmem:[%s302 + $0x118] sm:$0xff]
        %v393 = vld [vmem:[%s302 + $0x120] sm:$0xff]
        %v394 = vld [vmem:[%s302 + $0x128] sm:$0xff]
        %v395 = vld [vmem:[%s302 + $0x130] sm:$0xff]
        %v396 = vld [vmem:[%s302 + $0x138] sm:$0xff]
        %v397 = vld [vmem:[%s302 + $0x140] sm:$0xff]
        %v398 = vld [vmem:[%s302 + $0x148] sm:$0xff]
        %v399 = vld [vmem:[%s302 + $0x150] sm:$0xff]
        %v400 = vld [vmem:[%s302 + $0x158] sm:$0xff]
        %v401 = vld [vmem:[%s302 + $0x160] sm:$0xff]
        %v402 = vld [vmem:[%s302 + $0x168] sm:$0xff]
        %v403 = vld [vmem:[%s302 + $0x170] sm:$0xff]
        %v404 = vld [vmem:[%s302 + $0x178] sm:$0xff]
        %v405 = vld [vmem:[%s302 + $0x180] sm:$0xff]
        %v406 = vld [vmem:[%s302 + $0x188] sm:$0xff]
        %v407 = vld [vmem:[%s302 + $0x190] sm:$0xff]
        %v408 = vld [vmem:[%s302 + $0x198] sm:$0xff]
        %v409 = vld [vmem:[%s302 + $0x1a0] sm:$0xff]
        %v410 = vld [vmem:[%s302 + $0x1a8] sm:$0xff]
        %v411 = vld [vmem:[%s302 + $0x1b0] sm:$0xff]
        %v412 = vld [vmem:[%s302 + $0x1b8] sm:$0xff]
        %v413 = vld [vmem:[%s302 + $0x1c0] sm:$0xff]
        %v414 = vld [vmem:[%s302 + $0x1c8] sm:$0xff]
        %v415 = vld [vmem:[%s302 + $0x1d0] sm:$0xff]
        %v416 = vld [vmem:[%s302 + $0x1d8] sm:$0xff]
        %v417 = vld [vmem:[%s302 + $0x1e0] sm:$0xff]
        %v418 = vld [vmem:[%s302 + $0x1e8] sm:$0xff]
        %v419 = vld [vmem:[%s302 + $0x1f0] sm:$0xff]
        %v420 = vld [vmem:[%s302 + $0x1f8] sm:$0xff]
        %v421 = vld [vmem:[%s0] sm:$0x1]
        %v423 = vlaneseq
        %v424 = vshrl.u32 %v423, 7
        %v425 = vsub.s32 0, %v424
        %v426 = vrot.slane %v421, %v425
        %v428 = vmul.f32 %v357, %v426
        %v429 = vmul.f32 %v358, %v426
        %v430 = vmul.f32 %v359, %v426
        %v431 = vmul.f32 %v360, %v426
        %v432 = vmul.f32 %v361, %v426
        %v433 = vmul.f32 %v362, %v426
        %v434 = vmul.f32 %v363, %v426
        %v435 = vmul.f32 %v364, %v426
        %v436 = vmul.f32 %v365, %v426
        %v437 = vmul.f32 %v366, %v426
        %v438 = vmul.f32 %v367, %v426
        %v439 = vmul.f32 %v368, %v426
        %v440 = vmul.f32 %v369, %v426
        %v441 = vmul.f32 %v370, %v426
        %v442 = vmul.f32 %v371, %v426
        %v443 = vmul.f32 %v372, %v426
        %v444 = vmul.f32 %v373, %v426
        %v445 = vmul.f32 %v374, %v426
        %v446 = vmul.f32 %v375, %v426
        %v447 = vmul.f32 %v376, %v426
        %v448 = vmul.f32 %v377, %v426
        %v449 = vmul.f32 %v378, %v426
        %v450 = vmul.f32 %v379, %v426
        %v451 = vmul.f32 %v380, %v426
        %v452 = vmul.f32 %v381, %v426
        %v453 = vmul.f32 %v382, %v426
        %v454 = vmul.f32 %v383, %v426
        %v455 = vmul.f32 %v384, %v426
        %v456 = vmul.f32 %v385, %v426
        %v457 = vmul.f32 %v386, %v426
        %v458 = vmul.f32 %v387, %v426
        %v459 = vmul.f32 %v388, %v426
        %v460 = vmul.f32 %v389, %v426
        %v461 = vmul.f32 %v390, %v426
        %v462 = vmul.f32 %v391, %v426
        %v463 = vmul.f32 %v392, %v426
        %v464 = vmul.f32 %v393, %v426
        %v465 = vmul.f32 %v394, %v426
        %v466 = vmul.f32 %v395, %v426
        %v467 = vmul.f32 %v396, %v426
        %v468 = vmul.f32 %v397, %v426
        %v469 = vmul.f32 %v398, %v426
        %v470 = vmul.f32 %v399, %v426
        %v471 = vmul.f32 %v400, %v426
        %v472 = vmul.f32 %v401, %v426
        %v473 = vmul.f32 %v402, %v426
        %v474 = vmul.f32 %v403, %v426
        %v475 = vmul.f32 %v404, %v426
        %v476 = vmul.f32 %v405, %v426
        %v477 = vmul.f32 %v406, %v426
        %v478 = vmul.f32 %v407, %v426
        %v479 = vmul.f32 %v408, %v426
        %v480 = vmul.f32 %v409, %v426
        %v481 = vmul.f32 %v410, %v426
        %v482 = vmul.f32 %v411, %v426
        %v483 = vmul.f32 %v412, %v426
        %v484 = vmul.f32 %v413, %v426
        %v485 = vmul.f32 %v414, %v426
        %v486 = vmul.f32 %v415, %v426
        %v487 = vmul.f32 %v416, %v426
        %v488 = vmul.f32 %v417, %v426
        %v489 = vmul.f32 %v418, %v426
        %v490 = vmul.f32 %v419, %v426
        %v491 = vmul.f32 %v420, %v426
        %v492 = vld [vmem:[%s1] sm:$0x1]
        %v494 = vlaneseq
        %v495 = vshrl.u32 %v494, 7
        %v496 = vsub.s32 0, %v495
        %v497 = vrot.slane %v492, %v496
        %v499 = vadd.f32 %v428, %v497
        %v500 = vadd.f32 %v429, %v497
        %v501 = vadd.f32 %v430, %v497
        %v502 = vadd.f32 %v431, %v497
        %v503 = vadd.f32 %v432, %v497
        %v504 = vadd.f32 %v433, %v497
        %v505 = vadd.f32 %v434, %v497
        %v506 = vadd.f32 %v435, %v497
        %v507 = vadd.f32 %v436, %v497
        %v508 = vadd.f32 %v437, %v497
        %v509 = vadd.f32 %v438, %v497
        %v510 = vadd.f32 %v439, %v497
        %v511 = vadd.f32 %v440, %v497
        %v512 = vadd.f32 %v441, %v497
        %v513 = vadd.f32 %v442, %v497
        %v514 = vadd.f32 %v443, %v497
        %v515 = vadd.f32 %v444, %v497
        %v516 = vadd.f32 %v445, %v497
        %v517 = vadd.f32 %v446, %v497
        %v518 = vadd.f32 %v447, %v497
        %v519 = vadd.f32 %v448, %v497
        %v520 = vadd.f32 %v449, %v497
        %v521 = vadd.f32 %v450, %v497
        %v522 = vadd.f32 %v451, %v497
        %v523 = vadd.f32 %v452, %v497
        %v524 = vadd.f32 %v453, %v497
        %v525 = vadd.f32 %v454, %v497
        %v526 = vadd.f32 %v455, %v497
        %v527 = vadd.f32 %v456, %v497
        %v528 = vadd.f32 %v457, %v497
        %v529 = vadd.f32 %v458, %v497
        %v530 = vadd.f32 %v459, %v497
        %v531 = vadd.f32 %v460, %v497
        %v532 = vadd.f32 %v461, %v497
        %v533 = vadd.f32 %v462, %v497
        %v534 = vadd.f32 %v463, %v497
        %v535 = vadd.f32 %v464, %v497
        %v536 = vadd.f32 %v465, %v497
        %v537 = vadd.f32 %v466, %v497
        %v538 = vadd.f32 %v467, %v497
        %v539 = vadd.f32 %v468, %v497
        %v540 = vadd.f32 %v469, %v497
        %v541 = vadd.f32 %v470, %v497
        %v542 = vadd.f32 %v471, %v497
        %v543 = vadd.f32 %v472, %v497
        %v544 = vadd.f32 %v473, %v497
        %v545 = vadd.f32 %v474, %v497
        %v546 = vadd.f32 %v475, %v497
        %v547 = vadd.f32 %v476, %v497
        %v548 = vadd.f32 %v477, %v497
        %v549 = vadd.f32 %v478, %v497
        %v550 = vadd.f32 %v479, %v497
        %v551 = vadd.f32 %v480, %v497
        %v552 = vadd.f32 %v481, %v497
        %v553 = vadd.f32 %v482, %v497
        %v554 = vadd.f32 %v483, %v497
        %v555 = vadd.f32 %v484, %v497
        %v556 = vadd.f32 %v485, %v497
        %v557 = vadd.f32 %v486, %v497
        %v558 = vadd.f32 %v487, %v497
        %v559 = vadd.f32 %v488, %v497
        %v560 = vadd.f32 %v489, %v497
        %v561 = vadd.f32 %v490, %v497
        %v562 = vadd.f32 %v491, %v497
        %v563 = vmax.f32 %v499, 0.0
        %v564 = vmax.f32 %v500, 0.0
        %v565 = vmax.f32 %v501, 0.0
        %v566 = vmax.f32 %v502, 0.0
        %v567 = vmax.f32 %v503, 0.0
        %v568 = vmax.f32 %v504, 0.0
        %v569 = vmax.f32 %v505, 0.0
        %v570 = vmax.f32 %v506, 0.0
        %v571 = vmax.f32 %v507, 0.0
        %v572 = vmax.f32 %v508, 0.0
        %v573 = vmax.f32 %v509, 0.0
        %v574 = vmax.f32 %v510, 0.0
        %v575 = vmax.f32 %v511, 0.0
        %v576 = vmax.f32 %v512, 0.0
        %v577 = vmax.f32 %v513, 0.0
        %v578 = vmax.f32 %v514, 0.0
        %v579 = vmax.f32 %v515, 0.0
        %v580 = vmax.f32 %v516, 0.0
        %v581 = vmax.f32 %v517, 0.0
        %v582 = vmax.f32 %v518, 0.0
        %v583 = vmax.f32 %v519, 0.0
        %v584 = vmax.f32 %v520, 0.0
        %v585 = vmax.f32 %v521, 0.0
        %v586 = vmax.f32 %v522, 0.0
        %v587 = vmax.f32 %v523, 0.0
        %v588 = vmax.f32 %v524, 0.0
        %v589 = vmax.f32 %v525, 0.0
        %v590 = vmax.f32 %v526, 0.0
        %v591 = vmax.f32 %v527, 0.0
        %v592 = vmax.f32 %v528, 0.0
        %v593 = vmax.f32 %v529, 0.0
        %v594 = vmax.f32 %v530, 0.0
        %v595 = vmax.f32 %v531, 0.0
        %v596 = vmax.f32 %v532, 0.0
        %v597 = vmax.f32 %v533, 0.0
        %v598 = vmax.f32 %v534, 0.0
        %v599 = vmax.f32 %v535, 0.0
        %v600 = vmax.f32 %v536, 0.0
        %v601 = vmax.f32 %v537, 0.0
        %v602 = vmax.f32 %v538, 0.0
        %v603 = vmax.f32 %v539, 0.0
        %v604 = vmax.f32 %v540, 0.0
        %v605 = vmax.f32 %v541, 0.0
        %v606 = vmax.f32 %v542, 0.0
        %v607 = vmax.f32 %v543, 0.0
        %v608 = vmax.f32 %v544, 0.0
        %v609 = vmax.f32 %v545, 0.0
        %v610 = vmax.f32 %v546, 0.0
        %v611 = vmax.f32 %v547, 0.0
        %v612 = vmax.f32 %v548, 0.0
        %v613 = vmax.f32 %v549, 0.0
        %v614 = vmax.f32 %v550, 0.0
        %v615 = vmax.f32 %v551, 0.0
        %v616 = vmax.f32 %v552, 0.0
        %v617 = vmax.f32 %v553, 0.0
        %v618 = vmax.f32 %v554, 0.0
        %v619 = vmax.f32 %v555, 0.0
        %v620 = vmax.f32 %v556, 0.0
        %v621 = vmax.f32 %v557, 0.0
        %v622 = vmax.f32 %v558, 0.0
        %v623 = vmax.f32 %v559, 0.0
        %v624 = vmax.f32 %v560, 0.0
        %v625 = vmax.f32 %v561, 0.0
        %v626 = vmax.f32 %v562, 0.0
        %v627 = vld [vmem:[%s5] sm:$0xff]
        %v628 = vld [vmem:[%s5 + $0x8] sm:$0xff]
        %vm629 = vcmask 130048
        %v631 = vsel %vm629, %v563, 0
        %v634 = vsel %vm629, %v564, 0
        %v637 = vsel %vm629, %v565, 0
        %v640 = vsel %vm629, %v566, 0
        %v643 = vsel %vm629, %v567, 0
        %v646 = vsel %vm629, %v568, 0
        %v649 = vsel %vm629, %v569, 0
        %v652 = vsel %vm629, %v570, 0
        %v655 = vsel %vm629, %v571, 0
        %v658 = vsel %vm629, %v572, 0
        %v661 = vsel %vm629, %v573, 0
        %v664 = vsel %vm629, %v574, 0
        %v667 = vsel %vm629, %v575, 0
        %v670 = vsel %vm629, %v576, 0
        %v673 = vsel %vm629, %v577, 0
        %v676 = vsel %vm629, %v578, 0
        %v679 = vsel %vm629, %v579, 0
        %v682 = vsel %vm629, %v580, 0
        %v685 = vsel %vm629, %v581, 0
        %v688 = vsel %vm629, %v582, 0
        %v691 = vsel %vm629, %v583, 0
        %v694 = vsel %vm629, %v584, 0
        %v697 = vsel %vm629, %v585, 0
        %v700 = vsel %vm629, %v586, 0
        %v703 = vsel %vm629, %v587, 0
        %v706 = vsel %vm629, %v588, 0
        %v709 = vsel %vm629, %v589, 0
        %v712 = vsel %vm629, %v590, 0
        %v715 = vsel %vm629, %v591, 0
        %v718 = vsel %vm629, %v592, 0
        %v721 = vsel %vm629, %v593, 0
        %v724 = vsel %vm629, %v594, 0
        %v727 = vsel %vm629, %v595, 0
        %v730 = vsel %vm629, %v596, 0
        %v733 = vsel %vm629, %v597, 0
        %v736 = vsel %vm629, %v598, 0
        %v739 = vsel %vm629, %v599, 0
        %v742 = vsel %vm629, %v600, 0
        %v745 = vsel %vm629, %v601, 0
        %v748 = vsel %vm629, %v602, 0
        %v751 = vsel %vm629, %v603, 0
        %v754 = vsel %vm629, %v604, 0
        %v757 = vsel %vm629, %v605, 0
        %v760 = vsel %vm629, %v606, 0
        %v763 = vsel %vm629, %v607, 0
        %v766 = vsel %vm629, %v608, 0
        %v769 = vsel %vm629, %v609, 0
        %v772 = vsel %vm629, %v610, 0
        %v775 = vsel %vm629, %v611, 0
        %v778 = vsel %vm629, %v612, 0
        %v781 = vsel %vm629, %v613, 0
        %v784 = vsel %vm629, %v614, 0
        %v787 = vsel %vm629, %v615, 0
        %v790 = vsel %vm629, %v616, 0
        %v793 = vsel %vm629, %v617, 0
        %v796 = vsel %vm629, %v618, 0
        %v799 = vsel %vm629, %v619, 0
        %v802 = vsel %vm629, %v620, 0
        %v805 = vsel %vm629, %v621, 0
        %v808 = vsel %vm629, %v622, 0
        %v811 = vsel %vm629, %v623, 0
        %v814 = vsel %vm629, %v624, 0
        %v817 = vsel %vm629, %v625, 0
        %v820 = vsel %vm629, %v626, 0
        %822 = vmatprep.subr.mxu0 0.0
        %823 = vmatpush1.msra.mxu0 0.0
        %824 = vmatprep.subr.mxu0 0.0
        %825 = vmatpush1.msra.mxu0 0.0
        %826 = vmatprep.subr.mxu0 0.0
        %827 = vmatpush1.msra.mxu0 0.0
        %828 = vmatprep.subr.mxu0 0.0
        %829 = vmatpush1.msra.mxu0 0.0
        %830 = vmatprep.subr.mxu0 0.0
        %831 = vmatpush1.msra.mxu0 0.0
        %832 = vmatprep.subr.mxu0 0.0
        %833 = vmatpush1.msra.mxu0 0.0
        %834 = vmatprep.subr.mxu0 0.0
        %835 = vmatpush1.msra.mxu0 0.0
        %836 = vmatprep.subr.mxu0 0.0
        %837 = vmatpush1.msra.mxu0 0.0
        %838 = vmatprep.subr.mxu0 0.0
        %839 = vmatpush1.msra.mxu0 0.0
        %840 = vmatprep.subr.mxu0 0.0
        %841 = vmatpush1.msra.mxu0 0.0
        %842 = vmatprep.subr.mxu0 0.0
        %843 = vmatpush1.msra.mxu0 0.0
        %844 = vmatprep.subr.mxu0 0.0
        %845 = vmatpush1.msra.mxu0 0.0
        %846 = vmatprep.subr.mxu0 0.0
        %847 = vmatpush1.msra.mxu0 0.0
        %848 = vmatprep.subr.mxu0 0.0
        %849 = vmatpush1.msra.mxu0 0.0
        %850 = vmatprep.subr.mxu0 0.0
        %851 = vmatpush1.msra.mxu0 %v628
        %852 = vmatprep.subr.mxu0 0.0
        %853 = vmatpush1.msra.mxu0 %v627
        %854 = vmatprep.subr.mxu0 0.0
        %855 = vmatpush2.msra.mxu0 0.0
        %856 = vmatprep.subr.mxu0 0.0
        %857 = vmatpush2.msra.mxu0 0.0
        %858 = vmatprep.subr.mxu0 0.0
        %859 = vmatpush2.msra.mxu0 0.0
        %860 = vmatprep.subr.mxu0 0.0
        %861 = vmatpush2.msra.mxu0 0.0
        %862 = vmatprep.subr.mxu0 0.0
        %863 = vmatpush2.msra.mxu0 0.0
        %864 = vmatprep.subr.mxu0 0.0
        %865 = vmatpush2.msra.mxu0 0.0
        %866 = vmatprep.subr.mxu0 0.0
        %867 = vmatpush2.msra.mxu0 0.0
        %868 = vmatprep.subr.mxu0 0.0
        %869 = vmatpush2.msra.mxu0 0.0
        %870 = vmatprep.subr.mxu0 0.0
        %871 = vmatpush2.msra.mxu0 0.0
        %872 = vmatprep.subr.mxu0 0.0
        %873 = vmatpush2.msra.mxu0 0.0
        %874 = vmatprep.subr.mxu0 0.0
        %875 = vmatpush2.msra.mxu0 0.0
        %876 = vmatprep.subr.mxu0 0.0
        %877 = vmatpush2.msra.mxu0 0.0
        %878 = vmatprep.subr.mxu0 0.0
        %879 = vmatpush2.msra.mxu0 0.0
        %880 = vmatprep.subr.mxu0 0.0
        %881 = vmatpush2.msra.mxu0 0.0
        %882 = vmatprep.subr.mxu0 0.0
        %883 = vmatpush2.msra.mxu0 0.0
        %884 = vmatprep.subr.mxu0 0.0
        %885 = vmatpush2.msra.mxu0 0.0
        %886 = vmatprep.mubr.f32.mxu0 0.0
        %887 = vmatmul.mubr.f32.gmra.mxu0 %v631
        %v888 = vpop.f32.mrf.mxu0
        %v889 = vadd.f32 0.0, %v888
        %v890 = vpop.f32.mrf.mxu0
        %891 = vmatprep.mubr.f32.mxu0 0.0
        %892 = vmatmul.mubr.f32.gmra.mxu0 %v634
        %v893 = vpop.f32.mrf.mxu0
        %v894 = vadd.f32 0.0, %v893
        %v895 = vpop.f32.mrf.mxu0
        %896 = vmatprep.mubr.f32.mxu0 0.0
        %897 = vmatmul.mubr.f32.gmra.mxu0 %v637
        %v898 = vpop.f32.mrf.mxu0
        %v899 = vadd.f32 0.0, %v898
        %v900 = vpop.f32.mrf.mxu0
        %901 = vmatprep.mubr.f32.mxu0 0.0
        %902 = vmatmul.mubr.f32.gmra.mxu0 %v640
        %v903 = vpop.f32.mrf.mxu0
        %v904 = vadd.f32 0.0, %v903
        %v905 = vpop.f32.mrf.mxu0
        %906 = vmatprep.mubr.f32.mxu0 0.0
        %907 = vmatmul.mubr.f32.gmra.mxu0 %v643
        %v908 = vpop.f32.mrf.mxu0
        %v909 = vadd.f32 0.0, %v908
        %v910 = vpop.f32.mrf.mxu0
        %911 = vmatprep.mubr.f32.mxu0 0.0
        %912 = vmatmul.mubr.f32.gmra.mxu0 %v646
        %v913 = vpop.f32.mrf.mxu0
        %v914 = vadd.f32 0.0, %v913
        %v915 = vpop.f32.mrf.mxu0
        %916 = vmatprep.mubr.f32.mxu0 0.0
        %917 = vmatmul.mubr.f32.gmra.mxu0 %v649
        %v918 = vpop.f32.mrf.mxu0
        %v919 = vadd.f32 0.0, %v918
        %v920 = vpop.f32.mrf.mxu0
        %921 = vmatprep.mubr.f32.mxu0 0.0
        %922 = vmatmul.mubr.f32.gmra.mxu0 %v652
        %v923 = vpop.f32.mrf.mxu0
        %v924 = vadd.f32 0.0, %v923
        %v925 = vpop.f32.mrf.mxu0
        %926 = vmatprep.mubr.f32.mxu0 0.0
        %927 = vmatmul.mubr.f32.gmra.mxu0 %v655
        %v928 = vpop.f32.mrf.mxu0
        %v929 = vadd.f32 0.0, %v928
        %v930 = vpop.f32.mrf.mxu0
        %931 = vmatprep.mubr.f32.mxu0 0.0
        %932 = vmatmul.mubr.f32.gmra.mxu0 %v658
        %v933 = vpop.f32.mrf.mxu0
        %v934 = vadd.f32 0.0, %v933
        %v935 = vpop.f32.mrf.mxu0
        %936 = vmatprep.mubr.f32.mxu0 0.0
        %937 = vmatmul.mubr.f32.gmra.mxu0 %v661
        %v938 = vpop.f32.mrf.mxu0
        %v939 = vadd.f32 0.0, %v938
        %v940 = vpop.f32.mrf.mxu0
        %941 = vmatprep.mubr.f32.mxu0 0.0
        %942 = vmatmul.mubr.f32.gmra.mxu0 %v664
        %v943 = vpop.f32.mrf.mxu0
        %v944 = vadd.f32 0.0, %v943
        %v945 = vpop.f32.mrf.mxu0
        %946 = vmatprep.mubr.f32.mxu0 0.0
        %947 = vmatmul.mubr.f32.gmra.mxu0 %v667
        %v948 = vpop.f32.mrf.mxu0
        %v949 = vadd.f32 0.0, %v948
        %v950 = vpop.f32.mrf.mxu0
        %951 = vmatprep.mubr.f32.mxu0 0.0
        %952 = vmatmul.mubr.f32.gmra.mxu0 %v670
        %v953 = vpop.f32.mrf.mxu0
        %v954 = vadd.f32 0.0, %v953
        %v955 = vpop.f32.mrf.mxu0
        %956 = vmatprep.mubr.f32.mxu0 0.0
        %957 = vmatmul.mubr.f32.gmra.mxu0 %v673
        %v958 = vpop.f32.mrf.mxu0
        %v959 = vadd.f32 0.0, %v958
        %v960 = vpop.f32.mrf.mxu0
        %961 = vmatprep.mubr.f32.mxu0 0.0
        %962 = vmatmul.mubr.f32.gmra.mxu0 %v676
        %v963 = vpop.f32.mrf.mxu0
        %v964 = vadd.f32 0.0, %v963
        %v965 = vpop.f32.mrf.mxu0
        %966 = vmatprep.mubr.f32.mxu0 0.0
        %967 = vmatmul.mubr.f32.gmra.mxu0 %v679
        %v968 = vpop.f32.mrf.mxu0
        %v969 = vadd.f32 0.0, %v968
        %v970 = vpop.f32.mrf.mxu0
        %971 = vmatprep.mubr.f32.mxu0 0.0
        %972 = vmatmul.mubr.f32.gmra.mxu0 %v682
        %v973 = vpop.f32.mrf.mxu0
        %v974 = vadd.f32 0.0, %v973
        %v975 = vpop.f32.mrf.mxu0
        %976 = vmatprep.mubr.f32.mxu0 0.0
        %977 = vmatmul.mubr.f32.gmra.mxu0 %v685
        %v978 = vpop.f32.mrf.mxu0
        %v979 = vadd.f32 0.0, %v978
        %v980 = vpop.f32.mrf.mxu0
        %981 = vmatprep.mubr.f32.mxu0 0.0
        %982 = vmatmul.mubr.f32.gmra.mxu0 %v688
        %v983 = vpop.f32.mrf.mxu0
        %v984 = vadd.f32 0.0, %v983
        %v985 = vpop.f32.mrf.mxu0
        %986 = vmatprep.mubr.f32.mxu0 0.0
        %987 = vmatmul.mubr.f32.gmra.mxu0 %v691
        %v988 = vpop.f32.mrf.mxu0
        %v989 = vadd.f32 0.0, %v988
        %v990 = vpop.f32.mrf.mxu0
        %991 = vmatprep.mubr.f32.mxu0 0.0
        %992 = vmatmul.mubr.f32.gmra.mxu0 %v694
        %v993 = vpop.f32.mrf.mxu0
        %v994 = vadd.f32 0.0, %v993
        %v995 = vpop.f32.mrf.mxu0
        %996 = vmatprep.mubr.f32.mxu0 0.0
        %997 = vmatmul.mubr.f32.gmra.mxu0 %v697
        %v998 = vpop.f32.mrf.mxu0
        %v999 = vadd.f32 0.0, %v998
        %v1000 = vpop.f32.mrf.mxu0
        %1001 = vmatprep.mubr.f32.mxu0 0.0
        %1002 = vmatmul.mubr.f32.gmra.mxu0 %v700
        %v1003 = vpop.f32.mrf.mxu0
        %v1004 = vadd.f32 0.0, %v1003
        %v1005 = vpop.f32.mrf.mxu0
        %1006 = vmatprep.mubr.f32.mxu0 0.0
        %1007 = vmatmul.mubr.f32.gmra.mxu0 %v703
        %v1008 = vpop.f32.mrf.mxu0
        %v1009 = vadd.f32 0.0, %v1008
        %v1010 = vpop.f32.mrf.mxu0
        %1011 = vmatprep.mubr.f32.mxu0 0.0
        %1012 = vmatmul.mubr.f32.gmra.mxu0 %v706
        %v1013 = vpop.f32.mrf.mxu0
        %v1014 = vadd.f32 0.0, %v1013
        %v1015 = vpop.f32.mrf.mxu0
        %1016 = vmatprep.mubr.f32.mxu0 0.0
        %1017 = vmatmul.mubr.f32.gmra.mxu0 %v709
        %v1018 = vpop.f32.mrf.mxu0
        %v1019 = vadd.f32 0.0, %v1018
        %v1020 = vpop.f32.mrf.mxu0
        %1021 = vmatprep.mubr.f32.mxu0 0.0
        %1022 = vmatmul.mubr.f32.gmra.mxu0 %v712
        %v1023 = vpop.f32.mrf.mxu0
        %v1024 = vadd.f32 0.0, %v1023
        %v1025 = vpop.f32.mrf.mxu0
        %1026 = vmatprep.mubr.f32.mxu0 0.0
        %1027 = vmatmul.mubr.f32.gmra.mxu0 %v715
        %v1028 = vpop.f32.mrf.mxu0
        %v1029 = vadd.f32 0.0, %v1028
        %v1030 = vpop.f32.mrf.mxu0
        %1031 = vmatprep.mubr.f32.mxu0 0.0
        %1032 = vmatmul.mubr.f32.gmra.mxu0 %v718
        %v1033 = vpop.f32.mrf.mxu0
        %v1034 = vadd.f32 0.0, %v1033
        %v1035 = vpop.f32.mrf.mxu0
        %1036 = vmatprep.mubr.f32.mxu0 0.0
        %1037 = vmatmul.mubr.f32.gmra.mxu0 %v721
        %v1038 = vpop.f32.mrf.mxu0
        %v1039 = vadd.f32 0.0, %v1038
        %v1040 = vpop.f32.mrf.mxu0
        %1041 = vmatprep.mubr.f32.mxu0 0.0
        %1042 = vmatmul.mubr.f32.gmra.mxu0 %v724
        %v1043 = vpop.f32.mrf.mxu0
        %v1044 = vadd.f32 0.0, %v1043
        %v1045 = vpop.f32.mrf.mxu0
        %1046 = vmatprep.mubr.f32.mxu0 0.0
        %1047 = vmatmul.mubr.f32.gmra.mxu0 %v727
        %v1048 = vpop.f32.mrf.mxu0
        %v1049 = vadd.f32 0.0, %v1048
        %v1050 = vpop.f32.mrf.mxu0
        %1051 = vmatprep.mubr.f32.mxu0 0.0
        %1052 = vmatmul.mubr.f32.gmra.mxu0 %v730
        %v1053 = vpop.f32.mrf.mxu0
        %v1054 = vadd.f32 0.0, %v1053
        %v1055 = vpop.f32.mrf.mxu0
        %1056 = vmatprep.mubr.f32.mxu0 0.0
        %1057 = vmatmul.mubr.f32.gmra.mxu0 %v733
        %v1058 = vpop.f32.mrf.mxu0
        %v1059 = vadd.f32 0.0, %v1058
        %v1060 = vpop.f32.mrf.mxu0
        %1061 = vmatprep.mubr.f32.mxu0 0.0
        %1062 = vmatmul.mubr.f32.gmra.mxu0 %v736
        %v1063 = vpop.f32.mrf.mxu0
        %v1064 = vadd.f32 0.0, %v1063
        %v1065 = vpop.f32.mrf.mxu0
        %1066 = vmatprep.mubr.f32.mxu0 0.0
        %1067 = vmatmul.mubr.f32.gmra.mxu0 %v739
        %v1068 = vpop.f32.mrf.mxu0
        %v1069 = vadd.f32 0.0, %v1068
        %v1070 = vpop.f32.mrf.mxu0
        %1071 = vmatprep.mubr.f32.mxu0 0.0
        %1072 = vmatmul.mubr.f32.gmra.mxu0 %v742
        %v1073 = vpop.f32.mrf.mxu0
        %v1074 = vadd.f32 0.0, %v1073
        %v1075 = vpop.f32.mrf.mxu0
        %1076 = vmatprep.mubr.f32.mxu0 0.0
        %1077 = vmatmul.mubr.f32.gmra.mxu0 %v745
        %v1078 = vpop.f32.mrf.mxu0
        %v1079 = vadd.f32 0.0, %v1078
        %v1080 = vpop.f32.mrf.mxu0
        %1081 = vmatprep.mubr.f32.mxu0 0.0
        %1082 = vmatmul.mubr.f32.gmra.mxu0 %v748
        %v1083 = vpop.f32.mrf.mxu0
        %v1084 = vadd.f32 0.0, %v1083
        %v1085 = vpop.f32.mrf.mxu0
        %1086 = vmatprep.mubr.f32.mxu0 0.0
        %1087 = vmatmul.mubr.f32.gmra.mxu0 %v751
        %v1088 = vpop.f32.mrf.mxu0
        %v1089 = vadd.f32 0.0, %v1088
        %v1090 = vpop.f32.mrf.mxu0
        %1091 = vmatprep.mubr.f32.mxu0 0.0
        %1092 = vmatmul.mubr.f32.gmra.mxu0 %v754
        %v1093 = vpop.f32.mrf.mxu0
        %v1094 = vadd.f32 0.0, %v1093
        %v1095 = vpop.f32.mrf.mxu0
        %1096 = vmatprep.mubr.f32.mxu0 0.0
        %1097 = vmatmul.mubr.f32.gmra.mxu0 %v757
        %v1098 = vpop.f32.mrf.mxu0
        %v1099 = vadd.f32 0.0, %v1098
        %v1100 = vpop.f32.mrf.mxu0
        %1101 = vmatprep.mubr.f32.mxu0 0.0
        %1102 = vmatmul.mubr.f32.gmra.mxu0 %v760
        %v1103 = vpop.f32.mrf.mxu0
        %v1104 = vadd.f32 0.0, %v1103
        %v1105 = vpop.f32.mrf.mxu0
        %1106 = vmatprep.mubr.f32.mxu0 0.0
        %1107 = vmatmul.mubr.f32.gmra.mxu0 %v763
        %v1108 = vpop.f32.mrf.mxu0
        %v1109 = vadd.f32 0.0, %v1108
        %v1110 = vpop.f32.mrf.mxu0
        %1111 = vmatprep.mubr.f32.mxu0 0.0
        %1112 = vmatmul.mubr.f32.gmra.mxu0 %v766
        %v1113 = vpop.f32.mrf.mxu0
        %v1114 = vadd.f32 0.0, %v1113
        %v1115 = vpop.f32.mrf.mxu0
        %1116 = vmatprep.mubr.f32.mxu0 0.0
        %1117 = vmatmul.mubr.f32.gmra.mxu0 %v769
        %v1118 = vpop.f32.mrf.mxu0
        %v1119 = vadd.f32 0.0, %v1118
        %v1120 = vpop.f32.mrf.mxu0
        %1121 = vmatprep.mubr.f32.mxu0 0.0
        %1122 = vmatmul.mubr.f32.gmra.mxu0 %v772
        %v1123 = vpop.f32.mrf.mxu0
        %v1124 = vadd.f32 0.0, %v1123
        %v1125 = vpop.f32.mrf.mxu0
        %1126 = vmatprep.mubr.f32.mxu0 0.0
        %1127 = vmatmul.mubr.f32.gmra.mxu0 %v775
        %v1128 = vpop.f32.mrf.mxu0
        %v1129 = vadd.f32 0.0, %v1128
        %v1130 = vpop.f32.mrf.mxu0
        %1131 = vmatprep.mubr.f32.mxu0 0.0
        %1132 = vmatmul.mubr.f32.gmra.mxu0 %v778
        %v1133 = vpop.f32.mrf.mxu0
        %v1134 = vadd.f32 0.0, %v1133
        %v1135 = vpop.f32.mrf.mxu0
        %1136 = vmatprep.mubr.f32.mxu0 0.0
        %1137 = vmatmul.mubr.f32.gmra.mxu0 %v781
        %v1138 = vpop.f32.mrf.mxu0
        %v1139 = vadd.f32 0.0, %v1138
        %v1140 = vpop.f32.mrf.mxu0
        %1141 = vmatprep.mubr.f32.mxu0 0.0
        %1142 = vmatmul.mubr.f32.gmra.mxu0 %v784
        %v1143 = vpop.f32.mrf.mxu0
        %v1144 = vadd.f32 0.0, %v1143
        %v1145 = vpop.f32.mrf.mxu0
        %1146 = vmatprep.mubr.f32.mxu0 0.0
        %1147 = vmatmul.mubr.f32.gmra.mxu0 %v787
        %v1148 = vpop.f32.mrf.mxu0
        %v1149 = vadd.f32 0.0, %v1148
        %v1150 = vpop.f32.mrf.mxu0
        %1151 = vmatprep.mubr.f32.mxu0 0.0
        %1152 = vmatmul.mubr.f32.gmra.mxu0 %v790
        %v1153 = vpop.f32.mrf.mxu0
        %v1154 = vadd.f32 0.0, %v1153
        %v1155 = vpop.f32.mrf.mxu0
        %1156 = vmatprep.mubr.f32.mxu0 0.0
        %1157 = vmatmul.mubr.f32.gmra.mxu0 %v793
        %v1158 = vpop.f32.mrf.mxu0
        %v1159 = vadd.f32 0.0, %v1158
        %v1160 = vpop.f32.mrf.mxu0
        %1161 = vmatprep.mubr.f32.mxu0 0.0
        %1162 = vmatmul.mubr.f32.gmra.mxu0 %v796
        %v1163 = vpop.f32.mrf.mxu0
        %v1164 = vadd.f32 0.0, %v1163
        %v1165 = vpop.f32.mrf.mxu0
        %1166 = vmatprep.mubr.f32.mxu0 0.0
        %1167 = vmatmul.mubr.f32.gmra.mxu0 %v799
        %v1168 = vpop.f32.mrf.mxu0
        %v1169 = vadd.f32 0.0, %v1168
        %v1170 = vpop.f32.mrf.mxu0
        %1171 = vmatprep.mubr.f32.mxu0 0.0
        %1172 = vmatmul.mubr.f32.gmra.mxu0 %v802
        %v1173 = vpop.f32.mrf.mxu0
        %v1174 = vadd.f32 0.0, %v1173
        %v1175 = vpop.f32.mrf.mxu0
        %1176 = vmatprep.mubr.f32.mxu0 0.0
        %1177 = vmatmul.mubr.f32.gmra.mxu0 %v805
        %v1178 = vpop.f32.mrf.mxu0
        %v1179 = vadd.f32 0.0, %v1178
        %v1180 = vpop.f32.mrf.mxu0
        %1181 = vmatprep.mubr.f32.mxu0 0.0
        %1182 = vmatmul.mubr.f32.gmra.mxu0 %v808
        %v1183 = vpop.f32.mrf.mxu0
        %v1184 = vadd.f32 0.0, %v1183
        %v1185 = vpop.f32.mrf.mxu0
        %1186 = vmatprep.mubr.f32.mxu0 0.0
        %1187 = vmatmul.mubr.f32.gmra.mxu0 %v811
        %v1188 = vpop.f32.mrf.mxu0
        %v1189 = vadd.f32 0.0, %v1188
        %v1190 = vpop.f32.mrf.mxu0
        %1191 = vmatprep.mubr.f32.mxu0 0.0
        %1192 = vmatmul.mubr.f32.gmra.mxu0 %v814
        %v1193 = vpop.f32.mrf.mxu0
        %v1194 = vadd.f32 0.0, %v1193
        %v1195 = vpop.f32.mrf.mxu0
        %1196 = vmatprep.mubr.f32.mxu0 0.0
        %1197 = vmatmul.mubr.f32.gmra.mxu0 %v817
        %v1198 = vpop.f32.mrf.mxu0
        %v1199 = vadd.f32 0.0, %v1198
        %v1200 = vpop.f32.mrf.mxu0
        %1201 = vmatprep.mubr.f32.mxu0 0.0
        %1202 = vmatmul.mubr.f32.gmra.mxu0 %v820
        %v1203 = vpop.f32.mrf.mxu0
        %v1204 = vadd.f32 0.0, %v1203
        %v1205 = vpop.f32.mrf.mxu0
        %1206 = vdwg.mxu0
        %vm1207 = vcmask 31744
        %1208 = vst.msk [vmem:[%s349] sm:$0xff] %vm1207, %v889
        %1209 = vst.msk [vmem:[%s349 + $0x8] sm:$0xff] %vm1207, %v894
        %1210 = vst.msk [vmem:[%s349 + $0x10] sm:$0xff] %vm1207, %v899
        %1211 = vst.msk [vmem:[%s349 + $0x18] sm:$0xff] %vm1207, %v904
        %1212 = vst.msk [vmem:[%s349 + $0x20] sm:$0xff] %vm1207, %v909
        %1213 = vst.msk [vmem:[%s349 + $0x28] sm:$0xff] %vm1207, %v914
        %1214 = vst.msk [vmem:[%s349 + $0x30] sm:$0xff] %vm1207, %v919
        %1215 = vst.msk [vmem:[%s349 + $0x38] sm:$0xff] %vm1207, %v924
        %1216 = vst.msk [vmem:[%s349 + $0x40] sm:$0xff] %vm1207, %v929
        %1217 = vst.msk [vmem:[%s349 + $0x48] sm:$0xff] %vm1207, %v934
        %1218 = vst.msk [vmem:[%s349 + $0x50] sm:$0xff] %vm1207, %v939
        %1219 = vst.msk [vmem:[%s349 + $0x58] sm:$0xff] %vm1207, %v944
        %1220 = vst.msk [vmem:[%s349 + $0x60] sm:$0xff] %vm1207, %v949
        %1221 = vst.msk [vmem:[%s349 + $0x68] sm:$0xff] %vm1207, %v954
        %1222 = vst.msk [vmem:[%s349 + $0x70] sm:$0xff] %vm1207, %v959
        %1223 = vst.msk [vmem:[%s349 + $0x78] sm:$0xff] %vm1207, %v964
        %1224 = vst.msk [vmem:[%s349 + $0x80] sm:$0xff] %vm1207, %v969
        %1225 = vst.msk [vmem:[%s349 + $0x88] sm:$0xff] %vm1207, %v974
        %1226 = vst.msk [vmem:[%s349 + $0x90] sm:$0xff] %vm1207, %v979
        %1227 = vst.msk [vmem:[%s349 + $0x98] sm:$0xff] %vm1207, %v984
        %1228 = vst.msk [vmem:[%s349 + $0xa0] sm:$0xff] %vm1207, %v989
        %1229 = vst.msk [vmem:[%s349 + $0xa8] sm:$0xff] %vm1207, %v994
        %1230 = vst.msk [vmem:[%s349 + $0xb0] sm:$0xff] %vm1207, %v999
        %1231 = vst.msk [vmem:[%s349 + $0xb8] sm:$0xff] %vm1207, %v1004
        %1232 = vst.msk [vmem:[%s349 + $0xc0] sm:$0xff] %vm1207, %v1009
        %1233 = vst.msk [vmem:[%s349 + $0xc8] sm:$0xff] %vm1207, %v1014
        %1234 = vst.msk [vmem:[%s349 + $0xd0] sm:$0xff] %vm1207, %v1019
        %1235 = vst.msk [vmem:[%s349 + $0xd8] sm:$0xff] %vm1207, %v1024
        %1236 = vst.msk [vmem:[%s349 + $0xe0] sm:$0xff] %vm1207, %v1029
        %1237 = vst.msk [vmem:[%s349 + $0xe8] sm:$0xff] %vm1207, %v1034
        %1238 = vst.msk [vmem:[%s349 + $0xf0] sm:$0xff] %vm1207, %v1039
        %1239 = vst.msk [vmem:[%s349 + $0xf8] sm:$0xff] %vm1207, %v1044
        %1240 = vst.msk [vmem:[%s349 + $0x100] sm:$0xff] %vm1207, %v1049
        %1241 = vst.msk [vmem:[%s349 + $0x108] sm:$0xff] %vm1207, %v1054
        %1242 = vst.msk [vmem:[%s349 + $0x110] sm:$0xff] %vm1207, %v1059
        %1243 = vst.msk [vmem:[%s349 + $0x118] sm:$0xff] %vm1207, %v1064
        %1244 = vst.msk [vmem:[%s349 + $0x120] sm:$0xff] %vm1207, %v1069
        %1245 = vst.msk [vmem:[%s349 + $0x128] sm:$0xff] %vm1207, %v1074
        %1246 = vst.msk [vmem:[%s349 + $0x130] sm:$0xff] %vm1207, %v1079
        %1247 = vst.msk [vmem:[%s349 + $0x138] sm:$0xff] %vm1207, %v1084
        %1248 = vst.msk [vmem:[%s349 + $0x140] sm:$0xff] %vm1207, %v1089
        %1249 = vst.msk [vmem:[%s349 + $0x148] sm:$0xff] %vm1207, %v1094
        %1250 = vst.msk [vmem:[%s349 + $0x150] sm:$0xff] %vm1207, %v1099
        %1251 = vst.msk [vmem:[%s349 + $0x158] sm:$0xff] %vm1207, %v1104
        %1252 = vst.msk [vmem:[%s349 + $0x160] sm:$0xff] %vm1207, %v1109
        %1253 = vst.msk [vmem:[%s349 + $0x168] sm:$0xff] %vm1207, %v1114
        %1254 = vst.msk [vmem:[%s349 + $0x170] sm:$0xff] %vm1207, %v1119
        %1255 = vst.msk [vmem:[%s349 + $0x178] sm:$0xff] %vm1207, %v1124
        %1256 = vst.msk [vmem:[%s349 + $0x180] sm:$0xff] %vm1207, %v1129
        %1257 = vst.msk [vmem:[%s349 + $0x188] sm:$0xff] %vm1207, %v1134
        %1258 = vst.msk [vmem:[%s349 + $0x190] sm:$0xff] %vm1207, %v1139
        %1259 = vst.msk [vmem:[%s349 + $0x198] sm:$0xff] %vm1207, %v1144
        %1260 = vst.msk [vmem:[%s349 + $0x1a0] sm:$0xff] %vm1207, %v1149
        %1261 = vst.msk [vmem:[%s349 + $0x1a8] sm:$0xff] %vm1207, %v1154
        %1262 = vst.msk [vmem:[%s349 + $0x1b0] sm:$0xff] %vm1207, %v1159
        %1263 = vst.msk [vmem:[%s349 + $0x1b8] sm:$0xff] %vm1207, %v1164
        %1264 = vst.msk [vmem:[%s349 + $0x1c0] sm:$0xff] %vm1207, %v1169
        %1265 = vst.msk [vmem:[%s349 + $0x1c8] sm:$0xff] %vm1207, %v1174
        %1266 = vst.msk [vmem:[%s349 + $0x1d0] sm:$0xff] %vm1207, %v1179
        %1267 = vst.msk [vmem:[%s349 + $0x1d8] sm:$0xff] %vm1207, %v1184
        %1268 = vst.msk [vmem:[%s349 + $0x1e0] sm:$0xff] %vm1207, %v1189
        %1269 = vst.msk [vmem:[%s349 + $0x1e8] sm:$0xff] %vm1207, %v1194
        %1270 = vst.msk [vmem:[%s349 + $0x1f0] sm:$0xff] %vm1207, %v1199
        %1271 = vst.msk [vmem:[%s349 + $0x1f8] sm:$0xff] %vm1207, %v1204
        %v1272 = vld [vmem:[%s2] sm:$0x1]
        %v1274 = vlaneseq
        %v1275 = vshrl.u32 %v1274, 7
        %v1276 = vsub.s32 0, %v1275
        %v1277 = vrot.slane %v1272, %v1276
        %v1279 = vmul.f32 %v357, %v1277
        %v1280 = vmul.f32 %v358, %v1277
        %v1281 = vmul.f32 %v359, %v1277
        %v1282 = vmul.f32 %v360, %v1277
        %v1283 = vmul.f32 %v361, %v1277
        %v1284 = vmul.f32 %v362, %v1277
        %v1285 = vmul.f32 %v363, %v1277
        %v1286 = vmul.f32 %v364, %v1277
        %v1287 = vmul.f32 %v365, %v1277
        %v1288 = vmul.f32 %v366, %v1277
        %v1289 = vmul.f32 %v367, %v1277
        %v1290 = vmul.f32 %v368, %v1277
        %v1291 = vmul.f32 %v369, %v1277
        %v1292 = vmul.f32 %v370, %v1277
        %v1293 = vmul.f32 %v371, %v1277
        %v1294 = vmul.f32 %v372, %v1277
        %v1295 = vmul.f32 %v373, %v1277
        %v1296 = vmul.f32 %v374, %v1277
        %v1297 = vmul.f32 %v375, %v1277
        %v1298 = vmul.f32 %v376, %v1277
        %v1299 = vmul.f32 %v377, %v1277
        %v1300 = vmul.f32 %v378, %v1277
        %v1301 = vmul.f32 %v379, %v1277
        %v1302 = vmul.f32 %v380, %v1277
        %v1303 = vmul.f32 %v381, %v1277
        %v1304 = vmul.f32 %v382, %v1277
        %v1305 = vmul.f32 %v383, %v1277
        %v1306 = vmul.f32 %v384, %v1277
        %v1307 = vmul.f32 %v385, %v1277
        %v1308 = vmul.f32 %v386, %v1277
        %v1309 = vmul.f32 %v387, %v1277
        %v1310 = vmul.f32 %v388, %v1277
        %v1311 = vmul.f32 %v389, %v1277
        %v1312 = vmul.f32 %v390, %v1277
        %v1313 = vmul.f32 %v391, %v1277
        %v1314 = vmul.f32 %v392, %v1277
        %v1315 = vmul.f32 %v393, %v1277
        %v1316 = vmul.f32 %v394, %v1277
        %v1317 = vmul.f32 %v395, %v1277
        %v1318 = vmul.f32 %v396, %v1277
        %v1319 = vmul.f32 %v397, %v1277
        %v1320 = vmul.f32 %v398, %v1277
        %v1321 = vmul.f32 %v399, %v1277
        %v1322 = vmul.f32 %v400, %v1277
        %v1323 = vmul.f32 %v401, %v1277
        %v1324 = vmul.f32 %v402, %v1277
        %v1325 = vmul.f32 %v403, %v1277
        %v1326 = vmul.f32 %v404, %v1277
        %v1327 = vmul.f32 %v405, %v1277
        %v1328 = vmul.f32 %v406, %v1277
        %v1329 = vmul.f32 %v407, %v1277
        %v1330 = vmul.f32 %v408, %v1277
        %v1331 = vmul.f32 %v409, %v1277
        %v1332 = vmul.f32 %v410, %v1277
        %v1333 = vmul.f32 %v411, %v1277
        %v1334 = vmul.f32 %v412, %v1277
        %v1335 = vmul.f32 %v413, %v1277
        %v1336 = vmul.f32 %v414, %v1277
        %v1337 = vmul.f32 %v415, %v1277
        %v1338 = vmul.f32 %v416, %v1277
        %v1339 = vmul.f32 %v417, %v1277
        %v1340 = vmul.f32 %v418, %v1277
        %v1341 = vmul.f32 %v419, %v1277
        %v1342 = vmul.f32 %v420, %v1277
        %v1343 = vld [vmem:[%s3] sm:$0x1]
        %v1345 = vlaneseq
        %v1346 = vshrl.u32 %v1345, 7
        %v1347 = vsub.s32 0, %v1346
        %v1348 = vrot.slane %v1343, %v1347
        %v1350 = vadd.f32 %v1279, %v1348
        %v1351 = vadd.f32 %v1280, %v1348
        %v1352 = vadd.f32 %v1281, %v1348
        %v1353 = vadd.f32 %v1282, %v1348
        %v1354 = vadd.f32 %v1283, %v1348
        %v1355 = vadd.f32 %v1284, %v1348
        %v1356 = vadd.f32 %v1285, %v1348
        %v1357 = vadd.f32 %v1286, %v1348
        %v1358 = vadd.f32 %v1287, %v1348
        %v1359 = vadd.f32 %v1288, %v1348
        %v1360 = vadd.f32 %v1289, %v1348
        %v1361 = vadd.f32 %v1290, %v1348
        %v1362 = vadd.f32 %v1291, %v1348
        %v1363 = vadd.f32 %v1292, %v1348
        %v1364 = vadd.f32 %v1293, %v1348
        %v1365 = vadd.f32 %v1294, %v1348
        %v1366 = vadd.f32 %v1295, %v1348
        %v1367 = vadd.f32 %v1296, %v1348
        %v1368 = vadd.f32 %v1297, %v1348
        %v1369 = vadd.f32 %v1298, %v1348
        %v1370 = vadd.f32 %v1299, %v1348
        %v1371 = vadd.f32 %v1300, %v1348
        %v1372 = vadd.f32 %v1301, %v1348
        %v1373 = vadd.f32 %v1302, %v1348
        %v1374 = vadd.f32 %v1303, %v1348
        %v1375 = vadd.f32 %v1304, %v1348
        %v1376 = vadd.f32 %v1305, %v1348
        %v1377 = vadd.f32 %v1306, %v1348
        %v1378 = vadd.f32 %v1307, %v1348
        %v1379 = vadd.f32 %v1308, %v1348
        %v1380 = vadd.f32 %v1309, %v1348
        %v1381 = vadd.f32 %v1310, %v1348
        %v1382 = vadd.f32 %v1311, %v1348
        %v1383 = vadd.f32 %v1312, %v1348
        %v1384 = vadd.f32 %v1313, %v1348
        %v1385 = vadd.f32 %v1314, %v1348
        %v1386 = vadd.f32 %v1315, %v1348
        %v1387 = vadd.f32 %v1316, %v1348
        %v1388 = vadd.f32 %v1317, %v1348
        %v1389 = vadd.f32 %v1318, %v1348
        %v1390 = vadd.f32 %v1319, %v1348
        %v1391 = vadd.f32 %v1320, %v1348
        %v1392 = vadd.f32 %v1321, %v1348
        %v1393 = vadd.f32 %v1322, %v1348
        %v1394 = vadd.f32 %v1323, %v1348
        %v1395 = vadd.f32 %v1324, %v1348
        %v1396 = vadd.f32 %v1325, %v1348
        %v1397 = vadd.f32 %v1326, %v1348
        %v1398 = vadd.f32 %v1327, %v1348
        %v1399 = vadd.f32 %v1328, %v1348
        %v1400 = vadd.f32 %v1329, %v1348
        %v1401 = vadd.f32 %v1330, %v1348
        %v1402 = vadd.f32 %v1331, %v1348
        %v1403 = vadd.f32 %v1332, %v1348
        %v1404 = vadd.f32 %v1333, %v1348
        %v1405 = vadd.f32 %v1334, %v1348
        %v1406 = vadd.f32 %v1335, %v1348
        %v1407 = vadd.f32 %v1336, %v1348
        %v1408 = vadd.f32 %v1337, %v1348
        %v1409 = vadd.f32 %v1338, %v1348
        %v1410 = vadd.f32 %v1339, %v1348
        %v1411 = vadd.f32 %v1340, %v1348
        %v1412 = vadd.f32 %v1341, %v1348
        %v1413 = vadd.f32 %v1342, %v1348
        %v1414 = vmax.f32 %v1350, 0.0
        %v1415 = vmax.f32 %v1351, 0.0
        %v1416 = vmax.f32 %v1352, 0.0
        %v1417 = vmax.f32 %v1353, 0.0
        %v1418 = vmax.f32 %v1354, 0.0
        %v1419 = vmax.f32 %v1355, 0.0
        %v1420 = vmax.f32 %v1356, 0.0
        %v1421 = vmax.f32 %v1357, 0.0
        %v1422 = vmax.f32 %v1358, 0.0
        %v1423 = vmax.f32 %v1359, 0.0
        %v1424 = vmax.f32 %v1360, 0.0
        %v1425 = vmax.f32 %v1361, 0.0
        %v1426 = vmax.f32 %v1362, 0.0
        %v1427 = vmax.f32 %v1363, 0.0
        %v1428 = vmax.f32 %v1364, 0.0
        %v1429 = vmax.f32 %v1365, 0.0
        %v1430 = vmax.f32 %v1366, 0.0
        %v1431 = vmax.f32 %v1367, 0.0
        %v1432 = vmax.f32 %v1368, 0.0
        %v1433 = vmax.f32 %v1369, 0.0
        %v1434 = vmax.f32 %v1370, 0.0
        %v1435 = vmax.f32 %v1371, 0.0
        %v1436 = vmax.f32 %v1372, 0.0
        %v1437 = vmax.f32 %v1373, 0.0
        %v1438 = vmax.f32 %v1374, 0.0
        %v1439 = vmax.f32 %v1375, 0.0
        %v1440 = vmax.f32 %v1376, 0.0
        %v1441 = vmax.f32 %v1377, 0.0
        %v1442 = vmax.f32 %v1378, 0.0
        %v1443 = vmax.f32 %v1379, 0.0
        %v1444 = vmax.f32 %v1380, 0.0
        %v1445 = vmax.f32 %v1381, 0.0
        %v1446 = vmax.f32 %v1382, 0.0
        %v1447 = vmax.f32 %v1383, 0.0
        %v1448 = vmax.f32 %v1384, 0.0
        %v1449 = vmax.f32 %v1385, 0.0
        %v1450 = vmax.f32 %v1386, 0.0
        %v1451 = vmax.f32 %v1387, 0.0
        %v1452 = vmax.f32 %v1388, 0.0
        %v1453 = vmax.f32 %v1389, 0.0
        %v1454 = vmax.f32 %v1390, 0.0
        %v1455 = vmax.f32 %v1391, 0.0
        %v1456 = vmax.f32 %v1392, 0.0
        %v1457 = vmax.f32 %v1393, 0.0
        %v1458 = vmax.f32 %v1394, 0.0
        %v1459 = vmax.f32 %v1395, 0.0
        %v1460 = vmax.f32 %v1396, 0.0
        %v1461 = vmax.f32 %v1397, 0.0
        %v1462 = vmax.f32 %v1398, 0.0
        %v1463 = vmax.f32 %v1399, 0.0
        %v1464 = vmax.f32 %v1400, 0.0
        %v1465 = vmax.f32 %v1401, 0.0
        %v1466 = vmax.f32 %v1402, 0.0
        %v1467 = vmax.f32 %v1403, 0.0
        %v1468 = vmax.f32 %v1404, 0.0
        %v1469 = vmax.f32 %v1405, 0.0
        %v1470 = vmax.f32 %v1406, 0.0
        %v1471 = vmax.f32 %v1407, 0.0
        %v1472 = vmax.f32 %v1408, 0.0
        %v1473 = vmax.f32 %v1409, 0.0
        %v1474 = vmax.f32 %v1410, 0.0
        %v1475 = vmax.f32 %v1411, 0.0
        %v1476 = vmax.f32 %v1412, 0.0
        %v1477 = vmax.f32 %v1413, 0.0
        %v1478 = vld [vmem:[#allocation4] sm:$0xff]
        %v1479 = vld [vmem:[#allocation4 + $0x8] sm:$0xff]
        %v1481 = vsel %vm629, %v1414, 0
        %v1484 = vsel %vm629, %v1415, 0
        %v1487 = vsel %vm629, %v1416, 0
        %v1490 = vsel %vm629, %v1417, 0
        %v1493 = vsel %vm629, %v1418, 0
        %v1496 = vsel %vm629, %v1419, 0
        %v1499 = vsel %vm629, %v1420, 0
        %v1502 = vsel %vm629, %v1421, 0
        %v1505 = vsel %vm629, %v1422, 0
        %v1508 = vsel %vm629, %v1423, 0
        %v1511 = vsel %vm629, %v1424, 0
        %v1514 = vsel %vm629, %v1425, 0
        %v1517 = vsel %vm629, %v1426, 0
        %v1520 = vsel %vm629, %v1427, 0
        %v1523 = vsel %vm629, %v1428, 0
        %v1526 = vsel %vm629, %v1429, 0
        %v1529 = vsel %vm629, %v1430, 0
        %v1532 = vsel %vm629, %v1431, 0
        %v1535 = vsel %vm629, %v1432, 0
        %v1538 = vsel %vm629, %v1433, 0
        %v1541 = vsel %vm629, %v1434, 0
        %v1544 = vsel %vm629, %v1435, 0
        %v1547 = vsel %vm629, %v1436, 0
        %v1550 = vsel %vm629, %v1437, 0
        %v1553 = vsel %vm629, %v1438, 0
        %v1556 = vsel %vm629, %v1439, 0
        %v1559 = vsel %vm629, %v1440, 0
        %v1562 = vsel %vm629, %v1441, 0
        %v1565 = vsel %vm629, %v1442, 0
        %v1568 = vsel %vm629, %v1443, 0
        %v1571 = vsel %vm629, %v1444, 0
        %v1574 = vsel %vm629, %v1445, 0
        %v1577 = vsel %vm629, %v1446, 0
        %v1580 = vsel %vm629, %v1447, 0
        %v1583 = vsel %vm629, %v1448, 0
        %v1586 = vsel %vm629, %v1449, 0
        %v1589 = vsel %vm629, %v1450, 0
        %v1592 = vsel %vm629, %v1451, 0
        %v1595 = vsel %vm629, %v1452, 0
        %v1598 = vsel %vm629, %v1453, 0
        %v1601 = vsel %vm629, %v1454, 0
        %v1604 = vsel %vm629, %v1455, 0
        %v1607 = vsel %vm629, %v1456, 0
        %v1610 = vsel %vm629, %v1457, 0
        %v1613 = vsel %vm629, %v1458, 0
        %v1616 = vsel %vm629, %v1459, 0
        %v1619 = vsel %vm629, %v1460, 0
        %v1622 = vsel %vm629, %v1461, 0
        %v1625 = vsel %vm629, %v1462, 0
        %v1628 = vsel %vm629, %v1463, 0
        %v1631 = vsel %vm629, %v1464, 0
        %v1634 = vsel %vm629, %v1465, 0
        %v1637 = vsel %vm629, %v1466, 0
        %v1640 = vsel %vm629, %v1467, 0
        %v1643 = vsel %vm629, %v1468, 0
        %v1646 = vsel %vm629, %v1469, 0
        %v1649 = vsel %vm629, %v1470, 0
        %v1652 = vsel %vm629, %v1471, 0
        %v1655 = vsel %vm629, %v1472, 0
        %v1658 = vsel %vm629, %v1473, 0
        %v1661 = vsel %vm629, %v1474, 0
        %v1664 = vsel %vm629, %v1475, 0
        %v1667 = vsel %vm629, %v1476, 0
        %v1670 = vsel %vm629, %v1477, 0
        %1672 = vmatprep.subr.mxu0 0.0
        %1673 = vmatpush1.msra.mxu0 0.0
        %1674 = vmatprep.subr.mxu0 0.0
        %1675 = vmatpush1.msra.mxu0 0.0
        %1676 = vmatprep.subr.mxu0 0.0
        %1677 = vmatpush1.msra.mxu0 0.0
        %1678 = vmatprep.subr.mxu0 0.0
        %1679 = vmatpush1.msra.mxu0 0.0
        %1680 = vmatprep.subr.mxu0 0.0
        %1681 = vmatpush1.msra.mxu0 0.0
        %1682 = vmatprep.subr.mxu0 0.0
        %1683 = vmatpush1.msra.mxu0 0.0
        %1684 = vmatprep.subr.mxu0 0.0
        %1685 = vmatpush1.msra.mxu0 0.0
        %1686 = vmatprep.subr.mxu0 0.0
        %1687 = vmatpush1.msra.mxu0 0.0
        %1688 = vmatprep.subr.mxu0 0.0
        %1689 = vmatpush1.msra.mxu0 0.0
        %1690 = vmatprep.subr.mxu0 0.0
        %1691 = vmatpush1.msra.mxu0 0.0
        %1692 = vmatprep.subr.mxu0 0.0
        %1693 = vmatpush1.msra.mxu0 0.0
        %1694 = vmatprep.subr.mxu0 0.0
        %1695 = vmatpush1.msra.mxu0 0.0
        %1696 = vmatprep.subr.mxu0 0.0
        %1697 = vmatpush1.msra.mxu0 0.0
        %1698 = vmatprep.subr.mxu0 0.0
        %1699 = vmatpush1.msra.mxu0 0.0
        %1700 = vmatprep.subr.mxu0 0.0
        %1701 = vmatpush1.msra.mxu0 %v1479
        %1702 = vmatprep.subr.mxu0 0.0
        %1703 = vmatpush1.msra.mxu0 %v1478
        %1704 = vmatprep.subr.mxu0 0.0
        %1705 = vmatpush2.msra.mxu0 0.0
        %1706 = vmatprep.subr.mxu0 0.0
        %1707 = vmatpush2.msra.mxu0 0.0
        %1708 = vmatprep.subr.mxu0 0.0
        %1709 = vmatpush2.msra.mxu0 0.0
        %1710 = vmatprep.subr.mxu0 0.0
        %1711 = vmatpush2.msra.mxu0 0.0
        %1712 = vmatprep.subr.mxu0 0.0
        %1713 = vmatpush2.msra.mxu0 0.0
        %1714 = vmatprep.subr.mxu0 0.0
        %1715 = vmatpush2.msra.mxu0 0.0
        %1716 = vmatprep.subr.mxu0 0.0
        %1717 = vmatpush2.msra.mxu0 0.0
        %1718 = vmatprep.subr.mxu0 0.0
        %1719 = vmatpush2.msra.mxu0 0.0
        %1720 = vmatprep.subr.mxu0 0.0
        %1721 = vmatpush2.msra.mxu0 0.0
        %1722 = vmatprep.subr.mxu0 0.0
        %1723 = vmatpush2.msra.mxu0 0.0
        %1724 = vmatprep.subr.mxu0 0.0
        %1725 = vmatpush2.msra.mxu0 0.0
        %1726 = vmatprep.subr.mxu0 0.0
        %1727 = vmatpush2.msra.mxu0 0.0
        %1728 = vmatprep.subr.mxu0 0.0
        %1729 = vmatpush2.msra.mxu0 0.0
        %1730 = vmatprep.subr.mxu0 0.0
        %1731 = vmatpush2.msra.mxu0 0.0
        %1732 = vmatprep.subr.mxu0 0.0
        %1733 = vmatpush2.msra.mxu0 0.0
        %1734 = vmatprep.subr.mxu0 0.0
        %1735 = vmatpush2.msra.mxu0 0.0
        %1736 = vmatprep.mubr.f32.mxu0 0.0
        %1737 = vmatmul.mubr.f32.gmra.mxu0 %v1481
        %v1738 = vpop.f32.mrf.mxu0
        %v1739 = vadd.f32 0.0, %v1738
        %v1740 = vpop.f32.mrf.mxu0
        %1741 = vmatprep.mubr.f32.mxu0 0.0
        %1742 = vmatmul.mubr.f32.gmra.mxu0 %v1484
        %v1743 = vpop.f32.mrf.mxu0
        %v1744 = vadd.f32 0.0, %v1743
        %v1745 = vpop.f32.mrf.mxu0
        %1746 = vmatprep.mubr.f32.mxu0 0.0
        %1747 = vmatmul.mubr.f32.gmra.mxu0 %v1487
        %v1748 = vpop.f32.mrf.mxu0
        %v1749 = vadd.f32 0.0, %v1748
        %v1750 = vpop.f32.mrf.mxu0
        %1751 = vmatprep.mubr.f32.mxu0 0.0
        %1752 = vmatmul.mubr.f32.gmra.mxu0 %v1490
        %v1753 = vpop.f32.mrf.mxu0
        %v1754 = vadd.f32 0.0, %v1753
        %v1755 = vpop.f32.mrf.mxu0
        %1756 = vmatprep.mubr.f32.mxu0 0.0
        %1757 = vmatmul.mubr.f32.gmra.mxu0 %v1493
        %v1758 = vpop.f32.mrf.mxu0
        %v1759 = vadd.f32 0.0, %v1758
        %v1760 = vpop.f32.mrf.mxu0
        %1761 = vmatprep.mubr.f32.mxu0 0.0
        %1762 = vmatmul.mubr.f32.gmra.mxu0 %v1496
        %v1763 = vpop.f32.mrf.mxu0
        %v1764 = vadd.f32 0.0, %v1763
        %v1765 = vpop.f32.mrf.mxu0
        %1766 = vmatprep.mubr.f32.mxu0 0.0
        %1767 = vmatmul.mubr.f32.gmra.mxu0 %v1499
        %v1768 = vpop.f32.mrf.mxu0
        %v1769 = vadd.f32 0.0, %v1768
        %v1770 = vpop.f32.mrf.mxu0
        %1771 = vmatprep.mubr.f32.mxu0 0.0
        %1772 = vmatmul.mubr.f32.gmra.mxu0 %v1502
        %v1773 = vpop.f32.mrf.mxu0
        %v1774 = vadd.f32 0.0, %v1773
        %v1775 = vpop.f32.mrf.mxu0
        %1776 = vmatprep.mubr.f32.mxu0 0.0
        %1777 = vmatmul.mubr.f32.gmra.mxu0 %v1505
        %v1778 = vpop.f32.mrf.mxu0
        %v1779 = vadd.f32 0.0, %v1778
        %v1780 = vpop.f32.mrf.mxu0
        %1781 = vmatprep.mubr.f32.mxu0 0.0
        %1782 = vmatmul.mubr.f32.gmra.mxu0 %v1508
        %v1783 = vpop.f32.mrf.mxu0
        %v1784 = vadd.f32 0.0, %v1783
        %v1785 = vpop.f32.mrf.mxu0
        %1786 = vmatprep.mubr.f32.mxu0 0.0
        %1787 = vmatmul.mubr.f32.gmra.mxu0 %v1511
        %v1788 = vpop.f32.mrf.mxu0
        %v1789 = vadd.f32 0.0, %v1788
        %v1790 = vpop.f32.mrf.mxu0
        %1791 = vmatprep.mubr.f32.mxu0 0.0
        %1792 = vmatmul.mubr.f32.gmra.mxu0 %v1514
        %v1793 = vpop.f32.mrf.mxu0
        %v1794 = vadd.f32 0.0, %v1793
        %v1795 = vpop.f32.mrf.mxu0
        %1796 = vmatprep.mubr.f32.mxu0 0.0
        %1797 = vmatmul.mubr.f32.gmra.mxu0 %v1517
        %v1798 = vpop.f32.mrf.mxu0
        %v1799 = vadd.f32 0.0, %v1798
        %v1800 = vpop.f32.mrf.mxu0
        %1801 = vmatprep.mubr.f32.mxu0 0.0
        %1802 = vmatmul.mubr.f32.gmra.mxu0 %v1520
        %v1803 = vpop.f32.mrf.mxu0
        %v1804 = vadd.f32 0.0, %v1803
        %v1805 = vpop.f32.mrf.mxu0
        %1806 = vmatprep.mubr.f32.mxu0 0.0
        %1807 = vmatmul.mubr.f32.gmra.mxu0 %v1523
        %v1808 = vpop.f32.mrf.mxu0
        %v1809 = vadd.f32 0.0, %v1808
        %v1810 = vpop.f32.mrf.mxu0
        %1811 = vmatprep.mubr.f32.mxu0 0.0
        %1812 = vmatmul.mubr.f32.gmra.mxu0 %v1526
        %v1813 = vpop.f32.mrf.mxu0
        %v1814 = vadd.f32 0.0, %v1813
        %v1815 = vpop.f32.mrf.mxu0
        %1816 = vmatprep.mubr.f32.mxu0 0.0
        %1817 = vmatmul.mubr.f32.gmra.mxu0 %v1529
        %v1818 = vpop.f32.mrf.mxu0
        %v1819 = vadd.f32 0.0, %v1818
        %v1820 = vpop.f32.mrf.mxu0
        %1821 = vmatprep.mubr.f32.mxu0 0.0
        %1822 = vmatmul.mubr.f32.gmra.mxu0 %v1532
        %v1823 = vpop.f32.mrf.mxu0
        %v1824 = vadd.f32 0.0, %v1823
        %v1825 = vpop.f32.mrf.mxu0
        %1826 = vmatprep.mubr.f32.mxu0 0.0
        %1827 = vmatmul.mubr.f32.gmra.mxu0 %v1535
        %v1828 = vpop.f32.mrf.mxu0
        %v1829 = vadd.f32 0.0, %v1828
        %v1830 = vpop.f32.mrf.mxu0
        %1831 = vmatprep.mubr.f32.mxu0 0.0
        %1832 = vmatmul.mubr.f32.gmra.mxu0 %v1538
        %v1833 = vpop.f32.mrf.mxu0
        %v1834 = vadd.f32 0.0, %v1833
        %v1835 = vpop.f32.mrf.mxu0
        %1836 = vmatprep.mubr.f32.mxu0 0.0
        %1837 = vmatmul.mubr.f32.gmra.mxu0 %v1541
        %v1838 = vpop.f32.mrf.mxu0
        %v1839 = vadd.f32 0.0, %v1838
        %v1840 = vpop.f32.mrf.mxu0
        %1841 = vmatprep.mubr.f32.mxu0 0.0
        %1842 = vmatmul.mubr.f32.gmra.mxu0 %v1544
        %v1843 = vpop.f32.mrf.mxu0
        %v1844 = vadd.f32 0.0, %v1843
        %v1845 = vpop.f32.mrf.mxu0
        %1846 = vmatprep.mubr.f32.mxu0 0.0
        %1847 = vmatmul.mubr.f32.gmra.mxu0 %v1547
        %v1848 = vpop.f32.mrf.mxu0
        %v1849 = vadd.f32 0.0, %v1848
        %v1850 = vpop.f32.mrf.mxu0
        %1851 = vmatprep.mubr.f32.mxu0 0.0
        %1852 = vmatmul.mubr.f32.gmra.mxu0 %v1550
        %v1853 = vpop.f32.mrf.mxu0
        %v1854 = vadd.f32 0.0, %v1853
        %v1855 = vpop.f32.mrf.mxu0
        %1856 = vmatprep.mubr.f32.mxu0 0.0
        %1857 = vmatmul.mubr.f32.gmra.mxu0 %v1553
        %v1858 = vpop.f32.mrf.mxu0
        %v1859 = vadd.f32 0.0, %v1858
        %v1860 = vpop.f32.mrf.mxu0
        %1861 = vmatprep.mubr.f32.mxu0 0.0
        %1862 = vmatmul.mubr.f32.gmra.mxu0 %v1556
        %v1863 = vpop.f32.mrf.mxu0
        %v1864 = vadd.f32 0.0, %v1863
        %v1865 = vpop.f32.mrf.mxu0
        %1866 = vmatprep.mubr.f32.mxu0 0.0
        %1867 = vmatmul.mubr.f32.gmra.mxu0 %v1559
        %v1868 = vpop.f32.mrf.mxu0
        %v1869 = vadd.f32 0.0, %v1868
        %v1870 = vpop.f32.mrf.mxu0
        %1871 = vmatprep.mubr.f32.mxu0 0.0
        %1872 = vmatmul.mubr.f32.gmra.mxu0 %v1562
        %v1873 = vpop.f32.mrf.mxu0
        %v1874 = vadd.f32 0.0, %v1873
        %v1875 = vpop.f32.mrf.mxu0
        %1876 = vmatprep.mubr.f32.mxu0 0.0
        %1877 = vmatmul.mubr.f32.gmra.mxu0 %v1565
        %v1878 = vpop.f32.mrf.mxu0
        %v1879 = vadd.f32 0.0, %v1878
        %v1880 = vpop.f32.mrf.mxu0
        %1881 = vmatprep.mubr.f32.mxu0 0.0
        %1882 = vmatmul.mubr.f32.gmra.mxu0 %v1568
        %v1883 = vpop.f32.mrf.mxu0
        %v1884 = vadd.f32 0.0, %v1883
        %v1885 = vpop.f32.mrf.mxu0
        %1886 = vmatprep.mubr.f32.mxu0 0.0
        %1887 = vmatmul.mubr.f32.gmra.mxu0 %v1571
        %v1888 = vpop.f32.mrf.mxu0
        %v1889 = vadd.f32 0.0, %v1888
        %v1890 = vpop.f32.mrf.mxu0
        %1891 = vmatprep.mubr.f32.mxu0 0.0
        %1892 = vmatmul.mubr.f32.gmra.mxu0 %v1574
        %v1893 = vpop.f32.mrf.mxu0
        %v1894 = vadd.f32 0.0, %v1893
        %v1895 = vpop.f32.mrf.mxu0
        %1896 = vmatprep.mubr.f32.mxu0 0.0
        %1897 = vmatmul.mubr.f32.gmra.mxu0 %v1577
        %v1898 = vpop.f32.mrf.mxu0
        %v1899 = vadd.f32 0.0, %v1898
        %v1900 = vpop.f32.mrf.mxu0
        %1901 = vmatprep.mubr.f32.mxu0 0.0
        %1902 = vmatmul.mubr.f32.gmra.mxu0 %v1580
        %v1903 = vpop.f32.mrf.mxu0
        %v1904 = vadd.f32 0.0, %v1903
        %v1905 = vpop.f32.mrf.mxu0
        %1906 = vmatprep.mubr.f32.mxu0 0.0
        %1907 = vmatmul.mubr.f32.gmra.mxu0 %v1583
        %v1908 = vpop.f32.mrf.mxu0
        %v1909 = vadd.f32 0.0, %v1908
        %v1910 = vpop.f32.mrf.mxu0
        %1911 = vmatprep.mubr.f32.mxu0 0.0
        %1912 = vmatmul.mubr.f32.gmra.mxu0 %v1586
        %v1913 = vpop.f32.mrf.mxu0
        %v1914 = vadd.f32 0.0, %v1913
        %v1915 = vpop.f32.mrf.mxu0
        %1916 = vmatprep.mubr.f32.mxu0 0.0
        %1917 = vmatmul.mubr.f32.gmra.mxu0 %v1589
        %v1918 = vpop.f32.mrf.mxu0
        %v1919 = vadd.f32 0.0, %v1918
        %v1920 = vpop.f32.mrf.mxu0
        %1921 = vmatprep.mubr.f32.mxu0 0.0
        %1922 = vmatmul.mubr.f32.gmra.mxu0 %v1592
        %v1923 = vpop.f32.mrf.mxu0
        %v1924 = vadd.f32 0.0, %v1923
        %v1925 = vpop.f32.mrf.mxu0
        %1926 = vmatprep.mubr.f32.mxu0 0.0
        %1927 = vmatmul.mubr.f32.gmra.mxu0 %v1595
        %v1928 = vpop.f32.mrf.mxu0
        %v1929 = vadd.f32 0.0, %v1928
        %v1930 = vpop.f32.mrf.mxu0
        %1931 = vmatprep.mubr.f32.mxu0 0.0
        %1932 = vmatmul.mubr.f32.gmra.mxu0 %v1598
        %v1933 = vpop.f32.mrf.mxu0
        %v1934 = vadd.f32 0.0, %v1933
        %v1935 = vpop.f32.mrf.mxu0
        %1936 = vmatprep.mubr.f32.mxu0 0.0
        %1937 = vmatmul.mubr.f32.gmra.mxu0 %v1601
        %v1938 = vpop.f32.mrf.mxu0
        %v1939 = vadd.f32 0.0, %v1938
        %v1940 = vpop.f32.mrf.mxu0
        %1941 = vmatprep.mubr.f32.mxu0 0.0
        %1942 = vmatmul.mubr.f32.gmra.mxu0 %v1604
        %v1943 = vpop.f32.mrf.mxu0
        %v1944 = vadd.f32 0.0, %v1943
        %v1945 = vpop.f32.mrf.mxu0
        %1946 = vmatprep.mubr.f32.mxu0 0.0
        %1947 = vmatmul.mubr.f32.gmra.mxu0 %v1607
        %v1948 = vpop.f32.mrf.mxu0
        %v1949 = vadd.f32 0.0, %v1948
        %v1950 = vpop.f32.mrf.mxu0
        %1951 = vmatprep.mubr.f32.mxu0 0.0
        %1952 = vmatmul.mubr.f32.gmra.mxu0 %v1610
        %v1953 = vpop.f32.mrf.mxu0
        %v1954 = vadd.f32 0.0, %v1953
        %v1955 = vpop.f32.mrf.mxu0
        %1956 = vmatprep.mubr.f32.mxu0 0.0
        %1957 = vmatmul.mubr.f32.gmra.mxu0 %v1613
        %v1958 = vpop.f32.mrf.mxu0
        %v1959 = vadd.f32 0.0, %v1958
        %v1960 = vpop.f32.mrf.mxu0
        %1961 = vmatprep.mubr.f32.mxu0 0.0
        %1962 = vmatmul.mubr.f32.gmra.mxu0 %v1616
        %v1963 = vpop.f32.mrf.mxu0
        %v1964 = vadd.f32 0.0, %v1963
        %v1965 = vpop.f32.mrf.mxu0
        %1966 = vmatprep.mubr.f32.mxu0 0.0
        %1967 = vmatmul.mubr.f32.gmra.mxu0 %v1619
        %v1968 = vpop.f32.mrf.mxu0
        %v1969 = vadd.f32 0.0, %v1968
        %v1970 = vpop.f32.mrf.mxu0
        %1971 = vmatprep.mubr.f32.mxu0 0.0
        %1972 = vmatmul.mubr.f32.gmra.mxu0 %v1622
        %v1973 = vpop.f32.mrf.mxu0
        %v1974 = vadd.f32 0.0, %v1973
        %v1975 = vpop.f32.mrf.mxu0
        %1976 = vmatprep.mubr.f32.mxu0 0.0
        %1977 = vmatmul.mubr.f32.gmra.mxu0 %v1625
        %v1978 = vpop.f32.mrf.mxu0
        %v1979 = vadd.f32 0.0, %v1978
        %v1980 = vpop.f32.mrf.mxu0
        %1981 = vmatprep.mubr.f32.mxu0 0.0
        %1982 = vmatmul.mubr.f32.gmra.mxu0 %v1628
        %v1983 = vpop.f32.mrf.mxu0
        %v1984 = vadd.f32 0.0, %v1983
        %v1985 = vpop.f32.mrf.mxu0
        %1986 = vmatprep.mubr.f32.mxu0 0.0
        %1987 = vmatmul.mubr.f32.gmra.mxu0 %v1631
        %v1988 = vpop.f32.mrf.mxu0
        %v1989 = vadd.f32 0.0, %v1988
        %v1990 = vpop.f32.mrf.mxu0
        %1991 = vmatprep.mubr.f32.mxu0 0.0
        %1992 = vmatmul.mubr.f32.gmra.mxu0 %v1634
        %v1993 = vpop.f32.mrf.mxu0
        %v1994 = vadd.f32 0.0, %v1993
        %v1995 = vpop.f32.mrf.mxu0
        %1996 = vmatprep.mubr.f32.mxu0 0.0
        %1997 = vmatmul.mubr.f32.gmra.mxu0 %v1637
        %v1998 = vpop.f32.mrf.mxu0
        %v1999 = vadd.f32 0.0, %v1998
        %v2000 = vpop.f32.mrf.mxu0
        %2001 = vmatprep.mubr.f32.mxu0 0.0
        %2002 = vmatmul.mubr.f32.gmra.mxu0 %v1640
        %v2003 = vpop.f32.mrf.mxu0
        %v2004 = vadd.f32 0.0, %v2003
        %v2005 = vpop.f32.mrf.mxu0
        %2006 = vmatprep.mubr.f32.mxu0 0.0
        %2007 = vmatmul.mubr.f32.gmra.mxu0 %v1643
        %v2008 = vpop.f32.mrf.mxu0
        %v2009 = vadd.f32 0.0, %v2008
        %v2010 = vpop.f32.mrf.mxu0
        %2011 = vmatprep.mubr.f32.mxu0 0.0
        %2012 = vmatmul.mubr.f32.gmra.mxu0 %v1646
        %v2013 = vpop.f32.mrf.mxu0
        %v2014 = vadd.f32 0.0, %v2013
        %v2015 = vpop.f32.mrf.mxu0
        %2016 = vmatprep.mubr.f32.mxu0 0.0
        %2017 = vmatmul.mubr.f32.gmra.mxu0 %v1649
        %v2018 = vpop.f32.mrf.mxu0
        %v2019 = vadd.f32 0.0, %v2018
        %v2020 = vpop.f32.mrf.mxu0
        %2021 = vmatprep.mubr.f32.mxu0 0.0
        %2022 = vmatmul.mubr.f32.gmra.mxu0 %v1652
        %v2023 = vpop.f32.mrf.mxu0
        %v2024 = vadd.f32 0.0, %v2023
        %v2025 = vpop.f32.mrf.mxu0
        %2026 = vmatprep.mubr.f32.mxu0 0.0
        %2027 = vmatmul.mubr.f32.gmra.mxu0 %v1655
        %v2028 = vpop.f32.mrf.mxu0
        %v2029 = vadd.f32 0.0, %v2028
        %v2030 = vpop.f32.mrf.mxu0
        %2031 = vmatprep.mubr.f32.mxu0 0.0
        %2032 = vmatmul.mubr.f32.gmra.mxu0 %v1658
        %v2033 = vpop.f32.mrf.mxu0
        %v2034 = vadd.f32 0.0, %v2033
        %v2035 = vpop.f32.mrf.mxu0
        %2036 = vmatprep.mubr.f32.mxu0 0.0
        %2037 = vmatmul.mubr.f32.gmra.mxu0 %v1661
        %v2038 = vpop.f32.mrf.mxu0
        %v2039 = vadd.f32 0.0, %v2038
        %v2040 = vpop.f32.mrf.mxu0
        %2041 = vmatprep.mubr.f32.mxu0 0.0
        %2042 = vmatmul.mubr.f32.gmra.mxu0 %v1664
        %v2043 = vpop.f32.mrf.mxu0
        %v2044 = vadd.f32 0.0, %v2043
        %v2045 = vpop.f32.mrf.mxu0
        %2046 = vmatprep.mubr.f32.mxu0 0.0
        %2047 = vmatmul.mubr.f32.gmra.mxu0 %v1667
        %v2048 = vpop.f32.mrf.mxu0
        %v2049 = vadd.f32 0.0, %v2048
        %v2050 = vpop.f32.mrf.mxu0
        %2051 = vmatprep.mubr.f32.mxu0 0.0
        %2052 = vmatmul.mubr.f32.gmra.mxu0 %v1670
        %v2053 = vpop.f32.mrf.mxu0
        %v2054 = vadd.f32 0.0, %v2053
        %v2055 = vpop.f32.mrf.mxu0
        %2056 = vdwg.mxu0
        %vm2057 = vcmask 261120
        %2058 = vst.msk [vmem:[%s355] sm:$0xff] %vm2057, %v1739
        %2059 = vst.msk [vmem:[%s355 + $0x8] sm:$0xff] %vm2057, %v1744
        %2060 = vst.msk [vmem:[%s355 + $0x10] sm:$0xff] %vm2057, %v1749
        %2061 = vst.msk [vmem:[%s355 + $0x18] sm:$0xff] %vm2057, %v1754
        %2062 = vst.msk [vmem:[%s355 + $0x20] sm:$0xff] %vm2057, %v1759
        %2063 = vst.msk [vmem:[%s355 + $0x28] sm:$0xff] %vm2057, %v1764
        %2064 = vst.msk [vmem:[%s355 + $0x30] sm:$0xff] %vm2057, %v1769
        %2065 = vst.msk [vmem:[%s355 + $0x38] sm:$0xff] %vm2057, %v1774
        %2066 = vst.msk [vmem:[%s355 + $0x40] sm:$0xff] %vm2057, %v1779
        %2067 = vst.msk [vmem:[%s355 + $0x48] sm:$0xff] %vm2057, %v1784
        %2068 = vst.msk [vmem:[%s355 + $0x50] sm:$0xff] %vm2057, %v1789
        %2069 = vst.msk [vmem:[%s355 + $0x58] sm:$0xff] %vm2057, %v1794
        %2070 = vst.msk [vmem:[%s355 + $0x60] sm:$0xff] %vm2057, %v1799
        %2071 = vst.msk [vmem:[%s355 + $0x68] sm:$0xff] %vm2057, %v1804
        %2072 = vst.msk [vmem:[%s355 + $0x70] sm:$0xff] %vm2057, %v1809
        %2073 = vst.msk [vmem:[%s355 + $0x78] sm:$0xff] %vm2057, %v1814
        %2074 = vst.msk [vmem:[%s355 + $0x80] sm:$0xff] %vm2057, %v1819
        %2075 = vst.msk [vmem:[%s355 + $0x88] sm:$0xff] %vm2057, %v1824
        %2076 = vst.msk [vmem:[%s355 + $0x90] sm:$0xff] %vm2057, %v1829
        %2077 = vst.msk [vmem:[%s355 + $0x98] sm:$0xff] %vm2057, %v1834
        %2078 = vst.msk [vmem:[%s355 + $0xa0] sm:$0xff] %vm2057, %v1839
        %2079 = vst.msk [vmem:[%s355 + $0xa8] sm:$0xff] %vm2057, %v1844
        %2080 = vst.msk [vmem:[%s355 + $0xb0] sm:$0xff] %vm2057, %v1849
        %2081 = vst.msk [vmem:[%s355 + $0xb8] sm:$0xff] %vm2057, %v1854
        %2082 = vst.msk [vmem:[%s355 + $0xc0] sm:$0xff] %vm2057, %v1859
        %2083 = vst.msk [vmem:[%s355 + $0xc8] sm:$0xff] %vm2057, %v1864
        %2084 = vst.msk [vmem:[%s355 + $0xd0] sm:$0xff] %vm2057, %v1869
        %2085 = vst.msk [vmem:[%s355 + $0xd8] sm:$0xff] %vm2057, %v1874
        %2086 = vst.msk [vmem:[%s355 + $0xe0] sm:$0xff] %vm2057, %v1879
        %2087 = vst.msk [vmem:[%s355 + $0xe8] sm:$0xff] %vm2057, %v1884
        %2088 = vst.msk [vmem:[%s355 + $0xf0] sm:$0xff] %vm2057, %v1889
        %2089 = vst.msk [vmem:[%s355 + $0xf8] sm:$0xff] %vm2057, %v1894
        %2090 = vst.msk [vmem:[%s355 + $0x100] sm:$0xff] %vm2057, %v1899
        %2091 = vst.msk [vmem:[%s355 + $0x108] sm:$0xff] %vm2057, %v1904
        %2092 = vst.msk [vmem:[%s355 + $0x110] sm:$0xff] %vm2057, %v1909
        %2093 = vst.msk [vmem:[%s355 + $0x118] sm:$0xff] %vm2057, %v1914
        %2094 = vst.msk [vmem:[%s355 + $0x120] sm:$0xff] %vm2057, %v1919
        %2095 = vst.msk [vmem:[%s355 + $0x128] sm:$0xff] %vm2057, %v1924
        %2096 = vst.msk [vmem:[%s355 + $0x130] sm:$0xff] %vm2057, %v1929
        %2097 = vst.msk [vmem:[%s355 + $0x138] sm:$0xff] %vm2057, %v1934
        %2098 = vst.msk [vmem:[%s355 + $0x140] sm:$0xff] %vm2057, %v1939
        %2099 = vst.msk [vmem:[%s355 + $0x148] sm:$0xff] %vm2057, %v1944
        %2100 = vst.msk [vmem:[%s355 + $0x150] sm:$0xff] %vm2057, %v1949
        %2101 = vst.msk [vmem:[%s355 + $0x158] sm:$0xff] %vm2057, %v1954
        %2102 = vst.msk [vmem:[%s355 + $0x160] sm:$0xff] %vm2057, %v1959
        %2103 = vst.msk [vmem:[%s355 + $0x168] sm:$0xff] %vm2057, %v1964
        %2104 = vst.msk [vmem:[%s355 + $0x170] sm:$0xff] %vm2057, %v1969
        %2105 = vst.msk [vmem:[%s355 + $0x178] sm:$0xff] %vm2057, %v1974
        %2106 = vst.msk [vmem:[%s355 + $0x180] sm:$0xff] %vm2057, %v1979
        %2107 = vst.msk [vmem:[%s355 + $0x188] sm:$0xff] %vm2057, %v1984
        %2108 = vst.msk [vmem:[%s355 + $0x190] sm:$0xff] %vm2057, %v1989
        %2109 = vst.msk [vmem:[%s355 + $0x198] sm:$0xff] %vm2057, %v1994
        %2110 = vst.msk [vmem:[%s355 + $0x1a0] sm:$0xff] %vm2057, %v1999
        %2111 = vst.msk [vmem:[%s355 + $0x1a8] sm:$0xff] %vm2057, %v2004
        %2112 = vst.msk [vmem:[%s355 + $0x1b0] sm:$0xff] %vm2057, %v2009
        %2113 = vst.msk [vmem:[%s355 + $0x1b8] sm:$0xff] %vm2057, %v2014
        %2114 = vst.msk [vmem:[%s355 + $0x1c0] sm:$0xff] %vm2057, %v2019
        %2115 = vst.msk [vmem:[%s355 + $0x1c8] sm:$0xff] %vm2057, %v2024
        %2116 = vst.msk [vmem:[%s355 + $0x1d0] sm:$0xff] %vm2057, %v2029
        %2117 = vst.msk [vmem:[%s355 + $0x1d8] sm:$0xff] %vm2057, %v2034
        %2118 = vst.msk [vmem:[%s355 + $0x1e0] sm:$0xff] %vm2057, %v2039
        %2119 = vst.msk [vmem:[%s355 + $0x1e8] sm:$0xff] %vm2057, %v2044
        %2120 = vst.msk [vmem:[%s355 + $0x1f0] sm:$0xff] %vm2057, %v2049
        %2121 = vst.msk [vmem:[%s355 + $0x1f8] sm:$0xff] %vm2057, %v2054
        %s2122 = smul.u32 64, %s24
        %p2123 = scmp.lt.s32.totalorder %s2122, 127
        %s2124 = scalar_select %p2123, %s2122, 127
        %s2125 = smul.addr %s2124, 8
        %s2126 = scalar_lea.vmem %s7, %s2125
        %s2127 = smul.u32 64, %s24
        %p2128 = scmp.lt.s32.totalorder %s2127, 127
        %s2129 = scalar_select %p2128, %s2127, 127
        %s2130 = smul.addr %s2129, 8
        %s2131 = scalar_lea.vmem %s8, %s2130
        // Predicated region
        $region57: #{mfunit_add1_forward.4} parent=47 // pred_check
          %p2132 = pneg %p194
        $region58: #{mfunit_add1_forward.4} parent=47 // pred_check_branch
          %2134 = sbr.rel (%p2132) target = $region60
        $region59: #{mfunit_add1_forward.4} parent=47 // pred_region
          %s2135 = smul.u32 64, %s24
        $region60: #{mfunit_add1_forward.4} parent=47 // pred_fallthru
          _
        // Predicated region
        $region61: #{mfunit_add1_forward.4} parent=47 // pred_check
          %p2136 = pneg %p220
        $region62: #{mfunit_add1_forward.4} parent=47 // pred_check_branch
          %2138 = sbr.rel (%p2136) target = $region64
        $region63: #{mfunit_add1_forward.4} parent=47 // pred_region
          %s2139 = smul.u32 64, %s24
        $region64: #{mfunit_add1_forward.4} parent=47 // pred_fallthru
          _
      $region48: #{mfunit_add1_forward.4} parent=5 // pred_fallthru
        _
      %p2140 = scmp.le.s32.totalorder 2, %s19
      // Predicated region
      $region65: #{mfunit_add1_forward.4} parent=5 // pred_check
        %p2141 = pneg %p2140
      $region66: #{mfunit_add1_forward.4} parent=5 // pred_check_branch
        %2143 = sbr.rel (%p2141) target = $region68
      $region67: #{mfunit_add1_forward.4} parent=5 // pred_region
        %s2144 = ssub.s32 %s19, 2
        // Predicated region
        $region69: #{mfunit_add1_forward.4} parent=67 // pred_check
          %p2145 = pneg %p200
        $region70: #{mfunit_add1_forward.4} parent=67 // pred_check_branch
          %2147 = sbr.rel (%p2145) target = $region72
        $region71: #{mfunit_add1_forward.4} parent=67 // pred_region
          %s2148 = smul.u32 64, %s25
          %p2149 = scmp.lt.s32.totalorder %s2148, 127
          %s2150 = scalar_select %p2149, %s2148, 127
          %s2151 = smul.addr %s2150, 8
          %s2152 = scalar_lea.vmem %s7, %s2151
        $region72: #{mfunit_add1_forward.4} parent=67 // pred_fallthru
          _
        // Predicated region
        $region73: #{mfunit_add1_forward.4} parent=67 // pred_check
          %p2153 = pneg %p226
        $region74: #{mfunit_add1_forward.4} parent=67 // pred_check_branch
          %2155 = sbr.rel (%p2153) target = $region76
        $region75: #{mfunit_add1_forward.4} parent=67 // pred_region
          %s2156 = smul.u32 64, %s25
          %p2157 = scmp.lt.s32.totalorder %s2156, 127
          %s2158 = scalar_select %p2157, %s2156, 127
          %s2159 = smul.addr %s2158, 8
          %s2160 = scalar_lea.vmem %s8, %s2159
        $region76: #{mfunit_add1_forward.4} parent=67 // pred_fallthru
          _
      $region68: #{mfunit_add1_forward.4} parent=5 // pred_fallthru
        _
    $region6: #{mfunit_add1_forward.4} parent=1 // loop_footer
      %s23 = sadd.s32 1, %s19
    $region7: #{mfunit_add1_forward.4} parent=1 // loop_footer_branch
      %18 = sbr.rel target = $region3
    $region8: #{mfunit_add1_forward.4} parent=1 // loop_exit
      _
    %2161 = vsyncpa [#allocation3], 1
    %s2162 = scalar_lea.sflag [#allocation3], 1
    %2163 = vsyncpa %s2162, 1
    %2164 = vsyncpa [#allocation5], 1

// kernel: mfunit_add1_forward.6
$region0: #{mfunit_add1_forward.6}
  #allocation0 [shape = 'u32[]', space=smem, size = 0x4, offset = 0x4, fixed_abs, tag = 'smem constant byte address 0x4 - core index']
  #allocation1 [shape = 'u32[144,128]{1,0:T(1,128)}', space=vmem, size = 0x12000, scoped, tag = 'internal scratch']
  %s0 = inlined_call_operand.vmem [shape: f32[1024,32], index: 0, kind: input, shape index: {}]
  %s1 = inlined_call_operand.vmem [shape: bf16[1024,1408], index: 1, kind: input, shape index: {}]
  %s2 = inlined_call_operand.vmem [shape: bf16[1408,32], index: 2, kind: input, shape index: {}]
  %s3 = inlined_call_operand.vmem [shape: f32[1024,32], index: 3, kind: output, shape index: {}]
  %s4 = sld [smem:[#allocation0]]
  $region49: #{mfunit_add1_forward.6} parent=0
    _
  %s6 = ssub.s32 1, %s4
  %s7 = scalar_select 0, %s6, %s4
  loop: start=0, step=1, limit=4
  $region2: #{mfunit_add1_forward.6} parent=0 // loop_pre_header
    _
  $region3: #{mfunit_add1_forward.6} parent=0 // loop_header
    %s9 = sphi 0, %s13
    %p10 = scmp.ge.s32.totalorder %s9, 4
    %s16 = sphi 0, %s28
    %s17 = sphi 0, %s24
    %s18 = sphi 0, %s16
    %s19 = sphi 0, %s17
    %s20 = sphi 0, %s18
    %s21 = sphi 0, %s19
    %s31 = sphi 0, %s33
    %s34 = sphi 0, %s31
    %s35 = sphi 0, %s34
    %s51 = sphi 0, %s35
    %s59 = sphi 0, %s61
    %s62 = sphi 0, %s59
    %s63 = sphi 0, %s62
    %s79 = sphi 0, %s63
    %s85 = sphi 0, %s87
    %s88 = sphi 0, %s85
    %s89 = sphi 0, %s88
    %s105 = sphi 0, %s89
    %s111 = sphi 0, %s113
    %s114 = sphi 0, %s111
    %s115 = sphi 0, %s114
    %s131 = sphi 0, %s115
  $region4: #{mfunit_add1_forward.6} parent=0 // loop_header_branch
    %12 = sbr.rel (%p10) target = $region8
  $region5: #{mfunit_add1_forward.6} parent=0 // loop_body
    %s14 = ssub.s32 %s9, 1
    %s15 = ssub.s32 %s9, 2
    %s22 = sadd.s32 1, %s17
    %p23 = scmp.ge.s32.totalorder %s22, 1
    %s24 = scalar_select %p23, 0, %s22
    %s25 = sadd.s32 1, %s16
    %s26 = scalar_select %p23, %s25, %s16
    %p27 = scmp.ge.s32.totalorder %s26, 2
    %s28 = scalar_select %p27, 0, %s26
    %s29 = ssub.s32 %s16, %s28
    %p30 = scmp.eq.s32.totalorder %s29, 0
    %s32 = sadd.s32 %s31, 1
    %s33 = scalar_select %p30, %s31, %s32
    %p36 = pneg %p30
    %p37 = scmp.eq.s32.totalorder %s9, 1
    %p38 = por %p36, %p37
    %p39 = scmp.ne.s32.totalorder %s31, %s34
    %p40 = scmp.eq.s32.totalorder %s9, 0
    %p41 = por %p39, %p40
    %p42 = scmp.ne.s32.totalorder %s31, %s34
    %p43 = scmp.eq.s32.totalorder %s14, 1
    %p44 = por %p42, %p43
    %p45 = scmp.ne.s32.totalorder %s34, %s35
    %p46 = scmp.eq.s32.totalorder %s14, 0
    %p47 = por %p45, %p46
    %p48 = scmp.ne.s32.totalorder %s34, %s35
    %p49 = scmp.eq.s32.totalorder %s15, 1
    %p50 = por %p48, %p49
    %p52 = scmp.ne.s32.totalorder %s35, %s51
    %p53 = scmp.eq.s32.totalorder %s15, 0
    %p54 = por %p52, %p53
    %s55 = ssub.s32 %s16, %s28
    %s56 = ssub.s32 %s17, %s24
    %s57 = sor.u32 %s55, %s56
    %p58 = scmp.eq.s32.totalorder %s57, 0
    %s60 = sadd.s32 %s59, 1
    %s61 = scalar_select %p58, %s59, %s60
    %p64 = pneg %p58
    %p65 = scmp.eq.s32.totalorder %s9, 1
    %p66 = por %p64, %p65
    %p67 = scmp.ne.s32.totalorder %s59, %s62
    %p68 = scmp.eq.s32.totalorder %s9, 0
    %p69 = por %p67, %p68
    %p70 = scmp.ne.s32.totalorder %s59, %s62
    %p71 = scmp.eq.s32.totalorder %s14, 1
    %p72 = por %p70, %p71
    %p73 = scmp.ne.s32.totalorder %s62, %s63
    %p74 = scmp.eq.s32.totalorder %s14, 0
    %p75 = por %p73, %p74
    %p76 = scmp.ne.s32.totalorder %s62, %s63
    %p77 = scmp.eq.s32.totalorder %s15, 1
    %p78 = por %p76, %p77
    %p80 = scmp.ne.s32.totalorder %s63, %s79
    %p81 = scmp.eq.s32.totalorder %s15, 0
    %p82 = por %p80, %p81
    %s83 = ssub.s32 %s17, %s24
    %p84 = scmp.eq.s32.totalorder %s83, 0
    %s86 = sadd.s32 %s85, 1
    %s87 = scalar_select %p84, %s85, %s86
    %p90 = pneg %p84
    %p91 = scmp.eq.s32.totalorder %s9, 1
    %p92 = por %p90, %p91
    %p93 = scmp.ne.s32.totalorder %s85, %s88
    %p94 = scmp.eq.s32.totalorder %s9, 0
    %p95 = por %p93, %p94
    %p96 = scmp.ne.s32.totalorder %s85, %s88
    %p97 = scmp.eq.s32.totalorder %s14, 1
    %p98 = por %p96, %p97
    %p99 = scmp.ne.s32.totalorder %s88, %s89
    %p100 = scmp.eq.s32.totalorder %s14, 0
    %p101 = por %p99, %p100
    %p102 = scmp.ne.s32.totalorder %s88, %s89
    %p103 = scmp.eq.s32.totalorder %s15, 1
    %p104 = por %p102, %p103
    %p106 = scmp.ne.s32.totalorder %s89, %s105
    %p107 = scmp.eq.s32.totalorder %s15, 0
    %p108 = por %p106, %p107
    %s109 = ssub.s32 %s16, %s28
    %p110 = scmp.eq.s32.totalorder %s109, 0
    %s112 = sadd.s32 %s111, 1
    %s113 = scalar_select %p110, %s111, %s112
    %p116 = pneg %p110
    %p117 = scmp.eq.s32.totalorder %s9, 1
    %p118 = por %p116, %p117
    %p119 = scmp.ne.s32.totalorder %s111, %s114
    %p120 = scmp.eq.s32.totalorder %s9, 0
    %p121 = por %p119, %p120
    %p122 = scmp.ne.s32.totalorder %s111, %s114
    %p123 = scmp.eq.s32.totalorder %s14, 1
    %p124 = por %p122, %p123
    %p125 = scmp.ne.s32.totalorder %s114, %s115
    %p126 = scmp.eq.s32.totalorder %s14, 0
    %p127 = por %p125, %p126
    %p128 = scmp.ne.s32.totalorder %s114, %s115
    %p129 = scmp.eq.s32.totalorder %s15, 1
    %p130 = por %p128, %p129
    %p132 = scmp.ne.s32.totalorder %s115, %s131
    %p133 = scmp.eq.s32.totalorder %s15, 0
    %p134 = por %p132, %p133
    %p135 = scmp.le.s32.totalorder 1, %s9
    %p136 = scmp.lt.s32.totalorder %s9, 3
    %p137 = pnand %p135, %p136
    %p138 = pneg %p137
    // Predicated region
    $region9: #{mfunit_add1_forward.6} parent=5 // pred_check
      _
    $region10: #{mfunit_add1_forward.6} parent=5 // pred_check_branch
      %140 = sbr.rel (%p137) target = $region12
    $region11: #{mfunit_add1_forward.6} parent=5 // pred_region
      %s141 = ssub.s32 %s9, 1
      // Predicated region
      $region13: #{mfunit_add1_forward.6} parent=11 // pred_check
        %p142 = pneg %p101
      $region14: #{mfunit_add1_forward.6} parent=11 // pred_check_branch
        %144 = sbr.rel (%p142) target = $region16
      $region15: #{mfunit_add1_forward.6} parent=11 // pred_region
        %s145 = smul.u32 176, %s19
        %p146 = scmp.lt.s32.totalorder %s145, 175
        %s147 = scalar_select %p146, %s145, 175
        %s148 = smul.addr %s147, 4
        %s149 = scalar_lea.vmem %s2, %s148
        %s150 = smul.u32 176, %s19
      $region16: #{mfunit_add1_forward.6} parent=11 // pred_fallthru
        _
    $region12: #{mfunit_add1_forward.6} parent=5 // pred_fallthru
      _
    %p151 = scmp.lt.s32.totalorder %s9, 2
    // Predicated region
    $region17: #{mfunit_add1_forward.6} parent=5 // pred_check
      %p152 = pneg %p151
    $region18: #{mfunit_add1_forward.6} parent=5 // pred_check_branch
      %154 = sbr.rel (%p152) target = $region20
    $region19: #{mfunit_add1_forward.6} parent=5 // pred_region
      // Predicated region
      $region21: #{mfunit_add1_forward.6} parent=19 // pred_check
        %p155 = pneg %p41
      $region22: #{mfunit_add1_forward.6} parent=19 // pred_check_branch
        %157 = sbr.rel (%p155) target = $region24
      $region23: #{mfunit_add1_forward.6} parent=19 // pred_region
        %s158 = smul.u32 64, %s16
        %p159 = scmp.lt.s32.totalorder %s158, 127
        %s160 = scalar_select %p159, %s158, 127
        %s161 = smul.addr %s160, 8
        %s162 = scalar_lea.vmem %s0, %s161
        %s163 = smul.u32 64, %s16
      $region24: #{mfunit_add1_forward.6} parent=19 // pred_fallthru
        _
      // Predicated region
      $region25: #{mfunit_add1_forward.6} parent=19 // pred_check
        %p164 = pneg %p69
      $region26: #{mfunit_add1_forward.6} parent=19 // pred_check_branch
        %166 = sbr.rel (%p164) target = $region28
      $region27: #{mfunit_add1_forward.6} parent=19 // pred_region
        %s167 = smul.u32 64, %s16
        %s168 = smul.u32 11, %s17
        %p169 = scmp.lt.s32.totalorder %s167, 127
        %s170 = scalar_select %p169, %s167, 127
        %p171 = scmp.lt.s32.totalorder %s168, 10
        %s172 = scalar_select %p171, %s168, 10
        %s173 = smul.addr %s170, 11
        %s174 = sadd.s32 %s172, %s173
        %s175 = smul.addr %s174, 4
        %s176 = scalar_lea.vmem %s1, %s175
        %s177 = smul.u32 64, %s16
        %s178 = smul.u32 11, %s17
      $region28: #{mfunit_add1_forward.6} parent=19 // pred_fallthru
        _
    $region20: #{mfunit_add1_forward.6} parent=5 // pred_fallthru
      _
    %p179 = scmp.le.s32.totalorder 1, %s9
    %p180 = scmp.lt.s32.totalorder %s9, 3
    %p181 = pnand %p179, %p180
    %p182 = pneg %p181
    // Predicated region
    $region29: #{mfunit_add1_forward.6} parent=5 // pred_check
      _
    $region30: #{mfunit_add1_forward.6} parent=5 // pred_check_branch
      %184 = sbr.rel (%p181) target = $region32
    $region31: #{mfunit_add1_forward.6} parent=5 // pred_region
      %s185 = ssub.s32 %s9, 1
      %s186 = smul.u32 64, %s18
      %p187 = scmp.lt.s32.totalorder %s186, 127
      %s188 = scalar_select %p187, %s186, 127
      %s189 = smul.addr %s188, 8
      %s190 = scalar_lea.vmem %s0, %s189
      %p191 = pneg %p47
      %p192 = pneg %p44
      %s193 = smul.u32 64, %s18
      %s194 = smul.u32 11, %s19
      %p195 = scmp.lt.s32.totalorder %s193, 127
      %s196 = scalar_select %p195, %s193, 127
      %p197 = scmp.lt.s32.totalorder %s194, 10
      %s198 = scalar_select %p197, %s194, 10
      %s199 = smul.addr %s196, 11
      %s200 = sadd.s32 %s198, %s199
      %s201 = smul.addr %s200, 4
      %s202 = scalar_lea.vmem %s1, %s201
      %p203 = pneg %p75
      %p204 = pneg %p72
      %s205 = smul.u32 176, %s19
      %p206 = scmp.lt.s32.totalorder %s205, 175
      %s207 = scalar_select %p206, %s205, 175
      %s208 = smul.addr %s207, 4
      %s209 = scalar_lea.vmem %s2, %s208
      %p210 = pneg %p101
      %p211 = pneg %p98
      %p212 = pneg %p127
      %p213 = pneg %p124
      %s214 = smul.u32 64, %s18
      %p215 = scmp.lt.s32.totalorder %s214, 127
      %s216 = scalar_select %p215, %s214, 127
      %s217 = smul.addr %s216, 8
      %s218 = scalar_lea.vmem %s3, %s217
      %s219 = smul.u32 64, %s18
      %p220 = scmp.lt.s32.totalorder %s219, 127
      %s221 = scalar_select %p220, %s219, 127
      %s222 = smul.addr %s221, 8
      %s223 = scalar_lea.vmem %s0, %s222
      %s224 = smul.u32 64, %s18
      %s225 = smul.u32 64, %s18
      %s226 = smul.u32 11, %s19
      %p227 = scmp.lt.s32.totalorder %s225, 127
      %s228 = scalar_select %p227, %s225, 127
      %p229 = scmp.lt.s32.totalorder %s226, 10
      %s230 = scalar_select %p229, %s226, 10
      %s231 = smul.addr %s228, 11
      %s232 = sadd.s32 %s230, %s231
      %s233 = smul.addr %s232, 4
      %s234 = scalar_lea.vmem %s1, %s233
      %s235 = smul.u32 64, %s18
      %s236 = smul.u32 11, %s19
      %s237 = smul.u32 176, %s19
      %p238 = scmp.lt.s32.totalorder %s237, 175
      %s239 = scalar_select %p238, %s237, 175
      %s240 = smul.addr %s239, 4
      %s241 = scalar_lea.vmem %s2, %s240
      %s242 = smul.u32 176, %s19
      %s243 = smul.u32 64, %s18
      %p244 = scmp.lt.s32.totalorder %s243, 127
      %s245 = scalar_select %p244, %s243, 127
      %s246 = smul.addr %s245, 8
      %s247 = scalar_lea.vmem %s3, %s246
      %s248 = smul.u32 64, %s18
      %p250 = scmp.eq.s32.totalorder %s19, 0
      // Predicated region
      $region33: #{mfunit_add1_forward.6} parent=31 // pred_check
        %p251 = pneg %p250
      $region34: #{mfunit_add1_forward.6} parent=31 // pred_check_branch
        %253 = sbr.rel (%p251) target = $region36
      $region35: #{mfunit_add1_forward.6} parent=31 // pred_region
        %v254 = vld [vmem:[%s223] sm:$0xff]
        %v255 = vld [vmem:[%s223 + $0x8] sm:$0xff]
        %v256 = vld [vmem:[%s223 + $0x10] sm:$0xff]
        %v257 = vld [vmem:[%s223 + $0x18] sm:$0xff]
        %v258 = vld [vmem:[%s223 + $0x20] sm:$0xff]
        %v259 = vld [vmem:[%s223 + $0x28] sm:$0xff]
        %v260 = vld [vmem:[%s223 + $0x30] sm:$0xff]
        %v261 = vld [vmem:[%s223 + $0x38] sm:$0xff]
        %v262 = vld [vmem:[%s223 + $0x40] sm:$0xff]
        %v263 = vld [vmem:[%s223 + $0x48] sm:$0xff]
        %v264 = vld [vmem:[%s223 + $0x50] sm:$0xff]
        %v265 = vld [vmem:[%s223 + $0x58] sm:$0xff]
        %v266 = vld [vmem:[%s223 + $0x60] sm:$0xff]
        %v267 = vld [vmem:[%s223 + $0x68] sm:$0xff]
        %v268 = vld [vmem:[%s223 + $0x70] sm:$0xff]
        %v269 = vld [vmem:[%s223 + $0x78] sm:$0xff]
        %v270 = vld [vmem:[%s223 + $0x80] sm:$0xff]
        %v271 = vld [vmem:[%s223 + $0x88] sm:$0xff]
        %v272 = vld [vmem:[%s223 + $0x90] sm:$0xff]
        %v273 = vld [vmem:[%s223 + $0x98] sm:$0xff]
        %v274 = vld [vmem:[%s223 + $0xa0] sm:$0xff]
        %v275 = vld [vmem:[%s223 + $0xa8] sm:$0xff]
        %v276 = vld [vmem:[%s223 + $0xb0] sm:$0xff]
        %v277 = vld [vmem:[%s223 + $0xb8] sm:$0xff]
        %v278 = vld [vmem:[%s223 + $0xc0] sm:$0xff]
        %v279 = vld [vmem:[%s223 + $0xc8] sm:$0xff]
        %v280 = vld [vmem:[%s223 + $0xd0] sm:$0xff]
        %v281 = vld [vmem:[%s223 + $0xd8] sm:$0xff]
        %v282 = vld [vmem:[%s223 + $0xe0] sm:$0xff]
        %v283 = vld [vmem:[%s223 + $0xe8] sm:$0xff]
        %v284 = vld [vmem:[%s223 + $0xf0] sm:$0xff]
        %v285 = vld [vmem:[%s223 + $0xf8] sm:$0xff]
        %v286 = vld [vmem:[%s223 + $0x100] sm:$0xff]
        %v287 = vld [vmem:[%s223 + $0x108] sm:$0xff]
        %v288 = vld [vmem:[%s223 + $0x110] sm:$0xff]
        %v289 = vld [vmem:[%s223 + $0x118] sm:$0xff]
        %v290 = vld [vmem:[%s223 + $0x120] sm:$0xff]
        %v291 = vld [vmem:[%s223 + $0x128] sm:$0xff]
        %v292 = vld [vmem:[%s223 + $0x130] sm:$0xff]
        %v293 = vld [vmem:[%s223 + $0x138] sm:$0xff]
        %v294 = vld [vmem:[%s223 + $0x140] sm:$0xff]
        %v295 = vld [vmem:[%s223 + $0x148] sm:$0xff]
        %v296 = vld [vmem:[%s223 + $0x150] sm:$0xff]
        %v297 = vld [vmem:[%s223 + $0x158] sm:$0xff]
        %v298 = vld [vmem:[%s223 + $0x160] sm:$0xff]
        %v299 = vld [vmem:[%s223 + $0x168] sm:$0xff]
        %v300 = vld [vmem:[%s223 + $0x170] sm:$0xff]
        %v301 = vld [vmem:[%s223 + $0x178] sm:$0xff]
        %v302 = vld [vmem:[%s223 + $0x180] sm:$0xff]
        %v303 = vld [vmem:[%s223 + $0x188] sm:$0xff]
        %v304 = vld [vmem:[%s223 + $0x190] sm:$0xff]
        %v305 = vld [vmem:[%s223 + $0x198] sm:$0xff]
        %v306 = vld [vmem:[%s223 + $0x1a0] sm:$0xff]
        %v307 = vld [vmem:[%s223 + $0x1a8] sm:$0xff]
        %v308 = vld [vmem:[%s223 + $0x1b0] sm:$0xff]
        %v309 = vld [vmem:[%s223 + $0x1b8] sm:$0xff]
        %v310 = vld [vmem:[%s223 + $0x1c0] sm:$0xff]
        %v311 = vld [vmem:[%s223 + $0x1c8] sm:$0xff]
        %v312 = vld [vmem:[%s223 + $0x1d0] sm:$0xff]
        %v313 = vld [vmem:[%s223 + $0x1d8] sm:$0xff]
        %v314 = vld [vmem:[%s223 + $0x1e0] sm:$0xff]
        %v315 = vld [vmem:[%s223 + $0x1e8] sm:$0xff]
        %v316 = vld [vmem:[%s223 + $0x1f0] sm:$0xff]
        %v317 = vld [vmem:[%s223 + $0x1f8] sm:$0xff]
        %vm318 = vcmask 261120
        %319 = vst.msk [vmem:[%s247] sm:$0xff] %vm318, %v254
        %320 = vst.msk [vmem:[%s247 + $0x8] sm:$0xff] %vm318, %v255
        %321 = vst.msk [vmem:[%s247 + $0x10] sm:$0xff] %vm318, %v256
        %322 = vst.msk [vmem:[%s247 + $0x18] sm:$0xff] %vm318, %v257
        %323 = vst.msk [vmem:[%s247 + $0x20] sm:$0xff] %vm318, %v258
        %324 = vst.msk [vmem:[%s247 + $0x28] sm:$0xff] %vm318, %v259
        %325 = vst.msk [vmem:[%s247 + $0x30] sm:$0xff] %vm318, %v260
        %326 = vst.msk [vmem:[%s247 + $0x38] sm:$0xff] %vm318, %v261
        %327 = vst.msk [vmem:[%s247 + $0x40] sm:$0xff] %vm318, %v262
        %328 = vst.msk [vmem:[%s247 + $0x48] sm:$0xff] %vm318, %v263
        %329 = vst.msk [vmem:[%s247 + $0x50] sm:$0xff] %vm318, %v264
        %330 = vst.msk [vmem:[%s247 + $0x58] sm:$0xff] %vm318, %v265
        %331 = vst.msk [vmem:[%s247 + $0x60] sm:$0xff] %vm318, %v266
        %332 = vst.msk [vmem:[%s247 + $0x68] sm:$0xff] %vm318, %v267
        %333 = vst.msk [vmem:[%s247 + $0x70] sm:$0xff] %vm318, %v268
        %334 = vst.msk [vmem:[%s247 + $0x78] sm:$0xff] %vm318, %v269
        %335 = vst.msk [vmem:[%s247 + $0x80] sm:$0xff] %vm318, %v270
        %336 = vst.msk [vmem:[%s247 + $0x88] sm:$0xff] %vm318, %v271
        %337 = vst.msk [vmem:[%s247 + $0x90] sm:$0xff] %vm318, %v272
        %338 = vst.msk [vmem:[%s247 + $0x98] sm:$0xff] %vm318, %v273
        %339 = vst.msk [vmem:[%s247 + $0xa0] sm:$0xff] %vm318, %v274
        %340 = vst.msk [vmem:[%s247 + $0xa8] sm:$0xff] %vm318, %v275
        %341 = vst.msk [vmem:[%s247 + $0xb0] sm:$0xff] %vm318, %v276
        %342 = vst.msk [vmem:[%s247 + $0xb8] sm:$0xff] %vm318, %v277
        %343 = vst.msk [vmem:[%s247 + $0xc0] sm:$0xff] %vm318, %v278
        %344 = vst.msk [vmem:[%s247 + $0xc8] sm:$0xff] %vm318, %v279
        %345 = vst.msk [vmem:[%s247 + $0xd0] sm:$0xff] %vm318, %v280
        %346 = vst.msk [vmem:[%s247 + $0xd8] sm:$0xff] %vm318, %v281
        %347 = vst.msk [vmem:[%s247 + $0xe0] sm:$0xff] %vm318, %v282
        %348 = vst.msk [vmem:[%s247 + $0xe8] sm:$0xff] %vm318, %v283
        %349 = vst.msk [vmem:[%s247 + $0xf0] sm:$0xff] %vm318, %v284
        %350 = vst.msk [vmem:[%s247 + $0xf8] sm:$0xff] %vm318, %v285
        %351 = vst.msk [vmem:[%s247 + $0x100] sm:$0xff] %vm318, %v286
        %352 = vst.msk [vmem:[%s247 + $0x108] sm:$0xff] %vm318, %v287
        %353 = vst.msk [vmem:[%s247 + $0x110] sm:$0xff] %vm318, %v288
        %354 = vst.msk [vmem:[%s247 + $0x118] sm:$0xff] %vm318, %v289
        %355 = vst.msk [vmem:[%s247 + $0x120] sm:$0xff] %vm318, %v290
        %356 = vst.msk [vmem:[%s247 + $0x128] sm:$0xff] %vm318, %v291
        %357 = vst.msk [vmem:[%s247 + $0x130] sm:$0xff] %vm318, %v292
        %358 = vst.msk [vmem:[%s247 + $0x138] sm:$0xff] %vm318, %v293
        %359 = vst.msk [vmem:[%s247 + $0x140] sm:$0xff] %vm318, %v294
        %360 = vst.msk [vmem:[%s247 + $0x148] sm:$0xff] %vm318, %v295
        %361 = vst.msk [vmem:[%s247 + $0x150] sm:$0xff] %vm318, %v296
        %362 = vst.msk [vmem:[%s247 + $0x158] sm:$0xff] %vm318, %v297
        %363 = vst.msk [vmem:[%s247 + $0x160] sm:$0xff] %vm318, %v298
        %364 = vst.msk [vmem:[%s247 + $0x168] sm:$0xff] %vm318, %v299
        %365 = vst.msk [vmem:[%s247 + $0x170] sm:$0xff] %vm318, %v300
        %366 = vst.msk [vmem:[%s247 + $0x178] sm:$0xff] %vm318, %v301
        %367 = vst.msk [vmem:[%s247 + $0x180] sm:$0xff] %vm318, %v302
        %368 = vst.msk [vmem:[%s247 + $0x188] sm:$0xff] %vm318, %v303
        %369 = vst.msk [vmem:[%s247 + $0x190] sm:$0xff] %vm318, %v304
        %370 = vst.msk [vmem:[%s247 + $0x198] sm:$0xff] %vm318, %v305
        %371 = vst.msk [vmem:[%s247 + $0x1a0] sm:$0xff] %vm318, %v306
        %372 = vst.msk [vmem:[%s247 + $0x1a8] sm:$0xff] %vm318, %v307
        %373 = vst.msk [vmem:[%s247 + $0x1b0] sm:$0xff] %vm318, %v308
        %374 = vst.msk [vmem:[%s247 + $0x1b8] sm:$0xff] %vm318, %v309
        %375 = vst.msk [vmem:[%s247 + $0x1c0] sm:$0xff] %vm318, %v310
        %376 = vst.msk [vmem:[%s247 + $0x1c8] sm:$0xff] %vm318, %v311
        %377 = vst.msk [vmem:[%s247 + $0x1d0] sm:$0xff] %vm318, %v312
        %378 = vst.msk [vmem:[%s247 + $0x1d8] sm:$0xff] %vm318, %v313
        %379 = vst.msk [vmem:[%s247 + $0x1e0] sm:$0xff] %vm318, %v314
        %380 = vst.msk [vmem:[%s247 + $0x1e8] sm:$0xff] %vm318, %v315
        %381 = vst.msk [vmem:[%s247 + $0x1f0] sm:$0xff] %vm318, %v316
        %382 = vst.msk [vmem:[%s247 + $0x1f8] sm:$0xff] %vm318, %v317
      $region36: #{mfunit_add1_forward.6} parent=31 // pred_fallthru
        _
      %v383 = vld [vmem:[%s247] sm:$0xff]
      %v384 = vld [vmem:[%s247 + $0x8] sm:$0xff]
      %v385 = vld [vmem:[%s247 + $0x10] sm:$0xff]
      %v386 = vld [vmem:[%s247 + $0x18] sm:$0xff]
      %v387 = vld [vmem:[%s247 + $0x20] sm:$0xff]
      %v388 = vld [vmem:[%s247 + $0x28] sm:$0xff]
      %v389 = vld [vmem:[%s247 + $0x30] sm:$0xff]
      %v390 = vld [vmem:[%s247 + $0x38] sm:$0xff]
      %v391 = vld [vmem:[%s247 + $0x40] sm:$0xff]
      %v392 = vld [vmem:[%s247 + $0x48] sm:$0xff]
      %v393 = vld [vmem:[%s247 + $0x50] sm:$0xff]
      %v394 = vld [vmem:[%s247 + $0x58] sm:$0xff]
      %v395 = vld [vmem:[%s247 + $0x60] sm:$0xff]
      %v396 = vld [vmem:[%s247 + $0x68] sm:$0xff]
      %v397 = vld [vmem:[%s247 + $0x70] sm:$0xff]
      %v398 = vld [vmem:[%s247 + $0x78] sm:$0xff]
      %v399 = vld [vmem:[%s247 + $0x80] sm:$0xff]
      %v400 = vld [vmem:[%s247 + $0x88] sm:$0xff]
      %v401 = vld [vmem:[%s247 + $0x90] sm:$0xff]
      %v402 = vld [vmem:[%s247 + $0x98] sm:$0xff]
      %v403 = vld [vmem:[%s247 + $0xa0] sm:$0xff]
      %v404 = vld [vmem:[%s247 + $0xa8] sm:$0xff]
      %v405 = vld [vmem:[%s247 + $0xb0] sm:$0xff]
      %v406 = vld [vmem:[%s247 + $0xb8] sm:$0xff]
      %v407 = vld [vmem:[%s247 + $0xc0] sm:$0xff]
      %v408 = vld [vmem:[%s247 + $0xc8] sm:$0xff]
      %v409 = vld [vmem:[%s247 + $0xd0] sm:$0xff]
      %v410 = vld [vmem:[%s247 + $0xd8] sm:$0xff]
      %v411 = vld [vmem:[%s247 + $0xe0] sm:$0xff]
      %v412 = vld [vmem:[%s247 + $0xe8] sm:$0xff]
      %v413 = vld [vmem:[%s247 + $0xf0] sm:$0xff]
      %v414 = vld [vmem:[%s247 + $0xf8] sm:$0xff]
      %v415 = vld [vmem:[%s247 + $0x100] sm:$0xff]
      %v416 = vld [vmem:[%s247 + $0x108] sm:$0xff]
      %v417 = vld [vmem:[%s247 + $0x110] sm:$0xff]
      %v418 = vld [vmem:[%s247 + $0x118] sm:$0xff]
      %v419 = vld [vmem:[%s247 + $0x120] sm:$0xff]
      %v420 = vld [vmem:[%s247 + $0x128] sm:$0xff]
      %v421 = vld [vmem:[%s247 + $0x130] sm:$0xff]
      %v422 = vld [vmem:[%s247 + $0x138] sm:$0xff]
      %v423 = vld [vmem:[%s247 + $0x140] sm:$0xff]
      %v424 = vld [vmem:[%s247 + $0x148] sm:$0xff]
      %v425 = vld [vmem:[%s247 + $0x150] sm:$0xff]
      %v426 = vld [vmem:[%s247 + $0x158] sm:$0xff]
      %v427 = vld [vmem:[%s247 + $0x160] sm:$0xff]
      %v428 = vld [vmem:[%s247 + $0x168] sm:$0xff]
      %v429 = vld [vmem:[%s247 + $0x170] sm:$0xff]
      %v430 = vld [vmem:[%s247 + $0x178] sm:$0xff]
      %v431 = vld [vmem:[%s247 + $0x180] sm:$0xff]
      %v432 = vld [vmem:[%s247 + $0x188] sm:$0xff]
      %v433 = vld [vmem:[%s247 + $0x190] sm:$0xff]
      %v434 = vld [vmem:[%s247 + $0x198] sm:$0xff]
      %v435 = vld [vmem:[%s247 + $0x1a0] sm:$0xff]
      %v436 = vld [vmem:[%s247 + $0x1a8] sm:$0xff]
      %v437 = vld [vmem:[%s247 + $0x1b0] sm:$0xff]
      %v438 = vld [vmem:[%s247 + $0x1b8] sm:$0xff]
      %v439 = vld [vmem:[%s247 + $0x1c0] sm:$0xff]
      %v440 = vld [vmem:[%s247 + $0x1c8] sm:$0xff]
      %v441 = vld [vmem:[%s247 + $0x1d0] sm:$0xff]
      %v442 = vld [vmem:[%s247 + $0x1d8] sm:$0xff]
      %v443 = vld [vmem:[%s247 + $0x1e0] sm:$0xff]
      %v444 = vld [vmem:[%s247 + $0x1e8] sm:$0xff]
      %v445 = vld [vmem:[%s247 + $0x1f0] sm:$0xff]
      %v446 = vld [vmem:[%s247 + $0x1f8] sm:$0xff]
      %v447 = vld [vmem:[%s234] sm:$0xff]
      %v448 = vld [vmem:[%s234 + $0x8] sm:$0xff]
      %v449 = vld [vmem:[%s234 + $0x10] sm:$0xff]
      %v450 = vld [vmem:[%s234 + $0x18] sm:$0xff]
      %v451 = vld [vmem:[%s234 + $0x20] sm:$0xff]
      %v452 = vld [vmem:[%s234 + $0x28] sm:$0xf]
      %v453 = vld [vmem:[%s234 + $0x2c] sm:$0xff]
      %v454 = vld [vmem:[%s234 + $0x34] sm:$0xff]
      %v455 = vld [vmem:[%s234 + $0x3c] sm:$0xff]
      %v456 = vld [vmem:[%s234 + $0x44] sm:$0xff]
      %v457 = vld [vmem:[%s234 + $0x4c] sm:$0xff]
      %v458 = vld [vmem:[%s234 + $0x54] sm:$0xf]
      %v459 = vld [vmem:[%s234 + $0x58] sm:$0xff]
      %v460 = vld [vmem:[%s234 + $0x60] sm:$0xff]
      %v461 = vld [vmem:[%s234 + $0x68] sm:$0xff]
      %v462 = vld [vmem:[%s234 + $0x70] sm:$0xff]
      %v463 = vld [vmem:[%s234 + $0x78] sm:$0xff]
      %v464 = vld [vmem:[%s234 + $0x80] sm:$0xf]
      %v465 = vld [vmem:[%s234 + $0x84] sm:$0xff]
      %v466 = vld [vmem:[%s234 + $0x8c] sm:$0xff]
      %v467 = vld [vmem:[%s234 + $0x94] sm:$0xff]
      %v468 = vld [vmem:[%s234 + $0x9c] sm:$0xff]
      %v469 = vld [vmem:[%s234 + $0xa4] sm:$0xff]
      %v470 = vld [vmem:[%s234 + $0xac] sm:$0xf]
      %v471 = vld [vmem:[%s234 + $0xb0] sm:$0xff]
      %v472 = vld [vmem:[%s234 + $0xb8] sm:$0xff]
      %v473 = vld [vmem:[%s234 + $0xc0] sm:$0xff]
      %v474 = vld [vmem:[%s234 + $0xc8] sm:$0xff]
      %v475 = vld [vmem:[%s234 + $0xd0] sm:$0xff]
      %v476 = vld [vmem:[%s234 + $0xd8] sm:$0xf]
      %v477 = vld [vmem:[%s234 + $0xdc] sm:$0xff]
      %v478 = vld [vmem:[%s234 + $0xe4] sm:$0xff]
      %v479 = vld [vmem:[%s234 + $0xec] sm:$0xff]
      %v480 = vld [vmem:[%s234 + $0xf4] sm:$0xff]
      %v481 = vld [vmem:[%s234 + $0xfc] sm:$0xff]
      %v482 = vld [vmem:[%s234 + $0x104] sm:$0xf]
      %v483 = vld [vmem:[%s234 + $0x108] sm:$0xff]
      %v484 = vld [vmem:[%s234 + $0x110] sm:$0xff]
      %v485 = vld [vmem:[%s234 + $0x118] sm:$0xff]
      %v486 = vld [vmem:[%s234 + $0x120] sm:$0xff]
      %v487 = vld [vmem:[%s234 + $0x128] sm:$0xff]
      %v488 = vld [vmem:[%s234 + $0x130] sm:$0xf]
      %v489 = vld [vmem:[%s234 + $0x134] sm:$0xff]
      %v490 = vld [vmem:[%s234 + $0x13c] sm:$0xff]
      %v491 = vld [vmem:[%s234 + $0x144] sm:$0xff]
      %v492 = vld [vmem:[%s234 + $0x14c] sm:$0xff]
      %v493 = vld [vmem:[%s234 + $0x154] sm:$0xff]
      %v494 = vld [vmem:[%s234 + $0x15c] sm:$0xf]
      %v495 = vld [vmem:[%s234 + $0x160] sm:$0xff]
      %v496 = vld [vmem:[%s234 + $0x168] sm:$0xff]
      %v497 = vld [vmem:[%s234 + $0x170] sm:$0xff]
      %v498 = vld [vmem:[%s234 + $0x178] sm:$0xff]
      %v499 = vld [vmem:[%s234 + $0x180] sm:$0xff]
      %v500 = vld [vmem:[%s234 + $0x188] sm:$0xf]
      %v501 = vld [vmem:[%s234 + $0x18c] sm:$0xff]
      %v502 = vld [vmem:[%s234 + $0x194] sm:$0xff]
      %v503 = vld [vmem:[%s234 + $0x19c] sm:$0xff]
      %v504 = vld [vmem:[%s234 + $0x1a4] sm:$0xff]
      %v505 = vld [vmem:[%s234 + $0x1ac] sm:$0xff]
      %v506 = vld [vmem:[%s234 + $0x1b4] sm:$0xf]
      %v507 = vld [vmem:[%s234 + $0x1b8] sm:$0xff]
      %v508 = vld [vmem:[%s234 + $0x1c0] sm:$0xff]
      %v509 = vld [vmem:[%s234 + $0x1c8] sm:$0xff]
      %v510 = vld [vmem:[%s234 + $0x1d0] sm:$0xff]
      %v511 = vld [vmem:[%s234 + $0x1d8] sm:$0xff]
      %v512 = vld [vmem:[%s234 + $0x1e0] sm:$0xf]
      %v513 = vld [vmem:[%s234 + $0x1e4] sm:$0xff]
      %v514 = vld [vmem:[%s234 + $0x1ec] sm:$0xff]
      %v515 = vld [vmem:[%s234 + $0x1f4] sm:$0xff]
      %v516 = vld [vmem:[%s234 + $0x1fc] sm:$0xff]
      %v517 = vld [vmem:[%s234 + $0x204] sm:$0xff]
      %v518 = vld [vmem:[%s234 + $0x20c] sm:$0xf]
      %v519 = vld [vmem:[%s234 + $0x210] sm:$0xff]
      %v520 = vld [vmem:[%s234 + $0x218] sm:$0xff]
      %v521 = vld [vmem:[%s234 + $0x220] sm:$0xff]
      %v522 = vld [vmem:[%s234 + $0x228] sm:$0xff]
      %v523 = vld [vmem:[%s234 + $0x230] sm:$0xff]
      %v524 = vld [vmem:[%s234 + $0x238] sm:$0xf]
      %v525 = vld [vmem:[%s234 + $0x23c] sm:$0xff]
      %v526 = vld [vmem:[%s234 + $0x244] sm:$0xff]
      %v527 = vld [vmem:[%s234 + $0x24c] sm:$0xff]
      %v528 = vld [vmem:[%s234 + $0x254] sm:$0xff]
      %v529 = vld [vmem:[%s234 + $0x25c] sm:$0xff]
      %v530 = vld [vmem:[%s234 + $0x264] sm:$0xf]
      %v531 = vld [vmem:[%s234 + $0x268] sm:$0xff]
      %v532 = vld [vmem:[%s234 + $0x270] sm:$0xff]
      %v533 = vld [vmem:[%s234 + $0x278] sm:$0xff]
      %v534 = vld [vmem:[%s234 + $0x280] sm:$0xff]
      %v535 = vld [vmem:[%s234 + $0x288] sm:$0xff]
      %v536 = vld [vmem:[%s234 + $0x290] sm:$0xf]
      %v537 = vld [vmem:[%s234 + $0x294] sm:$0xff]
      %v538 = vld [vmem:[%s234 + $0x29c] sm:$0xff]
      %v539 = vld [vmem:[%s234 + $0x2a4] sm:$0xff]
      %v540 = vld [vmem:[%s234 + $0x2ac] sm:$0xff]
      %v541 = vld [vmem:[%s234 + $0x2b4] sm:$0xff]
      %v542 = vld [vmem:[%s234 + $0x2bc] sm:$0xf]
      %v543 = vld [vmem:[%s234 + $0x2c0] sm:$0xff]
      %v544 = vld [vmem:[%s234 + $0x2c8] sm:$0xff]
      %v545 = vld [vmem:[%s234 + $0x2d0] sm:$0xff]
      %v546 = vld [vmem:[%s234 + $0x2d8] sm:$0xff]
      %v547 = vld [vmem:[%s234 + $0x2e0] sm:$0xff]
      %v548 = vld [vmem:[%s234 + $0x2e8] sm:$0xf]
      %v549 = vld [vmem:[%s234 + $0x2ec] sm:$0xff]
      %v550 = vld [vmem:[%s234 + $0x2f4] sm:$0xff]
      %v551 = vld [vmem:[%s234 + $0x2fc] sm:$0xff]
      %v552 = vld [vmem:[%s234 + $0x304] sm:$0xff]
      %v553 = vld [vmem:[%s234 + $0x30c] sm:$0xff]
      %v554 = vld [vmem:[%s234 + $0x314] sm:$0xf]
      %v555 = vld [vmem:[%s234 + $0x318] sm:$0xff]
      %v556 = vld [vmem:[%s234 + $0x320] sm:$0xff]
      %v557 = vld [vmem:[%s234 + $0x328] sm:$0xff]
      %v558 = vld [vmem:[%s234 + $0x330] sm:$0xff]
      %v559 = vld [vmem:[%s234 + $0x338] sm:$0xff]
      %v560 = vld [vmem:[%s234 + $0x340] sm:$0xf]
      %v561 = vld [vmem:[%s234 + $0x344] sm:$0xff]
      %v562 = vld [vmem:[%s234 + $0x34c] sm:$0xff]
      %v563 = vld [vmem:[%s234 + $0x354] sm:$0xff]
      %v564 = vld [vmem:[%s234 + $0x35c] sm:$0xff]
      %v565 = vld [vmem:[%s234 + $0x364] sm:$0xff]
      %v566 = vld [vmem:[%s234 + $0x36c] sm:$0xf]
      %v567 = vld [vmem:[%s234 + $0x370] sm:$0xff]
      %v568 = vld [vmem:[%s234 + $0x378] sm:$0xff]
      %v569 = vld [vmem:[%s234 + $0x380] sm:$0xff]
      %v570 = vld [vmem:[%s234 + $0x388] sm:$0xff]
      %v571 = vld [vmem:[%s234 + $0x390] sm:$0xff]
      %v572 = vld [vmem:[%s234 + $0x398] sm:$0xf]
      %v573 = vld [vmem:[%s234 + $0x39c] sm:$0xff]
      %v574 = vld [vmem:[%s234 + $0x3a4] sm:$0xff]
      %v575 = vld [vmem:[%s234 + $0x3ac] sm:$0xff]
      %v576 = vld [vmem:[%s234 + $0x3b4] sm:$0xff]
      %v577 = vld [vmem:[%s234 + $0x3bc] sm:$0xff]
      %v578 = vld [vmem:[%s234 + $0x3c4] sm:$0xf]
      %v579 = vld [vmem:[%s234 + $0x3c8] sm:$0xff]
      %v580 = vld [vmem:[%s234 + $0x3d0] sm:$0xff]
      %v581 = vld [vmem:[%s234 + $0x3d8] sm:$0xff]
      %v582 = vld [vmem:[%s234 + $0x3e0] sm:$0xff]
      %v583 = vld [vmem:[%s234 + $0x3e8] sm:$0xff]
      %v584 = vld [vmem:[%s234 + $0x3f0] sm:$0xf]
      %v585 = vld [vmem:[%s234 + $0x3f4] sm:$0xff]
      %v586 = vld [vmem:[%s234 + $0x3fc] sm:$0xff]
      %v587 = vld [vmem:[%s234 + $0x404] sm:$0xff]
      %v588 = vld [vmem:[%s234 + $0x40c] sm:$0xff]
      %v589 = vld [vmem:[%s234 + $0x414] sm:$0xff]
      %v590 = vld [vmem:[%s234 + $0x41c] sm:$0xf]
      %v591 = vld [vmem:[%s234 + $0x420] sm:$0xff]
      %v592 = vld [vmem:[%s234 + $0x428] sm:$0xff]
      %v593 = vld [vmem:[%s234 + $0x430] sm:$0xff]
      %v594 = vld [vmem:[%s234 + $0x438] sm:$0xff]
      %v595 = vld [vmem:[%s234 + $0x440] sm:$0xff]
      %v596 = vld [vmem:[%s234 + $0x448] sm:$0xf]
      %v597 = vld [vmem:[%s234 + $0x44c] sm:$0xff]
      %v598 = vld [vmem:[%s234 + $0x454] sm:$0xff]
      %v599 = vld [vmem:[%s234 + $0x45c] sm:$0xff]
      %v600 = vld [vmem:[%s234 + $0x464] sm:$0xff]
      %v601 = vld [vmem:[%s234 + $0x46c] sm:$0xff]
      %v602 = vld [vmem:[%s234 + $0x474] sm:$0xf]
      %v603 = vld [vmem:[%s234 + $0x478] sm:$0xff]
      %v604 = vld [vmem:[%s234 + $0x480] sm:$0xff]
      %v605 = vld [vmem:[%s234 + $0x488] sm:$0xff]
      %v606 = vld [vmem:[%s234 + $0x490] sm:$0xff]
      %v607 = vld [vmem:[%s234 + $0x498] sm:$0xff]
      %v608 = vld [vmem:[%s234 + $0x4a0] sm:$0xf]
      %v609 = vld [vmem:[%s234 + $0x4a4] sm:$0xff]
      %v610 = vld [vmem:[%s234 + $0x4ac] sm:$0xff]
      %v611 = vld [vmem:[%s234 + $0x4b4] sm:$0xff]
      %v612 = vld [vmem:[%s234 + $0x4bc] sm:$0xff]
      %v613 = vld [vmem:[%s234 + $0x4c4] sm:$0xff]
      %v614 = vld [vmem:[%s234 + $0x4cc] sm:$0xf]
      %v615 = vld [vmem:[%s234 + $0x4d0] sm:$0xff]
      %v616 = vld [vmem:[%s234 + $0x4d8] sm:$0xff]
      %v617 = vld [vmem:[%s234 + $0x4e0] sm:$0xff]
      %v618 = vld [vmem:[%s234 + $0x4e8] sm:$0xff]
      %v619 = vld [vmem:[%s234 + $0x4f0] sm:$0xff]
      %v620 = vld [vmem:[%s234 + $0x4f8] sm:$0xf]
      %v621 = vld [vmem:[%s234 + $0x4fc] sm:$0xff]
      %v622 = vld [vmem:[%s234 + $0x504] sm:$0xff]
      %v623 = vld [vmem:[%s234 + $0x50c] sm:$0xff]
      %v624 = vld [vmem:[%s234 + $0x514] sm:$0xff]
      %v625 = vld [vmem:[%s234 + $0x51c] sm:$0xff]
      %v626 = vld [vmem:[%s234 + $0x524] sm:$0xf]
      %v627 = vld [vmem:[%s234 + $0x528] sm:$0xff]
      %v628 = vld [vmem:[%s234 + $0x530] sm:$0xff]
      %v629 = vld [vmem:[%s234 + $0x538] sm:$0xff]
      %v630 = vld [vmem:[%s234 + $0x540] sm:$0xff]
      %v631 = vld [vmem:[%s234 + $0x548] sm:$0xff]
      %v632 = vld [vmem:[%s234 + $0x550] sm:$0xf]
      %v633 = vld [vmem:[%s234 + $0x554] sm:$0xff]
      %v634 = vld [vmem:[%s234 + $0x55c] sm:$0xff]
      %v635 = vld [vmem:[%s234 + $0x564] sm:$0xff]
      %v636 = vld [vmem:[%s234 + $0x56c] sm:$0xff]
      %v637 = vld [vmem:[%s234 + $0x574] sm:$0xff]
      %v638 = vld [vmem:[%s234 + $0x57c] sm:$0xf]
      %v639 = vld [vmem:[%s234 + $0x580] sm:$0xff]
      %v640 = vld [vmem:[%s234 + $0x588] sm:$0xff]
      %v641 = vld [vmem:[%s234 + $0x590] sm:$0xff]
      %v642 = vld [vmem:[%s234 + $0x598] sm:$0xff]
      %v643 = vld [vmem:[%s234 + $0x5a0] sm:$0xff]
      %v644 = vld [vmem:[%s234 + $0x5a8] sm:$0xf]
      %v645 = vld [vmem:[%s234 + $0x5ac] sm:$0xff]
      %v646 = vld [vmem:[%s234 + $0x5b4] sm:$0xff]
      %v647 = vld [vmem:[%s234 + $0x5bc] sm:$0xff]
      %v648 = vld [vmem:[%s234 + $0x5c4] sm:$0xff]
      %v649 = vld [vmem:[%s234 + $0x5cc] sm:$0xff]
      %v650 = vld [vmem:[%s234 + $0x5d4] sm:$0xf]
      %v651 = vld [vmem:[%s234 + $0x5d8] sm:$0xff]
      %v652 = vld [vmem:[%s234 + $0x5e0] sm:$0xff]
      %v653 = vld [vmem:[%s234 + $0x5e8] sm:$0xff]
      %v654 = vld [vmem:[%s234 + $0x5f0] sm:$0xff]
      %v655 = vld [vmem:[%s234 + $0x5f8] sm:$0xff]
      %v656 = vld [vmem:[%s234 + $0x600] sm:$0xf]
      %v657 = vld [vmem:[%s234 + $0x604] sm:$0xff]
      %v658 = vld [vmem:[%s234 + $0x60c] sm:$0xff]
      %v659 = vld [vmem:[%s234 + $0x614] sm:$0xff]
      %v660 = vld [vmem:[%s234 + $0x61c] sm:$0xff]
      %v661 = vld [vmem:[%s234 + $0x624] sm:$0xff]
      %v662 = vld [vmem:[%s234 + $0x62c] sm:$0xf]
      %v663 = vld [vmem:[%s234 + $0x630] sm:$0xff]
      %v664 = vld [vmem:[%s234 + $0x638] sm:$0xff]
      %v665 = vld [vmem:[%s234 + $0x640] sm:$0xff]
      %v666 = vld [vmem:[%s234 + $0x648] sm:$0xff]
      %v667 = vld [vmem:[%s234 + $0x650] sm:$0xff]
      %v668 = vld [vmem:[%s234 + $0x658] sm:$0xf]
      %v669 = vld [vmem:[%s234 + $0x65c] sm:$0xff]
      %v670 = vld [vmem:[%s234 + $0x664] sm:$0xff]
      %v671 = vld [vmem:[%s234 + $0x66c] sm:$0xff]
      %v672 = vld [vmem:[%s234 + $0x674] sm:$0xff]
      %v673 = vld [vmem:[%s234 + $0x67c] sm:$0xff]
      %v674 = vld [vmem:[%s234 + $0x684] sm:$0xf]
      %v675 = vld [vmem:[%s234 + $0x688] sm:$0xff]
      %v676 = vld [vmem:[%s234 + $0x690] sm:$0xff]
      %v677 = vld [vmem:[%s234 + $0x698] sm:$0xff]
      %v678 = vld [vmem:[%s234 + $0x6a0] sm:$0xff]
      %v679 = vld [vmem:[%s234 + $0x6a8] sm:$0xff]
      %v680 = vld [vmem:[%s234 + $0x6b0] sm:$0xf]
      %v681 = vld [vmem:[%s234 + $0x6b4] sm:$0xff]
      %v682 = vld [vmem:[%s234 + $0x6bc] sm:$0xff]
      %v683 = vld [vmem:[%s234 + $0x6c4] sm:$0xff]
      %v684 = vld [vmem:[%s234 + $0x6cc] sm:$0xff]
      %v685 = vld [vmem:[%s234 + $0x6d4] sm:$0xff]
      %v686 = vld [vmem:[%s234 + $0x6dc] sm:$0xf]
      %v687 = vld [vmem:[%s234 + $0x6e0] sm:$0xff]
      %v688 = vld [vmem:[%s234 + $0x6e8] sm:$0xff]
      %v689 = vld [vmem:[%s234 + $0x6f0] sm:$0xff]
      %v690 = vld [vmem:[%s234 + $0x6f8] sm:$0xff]
      %v691 = vld [vmem:[%s234 + $0x700] sm:$0xff]
      %v692 = vld [vmem:[%s234 + $0x708] sm:$0xf]
      %v693 = vld [vmem:[%s234 + $0x70c] sm:$0xff]
      %v694 = vld [vmem:[%s234 + $0x714] sm:$0xff]
      %v695 = vld [vmem:[%s234 + $0x71c] sm:$0xff]
      %v696 = vld [vmem:[%s234 + $0x724] sm:$0xff]
      %v697 = vld [vmem:[%s234 + $0x72c] sm:$0xff]
      %v698 = vld [vmem:[%s234 + $0x734] sm:$0xf]
      %v699 = vld [vmem:[%s234 + $0x738] sm:$0xff]
      %v700 = vld [vmem:[%s234 + $0x740] sm:$0xff]
      %v701 = vld [vmem:[%s234 + $0x748] sm:$0xff]
      %v702 = vld [vmem:[%s234 + $0x750] sm:$0xff]
      %v703 = vld [vmem:[%s234 + $0x758] sm:$0xff]
      %v704 = vld [vmem:[%s234 + $0x760] sm:$0xf]
      %v705 = vld [vmem:[%s234 + $0x764] sm:$0xff]
      %v706 = vld [vmem:[%s234 + $0x76c] sm:$0xff]
      %v707 = vld [vmem:[%s234 + $0x774] sm:$0xff]
      %v708 = vld [vmem:[%s234 + $0x77c] sm:$0xff]
      %v709 = vld [vmem:[%s234 + $0x784] sm:$0xff]
      %v710 = vld [vmem:[%s234 + $0x78c] sm:$0xf]
      %v711 = vld [vmem:[%s234 + $0x790] sm:$0xff]
      %v712 = vld [vmem:[%s234 + $0x798] sm:$0xff]
      %v713 = vld [vmem:[%s234 + $0x7a0] sm:$0xff]
      %v714 = vld [vmem:[%s234 + $0x7a8] sm:$0xff]
      %v715 = vld [vmem:[%s234 + $0x7b0] sm:$0xff]
      %v716 = vld [vmem:[%s234 + $0x7b8] sm:$0xf]
      %v717 = vld [vmem:[%s234 + $0x7bc] sm:$0xff]
      %v718 = vld [vmem:[%s234 + $0x7c4] sm:$0xff]
      %v719 = vld [vmem:[%s234 + $0x7cc] sm:$0xff]
      %v720 = vld [vmem:[%s234 + $0x7d4] sm:$0xff]
      %v721 = vld [vmem:[%s234 + $0x7dc] sm:$0xff]
      %v722 = vld [vmem:[%s234 + $0x7e4] sm:$0xf]
      %v723 = vld [vmem:[%s234 + $0x7e8] sm:$0xff]
      %v724 = vld [vmem:[%s234 + $0x7f0] sm:$0xff]
      %v725 = vld [vmem:[%s234 + $0x7f8] sm:$0xff]
      %v726 = vld [vmem:[%s234 + $0x800] sm:$0xff]
      %v727 = vld [vmem:[%s234 + $0x808] sm:$0xff]
      %v728 = vld [vmem:[%s234 + $0x810] sm:$0xf]
      %v729 = vld [vmem:[%s234 + $0x814] sm:$0xff]
      %v730 = vld [vmem:[%s234 + $0x81c] sm:$0xff]
      %v731 = vld [vmem:[%s234 + $0x824] sm:$0xff]
      %v732 = vld [vmem:[%s234 + $0x82c] sm:$0xff]
      %v733 = vld [vmem:[%s234 + $0x834] sm:$0xff]
      %v734 = vld [vmem:[%s234 + $0x83c] sm:$0xf]
      %v735 = vld [vmem:[%s234 + $0x840] sm:$0xff]
      %v736 = vld [vmem:[%s234 + $0x848] sm:$0xff]
      %v737 = vld [vmem:[%s234 + $0x850] sm:$0xff]
      %v738 = vld [vmem:[%s234 + $0x858] sm:$0xff]
      %v739 = vld [vmem:[%s234 + $0x860] sm:$0xff]
      %v740 = vld [vmem:[%s234 + $0x868] sm:$0xf]
      %v741 = vld [vmem:[%s234 + $0x86c] sm:$0xff]
      %v742 = vld [vmem:[%s234 + $0x874] sm:$0xff]
      %v743 = vld [vmem:[%s234 + $0x87c] sm:$0xff]
      %v744 = vld [vmem:[%s234 + $0x884] sm:$0xff]
      %v745 = vld [vmem:[%s234 + $0x88c] sm:$0xff]
      %v746 = vld [vmem:[%s234 + $0x894] sm:$0xf]
      %v747 = vld [vmem:[%s234 + $0x898] sm:$0xff]
      %v748 = vld [vmem:[%s234 + $0x8a0] sm:$0xff]
      %v749 = vld [vmem:[%s234 + $0x8a8] sm:$0xff]
      %v750 = vld [vmem:[%s234 + $0x8b0] sm:$0xff]
      %v751 = vld [vmem:[%s234 + $0x8b8] sm:$0xff]
      %v752 = vld [vmem:[%s234 + $0x8c0] sm:$0xf]
      %v753 = vld [vmem:[%s234 + $0x8c4] sm:$0xff]
      %v754 = vld [vmem:[%s234 + $0x8cc] sm:$0xff]
      %v755 = vld [vmem:[%s234 + $0x8d4] sm:$0xff]
      %v756 = vld [vmem:[%s234 + $0x8dc] sm:$0xff]
      %v757 = vld [vmem:[%s234 + $0x8e4] sm:$0xff]
      %v758 = vld [vmem:[%s234 + $0x8ec] sm:$0xf]
      %v759 = vld [vmem:[%s234 + $0x8f0] sm:$0xff]
      %v760 = vld [vmem:[%s234 + $0x8f8] sm:$0xff]
      %v761 = vld [vmem:[%s234 + $0x900] sm:$0xff]
      %v762 = vld [vmem:[%s234 + $0x908] sm:$0xff]
      %v763 = vld [vmem:[%s234 + $0x910] sm:$0xff]
      %v764 = vld [vmem:[%s234 + $0x918] sm:$0xf]
      %v765 = vld [vmem:[%s234 + $0x91c] sm:$0xff]
      %v766 = vld [vmem:[%s234 + $0x924] sm:$0xff]
      %v767 = vld [vmem:[%s234 + $0x92c] sm:$0xff]
      %v768 = vld [vmem:[%s234 + $0x934] sm:$0xff]
      %v769 = vld [vmem:[%s234 + $0x93c] sm:$0xff]
      %v770 = vld [vmem:[%s234 + $0x944] sm:$0xf]
      %v771 = vld [vmem:[%s234 + $0x948] sm:$0xff]
      %v772 = vld [vmem:[%s234 + $0x950] sm:$0xff]
      %v773 = vld [vmem:[%s234 + $0x958] sm:$0xff]
      %v774 = vld [vmem:[%s234 + $0x960] sm:$0xff]
      %v775 = vld [vmem:[%s234 + $0x968] sm:$0xff]
      %v776 = vld [vmem:[%s234 + $0x970] sm:$0xf]
      %v777 = vld [vmem:[%s234 + $0x974] sm:$0xff]
      %v778 = vld [vmem:[%s234 + $0x97c] sm:$0xff]
      %v779 = vld [vmem:[%s234 + $0x984] sm:$0xff]
      %v780 = vld [vmem:[%s234 + $0x98c] sm:$0xff]
      %v781 = vld [vmem:[%s234 + $0x994] sm:$0xff]
      %v782 = vld [vmem:[%s234 + $0x99c] sm:$0xf]
      %v783 = vld [vmem:[%s234 + $0x9a0] sm:$0xff]
      %v784 = vld [vmem:[%s234 + $0x9a8] sm:$0xff]
      %v785 = vld [vmem:[%s234 + $0x9b0] sm:$0xff]
      %v786 = vld [vmem:[%s234 + $0x9b8] sm:$0xff]
      %v787 = vld [vmem:[%s234 + $0x9c0] sm:$0xff]
      %v788 = vld [vmem:[%s234 + $0x9c8] sm:$0xf]
      %v789 = vld [vmem:[%s234 + $0x9cc] sm:$0xff]
      %v790 = vld [vmem:[%s234 + $0x9d4] sm:$0xff]
      %v791 = vld [vmem:[%s234 + $0x9dc] sm:$0xff]
      %v792 = vld [vmem:[%s234 + $0x9e4] sm:$0xff]
      %v793 = vld [vmem:[%s234 + $0x9ec] sm:$0xff]
      %v794 = vld [vmem:[%s234 + $0x9f4] sm:$0xf]
      %v795 = vld [vmem:[%s234 + $0x9f8] sm:$0xff]
      %v796 = vld [vmem:[%s234 + $0xa00] sm:$0xff]
      %v797 = vld [vmem:[%s234 + $0xa08] sm:$0xff]
      %v798 = vld [vmem:[%s234 + $0xa10] sm:$0xff]
      %v799 = vld [vmem:[%s234 + $0xa18] sm:$0xff]
      %v800 = vld [vmem:[%s234 + $0xa20] sm:$0xf]
      %v801 = vld [vmem:[%s234 + $0xa24] sm:$0xff]
      %v802 = vld [vmem:[%s234 + $0xa2c] sm:$0xff]
      %v803 = vld [vmem:[%s234 + $0xa34] sm:$0xff]
      %v804 = vld [vmem:[%s234 + $0xa3c] sm:$0xff]
      %v805 = vld [vmem:[%s234 + $0xa44] sm:$0xff]
      %v806 = vld [vmem:[%s234 + $0xa4c] sm:$0xf]
      %v807 = vld [vmem:[%s234 + $0xa50] sm:$0xff]
      %v808 = vld [vmem:[%s234 + $0xa58] sm:$0xff]
      %v809 = vld [vmem:[%s234 + $0xa60] sm:$0xff]
      %v810 = vld [vmem:[%s234 + $0xa68] sm:$0xff]
      %v811 = vld [vmem:[%s234 + $0xa70] sm:$0xff]
      %v812 = vld [vmem:[%s234 + $0xa78] sm:$0xf]
      %v813 = vld [vmem:[%s234 + $0xa7c] sm:$0xff]
      %v814 = vld [vmem:[%s234 + $0xa84] sm:$0xff]
      %v815 = vld [vmem:[%s234 + $0xa8c] sm:$0xff]
      %v816 = vld [vmem:[%s234 + $0xa94] sm:$0xff]
      %v817 = vld [vmem:[%s234 + $0xa9c] sm:$0xff]
      %v818 = vld [vmem:[%s234 + $0xaa4] sm:$0xf]
      %v819 = vld [vmem:[%s234 + $0xaa8] sm:$0xff]
      %v820 = vld [vmem:[%s234 + $0xab0] sm:$0xff]
      %v821 = vld [vmem:[%s234 + $0xab8] sm:$0xff]
      %v822 = vld [vmem:[%s234 + $0xac0] sm:$0xff]
      %v823 = vld [vmem:[%s234 + $0xac8] sm:$0xff]
      %v824 = vld [vmem:[%s234 + $0xad0] sm:$0xf]
      %v825 = vld [vmem:[%s234 + $0xad4] sm:$0xff]
      %v826 = vld [vmem:[%s234 + $0xadc] sm:$0xff]
      %v827 = vld [vmem:[%s234 + $0xae4] sm:$0xff]
      %v828 = vld [vmem:[%s234 + $0xaec] sm:$0xff]
      %v829 = vld [vmem:[%s234 + $0xaf4] sm:$0xff]
      %v830 = vld [vmem:[%s234 + $0xafc] sm:$0xf]
      %v831 = vld [vmem:[%s241] sm:$0xf]
      %v832 = vld [vmem:[%s241 + $0x4] sm:$0xf]
      %v833 = vld [vmem:[%s241 + $0x8] sm:$0xf]
      %v834 = vld [vmem:[%s241 + $0xc] sm:$0xf]
      %v835 = vld [vmem:[%s241 + $0x10] sm:$0xf]
      %v836 = vld [vmem:[%s241 + $0x14] sm:$0xf]
      %v837 = vld [vmem:[%s241 + $0x18] sm:$0xf]
      %v838 = vld [vmem:[%s241 + $0x1c] sm:$0xf]
      %v839 = vld [vmem:[%s241 + $0x20] sm:$0xf]
      %v840 = vld [vmem:[%s241 + $0x24] sm:$0xf]
      %v841 = vld [vmem:[%s241 + $0x28] sm:$0xf]
      %v842 = vld [vmem:[%s241 + $0x2c] sm:$0xf]
      %v843 = vld [vmem:[%s241 + $0x30] sm:$0xf]
      %v844 = vld [vmem:[%s241 + $0x34] sm:$0xf]
      %v845 = vld [vmem:[%s241 + $0x38] sm:$0xf]
      %v846 = vld [vmem:[%s241 + $0x3c] sm:$0xf]
      %v847 = vld [vmem:[%s241 + $0x40] sm:$0xf]
      %v848 = vld [vmem:[%s241 + $0x44] sm:$0xf]
      %v849 = vld [vmem:[%s241 + $0x48] sm:$0xf]
      %v850 = vld [vmem:[%s241 + $0x4c] sm:$0xf]
      %v851 = vld [vmem:[%s241 + $0x50] sm:$0xf]
      %v852 = vld [vmem:[%s241 + $0x54] sm:$0xf]
      %v853 = vld [vmem:[%s241 + $0x58] sm:$0xf]
      %v854 = vld [vmem:[%s241 + $0x5c] sm:$0xf]
      %v855 = vld [vmem:[%s241 + $0x60] sm:$0xf]
      %v856 = vld [vmem:[%s241 + $0x64] sm:$0xf]
      %v857 = vld [vmem:[%s241 + $0x68] sm:$0xf]
      %v858 = vld [vmem:[%s241 + $0x6c] sm:$0xf]
      %v859 = vld [vmem:[%s241 + $0x70] sm:$0xf]
      %v860 = vld [vmem:[%s241 + $0x74] sm:$0xf]
      %v861 = vld [vmem:[%s241 + $0x78] sm:$0xf]
      %v862 = vld [vmem:[%s241 + $0x7c] sm:$0xf]
      %v863 = vld [vmem:[%s241 + $0x80] sm:$0xf]
      %v864 = vld [vmem:[%s241 + $0x84] sm:$0xf]
      %v865 = vld [vmem:[%s241 + $0x88] sm:$0xf]
      %v866 = vld [vmem:[%s241 + $0x8c] sm:$0xf]
      %v867 = vld [vmem:[%s241 + $0x90] sm:$0xf]
      %v868 = vld [vmem:[%s241 + $0x94] sm:$0xf]
      %v869 = vld [vmem:[%s241 + $0x98] sm:$0xf]
      %v870 = vld [vmem:[%s241 + $0x9c] sm:$0xf]
      %v871 = vld [vmem:[%s241 + $0xa0] sm:$0xf]
      %v872 = vld [vmem:[%s241 + $0xa4] sm:$0xf]
      %v873 = vld [vmem:[%s241 + $0xa8] sm:$0xf]
      %v874 = vld [vmem:[%s241 + $0xac] sm:$0xf]
      %v875 = vld [vmem:[%s241 + $0xb0] sm:$0xf]
      %v876 = vld [vmem:[%s241 + $0xb4] sm:$0xf]
      %v877 = vld [vmem:[%s241 + $0xb8] sm:$0xf]
      %v878 = vld [vmem:[%s241 + $0xbc] sm:$0xf]
      %v879 = vld [vmem:[%s241 + $0xc0] sm:$0xf]
      %v880 = vld [vmem:[%s241 + $0xc4] sm:$0xf]
      %v881 = vld [vmem:[%s241 + $0xc8] sm:$0xf]
      %v882 = vld [vmem:[%s241 + $0xcc] sm:$0xf]
      %v883 = vld [vmem:[%s241 + $0xd0] sm:$0xf]
      %v884 = vld [vmem:[%s241 + $0xd4] sm:$0xf]
      %v885 = vld [vmem:[%s241 + $0xd8] sm:$0xf]
      %v886 = vld [vmem:[%s241 + $0xdc] sm:$0xf]
      %v887 = vld [vmem:[%s241 + $0xe0] sm:$0xf]
      %v888 = vld [vmem:[%s241 + $0xe4] sm:$0xf]
      %v889 = vld [vmem:[%s241 + $0xe8] sm:$0xf]
      %v890 = vld [vmem:[%s241 + $0xec] sm:$0xf]
      %v891 = vld [vmem:[%s241 + $0xf0] sm:$0xf]
      %v892 = vld [vmem:[%s241 + $0xf4] sm:$0xf]
      %v893 = vld [vmem:[%s241 + $0xf8] sm:$0xf]
      %v894 = vld [vmem:[%s241 + $0xfc] sm:$0xf]
      %v895 = vld [vmem:[%s241 + $0x100] sm:$0xf]
      %v896 = vld [vmem:[%s241 + $0x104] sm:$0xf]
      %v897 = vld [vmem:[%s241 + $0x108] sm:$0xf]
      %v898 = vld [vmem:[%s241 + $0x10c] sm:$0xf]
      %v899 = vld [vmem:[%s241 + $0x110] sm:$0xf]
      %v900 = vld [vmem:[%s241 + $0x114] sm:$0xf]
      %v901 = vld [vmem:[%s241 + $0x118] sm:$0xf]
      %v902 = vld [vmem:[%s241 + $0x11c] sm:$0xf]
      %v903 = vld [vmem:[%s241 + $0x120] sm:$0xf]
      %v904 = vld [vmem:[%s241 + $0x124] sm:$0xf]
      %v905 = vld [vmem:[%s241 + $0x128] sm:$0xf]
      %v906 = vld [vmem:[%s241 + $0x12c] sm:$0xf]
      %v907 = vld [vmem:[%s241 + $0x130] sm:$0xf]
      %v908 = vld [vmem:[%s241 + $0x134] sm:$0xf]
      %v909 = vld [vmem:[%s241 + $0x138] sm:$0xf]
      %v910 = vld [vmem:[%s241 + $0x13c] sm:$0xf]
      %v911 = vld [vmem:[%s241 + $0x140] sm:$0xf]
      %v912 = vld [vmem:[%s241 + $0x144] sm:$0xf]
      %v913 = vld [vmem:[%s241 + $0x148] sm:$0xf]
      %v914 = vld [vmem:[%s241 + $0x14c] sm:$0xf]
      %v915 = vld [vmem:[%s241 + $0x150] sm:$0xf]
      %v916 = vld [vmem:[%s241 + $0x154] sm:$0xf]
      %v917 = vld [vmem:[%s241 + $0x158] sm:$0xf]
      %v918 = vld [vmem:[%s241 + $0x15c] sm:$0xf]
      %v919 = vld [vmem:[%s241 + $0x160] sm:$0xf]
      %v920 = vld [vmem:[%s241 + $0x164] sm:$0xf]
      %v921 = vld [vmem:[%s241 + $0x168] sm:$0xf]
      %v922 = vld [vmem:[%s241 + $0x16c] sm:$0xf]
      %v923 = vld [vmem:[%s241 + $0x170] sm:$0xf]
      %v924 = vld [vmem:[%s241 + $0x174] sm:$0xf]
      %v925 = vld [vmem:[%s241 + $0x178] sm:$0xf]
      %v926 = vld [vmem:[%s241 + $0x17c] sm:$0xf]
      %v927 = vld [vmem:[%s241 + $0x180] sm:$0xf]
      %v928 = vld [vmem:[%s241 + $0x184] sm:$0xf]
      %v929 = vld [vmem:[%s241 + $0x188] sm:$0xf]
      %v930 = vld [vmem:[%s241 + $0x18c] sm:$0xf]
      %v931 = vld [vmem:[%s241 + $0x190] sm:$0xf]
      %v932 = vld [vmem:[%s241 + $0x194] sm:$0xf]
      %v933 = vld [vmem:[%s241 + $0x198] sm:$0xf]
      %v934 = vld [vmem:[%s241 + $0x19c] sm:$0xf]
      %v935 = vld [vmem:[%s241 + $0x1a0] sm:$0xf]
      %v936 = vld [vmem:[%s241 + $0x1a4] sm:$0xf]
      %v937 = vld [vmem:[%s241 + $0x1a8] sm:$0xf]
      %v938 = vld [vmem:[%s241 + $0x1ac] sm:$0xf]
      %v939 = vld [vmem:[%s241 + $0x1b0] sm:$0xf]
      %v940 = vld [vmem:[%s241 + $0x1b4] sm:$0xf]
      %v941 = vld [vmem:[%s241 + $0x1b8] sm:$0xf]
      %v942 = vld [vmem:[%s241 + $0x1bc] sm:$0xf]
      %v943 = vld [vmem:[%s241 + $0x1c0] sm:$0xf]
      %v944 = vld [vmem:[%s241 + $0x1c4] sm:$0xf]
      %v945 = vld [vmem:[%s241 + $0x1c8] sm:$0xf]
      %v946 = vld [vmem:[%s241 + $0x1cc] sm:$0xf]
      %v947 = vld [vmem:[%s241 + $0x1d0] sm:$0xf]
      %v948 = vld [vmem:[%s241 + $0x1d4] sm:$0xf]
      %v949 = vld [vmem:[%s241 + $0x1d8] sm:$0xf]
      %v950 = vld [vmem:[%s241 + $0x1dc] sm:$0xf]
      %v951 = vld [vmem:[%s241 + $0x1e0] sm:$0xf]
      %v952 = vld [vmem:[%s241 + $0x1e4] sm:$0xf]
      %v953 = vld [vmem:[%s241 + $0x1e8] sm:$0xf]
      %v954 = vld [vmem:[%s241 + $0x1ec] sm:$0xf]
      %v955 = vld [vmem:[%s241 + $0x1f0] sm:$0xf]
      %v956 = vld [vmem:[%s241 + $0x1f4] sm:$0xf]
      %v957 = vld [vmem:[%s241 + $0x1f8] sm:$0xf]
      %v958 = vld [vmem:[%s241 + $0x1fc] sm:$0xf]
      %v959 = vld [vmem:[%s241 + $0x200] sm:$0xf]
      %v960 = vld [vmem:[%s241 + $0x204] sm:$0xf]
      %v961 = vld [vmem:[%s241 + $0x208] sm:$0xf]
      %v962 = vld [vmem:[%s241 + $0x20c] sm:$0xf]
      %v963 = vld [vmem:[%s241 + $0x210] sm:$0xf]
      %v964 = vld [vmem:[%s241 + $0x214] sm:$0xf]
      %v965 = vld [vmem:[%s241 + $0x218] sm:$0xf]
      %v966 = vld [vmem:[%s241 + $0x21c] sm:$0xf]
      %v967 = vld [vmem:[%s241 + $0x220] sm:$0xf]
      %v968 = vld [vmem:[%s241 + $0x224] sm:$0xf]
      %v969 = vld [vmem:[%s241 + $0x228] sm:$0xf]
      %v970 = vld [vmem:[%s241 + $0x22c] sm:$0xf]
      %v971 = vld [vmem:[%s241 + $0x230] sm:$0xf]
      %v972 = vld [vmem:[%s241 + $0x234] sm:$0xf]
      %v973 = vld [vmem:[%s241 + $0x238] sm:$0xf]
      %v974 = vld [vmem:[%s241 + $0x23c] sm:$0xf]
      %v975 = vld [vmem:[%s241 + $0x240] sm:$0xf]
      %v976 = vld [vmem:[%s241 + $0x244] sm:$0xf]
      %v977 = vld [vmem:[%s241 + $0x248] sm:$0xf]
      %v978 = vld [vmem:[%s241 + $0x24c] sm:$0xf]
      %v979 = vld [vmem:[%s241 + $0x250] sm:$0xf]
      %v980 = vld [vmem:[%s241 + $0x254] sm:$0xf]
      %v981 = vld [vmem:[%s241 + $0x258] sm:$0xf]
      %v982 = vld [vmem:[%s241 + $0x25c] sm:$0xf]
      %v983 = vld [vmem:[%s241 + $0x260] sm:$0xf]
      %v984 = vld [vmem:[%s241 + $0x264] sm:$0xf]
      %v985 = vld [vmem:[%s241 + $0x268] sm:$0xf]
      %v986 = vld [vmem:[%s241 + $0x26c] sm:$0xf]
      %v987 = vld [vmem:[%s241 + $0x270] sm:$0xf]
      %v988 = vld [vmem:[%s241 + $0x274] sm:$0xf]
      %v989 = vld [vmem:[%s241 + $0x278] sm:$0xf]
      %v990 = vld [vmem:[%s241 + $0x27c] sm:$0xf]
      %v991 = vld [vmem:[%s241 + $0x280] sm:$0xf]
      %v992 = vld [vmem:[%s241 + $0x284] sm:$0xf]
      %v993 = vld [vmem:[%s241 + $0x288] sm:$0xf]
      %v994 = vld [vmem:[%s241 + $0x28c] sm:$0xf]
      %v995 = vld [vmem:[%s241 + $0x290] sm:$0xf]
      %v996 = vld [vmem:[%s241 + $0x294] sm:$0xf]
      %v997 = vld [vmem:[%s241 + $0x298] sm:$0xf]
      %v998 = vld [vmem:[%s241 + $0x29c] sm:$0xf]
      %v999 = vld [vmem:[%s241 + $0x2a0] sm:$0xf]
      %v1000 = vld [vmem:[%s241 + $0x2a4] sm:$0xf]
      %v1001 = vld [vmem:[%s241 + $0x2a8] sm:$0xf]
      %v1002 = vld [vmem:[%s241 + $0x2ac] sm:$0xf]
      %v1003 = vld [vmem:[%s241 + $0x2b0] sm:$0xf]
      %v1004 = vld [vmem:[%s241 + $0x2b4] sm:$0xf]
      %v1005 = vld [vmem:[%s241 + $0x2b8] sm:$0xf]
      %v1006 = vld [vmem:[%s241 + $0x2bc] sm:$0xf]
      %v1391 = vunpack.c.l.b16 %v447
      %v1392 = vunpack.c.h.b16 %v447
      %v1393 = vunpack.c.l.b16 %v448
      %v1394 = vunpack.c.h.b16 %v448
      %v1395 = vunpack.c.l.b16 %v449
      %v1396 = vunpack.c.h.b16 %v449
      %v1397 = vunpack.c.l.b16 %v450
      %v1398 = vunpack.c.h.b16 %v450
      %v1399 = vunpack.c.l.b16 %v451
      %v1400 = vunpack.c.h.b16 %v451
      %v1401 = vunpack.c.l.b16 %v452
      %v1402 = vunpack.c.l.b16 %v453
      %v1403 = vunpack.c.h.b16 %v453
      %v1404 = vunpack.c.l.b16 %v454
      %v1405 = vunpack.c.h.b16 %v454
      %v1406 = vunpack.c.l.b16 %v455
      %v1407 = vunpack.c.h.b16 %v455
      %v1408 = vunpack.c.l.b16 %v456
      %v1409 = vunpack.c.h.b16 %v456
      %v1410 = vunpack.c.l.b16 %v457
      %v1411 = vunpack.c.h.b16 %v457
      %v1412 = vunpack.c.l.b16 %v458
      %v1413 = vunpack.c.l.b16 %v459
      %v1414 = vunpack.c.h.b16 %v459
      %v1415 = vunpack.c.l.b16 %v460
      %v1416 = vunpack.c.h.b16 %v460
      %v1417 = vunpack.c.l.b16 %v461
      %v1418 = vunpack.c.h.b16 %v461
      %v1419 = vunpack.c.l.b16 %v462
      %v1420 = vunpack.c.h.b16 %v462
      %v1421 = vunpack.c.l.b16 %v463
      %v1422 = vunpack.c.h.b16 %v463
      %v1423 = vunpack.c.l.b16 %v464
      %v1424 = vunpack.c.l.b16 %v465
      %v1425 = vunpack.c.h.b16 %v465
      %v1426 = vunpack.c.l.b16 %v466
      %v1427 = vunpack.c.h.b16 %v466
      %v1428 = vunpack.c.l.b16 %v467
      %v1429 = vunpack.c.h.b16 %v467
      %v1430 = vunpack.c.l.b16 %v468
      %v1431 = vunpack.c.h.b16 %v468
      %v1432 = vunpack.c.l.b16 %v469
      %v1433 = vunpack.c.h.b16 %v469
      %v1434 = vunpack.c.l.b16 %v470
      %v1435 = vunpack.c.l.b16 %v471
      %v1436 = vunpack.c.h.b16 %v471
      %v1437 = vunpack.c.l.b16 %v472
      %v1438 = vunpack.c.h.b16 %v472
      %v1439 = vunpack.c.l.b16 %v473
      %v1440 = vunpack.c.h.b16 %v473
      %v1441 = vunpack.c.l.b16 %v474
      %v1442 = vunpack.c.h.b16 %v474
      %v1443 = vunpack.c.l.b16 %v475
      %v1444 = vunpack.c.h.b16 %v475
      %v1445 = vunpack.c.l.b16 %v476
      %v1446 = vunpack.c.l.b16 %v477
      %v1447 = vunpack.c.h.b16 %v477
      %v1448 = vunpack.c.l.b16 %v478
      %v1449 = vunpack.c.h.b16 %v478
      %v1450 = vunpack.c.l.b16 %v479
      %v1451 = vunpack.c.h.b16 %v479
      %v1452 = vunpack.c.l.b16 %v480
      %v1453 = vunpack.c.h.b16 %v480
      %v1454 = vunpack.c.l.b16 %v481
      %v1455 = vunpack.c.h.b16 %v481
      %v1456 = vunpack.c.l.b16 %v482
      %v1457 = vunpack.c.l.b16 %v483
      %v1458 = vunpack.c.h.b16 %v483
      %v1459 = vunpack.c.l.b16 %v484
      %v1460 = vunpack.c.h.b16 %v484
      %v1461 = vunpack.c.l.b16 %v485
      %v1462 = vunpack.c.h.b16 %v485
      %v1463 = vunpack.c.l.b16 %v486
      %v1464 = vunpack.c.h.b16 %v486
      %v1465 = vunpack.c.l.b16 %v487
      %v1466 = vunpack.c.h.b16 %v487
      %v1467 = vunpack.c.l.b16 %v488
      %v1468 = vunpack.c.l.b16 %v489
      %v1469 = vunpack.c.h.b16 %v489
      %v1470 = vunpack.c.l.b16 %v490
      %v1471 = vunpack.c.h.b16 %v490
      %v1472 = vunpack.c.l.b16 %v491
      %v1473 = vunpack.c.h.b16 %v491
      %v1474 = vunpack.c.l.b16 %v492
      %v1475 = vunpack.c.h.b16 %v492
      %v1476 = vunpack.c.l.b16 %v493
      %v1477 = vunpack.c.h.b16 %v493
      %v1478 = vunpack.c.l.b16 %v494
      %v1479 = vunpack.c.l.b16 %v495
      %v1480 = vunpack.c.h.b16 %v495
      %v1481 = vunpack.c.l.b16 %v496
      %v1482 = vunpack.c.h.b16 %v496
      %v1483 = vunpack.c.l.b16 %v497
      %v1484 = vunpack.c.h.b16 %v497
      %v1485 = vunpack.c.l.b16 %v498
      %v1486 = vunpack.c.h.b16 %v498
      %v1487 = vunpack.c.l.b16 %v499
      %v1488 = vunpack.c.h.b16 %v499
      %v1489 = vunpack.c.l.b16 %v500
      %v1490 = vunpack.c.l.b16 %v501
      %v1491 = vunpack.c.h.b16 %v501
      %v1492 = vunpack.c.l.b16 %v502
      %v1493 = vunpack.c.h.b16 %v502
      %v1494 = vunpack.c.l.b16 %v503
      %v1495 = vunpack.c.h.b16 %v503
      %v1496 = vunpack.c.l.b16 %v504
      %v1497 = vunpack.c.h.b16 %v504
      %v1498 = vunpack.c.l.b16 %v505
      %v1499 = vunpack.c.h.b16 %v505
      %v1500 = vunpack.c.l.b16 %v506
      %v1501 = vunpack.c.l.b16 %v507
      %v1502 = vunpack.c.h.b16 %v507
      %v1503 = vunpack.c.l.b16 %v508
      %v1504 = vunpack.c.h.b16 %v508
      %v1505 = vunpack.c.l.b16 %v509
      %v1506 = vunpack.c.h.b16 %v509
      %v1507 = vunpack.c.l.b16 %v510
      %v1508 = vunpack.c.h.b16 %v510
      %v1509 = vunpack.c.l.b16 %v511
      %v1510 = vunpack.c.h.b16 %v511
      %v1511 = vunpack.c.l.b16 %v512
      %v1512 = vunpack.c.l.b16 %v513
      %v1513 = vunpack.c.h.b16 %v513
      %v1514 = vunpack.c.l.b16 %v514
      %v1515 = vunpack.c.h.b16 %v514
      %v1516 = vunpack.c.l.b16 %v515
      %v1517 = vunpack.c.h.b16 %v515
      %v1518 = vunpack.c.l.b16 %v516
      %v1519 = vunpack.c.h.b16 %v516
      %v1520 = vunpack.c.l.b16 %v517
      %v1521 = vunpack.c.h.b16 %v517
      %v1522 = vunpack.c.l.b16 %v518
      %v1523 = vunpack.c.l.b16 %v519
      %v1524 = vunpack.c.h.b16 %v519
      %v1525 = vunpack.c.l.b16 %v520
      %v1526 = vunpack.c.h.b16 %v520
      %v1527 = vunpack.c.l.b16 %v521
      %v1528 = vunpack.c.h.b16 %v521
      %v1529 = vunpack.c.l.b16 %v522
      %v1530 = vunpack.c.h.b16 %v522
      %v1531 = vunpack.c.l.b16 %v523
      %v1532 = vunpack.c.h.b16 %v523
      %v1533 = vunpack.c.l.b16 %v524
      %v1534 = vunpack.c.l.b16 %v525
      %v1535 = vunpack.c.h.b16 %v525
      %v1536 = vunpack.c.l.b16 %v526
      %v1537 = vunpack.c.h.b16 %v526
      %v1538 = vunpack.c.l.b16 %v527
      %v1539 = vunpack.c.h.b16 %v527
      %v1540 = vunpack.c.l.b16 %v528
      %v1541 = vunpack.c.h.b16 %v528
      %v1542 = vunpack.c.l.b16 %v529
      %v1543 = vunpack.c.h.b16 %v529
      %v1544 = vunpack.c.l.b16 %v530
      %v1545 = vunpack.c.l.b16 %v531
      %v1546 = vunpack.c.h.b16 %v531
      %v1547 = vunpack.c.l.b16 %v532
      %v1548 = vunpack.c.h.b16 %v532
      %v1549 = vunpack.c.l.b16 %v533
      %v1550 = vunpack.c.h.b16 %v533
      %v1551 = vunpack.c.l.b16 %v534
      %v1552 = vunpack.c.h.b16 %v534
      %v1553 = vunpack.c.l.b16 %v535
      %v1554 = vunpack.c.h.b16 %v535
      %v1555 = vunpack.c.l.b16 %v536
      %v1556 = vunpack.c.l.b16 %v537
      %v1557 = vunpack.c.h.b16 %v537
      %v1558 = vunpack.c.l.b16 %v538
      %v1559 = vunpack.c.h.b16 %v538
      %v1560 = vunpack.c.l.b16 %v539
      %v1561 = vunpack.c.h.b16 %v539
      %v1562 = vunpack.c.l.b16 %v540
      %v1563 = vunpack.c.h.b16 %v540
      %v1564 = vunpack.c.l.b16 %v541
      %v1565 = vunpack.c.h.b16 %v541
      %v1566 = vunpack.c.l.b16 %v542
      %v1567 = vunpack.c.l.b16 %v543
      %v1568 = vunpack.c.h.b16 %v543
      %v1569 = vunpack.c.l.b16 %v544
      %v1570 = vunpack.c.h.b16 %v544
      %v1571 = vunpack.c.l.b16 %v545
      %v1572 = vunpack.c.h.b16 %v545
      %v1573 = vunpack.c.l.b16 %v546
      %v1574 = vunpack.c.h.b16 %v546
      %v1575 = vunpack.c.l.b16 %v547
      %v1576 = vunpack.c.h.b16 %v547
      %v1577 = vunpack.c.l.b16 %v548
      %v1578 = vunpack.c.l.b16 %v549
      %v1579 = vunpack.c.h.b16 %v549
      %v1580 = vunpack.c.l.b16 %v550
      %v1581 = vunpack.c.h.b16 %v550
      %v1582 = vunpack.c.l.b16 %v551
      %v1583 = vunpack.c.h.b16 %v551
      %v1584 = vunpack.c.l.b16 %v552
      %v1585 = vunpack.c.h.b16 %v552
      %v1586 = vunpack.c.l.b16 %v553
      %v1587 = vunpack.c.h.b16 %v553
      %v1588 = vunpack.c.l.b16 %v554
      %v1589 = vunpack.c.l.b16 %v555
      %v1590 = vunpack.c.h.b16 %v555
      %v1591 = vunpack.c.l.b16 %v556
      %v1592 = vunpack.c.h.b16 %v556
      %v1593 = vunpack.c.l.b16 %v557
      %v1594 = vunpack.c.h.b16 %v557
      %v1595 = vunpack.c.l.b16 %v558
      %v1596 = vunpack.c.h.b16 %v558
      %v1597 = vunpack.c.l.b16 %v559
      %v1598 = vunpack.c.h.b16 %v559
      %v1599 = vunpack.c.l.b16 %v560
      %v1600 = vunpack.c.l.b16 %v561
      %v1601 = vunpack.c.h.b16 %v561
      %v1602 = vunpack.c.l.b16 %v562
      %v1603 = vunpack.c.h.b16 %v562
      %v1604 = vunpack.c.l.b16 %v563
      %v1605 = vunpack.c.h.b16 %v563
      %v1606 = vunpack.c.l.b16 %v564
      %v1607 = vunpack.c.h.b16 %v564
      %v1608 = vunpack.c.l.b16 %v565
      %v1609 = vunpack.c.h.b16 %v565
      %v1610 = vunpack.c.l.b16 %v566
      %v1611 = vunpack.c.l.b16 %v567
      %v1612 = vunpack.c.h.b16 %v567
      %v1613 = vunpack.c.l.b16 %v568
      %v1614 = vunpack.c.h.b16 %v568
      %v1615 = vunpack.c.l.b16 %v569
      %v1616 = vunpack.c.h.b16 %v569
      %v1617 = vunpack.c.l.b16 %v570
      %v1618 = vunpack.c.h.b16 %v570
      %v1619 = vunpack.c.l.b16 %v571
      %v1620 = vunpack.c.h.b16 %v571
      %v1621 = vunpack.c.l.b16 %v572
      %v1622 = vunpack.c.l.b16 %v573
      %v1623 = vunpack.c.h.b16 %v573
      %v1624 = vunpack.c.l.b16 %v574
      %v1625 = vunpack.c.h.b16 %v574
      %v1626 = vunpack.c.l.b16 %v575
      %v1627 = vunpack.c.h.b16 %v575
      %v1628 = vunpack.c.l.b16 %v576
      %v1629 = vunpack.c.h.b16 %v576
      %v1630 = vunpack.c.l.b16 %v577
      %v1631 = vunpack.c.h.b16 %v577
      %v1632 = vunpack.c.l.b16 %v578
      %v1633 = vunpack.c.l.b16 %v579
      %v1634 = vunpack.c.h.b16 %v579
      %v1635 = vunpack.c.l.b16 %v580
      %v1636 = vunpack.c.h.b16 %v580
      %v1637 = vunpack.c.l.b16 %v581
      %v1638 = vunpack.c.h.b16 %v581
      %v1639 = vunpack.c.l.b16 %v582
      %v1640 = vunpack.c.h.b16 %v582
      %v1641 = vunpack.c.l.b16 %v583
      %v1642 = vunpack.c.h.b16 %v583
      %v1643 = vunpack.c.l.b16 %v584
      %v1644 = vunpack.c.l.b16 %v585
      %v1645 = vunpack.c.h.b16 %v585
      %v1646 = vunpack.c.l.b16 %v586
      %v1647 = vunpack.c.h.b16 %v586
      %v1648 = vunpack.c.l.b16 %v587
      %v1649 = vunpack.c.h.b16 %v587
      %v1650 = vunpack.c.l.b16 %v588
      %v1651 = vunpack.c.h.b16 %v588
      %v1652 = vunpack.c.l.b16 %v589
      %v1653 = vunpack.c.h.b16 %v589
      %v1654 = vunpack.c.l.b16 %v590
      %v1655 = vunpack.c.l.b16 %v591
      %v1656 = vunpack.c.h.b16 %v591
      %v1657 = vunpack.c.l.b16 %v592
      %v1658 = vunpack.c.h.b16 %v592
      %v1659 = vunpack.c.l.b16 %v593
      %v1660 = vunpack.c.h.b16 %v593
      %v1661 = vunpack.c.l.b16 %v594
      %v1662 = vunpack.c.h.b16 %v594
      %v1663 = vunpack.c.l.b16 %v595
      %v1664 = vunpack.c.h.b16 %v595
      %v1665 = vunpack.c.l.b16 %v596
      %v1666 = vunpack.c.l.b16 %v597
      %v1667 = vunpack.c.h.b16 %v597
      %v1668 = vunpack.c.l.b16 %v598
      %v1669 = vunpack.c.h.b16 %v598
      %v1670 = vunpack.c.l.b16 %v599
      %v1671 = vunpack.c.h.b16 %v599
      %v1672 = vunpack.c.l.b16 %v600
      %v1673 = vunpack.c.h.b16 %v600
      %v1674 = vunpack.c.l.b16 %v601
      %v1675 = vunpack.c.h.b16 %v601
      %v1676 = vunpack.c.l.b16 %v602
      %v1677 = vunpack.c.l.b16 %v603
      %v1678 = vunpack.c.h.b16 %v603
      %v1679 = vunpack.c.l.b16 %v604
      %v1680 = vunpack.c.h.b16 %v604
      %v1681 = vunpack.c.l.b16 %v605
      %v1682 = vunpack.c.h.b16 %v605
      %v1683 = vunpack.c.l.b16 %v606
      %v1684 = vunpack.c.h.b16 %v606
      %v1685 = vunpack.c.l.b16 %v607
      %v1686 = vunpack.c.h.b16 %v607
      %v1687 = vunpack.c.l.b16 %v608
      %v1688 = vunpack.c.l.b16 %v609
      %v1689 = vunpack.c.h.b16 %v609
      %v1690 = vunpack.c.l.b16 %v610
      %v1691 = vunpack.c.h.b16 %v610
      %v1692 = vunpack.c.l.b16 %v611
      %v1693 = vunpack.c.h.b16 %v611
      %v1694 = vunpack.c.l.b16 %v612
      %v1695 = vunpack.c.h.b16 %v612
      %v1696 = vunpack.c.l.b16 %v613
      %v1697 = vunpack.c.h.b16 %v613
      %v1698 = vunpack.c.l.b16 %v614
      %v1699 = vunpack.c.l.b16 %v615
      %v1700 = vunpack.c.h.b16 %v615
      %v1701 = vunpack.c.l.b16 %v616
      %v1702 = vunpack.c.h.b16 %v616
      %v1703 = vunpack.c.l.b16 %v617
      %v1704 = vunpack.c.h.b16 %v617
      %v1705 = vunpack.c.l.b16 %v618
      %v1706 = vunpack.c.h.b16 %v618
      %v1707 = vunpack.c.l.b16 %v619
      %v1708 = vunpack.c.h.b16 %v619
      %v1709 = vunpack.c.l.b16 %v620
      %v1710 = vunpack.c.l.b16 %v621
      %v1711 = vunpack.c.h.b16 %v621
      %v1712 = vunpack.c.l.b16 %v622
      %v1713 = vunpack.c.h.b16 %v622
      %v1714 = vunpack.c.l.b16 %v623
      %v1715 = vunpack.c.h.b16 %v623
      %v1716 = vunpack.c.l.b16 %v624
      %v1717 = vunpack.c.h.b16 %v624
      %v1718 = vunpack.c.l.b16 %v625
      %v1719 = vunpack.c.h.b16 %v625
      %v1720 = vunpack.c.l.b16 %v626
      %v1721 = vunpack.c.l.b16 %v627
      %v1722 = vunpack.c.h.b16 %v627
      %v1723 = vunpack.c.l.b16 %v628
      %v1724 = vunpack.c.h.b16 %v628
      %v1725 = vunpack.c.l.b16 %v629
      %v1726 = vunpack.c.h.b16 %v629
      %v1727 = vunpack.c.l.b16 %v630
      %v1728 = vunpack.c.h.b16 %v630
      %v1729 = vunpack.c.l.b16 %v631
      %v1730 = vunpack.c.h.b16 %v631
      %v1731 = vunpack.c.l.b16 %v632
      %v1732 = vunpack.c.l.b16 %v633
      %v1733 = vunpack.c.h.b16 %v633
      %v1734 = vunpack.c.l.b16 %v634
      %v1735 = vunpack.c.h.b16 %v634
      %v1736 = vunpack.c.l.b16 %v635
      %v1737 = vunpack.c.h.b16 %v635
      %v1738 = vunpack.c.l.b16 %v636
      %v1739 = vunpack.c.h.b16 %v636
      %v1740 = vunpack.c.l.b16 %v637
      %v1741 = vunpack.c.h.b16 %v637
      %v1742 = vunpack.c.l.b16 %v638
      %v1743 = vunpack.c.l.b16 %v639
      %v1744 = vunpack.c.h.b16 %v639
      %v1745 = vunpack.c.l.b16 %v640
      %v1746 = vunpack.c.h.b16 %v640
      %v1747 = vunpack.c.l.b16 %v641
      %v1748 = vunpack.c.h.b16 %v641
      %v1749 = vunpack.c.l.b16 %v642
      %v1750 = vunpack.c.h.b16 %v642
      %v1751 = vunpack.c.l.b16 %v643
      %v1752 = vunpack.c.h.b16 %v643
      %v1753 = vunpack.c.l.b16 %v644
      %v1754 = vunpack.c.l.b16 %v645
      %v1755 = vunpack.c.h.b16 %v645
      %v1756 = vunpack.c.l.b16 %v646
      %v1757 = vunpack.c.h.b16 %v646
      %v1758 = vunpack.c.l.b16 %v647
      %v1759 = vunpack.c.h.b16 %v647
      %v1760 = vunpack.c.l.b16 %v648
      %v1761 = vunpack.c.h.b16 %v648
      %v1762 = vunpack.c.l.b16 %v649
      %v1763 = vunpack.c.h.b16 %v649
      %v1764 = vunpack.c.l.b16 %v650
      %v1765 = vunpack.c.l.b16 %v651
      %v1766 = vunpack.c.h.b16 %v651
      %v1767 = vunpack.c.l.b16 %v652
      %v1768 = vunpack.c.h.b16 %v652
      %v1769 = vunpack.c.l.b16 %v653
      %v1770 = vunpack.c.h.b16 %v653
      %v1771 = vunpack.c.l.b16 %v654
      %v1772 = vunpack.c.h.b16 %v654
      %v1773 = vunpack.c.l.b16 %v655
      %v1774 = vunpack.c.h.b16 %v655
      %v1775 = vunpack.c.l.b16 %v656
      %v1776 = vunpack.c.l.b16 %v657
      %v1777 = vunpack.c.h.b16 %v657
      %v1778 = vunpack.c.l.b16 %v658
      %v1779 = vunpack.c.h.b16 %v658
      %v1780 = vunpack.c.l.b16 %v659
      %v1781 = vunpack.c.h.b16 %v659
      %v1782 = vunpack.c.l.b16 %v660
      %v1783 = vunpack.c.h.b16 %v660
      %v1784 = vunpack.c.l.b16 %v661
      %v1785 = vunpack.c.h.b16 %v661
      %v1786 = vunpack.c.l.b16 %v662
      %v1787 = vunpack.c.l.b16 %v663
      %v1788 = vunpack.c.h.b16 %v663
      %v1789 = vunpack.c.l.b16 %v664
      %v1790 = vunpack.c.h.b16 %v664
      %v1791 = vunpack.c.l.b16 %v665
      %v1792 = vunpack.c.h.b16 %v665
      %v1793 = vunpack.c.l.b16 %v666
      %v1794 = vunpack.c.h.b16 %v666
      %v1795 = vunpack.c.l.b16 %v667
      %v1796 = vunpack.c.h.b16 %v667
      %v1797 = vunpack.c.l.b16 %v668
      %v1798 = vunpack.c.l.b16 %v669
      %v1799 = vunpack.c.h.b16 %v669
      %v1800 = vunpack.c.l.b16 %v670
      %v1801 = vunpack.c.h.b16 %v670
      %v1802 = vunpack.c.l.b16 %v671
      %v1803 = vunpack.c.h.b16 %v671
      %v1804 = vunpack.c.l.b16 %v672
      %v1805 = vunpack.c.h.b16 %v672
      %v1806 = vunpack.c.l.b16 %v673
      %v1807 = vunpack.c.h.b16 %v673
      %v1808 = vunpack.c.l.b16 %v674
      %v1809 = vunpack.c.l.b16 %v675
      %v1810 = vunpack.c.h.b16 %v675
      %v1811 = vunpack.c.l.b16 %v676
      %v1812 = vunpack.c.h.b16 %v676
      %v1813 = vunpack.c.l.b16 %v677
      %v1814 = vunpack.c.h.b16 %v677
      %v1815 = vunpack.c.l.b16 %v678
      %v1816 = vunpack.c.h.b16 %v678
      %v1817 = vunpack.c.l.b16 %v679
      %v1818 = vunpack.c.h.b16 %v679
      %v1819 = vunpack.c.l.b16 %v680
      %v1820 = vunpack.c.l.b16 %v681
      %v1821 = vunpack.c.h.b16 %v681
      %v1822 = vunpack.c.l.b16 %v682
      %v1823 = vunpack.c.h.b16 %v682
      %v1824 = vunpack.c.l.b16 %v683
      %v1825 = vunpack.c.h.b16 %v683
      %v1826 = vunpack.c.l.b16 %v684
      %v1827 = vunpack.c.h.b16 %v684
      %v1828 = vunpack.c.l.b16 %v685
      %v1829 = vunpack.c.h.b16 %v685
      %v1830 = vunpack.c.l.b16 %v686
      %v1831 = vunpack.c.l.b16 %v687
      %v1832 = vunpack.c.h.b16 %v687
      %v1833 = vunpack.c.l.b16 %v688
      %v1834 = vunpack.c.h.b16 %v688
      %v1835 = vunpack.c.l.b16 %v689
      %v1836 = vunpack.c.h.b16 %v689
      %v1837 = vunpack.c.l.b16 %v690
      %v1838 = vunpack.c.h.b16 %v690
      %v1839 = vunpack.c.l.b16 %v691
      %v1840 = vunpack.c.h.b16 %v691
      %v1841 = vunpack.c.l.b16 %v692
      %v1842 = vunpack.c.l.b16 %v693
      %v1843 = vunpack.c.h.b16 %v693
      %v1844 = vunpack.c.l.b16 %v694
      %v1845 = vunpack.c.h.b16 %v694
      %v1846 = vunpack.c.l.b16 %v695
      %v1847 = vunpack.c.h.b16 %v695
      %v1848 = vunpack.c.l.b16 %v696
      %v1849 = vunpack.c.h.b16 %v696
      %v1850 = vunpack.c.l.b16 %v697
      %v1851 = vunpack.c.h.b16 %v697
      %v1852 = vunpack.c.l.b16 %v698
      %v1853 = vunpack.c.l.b16 %v699
      %v1854 = vunpack.c.h.b16 %v699
      %v1855 = vunpack.c.l.b16 %v700
      %v1856 = vunpack.c.h.b16 %v700
      %v1857 = vunpack.c.l.b16 %v701
      %v1858 = vunpack.c.h.b16 %v701
      %v1859 = vunpack.c.l.b16 %v702
      %v1860 = vunpack.c.h.b16 %v702
      %v1861 = vunpack.c.l.b16 %v703
      %v1862 = vunpack.c.h.b16 %v703
      %v1863 = vunpack.c.l.b16 %v704
      %v1864 = vunpack.c.l.b16 %v705
      %v1865 = vunpack.c.h.b16 %v705
      %v1866 = vunpack.c.l.b16 %v706
      %v1867 = vunpack.c.h.b16 %v706
      %v1868 = vunpack.c.l.b16 %v707
      %v1869 = vunpack.c.h.b16 %v707
      %v1870 = vunpack.c.l.b16 %v708
      %v1871 = vunpack.c.h.b16 %v708
      %v1872 = vunpack.c.l.b16 %v709
      %v1873 = vunpack.c.h.b16 %v709
      %v1874 = vunpack.c.l.b16 %v710
      %v1875 = vunpack.c.l.b16 %v711
      %v1876 = vunpack.c.h.b16 %v711
      %v1877 = vunpack.c.l.b16 %v712
      %v1878 = vunpack.c.h.b16 %v712
      %v1879 = vunpack.c.l.b16 %v713
      %v1880 = vunpack.c.h.b16 %v713
      %v1881 = vunpack.c.l.b16 %v714
      %v1882 = vunpack.c.h.b16 %v714
      %v1883 = vunpack.c.l.b16 %v715
      %v1884 = vunpack.c.h.b16 %v715
      %v1885 = vunpack.c.l.b16 %v716
      %v1886 = vunpack.c.l.b16 %v717
      %v1887 = vunpack.c.h.b16 %v717
      %v1888 = vunpack.c.l.b16 %v718
      %v1889 = vunpack.c.h.b16 %v718
      %v1890 = vunpack.c.l.b16 %v719
      %v1891 = vunpack.c.h.b16 %v719
      %v1892 = vunpack.c.l.b16 %v720
      %v1893 = vunpack.c.h.b16 %v720
      %v1894 = vunpack.c.l.b16 %v721
      %v1895 = vunpack.c.h.b16 %v721
      %v1896 = vunpack.c.l.b16 %v722
      %v1897 = vunpack.c.l.b16 %v723
      %v1898 = vunpack.c.h.b16 %v723
      %v1899 = vunpack.c.l.b16 %v724
      %v1900 = vunpack.c.h.b16 %v724
      %v1901 = vunpack.c.l.b16 %v725
      %v1902 = vunpack.c.h.b16 %v725
      %v1903 = vunpack.c.l.b16 %v726
      %v1904 = vunpack.c.h.b16 %v726
      %v1905 = vunpack.c.l.b16 %v727
      %v1906 = vunpack.c.h.b16 %v727
      %v1907 = vunpack.c.l.b16 %v728
      %v1908 = vunpack.c.l.b16 %v729
      %v1909 = vunpack.c.h.b16 %v729
      %v1910 = vunpack.c.l.b16 %v730
      %v1911 = vunpack.c.h.b16 %v730
      %v1912 = vunpack.c.l.b16 %v731
      %v1913 = vunpack.c.h.b16 %v731
      %v1914 = vunpack.c.l.b16 %v732
      %v1915 = vunpack.c.h.b16 %v732
      %v1916 = vunpack.c.l.b16 %v733
      %v1917 = vunpack.c.h.b16 %v733
      %v1918 = vunpack.c.l.b16 %v734
      %v1919 = vunpack.c.l.b16 %v735
      %v1920 = vunpack.c.h.b16 %v735
      %v1921 = vunpack.c.l.b16 %v736
      %v1922 = vunpack.c.h.b16 %v736
      %v1923 = vunpack.c.l.b16 %v737
      %v1924 = vunpack.c.h.b16 %v737
      %v1925 = vunpack.c.l.b16 %v738
      %v1926 = vunpack.c.h.b16 %v738
      %v1927 = vunpack.c.l.b16 %v739
      %v1928 = vunpack.c.h.b16 %v739
      %v1929 = vunpack.c.l.b16 %v740
      %v1930 = vunpack.c.l.b16 %v741
      %v1931 = vunpack.c.h.b16 %v741
      %v1932 = vunpack.c.l.b16 %v742
      %v1933 = vunpack.c.h.b16 %v742
      %v1934 = vunpack.c.l.b16 %v743
      %v1935 = vunpack.c.h.b16 %v743
      %v1936 = vunpack.c.l.b16 %v744
      %v1937 = vunpack.c.h.b16 %v744
      %v1938 = vunpack.c.l.b16 %v745
      %v1939 = vunpack.c.h.b16 %v745
      %v1940 = vunpack.c.l.b16 %v746
      %v1941 = vunpack.c.l.b16 %v747
      %v1942 = vunpack.c.h.b16 %v747
      %v1943 = vunpack.c.l.b16 %v748
      %v1944 = vunpack.c.h.b16 %v748
      %v1945 = vunpack.c.l.b16 %v749
      %v1946 = vunpack.c.h.b16 %v749
      %v1947 = vunpack.c.l.b16 %v750
      %v1948 = vunpack.c.h.b16 %v750
      %v1949 = vunpack.c.l.b16 %v751
      %v1950 = vunpack.c.h.b16 %v751
      %v1951 = vunpack.c.l.b16 %v752
      %v1952 = vunpack.c.l.b16 %v753
      %v1953 = vunpack.c.h.b16 %v753
      %v1954 = vunpack.c.l.b16 %v754
      %v1955 = vunpack.c.h.b16 %v754
      %v1956 = vunpack.c.l.b16 %v755
      %v1957 = vunpack.c.h.b16 %v755
      %v1958 = vunpack.c.l.b16 %v756
      %v1959 = vunpack.c.h.b16 %v756
      %v1960 = vunpack.c.l.b16 %v757
      %v1961 = vunpack.c.h.b16 %v757
      %v1962 = vunpack.c.l.b16 %v758
      %v1963 = vunpack.c.l.b16 %v759
      %v1964 = vunpack.c.h.b16 %v759
      %v1965 = vunpack.c.l.b16 %v760
      %v1966 = vunpack.c.h.b16 %v760
      %v1967 = vunpack.c.l.b16 %v761
      %v1968 = vunpack.c.h.b16 %v761
      %v1969 = vunpack.c.l.b16 %v762
      %v1970 = vunpack.c.h.b16 %v762
      %v1971 = vunpack.c.l.b16 %v763
      %v1972 = vunpack.c.h.b16 %v763
      %v1973 = vunpack.c.l.b16 %v764
      %v1974 = vunpack.c.l.b16 %v765
      %v1975 = vunpack.c.h.b16 %v765
      %v1976 = vunpack.c.l.b16 %v766
      %v1977 = vunpack.c.h.b16 %v766
      %v1978 = vunpack.c.l.b16 %v767
      %v1979 = vunpack.c.h.b16 %v767
      %v1980 = vunpack.c.l.b16 %v768
      %v1981 = vunpack.c.h.b16 %v768
      %v1982 = vunpack.c.l.b16 %v769
      %v1983 = vunpack.c.h.b16 %v769
      %v1984 = vunpack.c.l.b16 %v770
      %v1985 = vunpack.c.l.b16 %v771
      %v1986 = vunpack.c.h.b16 %v771
      %v1987 = vunpack.c.l.b16 %v772
      %v1988 = vunpack.c.h.b16 %v772
      %v1989 = vunpack.c.l.b16 %v773
      %v1990 = vunpack.c.h.b16 %v773
      %v1991 = vunpack.c.l.b16 %v774
      %v1992 = vunpack.c.h.b16 %v774
      %v1993 = vunpack.c.l.b16 %v775
      %v1994 = vunpack.c.h.b16 %v775
      %v1995 = vunpack.c.l.b16 %v776
      %v1996 = vunpack.c.l.b16 %v777
      %v1997 = vunpack.c.h.b16 %v777
      %v1998 = vunpack.c.l.b16 %v778
      %v1999 = vunpack.c.h.b16 %v778
      %v2000 = vunpack.c.l.b16 %v779
      %v2001 = vunpack.c.h.b16 %v779
      %v2002 = vunpack.c.l.b16 %v780
      %v2003 = vunpack.c.h.b16 %v780
      %v2004 = vunpack.c.l.b16 %v781
      %v2005 = vunpack.c.h.b16 %v781
      %v2006 = vunpack.c.l.b16 %v782
      %v2007 = vunpack.c.l.b16 %v783
      %v2008 = vunpack.c.h.b16 %v783
      %v2009 = vunpack.c.l.b16 %v784
      %v2010 = vunpack.c.h.b16 %v784
      %v2011 = vunpack.c.l.b16 %v785
      %v2012 = vunpack.c.h.b16 %v785
      %v2013 = vunpack.c.l.b16 %v786
      %v2014 = vunpack.c.h.b16 %v786
      %v2015 = vunpack.c.l.b16 %v787
      %v2016 = vunpack.c.h.b16 %v787
      %v2017 = vunpack.c.l.b16 %v788
      %v2018 = vunpack.c.l.b16 %v789
      %v2019 = vunpack.c.h.b16 %v789
      %v2020 = vunpack.c.l.b16 %v790
      %v2021 = vunpack.c.h.b16 %v790
      %v2022 = vunpack.c.l.b16 %v791
      %v2023 = vunpack.c.h.b16 %v791
      %v2024 = vunpack.c.l.b16 %v792
      %v2025 = vunpack.c.h.b16 %v792
      %v2026 = vunpack.c.l.b16 %v793
      %v2027 = vunpack.c.h.b16 %v793
      %v2028 = vunpack.c.l.b16 %v794
      %v2029 = vunpack.c.l.b16 %v795
      %v2030 = vunpack.c.h.b16 %v795
      %v2031 = vunpack.c.l.b16 %v796
      %v2032 = vunpack.c.h.b16 %v796
      %v2033 = vunpack.c.l.b16 %v797
      %v2034 = vunpack.c.h.b16 %v797
      %v2035 = vunpack.c.l.b16 %v798
      %v2036 = vunpack.c.h.b16 %v798
      %v2037 = vunpack.c.l.b16 %v799
      %v2038 = vunpack.c.h.b16 %v799
      %v2039 = vunpack.c.l.b16 %v800
      %v2040 = vunpack.c.l.b16 %v801
      %v2041 = vunpack.c.h.b16 %v801
      %v2042 = vunpack.c.l.b16 %v802
      %v2043 = vunpack.c.h.b16 %v802
      %v2044 = vunpack.c.l.b16 %v803
      %v2045 = vunpack.c.h.b16 %v803
      %v2046 = vunpack.c.l.b16 %v804
      %v2047 = vunpack.c.h.b16 %v804
      %v2048 = vunpack.c.l.b16 %v805
      %v2049 = vunpack.c.h.b16 %v805
      %v2050 = vunpack.c.l.b16 %v806
      %v2051 = vunpack.c.l.b16 %v807
      %v2052 = vunpack.c.h.b16 %v807
      %v2053 = vunpack.c.l.b16 %v808
      %v2054 = vunpack.c.h.b16 %v808
      %v2055 = vunpack.c.l.b16 %v809
      %v2056 = vunpack.c.h.b16 %v809
      %v2057 = vunpack.c.l.b16 %v810
      %v2058 = vunpack.c.h.b16 %v810
      %v2059 = vunpack.c.l.b16 %v811
      %v2060 = vunpack.c.h.b16 %v811
      %v2061 = vunpack.c.l.b16 %v812
      %v2062 = vunpack.c.l.b16 %v813
      %v2063 = vunpack.c.h.b16 %v813
      %v2064 = vunpack.c.l.b16 %v814
      %v2065 = vunpack.c.h.b16 %v814
      %v2066 = vunpack.c.l.b16 %v815
      %v2067 = vunpack.c.h.b16 %v815
      %v2068 = vunpack.c.l.b16 %v816
      %v2069 = vunpack.c.h.b16 %v816
      %v2070 = vunpack.c.l.b16 %v817
      %v2071 = vunpack.c.h.b16 %v817
      %v2072 = vunpack.c.l.b16 %v818
      %v2073 = vunpack.c.l.b16 %v819
      %v2074 = vunpack.c.h.b16 %v819
      %v2075 = vunpack.c.l.b16 %v820
      %v2076 = vunpack.c.h.b16 %v820
      %v2077 = vunpack.c.l.b16 %v821
      %v2078 = vunpack.c.h.b16 %v821
      %v2079 = vunpack.c.l.b16 %v822
      %v2080 = vunpack.c.h.b16 %v822
      %v2081 = vunpack.c.l.b16 %v823
      %v2082 = vunpack.c.h.b16 %v823
      %v2083 = vunpack.c.l.b16 %v824
      %v2084 = vunpack.c.l.b16 %v825
      %v2085 = vunpack.c.h.b16 %v825
      %v2086 = vunpack.c.l.b16 %v826
      %v2087 = vunpack.c.h.b16 %v826
      %v2088 = vunpack.c.l.b16 %v827
      %v2089 = vunpack.c.h.b16 %v827
      %v2090 = vunpack.c.l.b16 %v828
      %v2091 = vunpack.c.h.b16 %v828
      %v2092 = vunpack.c.l.b16 %v829
      %v2093 = vunpack.c.h.b16 %v829
      %v2094 = vunpack.c.l.b16 %v830
      %v2095 = vpack.c.b16 %v1402, %v1391
      %v2096 = vpack.c.b16 %v1403, %v1392
      %v2097 = vpack.c.b16 %v1404, %v1393
      %v2098 = vpack.c.b16 %v1405, %v1394
      %v2099 = vpack.c.b16 %v1406, %v1395
      %v2100 = vpack.c.b16 %v1407, %v1396
      %v2101 = vpack.c.b16 %v1408, %v1397
      %v2102 = vpack.c.b16 %v1409, %v1398
      %v2103 = vpack.c.b16 %v1410, %v1399
      %v2104 = vpack.c.b16 %v1411, %v1400
      %v2105 = vpack.c.b16 %v1412, %v1401
      %v2106 = vpack.c.b16 %v1424, %v1413
      %v2107 = vpack.c.b16 %v1425, %v1414
      %v2108 = vpack.c.b16 %v1426, %v1415
      %v2109 = vpack.c.b16 %v1427, %v1416
      %v2110 = vpack.c.b16 %v1428, %v1417
      %v2111 = vpack.c.b16 %v1429, %v1418
      %v2112 = vpack.c.b16 %v1430, %v1419
      %v2113 = vpack.c.b16 %v1431, %v1420
      %v2114 = vpack.c.b16 %v1432, %v1421
      %v2115 = vpack.c.b16 %v1433, %v1422
      %v2116 = vpack.c.b16 %v1434, %v1423
      %v2117 = vpack.c.b16 %v1446, %v1435
      %v2118 = vpack.c.b16 %v1447, %v1436
      %v2119 = vpack.c.b16 %v1448, %v1437
      %v2120 = vpack.c.b16 %v1449, %v1438
      %v2121 = vpack.c.b16 %v1450, %v1439
      %v2122 = vpack.c.b16 %v1451, %v1440
      %v2123 = vpack.c.b16 %v1452, %v1441
      %v2124 = vpack.c.b16 %v1453, %v1442
      %v2125 = vpack.c.b16 %v1454, %v1443
      %v2126 = vpack.c.b16 %v1455, %v1444
      %v2127 = vpack.c.b16 %v1456, %v1445
      %v2128 = vpack.c.b16 %v1468, %v1457
      %v2129 = vpack.c.b16 %v1469, %v1458
      %v2130 = vpack.c.b16 %v1470, %v1459
      %v2131 = vpack.c.b16 %v1471, %v1460
      %v2132 = vpack.c.b16 %v1472, %v1461
      %v2133 = vpack.c.b16 %v1473, %v1462
      %v2134 = vpack.c.b16 %v1474, %v1463
      %v2135 = vpack.c.b16 %v1475, %v1464
      %v2136 = vpack.c.b16 %v1476, %v1465
      %v2137 = vpack.c.b16 %v1477, %v1466
      %v2138 = vpack.c.b16 %v1478, %v1467
      %v2139 = vpack.c.b16 %v1490, %v1479
      %v2140 = vpack.c.b16 %v1491, %v1480
      %v2141 = vpack.c.b16 %v1492, %v1481
      %v2142 = vpack.c.b16 %v1493, %v1482
      %v2143 = vpack.c.b16 %v1494, %v1483
      %v2144 = vpack.c.b16 %v1495, %v1484
      %v2145 = vpack.c.b16 %v1496, %v1485
      %v2146 = vpack.c.b16 %v1497, %v1486
      %v2147 = vpack.c.b16 %v1498, %v1487
      %v2148 = vpack.c.b16 %v1499, %v1488
      %v2149 = vpack.c.b16 %v1500, %v1489
      %v2150 = vpack.c.b16 %v1512, %v1501
      %v2151 = vpack.c.b16 %v1513, %v1502
      %v2152 = vpack.c.b16 %v1514, %v1503
      %v2153 = vpack.c.b16 %v1515, %v1504
      %v2154 = vpack.c.b16 %v1516, %v1505
      %v2155 = vpack.c.b16 %v1517, %v1506
      %v2156 = vpack.c.b16 %v1518, %v1507
      %v2157 = vpack.c.b16 %v1519, %v1508
      %v2158 = vpack.c.b16 %v1520, %v1509
      %v2159 = vpack.c.b16 %v1521, %v1510
      %v2160 = vpack.c.b16 %v1522, %v1511
      %v2161 = vpack.c.b16 %v1534, %v1523
      %v2162 = vpack.c.b16 %v1535, %v1524
      %v2163 = vpack.c.b16 %v1536, %v1525
      %v2164 = vpack.c.b16 %v1537, %v1526
      %v2165 = vpack.c.b16 %v1538, %v1527
      %v2166 = vpack.c.b16 %v1539, %v1528
      %v2167 = vpack.c.b16 %v1540, %v1529
      %v2168 = vpack.c.b16 %v1541, %v1530
      %v2169 = vpack.c.b16 %v1542, %v1531
      %v2170 = vpack.c.b16 %v1543, %v1532
      %v2171 = vpack.c.b16 %v1544, %v1533
      %v2172 = vpack.c.b16 %v1556, %v1545
      %v2173 = vpack.c.b16 %v1557, %v1546
      %v2174 = vpack.c.b16 %v1558, %v1547
      %v2175 = vpack.c.b16 %v1559, %v1548
      %v2176 = vpack.c.b16 %v1560, %v1549
      %v2177 = vpack.c.b16 %v1561, %v1550
      %v2178 = vpack.c.b16 %v1562, %v1551
      %v2179 = vpack.c.b16 %v1563, %v1552
      %v2180 = vpack.c.b16 %v1564, %v1553
      %v2181 = vpack.c.b16 %v1565, %v1554
      %v2182 = vpack.c.b16 %v1566, %v1555
      %v2183 = vpack.c.b16 %v1578, %v1567
      %v2184 = vpack.c.b16 %v1579, %v1568
      %v2185 = vpack.c.b16 %v1580, %v1569
      %v2186 = vpack.c.b16 %v1581, %v1570
      %v2187 = vpack.c.b16 %v1582, %v1571
      %v2188 = vpack.c.b16 %v1583, %v1572
      %v2189 = vpack.c.b16 %v1584, %v1573
      %v2190 = vpack.c.b16 %v1585, %v1574
      %v2191 = vpack.c.b16 %v1586, %v1575
      %v2192 = vpack.c.b16 %v1587, %v1576
      %v2193 = vpack.c.b16 %v1588, %v1577
      %v2194 = vpack.c.b16 %v1600, %v1589
      %v2195 = vpack.c.b16 %v1601, %v1590
      %v2196 = vpack.c.b16 %v1602, %v1591
      %v2197 = vpack.c.b16 %v1603, %v1592
      %v2198 = vpack.c.b16 %v1604, %v1593
      %v2199 = vpack.c.b16 %v1605, %v1594
      %v2200 = vpack.c.b16 %v1606, %v1595
      %v2201 = vpack.c.b16 %v1607, %v1596
      %v2202 = vpack.c.b16 %v1608, %v1597
      %v2203 = vpack.c.b16 %v1609, %v1598
      %v2204 = vpack.c.b16 %v1610, %v1599
      %v2205 = vpack.c.b16 %v1622, %v1611
      %v2206 = vpack.c.b16 %v1623, %v1612
      %v2207 = vpack.c.b16 %v1624, %v1613
      %v2208 = vpack.c.b16 %v1625, %v1614
      %v2209 = vpack.c.b16 %v1626, %v1615
      %v2210 = vpack.c.b16 %v1627, %v1616
      %v2211 = vpack.c.b16 %v1628, %v1617
      %v2212 = vpack.c.b16 %v1629, %v1618
      %v2213 = vpack.c.b16 %v1630, %v1619
      %v2214 = vpack.c.b16 %v1631, %v1620
      %v2215 = vpack.c.b16 %v1632, %v1621
      %v2216 = vpack.c.b16 %v1644, %v1633
      %v2217 = vpack.c.b16 %v1645, %v1634
      %v2218 = vpack.c.b16 %v1646, %v1635
      %v2219 = vpack.c.b16 %v1647, %v1636
      %v2220 = vpack.c.b16 %v1648, %v1637
      %v2221 = vpack.c.b16 %v1649, %v1638
      %v2222 = vpack.c.b16 %v1650, %v1639
      %v2223 = vpack.c.b16 %v1651, %v1640
      %v2224 = vpack.c.b16 %v1652, %v1641
      %v2225 = vpack.c.b16 %v1653, %v1642
      %v2226 = vpack.c.b16 %v1654, %v1643
      %v2227 = vpack.c.b16 %v1666, %v1655
      %v2228 = vpack.c.b16 %v1667, %v1656
      %v2229 = vpack.c.b16 %v1668, %v1657
      %v2230 = vpack.c.b16 %v1669, %v1658
      %v2231 = vpack.c.b16 %v1670, %v1659
      %v2232 = vpack.c.b16 %v1671, %v1660
      %v2233 = vpack.c.b16 %v1672, %v1661
      %v2234 = vpack.c.b16 %v1673, %v1662
      %v2235 = vpack.c.b16 %v1674, %v1663
      %v2236 = vpack.c.b16 %v1675, %v1664
      %v2237 = vpack.c.b16 %v1676, %v1665
      %v2238 = vpack.c.b16 %v1688, %v1677
      %v2239 = vpack.c.b16 %v1689, %v1678
      %v2240 = vpack.c.b16 %v1690, %v1679
      %v2241 = vpack.c.b16 %v1691, %v1680
      %v2242 = vpack.c.b16 %v1692, %v1681
      %v2243 = vpack.c.b16 %v1693, %v1682
      %v2244 = vpack.c.b16 %v1694, %v1683
      %v2245 = vpack.c.b16 %v1695, %v1684
      %v2246 = vpack.c.b16 %v1696, %v1685
      %v2247 = vpack.c.b16 %v1697, %v1686
      %v2248 = vpack.c.b16 %v1698, %v1687
      %v2249 = vpack.c.b16 %v1710, %v1699
      %v2250 = vpack.c.b16 %v1711, %v1700
      %v2251 = vpack.c.b16 %v1712, %v1701
      %v2252 = vpack.c.b16 %v1713, %v1702
      %v2253 = vpack.c.b16 %v1714, %v1703
      %v2254 = vpack.c.b16 %v1715, %v1704
      %v2255 = vpack.c.b16 %v1716, %v1705
      %v2256 = vpack.c.b16 %v1717, %v1706
      %v2257 = vpack.c.b16 %v1718, %v1707
      %v2258 = vpack.c.b16 %v1719, %v1708
      %v2259 = vpack.c.b16 %v1720, %v1709
      %v2260 = vpack.c.b16 %v1732, %v1721
      %v2261 = vpack.c.b16 %v1733, %v1722
      %v2262 = vpack.c.b16 %v1734, %v1723
      %v2263 = vpack.c.b16 %v1735, %v1724
      %v2264 = vpack.c.b16 %v1736, %v1725
      %v2265 = vpack.c.b16 %v1737, %v1726
      %v2266 = vpack.c.b16 %v1738, %v1727
      %v2267 = vpack.c.b16 %v1739, %v1728
      %v2268 = vpack.c.b16 %v1740, %v1729
      %v2269 = vpack.c.b16 %v1741, %v1730
      %v2270 = vpack.c.b16 %v1742, %v1731
      %v2271 = vpack.c.b16 %v1754, %v1743
      %v2272 = vpack.c.b16 %v1755, %v1744
      %v2273 = vpack.c.b16 %v1756, %v1745
      %v2274 = vpack.c.b16 %v1757, %v1746
      %v2275 = vpack.c.b16 %v1758, %v1747
      %v2276 = vpack.c.b16 %v1759, %v1748
      %v2277 = vpack.c.b16 %v1760, %v1749
      %v2278 = vpack.c.b16 %v1761, %v1750
      %v2279 = vpack.c.b16 %v1762, %v1751
      %v2280 = vpack.c.b16 %v1763, %v1752
      %v2281 = vpack.c.b16 %v1764, %v1753
      %v2282 = vpack.c.b16 %v1776, %v1765
      %v2283 = vpack.c.b16 %v1777, %v1766
      %v2284 = vpack.c.b16 %v1778, %v1767
      %v2285 = vpack.c.b16 %v1779, %v1768
      %v2286 = vpack.c.b16 %v1780, %v1769
      %v2287 = vpack.c.b16 %v1781, %v1770
      %v2288 = vpack.c.b16 %v1782, %v1771
      %v2289 = vpack.c.b16 %v1783, %v1772
      %v2290 = vpack.c.b16 %v1784, %v1773
      %v2291 = vpack.c.b16 %v1785, %v1774
      %v2292 = vpack.c.b16 %v1786, %v1775
      %v2293 = vpack.c.b16 %v1798, %v1787
      %v2294 = vpack.c.b16 %v1799, %v1788
      %v2295 = vpack.c.b16 %v1800, %v1789
      %v2296 = vpack.c.b16 %v1801, %v1790
      %v2297 = vpack.c.b16 %v1802, %v1791
      %v2298 = vpack.c.b16 %v1803, %v1792
      %v2299 = vpack.c.b16 %v1804, %v1793
      %v2300 = vpack.c.b16 %v1805, %v1794
      %v2301 = vpack.c.b16 %v1806, %v1795
      %v2302 = vpack.c.b16 %v1807, %v1796
      %v2303 = vpack.c.b16 %v1808, %v1797
      %v2304 = vpack.c.b16 %v1820, %v1809
      %v2305 = vpack.c.b16 %v1821, %v1810
      %v2306 = vpack.c.b16 %v1822, %v1811
      %v2307 = vpack.c.b16 %v1823, %v1812
      %v2308 = vpack.c.b16 %v1824, %v1813
      %v2309 = vpack.c.b16 %v1825, %v1814
      %v2310 = vpack.c.b16 %v1826, %v1815
      %v2311 = vpack.c.b16 %v1827, %v1816
      %v2312 = vpack.c.b16 %v1828, %v1817
      %v2313 = vpack.c.b16 %v1829, %v1818
      %v2314 = vpack.c.b16 %v1830, %v1819
      %v2315 = vpack.c.b16 %v1842, %v1831
      %v2316 = vpack.c.b16 %v1843, %v1832
      %v2317 = vpack.c.b16 %v1844, %v1833
      %v2318 = vpack.c.b16 %v1845, %v1834
      %v2319 = vpack.c.b16 %v1846, %v1835
      %v2320 = vpack.c.b16 %v1847, %v1836
      %v2321 = vpack.c.b16 %v1848, %v1837
      %v2322 = vpack.c.b16 %v1849, %v1838
      %v2323 = vpack.c.b16 %v1850, %v1839
      %v2324 = vpack.c.b16 %v1851, %v1840
      %v2325 = vpack.c.b16 %v1852, %v1841
      %v2326 = vpack.c.b16 %v1864, %v1853
      %v2327 = vpack.c.b16 %v1865, %v1854
      %v2328 = vpack.c.b16 %v1866, %v1855
      %v2329 = vpack.c.b16 %v1867, %v1856
      %v2330 = vpack.c.b16 %v1868, %v1857
      %v2331 = vpack.c.b16 %v1869, %v1858
      %v2332 = vpack.c.b16 %v1870, %v1859
      %v2333 = vpack.c.b16 %v1871, %v1860
      %v2334 = vpack.c.b16 %v1872, %v1861
      %v2335 = vpack.c.b16 %v1873, %v1862
      %v2336 = vpack.c.b16 %v1874, %v1863
      %v2337 = vpack.c.b16 %v1886, %v1875
      %v2338 = vpack.c.b16 %v1887, %v1876
      %v2339 = vpack.c.b16 %v1888, %v1877
      %v2340 = vpack.c.b16 %v1889, %v1878
      %v2341 = vpack.c.b16 %v1890, %v1879
      %v2342 = vpack.c.b16 %v1891, %v1880
      %v2343 = vpack.c.b16 %v1892, %v1881
      %v2344 = vpack.c.b16 %v1893, %v1882
      %v2345 = vpack.c.b16 %v1894, %v1883
      %v2346 = vpack.c.b16 %v1895, %v1884
      %v2347 = vpack.c.b16 %v1896, %v1885
      %v2348 = vpack.c.b16 %v1908, %v1897
      %v2349 = vpack.c.b16 %v1909, %v1898
      %v2350 = vpack.c.b16 %v1910, %v1899
      %v2351 = vpack.c.b16 %v1911, %v1900
      %v2352 = vpack.c.b16 %v1912, %v1901
      %v2353 = vpack.c.b16 %v1913, %v1902
      %v2354 = vpack.c.b16 %v1914, %v1903
      %v2355 = vpack.c.b16 %v1915, %v1904
      %v2356 = vpack.c.b16 %v1916, %v1905
      %v2357 = vpack.c.b16 %v1917, %v1906
      %v2358 = vpack.c.b16 %v1918, %v1907
      %v2359 = vpack.c.b16 %v1930, %v1919
      %v2360 = vpack.c.b16 %v1931, %v1920
      %v2361 = vpack.c.b16 %v1932, %v1921
      %v2362 = vpack.c.b16 %v1933, %v1922
      %v2363 = vpack.c.b16 %v1934, %v1923
      %v2364 = vpack.c.b16 %v1935, %v1924
      %v2365 = vpack.c.b16 %v1936, %v1925
      %v2366 = vpack.c.b16 %v1937, %v1926
      %v2367 = vpack.c.b16 %v1938, %v1927
      %v2368 = vpack.c.b16 %v1939, %v1928
      %v2369 = vpack.c.b16 %v1940, %v1929
      %v2370 = vpack.c.b16 %v1952, %v1941
      %v2371 = vpack.c.b16 %v1953, %v1942
      %v2372 = vpack.c.b16 %v1954, %v1943
      %v2373 = vpack.c.b16 %v1955, %v1944
      %v2374 = vpack.c.b16 %v1956, %v1945
      %v2375 = vpack.c.b16 %v1957, %v1946
      %v2376 = vpack.c.b16 %v1958, %v1947
      %v2377 = vpack.c.b16 %v1959, %v1948
      %v2378 = vpack.c.b16 %v1960, %v1949
      %v2379 = vpack.c.b16 %v1961, %v1950
      %v2380 = vpack.c.b16 %v1962, %v1951
      %v2381 = vpack.c.b16 %v1974, %v1963
      %v2382 = vpack.c.b16 %v1975, %v1964
      %v2383 = vpack.c.b16 %v1976, %v1965
      %v2384 = vpack.c.b16 %v1977, %v1966
      %v2385 = vpack.c.b16 %v1978, %v1967
      %v2386 = vpack.c.b16 %v1979, %v1968
      %v2387 = vpack.c.b16 %v1980, %v1969
      %v2388 = vpack.c.b16 %v1981, %v1970
      %v2389 = vpack.c.b16 %v1982, %v1971
      %v2390 = vpack.c.b16 %v1983, %v1972
      %v2391 = vpack.c.b16 %v1984, %v1973
      %v2392 = vpack.c.b16 %v1996, %v1985
      %v2393 = vpack.c.b16 %v1997, %v1986
      %v2394 = vpack.c.b16 %v1998, %v1987
      %v2395 = vpack.c.b16 %v1999, %v1988
      %v2396 = vpack.c.b16 %v2000, %v1989
      %v2397 = vpack.c.b16 %v2001, %v1990
      %v2398 = vpack.c.b16 %v2002, %v1991
      %v2399 = vpack.c.b16 %v2003, %v1992
      %v2400 = vpack.c.b16 %v2004, %v1993
      %v2401 = vpack.c.b16 %v2005, %v1994
      %v2402 = vpack.c.b16 %v2006, %v1995
      %v2403 = vpack.c.b16 %v2018, %v2007
      %v2404 = vpack.c.b16 %v2019, %v2008
      %v2405 = vpack.c.b16 %v2020, %v2009
      %v2406 = vpack.c.b16 %v2021, %v2010
      %v2407 = vpack.c.b16 %v2022, %v2011
      %v2408 = vpack.c.b16 %v2023, %v2012
      %v2409 = vpack.c.b16 %v2024, %v2013
      %v2410 = vpack.c.b16 %v2025, %v2014
      %v2411 = vpack.c.b16 %v2026, %v2015
      %v2412 = vpack.c.b16 %v2027, %v2016
      %v2413 = vpack.c.b16 %v2028, %v2017
      %v2414 = vpack.c.b16 %v2040, %v2029
      %v2415 = vpack.c.b16 %v2041, %v2030
      %v2416 = vpack.c.b16 %v2042, %v2031
      %v2417 = vpack.c.b16 %v2043, %v2032
      %v2418 = vpack.c.b16 %v2044, %v2033
      %v2419 = vpack.c.b16 %v2045, %v2034
      %v2420 = vpack.c.b16 %v2046, %v2035
      %v2421 = vpack.c.b16 %v2047, %v2036
      %v2422 = vpack.c.b16 %v2048, %v2037
      %v2423 = vpack.c.b16 %v2049, %v2038
      %v2424 = vpack.c.b16 %v2050, %v2039
      %v2425 = vpack.c.b16 %v2062, %v2051
      %v2426 = vpack.c.b16 %v2063, %v2052
      %v2427 = vpack.c.b16 %v2064, %v2053
      %v2428 = vpack.c.b16 %v2065, %v2054
      %v2429 = vpack.c.b16 %v2066, %v2055
      %v2430 = vpack.c.b16 %v2067, %v2056
      %v2431 = vpack.c.b16 %v2068, %v2057
      %v2432 = vpack.c.b16 %v2069, %v2058
      %v2433 = vpack.c.b16 %v2070, %v2059
      %v2434 = vpack.c.b16 %v2071, %v2060
      %v2435 = vpack.c.b16 %v2072, %v2061
      %v2436 = vpack.c.b16 %v2084, %v2073
      %v2437 = vpack.c.b16 %v2085, %v2074
      %v2438 = vpack.c.b16 %v2086, %v2075
      %v2439 = vpack.c.b16 %v2087, %v2076
      %v2440 = vpack.c.b16 %v2088, %v2077
      %v2441 = vpack.c.b16 %v2089, %v2078
      %v2442 = vpack.c.b16 %v2090, %v2079
      %v2443 = vpack.c.b16 %v2091, %v2080
      %v2444 = vpack.c.b16 %v2092, %v2081
      %v2445 = vpack.c.b16 %v2093, %v2082
      %v2446 = vpack.c.b16 %v2094, %v2083
      %v2975 = vunpack.c.l.b16 %v831
      %v2976 = vunpack.c.l.b16 %v832
      %v2977 = vunpack.c.l.b16 %v833
      %v2978 = vunpack.c.l.b16 %v834
      %v2979 = vunpack.c.l.b16 %v835
      %v2980 = vunpack.c.l.b16 %v836
      %v2981 = vunpack.c.l.b16 %v837
      %v2982 = vunpack.c.l.b16 %v838
      %v2983 = vunpack.c.l.b16 %v839
      %v2984 = vunpack.c.l.b16 %v840
      %v2985 = vunpack.c.l.b16 %v841
      %v2986 = vunpack.c.l.b16 %v842
      %v2987 = vunpack.c.l.b16 %v843
      %v2988 = vunpack.c.l.b16 %v844
      %v2989 = vunpack.c.l.b16 %v845
      %v2990 = vunpack.c.l.b16 %v846
      %v2991 = vunpack.c.l.b16 %v847
      %v2992 = vunpack.c.l.b16 %v848
      %v2993 = vunpack.c.l.b16 %v849
      %v2994 = vunpack.c.l.b16 %v850
      %v2995 = vunpack.c.l.b16 %v851
      %v2996 = vunpack.c.l.b16 %v852
      %v2997 = vunpack.c.l.b16 %v853
      %v2998 = vunpack.c.l.b16 %v854
      %v2999 = vunpack.c.l.b16 %v855
      %v3000 = vunpack.c.l.b16 %v856
      %v3001 = vunpack.c.l.b16 %v857
      %v3002 = vunpack.c.l.b16 %v858
      %v3003 = vunpack.c.l.b16 %v859
      %v3004 = vunpack.c.l.b16 %v860
      %v3005 = vunpack.c.l.b16 %v861
      %v3006 = vunpack.c.l.b16 %v862
      %v3007 = vunpack.c.l.b16 %v863
      %v3008 = vunpack.c.l.b16 %v864
      %v3009 = vunpack.c.l.b16 %v865
      %v3010 = vunpack.c.l.b16 %v866
      %v3011 = vunpack.c.l.b16 %v867
      %v3012 = vunpack.c.l.b16 %v868
      %v3013 = vunpack.c.l.b16 %v869
      %v3014 = vunpack.c.l.b16 %v870
      %v3015 = vunpack.c.l.b16 %v871
      %v3016 = vunpack.c.l.b16 %v872
      %v3017 = vunpack.c.l.b16 %v873
      %v3018 = vunpack.c.l.b16 %v874
      %v3019 = vunpack.c.l.b16 %v875
      %v3020 = vunpack.c.l.b16 %v876
      %v3021 = vunpack.c.l.b16 %v877
      %v3022 = vunpack.c.l.b16 %v878
      %v3023 = vunpack.c.l.b16 %v879
      %v3024 = vunpack.c.l.b16 %v880
      %v3025 = vunpack.c.l.b16 %v881
      %v3026 = vunpack.c.l.b16 %v882
      %v3027 = vunpack.c.l.b16 %v883
      %v3028 = vunpack.c.l.b16 %v884
      %v3029 = vunpack.c.l.b16 %v885
      %v3030 = vunpack.c.l.b16 %v886
      %v3031 = vunpack.c.l.b16 %v887
      %v3032 = vunpack.c.l.b16 %v888
      %v3033 = vunpack.c.l.b16 %v889
      %v3034 = vunpack.c.l.b16 %v890
      %v3035 = vunpack.c.l.b16 %v891
      %v3036 = vunpack.c.l.b16 %v892
      %v3037 = vunpack.c.l.b16 %v893
      %v3038 = vunpack.c.l.b16 %v894
      %v3039 = vunpack.c.l.b16 %v895
      %v3040 = vunpack.c.l.b16 %v896
      %v3041 = vunpack.c.l.b16 %v897
      %v3042 = vunpack.c.l.b16 %v898
      %v3043 = vunpack.c.l.b16 %v899
      %v3044 = vunpack.c.l.b16 %v900
      %v3045 = vunpack.c.l.b16 %v901
      %v3046 = vunpack.c.l.b16 %v902
      %v3047 = vunpack.c.l.b16 %v903
      %v3048 = vunpack.c.l.b16 %v904
      %v3049 = vunpack.c.l.b16 %v905
      %v3050 = vunpack.c.l.b16 %v906
      %v3051 = vunpack.c.l.b16 %v907
      %v3052 = vunpack.c.l.b16 %v908
      %v3053 = vunpack.c.l.b16 %v909
      %v3054 = vunpack.c.l.b16 %v910
      %v3055 = vunpack.c.l.b16 %v911
      %v3056 = vunpack.c.l.b16 %v912
      %v3057 = vunpack.c.l.b16 %v913
      %v3058 = vunpack.c.l.b16 %v914
      %v3059 = vunpack.c.l.b16 %v915
      %v3060 = vunpack.c.l.b16 %v916
      %v3061 = vunpack.c.l.b16 %v917
      %v3062 = vunpack.c.l.b16 %v918
      %v3063 = vunpack.c.l.b16 %v919
      %v3064 = vunpack.c.l.b16 %v920
      %v3065 = vunpack.c.l.b16 %v921
      %v3066 = vunpack.c.l.b16 %v922
      %v3067 = vunpack.c.l.b16 %v923
      %v3068 = vunpack.c.l.b16 %v924
      %v3069 = vunpack.c.l.b16 %v925
      %v3070 = vunpack.c.l.b16 %v926
      %v3071 = vunpack.c.l.b16 %v927
      %v3072 = vunpack.c.l.b16 %v928
      %v3073 = vunpack.c.l.b16 %v929
      %v3074 = vunpack.c.l.b16 %v930
      %v3075 = vunpack.c.l.b16 %v931
      %v3076 = vunpack.c.l.b16 %v932
      %v3077 = vunpack.c.l.b16 %v933
      %v3078 = vunpack.c.l.b16 %v934
      %v3079 = vunpack.c.l.b16 %v935
      %v3080 = vunpack.c.l.b16 %v936
      %v3081 = vunpack.c.l.b16 %v937
      %v3082 = vunpack.c.l.b16 %v938
      %v3083 = vunpack.c.l.b16 %v939
      %v3084 = vunpack.c.l.b16 %v940
      %v3085 = vunpack.c.l.b16 %v941
      %v3086 = vunpack.c.l.b16 %v942
      %v3087 = vunpack.c.l.b16 %v943
      %v3088 = vunpack.c.l.b16 %v944
      %v3089 = vunpack.c.l.b16 %v945
      %v3090 = vunpack.c.l.b16 %v946
      %v3091 = vunpack.c.l.b16 %v947
      %v3092 = vunpack.c.l.b16 %v948
      %v3093 = vunpack.c.l.b16 %v949
      %v3094 = vunpack.c.l.b16 %v950
      %v3095 = vunpack.c.l.b16 %v951
      %v3096 = vunpack.c.l.b16 %v952
      %v3097 = vunpack.c.l.b16 %v953
      %v3098 = vunpack.c.l.b16 %v954
      %v3099 = vunpack.c.l.b16 %v955
      %v3100 = vunpack.c.l.b16 %v956
      %v3101 = vunpack.c.l.b16 %v957
      %v3102 = vunpack.c.l.b16 %v958
      %v3103 = vunpack.c.l.b16 %v959
      %v3104 = vunpack.c.l.b16 %v960
      %v3105 = vunpack.c.l.b16 %v961
      %v3106 = vunpack.c.l.b16 %v962
      %v3107 = vunpack.c.l.b16 %v963
      %v3108 = vunpack.c.l.b16 %v964
      %v3109 = vunpack.c.l.b16 %v965
      %v3110 = vunpack.c.l.b16 %v966
      %v3111 = vunpack.c.l.b16 %v967
      %v3112 = vunpack.c.l.b16 %v968
      %v3113 = vunpack.c.l.b16 %v969
      %v3114 = vunpack.c.l.b16 %v970
      %v3115 = vunpack.c.l.b16 %v971
      %v3116 = vunpack.c.l.b16 %v972
      %v3117 = vunpack.c.l.b16 %v973
      %v3118 = vunpack.c.l.b16 %v974
      %v3119 = vunpack.c.l.b16 %v975
      %v3120 = vunpack.c.l.b16 %v976
      %v3121 = vunpack.c.l.b16 %v977
      %v3122 = vunpack.c.l.b16 %v978
      %v3123 = vunpack.c.l.b16 %v979
      %v3124 = vunpack.c.l.b16 %v980
      %v3125 = vunpack.c.l.b16 %v981
      %v3126 = vunpack.c.l.b16 %v982
      %v3127 = vunpack.c.l.b16 %v983
      %v3128 = vunpack.c.l.b16 %v984
      %v3129 = vunpack.c.l.b16 %v985
      %v3130 = vunpack.c.l.b16 %v986
      %v3131 = vunpack.c.l.b16 %v987
      %v3132 = vunpack.c.l.b16 %v988
      %v3133 = vunpack.c.l.b16 %v989
      %v3134 = vunpack.c.l.b16 %v990
      %v3135 = vunpack.c.l.b16 %v991
      %v3136 = vunpack.c.l.b16 %v992
      %v3137 = vunpack.c.l.b16 %v993
      %v3138 = vunpack.c.l.b16 %v994
      %v3139 = vunpack.c.l.b16 %v995
      %v3140 = vunpack.c.l.b16 %v996
      %v3141 = vunpack.c.l.b16 %v997
      %v3142 = vunpack.c.l.b16 %v998
      %v3143 = vunpack.c.l.b16 %v999
      %v3144 = vunpack.c.l.b16 %v1000
      %v3145 = vunpack.c.l.b16 %v1001
      %v3146 = vunpack.c.l.b16 %v1002
      %v3147 = vunpack.c.l.b16 %v1003
      %v3148 = vunpack.c.l.b16 %v1004
      %v3149 = vunpack.c.l.b16 %v1005
      %v3150 = vunpack.c.l.b16 %v1006
      %v3151 = vpack.c.b16 %v2976, %v2975
      %v3152 = vpack.c.b16 %v2978, %v2977
      %v3153 = vpack.c.b16 %v2980, %v2979
      %v3154 = vpack.c.b16 %v2982, %v2981
      %v3155 = vpack.c.b16 %v2984, %v2983
      %v3156 = vpack.c.b16 %v2986, %v2985
      %v3157 = vpack.c.b16 %v2988, %v2987
      %v3158 = vpack.c.b16 %v2990, %v2989
      %v3159 = vpack.c.b16 %v2992, %v2991
      %v3160 = vpack.c.b16 %v2994, %v2993
      %v3161 = vpack.c.b16 %v2996, %v2995
      %v3162 = vpack.c.b16 %v2998, %v2997
      %v3163 = vpack.c.b16 %v3000, %v2999
      %v3164 = vpack.c.b16 %v3002, %v3001
      %v3165 = vpack.c.b16 %v3004, %v3003
      %v3166 = vpack.c.b16 %v3006, %v3005
      %v3167 = vpack.c.b16 %v3008, %v3007
      %v3168 = vpack.c.b16 %v3010, %v3009
      %v3169 = vpack.c.b16 %v3012, %v3011
      %v3170 = vpack.c.b16 %v3014, %v3013
      %v3171 = vpack.c.b16 %v3016, %v3015
      %v3172 = vpack.c.b16 %v3018, %v3017
      %v3173 = vpack.c.b16 %v3020, %v3019
      %v3174 = vpack.c.b16 %v3022, %v3021
      %v3175 = vpack.c.b16 %v3024, %v3023
      %v3176 = vpack.c.b16 %v3026, %v3025
      %v3177 = vpack.c.b16 %v3028, %v3027
      %v3178 = vpack.c.b16 %v3030, %v3029
      %v3179 = vpack.c.b16 %v3032, %v3031
      %v3180 = vpack.c.b16 %v3034, %v3033
      %v3181 = vpack.c.b16 %v3036, %v3035
      %v3182 = vpack.c.b16 %v3038, %v3037
      %v3183 = vpack.c.b16 %v3040, %v3039
      %v3184 = vpack.c.b16 %v3042, %v3041
      %v3185 = vpack.c.b16 %v3044, %v3043
      %v3186 = vpack.c.b16 %v3046, %v3045
      %v3187 = vpack.c.b16 %v3048, %v3047
      %v3188 = vpack.c.b16 %v3050, %v3049
      %v3189 = vpack.c.b16 %v3052, %v3051
      %v3190 = vpack.c.b16 %v3054, %v3053
      %v3191 = vpack.c.b16 %v3056, %v3055
      %v3192 = vpack.c.b16 %v3058, %v3057
      %v3193 = vpack.c.b16 %v3060, %v3059
      %v3194 = vpack.c.b16 %v3062, %v3061
      %v3195 = vpack.c.b16 %v3064, %v3063
      %v3196 = vpack.c.b16 %v3066, %v3065
      %v3197 = vpack.c.b16 %v3068, %v3067
      %v3198 = vpack.c.b16 %v3070, %v3069
      %v3199 = vpack.c.b16 %v3072, %v3071
      %v3200 = vpack.c.b16 %v3074, %v3073
      %v3201 = vpack.c.b16 %v3076, %v3075
      %v3202 = vpack.c.b16 %v3078, %v3077
      %v3203 = vpack.c.b16 %v3080, %v3079
      %v3204 = vpack.c.b16 %v3082, %v3081
      %v3205 = vpack.c.b16 %v3084, %v3083
      %v3206 = vpack.c.b16 %v3086, %v3085
      %v3207 = vpack.c.b16 %v3088, %v3087
      %v3208 = vpack.c.b16 %v3090, %v3089
      %v3209 = vpack.c.b16 %v3092, %v3091
      %v3210 = vpack.c.b16 %v3094, %v3093
      %v3211 = vpack.c.b16 %v3096, %v3095
      %v3212 = vpack.c.b16 %v3098, %v3097
      %v3213 = vpack.c.b16 %v3100, %v3099
      %v3214 = vpack.c.b16 %v3102, %v3101
      %v3215 = vpack.c.b16 %v3104, %v3103
      %v3216 = vpack.c.b16 %v3106, %v3105
      %v3217 = vpack.c.b16 %v3108, %v3107
      %v3218 = vpack.c.b16 %v3110, %v3109
      %v3219 = vpack.c.b16 %v3112, %v3111
      %v3220 = vpack.c.b16 %v3114, %v3113
      %v3221 = vpack.c.b16 %v3116, %v3115
      %v3222 = vpack.c.b16 %v3118, %v3117
      %v3223 = vpack.c.b16 %v3120, %v3119
      %v3224 = vpack.c.b16 %v3122, %v3121
      %v3225 = vpack.c.b16 %v3124, %v3123
      %v3226 = vpack.c.b16 %v3126, %v3125
      %v3227 = vpack.c.b16 %v3128, %v3127
      %v3228 = vpack.c.b16 %v3130, %v3129
      %v3229 = vpack.c.b16 %v3132, %v3131
      %v3230 = vpack.c.b16 %v3134, %v3133
      %v3231 = vpack.c.b16 %v3136, %v3135
      %v3232 = vpack.c.b16 %v3138, %v3137
      %v3233 = vpack.c.b16 %v3140, %v3139
      %v3234 = vpack.c.b16 %v3142, %v3141
      %v3235 = vpack.c.b16 %v3144, %v3143
      %v3236 = vpack.c.b16 %v3146, %v3145
      %v3237 = vpack.c.b16 %v3148, %v3147
      %v3238 = vpack.c.b16 %v3150, %v3149
      %3327 = vmatprep.subr.bf16.mxu0 0
      %3328 = vmatpush1.bf16.msra.mxu0 %v3158
      %3329 = vmatprep.subr.bf16.mxu0 0
      %3330 = vmatpush1.bf16.msra.mxu0 %v3157
      %3331 = vmatprep.subr.bf16.mxu0 0
      %3332 = vmatpush1.bf16.msra.mxu0 %v3156
      %3333 = vmatprep.subr.bf16.mxu0 0
      %3334 = vmatpush1.bf16.msra.mxu0 %v3155
      %3335 = vmatprep.subr.bf16.mxu0 0
      %3336 = vmatpush1.bf16.msra.mxu0 %v3154
      %3337 = vmatprep.subr.bf16.mxu0 0
      %3338 = vmatpush1.bf16.msra.mxu0 %v3153
      %3339 = vmatprep.subr.bf16.mxu0 0
      %3340 = vmatpush1.bf16.msra.mxu0 %v3152
      %3341 = vmatprep.subr.bf16.mxu0 0
      %3342 = vmatpush1.bf16.msra.mxu0 %v3151
      %3343 = vmatprep.subr.bf16.mxu0 0
      %3344 = vmatpush2.bf16.msra.mxu0 %v3166
      %3345 = vmatprep.subr.bf16.mxu0 0
      %3346 = vmatpush2.bf16.msra.mxu0 %v3165
      %3347 = vmatprep.subr.bf16.mxu0 0
      %3348 = vmatpush2.bf16.msra.mxu0 %v3164
      %3349 = vmatprep.subr.bf16.mxu0 0
      %3350 = vmatpush2.bf16.msra.mxu0 %v3163
      %3351 = vmatprep.subr.bf16.mxu0 0
      %3352 = vmatpush2.bf16.msra.mxu0 %v3162
      %3353 = vmatprep.subr.bf16.mxu0 0
      %3354 = vmatpush2.bf16.msra.mxu0 %v3161
      %3355 = vmatprep.subr.bf16.mxu0 0
      %3356 = vmatpush2.bf16.msra.mxu0 %v3160
      %3357 = vmatprep.subr.bf16.mxu0 0
      %3358 = vmatpush2.bf16.msra.mxu0 %v3159
      %3359 = vmatprep.mubr.bf16.mxu0 %v2096
      %3360 = vmatmul.mubr.bf16.gmra.mxu0 %v2095
      %v3361 = vpop.f32.mrf.mxu0
      %v3362 = vadd.f32 0.0, %v3361
      %v3363 = vpop.f32.mrf.mxu0
      %v3364 = vpop.f32.mrf.mxu0
      %v3365 = vadd.f32 0.0, %v3364
      %v3366 = vpop.f32.mrf.mxu0
      %3367 = vmatprep.mubr.bf16.mxu0 %v2107
      %3368 = vmatmul.mubr.bf16.gmra.mxu0 %v2106
      %v3369 = vpop.f32.mrf.mxu0
      %v3370 = vadd.f32 0.0, %v3369
      %v3371 = vpop.f32.mrf.mxu0
      %v3372 = vpop.f32.mrf.mxu0
      %v3373 = vadd.f32 0.0, %v3372
      %v3374 = vpop.f32.mrf.mxu0
      %3375 = vmatprep.mubr.bf16.mxu0 %v2118
      %3376 = vmatmul.mubr.bf16.gmra.mxu0 %v2117
      %v3377 = vpop.f32.mrf.mxu0
      %v3378 = vadd.f32 0.0, %v3377
      %v3379 = vpop.f32.mrf.mxu0
      %v3380 = vpop.f32.mrf.mxu0
      %v3381 = vadd.f32 0.0, %v3380
      %v3382 = vpop.f32.mrf.mxu0
      %3383 = vmatprep.mubr.bf16.mxu0 %v2129
      %3384 = vmatmul.mubr.bf16.gmra.mxu0 %v2128
      %v3385 = vpop.f32.mrf.mxu0
      %v3386 = vadd.f32 0.0, %v3385
      %v3387 = vpop.f32.mrf.mxu0
      %v3388 = vpop.f32.mrf.mxu0
      %v3389 = vadd.f32 0.0, %v3388
      %v3390 = vpop.f32.mrf.mxu0
      %3391 = vmatprep.mubr.bf16.mxu0 %v2140
      %3392 = vmatmul.mubr.bf16.gmra.mxu0 %v2139
      %v3393 = vpop.f32.mrf.mxu0
      %v3394 = vadd.f32 0.0, %v3393
      %v3395 = vpop.f32.mrf.mxu0
      %v3396 = vpop.f32.mrf.mxu0
      %v3397 = vadd.f32 0.0, %v3396
      %v3398 = vpop.f32.mrf.mxu0
      %3399 = vmatprep.mubr.bf16.mxu0 %v2151
      %3400 = vmatmul.mubr.bf16.gmra.mxu0 %v2150
      %v3401 = vpop.f32.mrf.mxu0
      %v3402 = vadd.f32 0.0, %v3401
      %v3403 = vpop.f32.mrf.mxu0
      %v3404 = vpop.f32.mrf.mxu0
      %v3405 = vadd.f32 0.0, %v3404
      %v3406 = vpop.f32.mrf.mxu0
      %3407 = vmatprep.mubr.bf16.mxu0 %v2162
      %3408 = vmatmul.mubr.bf16.gmra.mxu0 %v2161
      %v3409 = vpop.f32.mrf.mxu0
      %v3410 = vadd.f32 0.0, %v3409
      %v3411 = vpop.f32.mrf.mxu0
      %v3412 = vpop.f32.mrf.mxu0
      %v3413 = vadd.f32 0.0, %v3412
      %v3414 = vpop.f32.mrf.mxu0
      %3415 = vmatprep.mubr.bf16.mxu0 %v2173
      %3416 = vmatmul.mubr.bf16.gmra.mxu0 %v2172
      %v3417 = vpop.f32.mrf.mxu0
      %v3418 = vadd.f32 0.0, %v3417
      %v3419 = vpop.f32.mrf.mxu0
      %v3420 = vpop.f32.mrf.mxu0
      %v3421 = vadd.f32 0.0, %v3420
      %v3422 = vpop.f32.mrf.mxu0
      %3423 = vmatprep.mubr.bf16.mxu0 %v2184
      %3424 = vmatmul.mubr.bf16.gmra.mxu0 %v2183
      %v3425 = vpop.f32.mrf.mxu0
      %v3426 = vadd.f32 0.0, %v3425
      %v3427 = vpop.f32.mrf.mxu0
      %v3428 = vpop.f32.mrf.mxu0
      %v3429 = vadd.f32 0.0, %v3428
      %v3430 = vpop.f32.mrf.mxu0
      %3431 = vmatprep.mubr.bf16.mxu0 %v2195
      %3432 = vmatmul.mubr.bf16.gmra.mxu0 %v2194
      %v3433 = vpop.f32.mrf.mxu0
      %v3434 = vadd.f32 0.0, %v3433
      %v3435 = vpop.f32.mrf.mxu0
      %v3436 = vpop.f32.mrf.mxu0
      %v3437 = vadd.f32 0.0, %v3436
      %v3438 = vpop.f32.mrf.mxu0
      %3439 = vmatprep.mubr.bf16.mxu0 %v2206
      %3440 = vmatmul.mubr.bf16.gmra.mxu0 %v2205
      %v3441 = vpop.f32.mrf.mxu0
      %v3442 = vadd.f32 0.0, %v3441
      %v3443 = vpop.f32.mrf.mxu0
      %v3444 = vpop.f32.mrf.mxu0
      %v3445 = vadd.f32 0.0, %v3444
      %v3446 = vpop.f32.mrf.mxu0
      %3447 = vmatprep.mubr.bf16.mxu0 %v2217
      %3448 = vmatmul.mubr.bf16.gmra.mxu0 %v2216
      %v3449 = vpop.f32.mrf.mxu0
      %v3450 = vadd.f32 0.0, %v3449
      %v3451 = vpop.f32.mrf.mxu0
      %v3452 = vpop.f32.mrf.mxu0
      %v3453 = vadd.f32 0.0, %v3452
      %v3454 = vpop.f32.mrf.mxu0
      %3455 = vmatprep.mubr.bf16.mxu0 %v2228
      %3456 = vmatmul.mubr.bf16.gmra.mxu0 %v2227
      %v3457 = vpop.f32.mrf.mxu0
      %v3458 = vadd.f32 0.0, %v3457
      %v3459 = vpop.f32.mrf.mxu0
      %v3460 = vpop.f32.mrf.mxu0
      %v3461 = vadd.f32 0.0, %v3460
      %v3462 = vpop.f32.mrf.mxu0
      %3463 = vmatprep.mubr.bf16.mxu0 %v2239
      %3464 = vmatmul.mubr.bf16.gmra.mxu0 %v2238
      %v3465 = vpop.f32.mrf.mxu0
      %v3466 = vadd.f32 0.0, %v3465
      %v3467 = vpop.f32.mrf.mxu0
      %v3468 = vpop.f32.mrf.mxu0
      %v3469 = vadd.f32 0.0, %v3468
      %v3470 = vpop.f32.mrf.mxu0
      %3471 = vmatprep.mubr.bf16.mxu0 %v2250
      %3472 = vmatmul.mubr.bf16.gmra.mxu0 %v2249
      %v3473 = vpop.f32.mrf.mxu0
      %v3474 = vadd.f32 0.0, %v3473
      %v3475 = vpop.f32.mrf.mxu0
      %v3476 = vpop.f32.mrf.mxu0
      %v3477 = vadd.f32 0.0, %v3476
      %v3478 = vpop.f32.mrf.mxu0
      %3479 = vmatprep.mubr.bf16.mxu0 %v2261
      %3480 = vmatmul.mubr.bf16.gmra.mxu0 %v2260
      %v3481 = vpop.f32.mrf.mxu0
      %v3482 = vadd.f32 0.0, %v3481
      %v3483 = vpop.f32.mrf.mxu0
      %v3484 = vpop.f32.mrf.mxu0
      %v3485 = vadd.f32 0.0, %v3484
      %v3486 = vpop.f32.mrf.mxu0
      %3487 = vmatprep.mubr.bf16.mxu0 %v2272
      %3488 = vmatmul.mubr.bf16.gmra.mxu0 %v2271
      %v3489 = vpop.f32.mrf.mxu0
      %v3490 = vadd.f32 0.0, %v3489
      %v3491 = vpop.f32.mrf.mxu0
      %v3492 = vpop.f32.mrf.mxu0
      %v3493 = vadd.f32 0.0, %v3492
      %v3494 = vpop.f32.mrf.mxu0
      %3495 = vmatprep.mubr.bf16.mxu0 %v2283
      %3496 = vmatmul.mubr.bf16.gmra.mxu0 %v2282
      %v3497 = vpop.f32.mrf.mxu0
      %v3498 = vadd.f32 0.0, %v3497
      %v3499 = vpop.f32.mrf.mxu0
      %v3500 = vpop.f32.mrf.mxu0
      %v3501 = vadd.f32 0.0, %v3500
      %v3502 = vpop.f32.mrf.mxu0
      %3503 = vmatprep.mubr.bf16.mxu0 %v2294
      %3504 = vmatmul.mubr.bf16.gmra.mxu0 %v2293
      %v3505 = vpop.f32.mrf.mxu0
      %v3506 = vadd.f32 0.0, %v3505
      %v3507 = vpop.f32.mrf.mxu0
      %v3508 = vpop.f32.mrf.mxu0
      %v3509 = vadd.f32 0.0, %v3508
      %v3510 = vpop.f32.mrf.mxu0
      %3511 = vmatprep.mubr.bf16.mxu0 %v2305
      %3512 = vmatmul.mubr.bf16.gmra.mxu0 %v2304
      %v3513 = vpop.f32.mrf.mxu0
      %v3514 = vadd.f32 0.0, %v3513
      %v3515 = vpop.f32.mrf.mxu0
      %v3516 = vpop.f32.mrf.mxu0
      %v3517 = vadd.f32 0.0, %v3516
      %v3518 = vpop.f32.mrf.mxu0
      %3519 = vmatprep.mubr.bf16.mxu0 %v2316
      %3520 = vmatmul.mubr.bf16.gmra.mxu0 %v2315
      %v3521 = vpop.f32.mrf.mxu0
      %v3522 = vadd.f32 0.0, %v3521
      %v3523 = vpop.f32.mrf.mxu0
      %v3524 = vpop.f32.mrf.mxu0
      %v3525 = vadd.f32 0.0, %v3524
      %v3526 = vpop.f32.mrf.mxu0
      %3527 = vmatprep.mubr.bf16.mxu0 %v2327
      %3528 = vmatmul.mubr.bf16.gmra.mxu0 %v2326
      %v3529 = vpop.f32.mrf.mxu0
      %v3530 = vadd.f32 0.0, %v3529
      %v3531 = vpop.f32.mrf.mxu0
      %v3532 = vpop.f32.mrf.mxu0
      %v3533 = vadd.f32 0.0, %v3532
      %v3534 = vpop.f32.mrf.mxu0
      %3535 = vmatprep.mubr.bf16.mxu0 %v2338
      %3536 = vmatmul.mubr.bf16.gmra.mxu0 %v2337
      %v3537 = vpop.f32.mrf.mxu0
      %v3538 = vadd.f32 0.0, %v3537
      %v3539 = vpop.f32.mrf.mxu0
      %v3540 = vpop.f32.mrf.mxu0
      %v3541 = vadd.f32 0.0, %v3540
      %v3542 = vpop.f32.mrf.mxu0
      %3543 = vmatprep.mubr.bf16.mxu0 %v2349
      %3544 = vmatmul.mubr.bf16.gmra.mxu0 %v2348
      %v3545 = vpop.f32.mrf.mxu0
      %v3546 = vadd.f32 0.0, %v3545
      %v3547 = vpop.f32.mrf.mxu0
      %v3548 = vpop.f32.mrf.mxu0
      %v3549 = vadd.f32 0.0, %v3548
      %v3550 = vpop.f32.mrf.mxu0
      %3551 = vmatprep.mubr.bf16.mxu0 %v2360
      %3552 = vmatmul.mubr.bf16.gmra.mxu0 %v2359
      %v3553 = vpop.f32.mrf.mxu0
      %v3554 = vadd.f32 0.0, %v3553
      %v3555 = vpop.f32.mrf.mxu0
      %v3556 = vpop.f32.mrf.mxu0
      %v3557 = vadd.f32 0.0, %v3556
      %v3558 = vpop.f32.mrf.mxu0
      %3559 = vmatprep.mubr.bf16.mxu0 %v2371
      %3560 = vmatmul.mubr.bf16.gmra.mxu0 %v2370
      %v3561 = vpop.f32.mrf.mxu0
      %v3562 = vadd.f32 0.0, %v3561
      %v3563 = vpop.f32.mrf.mxu0
      %v3564 = vpop.f32.mrf.mxu0
      %v3565 = vadd.f32 0.0, %v3564
      %v3566 = vpop.f32.mrf.mxu0
      %3567 = vmatprep.mubr.bf16.mxu0 %v2382
      %3568 = vmatmul.mubr.bf16.gmra.mxu0 %v2381
      %v3569 = vpop.f32.mrf.mxu0
      %v3570 = vadd.f32 0.0, %v3569
      %v3571 = vpop.f32.mrf.mxu0
      %v3572 = vpop.f32.mrf.mxu0
      %v3573 = vadd.f32 0.0, %v3572
      %v3574 = vpop.f32.mrf.mxu0
      %3575 = vmatprep.mubr.bf16.mxu0 %v2393
      %3576 = vmatmul.mubr.bf16.gmra.mxu0 %v2392
      %v3577 = vpop.f32.mrf.mxu0
      %v3578 = vadd.f32 0.0, %v3577
      %v3579 = vpop.f32.mrf.mxu0
      %v3580 = vpop.f32.mrf.mxu0
      %v3581 = vadd.f32 0.0, %v3580
      %v3582 = vpop.f32.mrf.mxu0
      %3583 = vmatprep.mubr.bf16.mxu0 %v2404
      %3584 = vmatmul.mubr.bf16.gmra.mxu0 %v2403
      %v3585 = vpop.f32.mrf.mxu0
      %v3586 = vadd.f32 0.0, %v3585
      %v3587 = vpop.f32.mrf.mxu0
      %v3588 = vpop.f32.mrf.mxu0
      %v3589 = vadd.f32 0.0, %v3588
      %v3590 = vpop.f32.mrf.mxu0
      %3591 = vmatprep.mubr.bf16.mxu0 %v2415
      %3592 = vmatmul.mubr.bf16.gmra.mxu0 %v2414
      %v3593 = vpop.f32.mrf.mxu0
      %v3594 = vadd.f32 0.0, %v3593
      %v3595 = vpop.f32.mrf.mxu0
      %v3596 = vpop.f32.mrf.mxu0
      %v3597 = vadd.f32 0.0, %v3596
      %v3598 = vpop.f32.mrf.mxu0
      %3599 = vmatprep.mubr.bf16.mxu0 %v2426
      %3600 = vmatmul.mubr.bf16.gmra.mxu0 %v2425
      %v3601 = vpop.f32.mrf.mxu0
      %v3602 = vadd.f32 0.0, %v3601
      %v3603 = vpop.f32.mrf.mxu0
      %v3604 = vpop.f32.mrf.mxu0
      %v3605 = vadd.f32 0.0, %v3604
      %v3606 = vpop.f32.mrf.mxu0
      %3607 = vmatprep.mubr.bf16.mxu0 %v2437
      %3608 = vmatmul.mubr.bf16.gmra.mxu0 %v2436
      %v3609 = vpop.f32.mrf.mxu0
      %v3610 = vadd.f32 0.0, %v3609
      %v3611 = vpop.f32.mrf.mxu0
      %v3612 = vpop.f32.mrf.mxu0
      %v3613 = vadd.f32 0.0, %v3612
      %v3614 = vpop.f32.mrf.mxu0
      %3615 = vdwg.mxu0
      %3616 = vmatprep.subr.bf16.mxu0 0
      %3617 = vmatpush1.bf16.msra.mxu0 %v3174
      %3618 = vmatprep.subr.bf16.mxu0 0
      %3619 = vmatpush1.bf16.msra.mxu0 %v3173
      %3620 = vmatprep.subr.bf16.mxu0 0
      %3621 = vmatpush1.bf16.msra.mxu0 %v3172
      %3622 = vmatprep.subr.bf16.mxu0 0
      %3623 = vmatpush1.bf16.msra.mxu0 %v3171
      %3624 = vmatprep.subr.bf16.mxu0 0
      %3625 = vmatpush1.bf16.msra.mxu0 %v3170
      %3626 = vmatprep.subr.bf16.mxu0 0
      %3627 = vmatpush1.bf16.msra.mxu0 %v3169
      %3628 = vmatprep.subr.bf16.mxu0 0
      %3629 = vmatpush1.bf16.msra.mxu0 %v3168
      %3630 = vmatprep.subr.bf16.mxu0 0
      %3631 = vmatpush1.bf16.msra.mxu0 %v3167
      %3632 = vmatprep.subr.bf16.mxu0 0
      %3633 = vmatpush2.bf16.msra.mxu0 %v3182
      %3634 = vmatprep.subr.bf16.mxu0 0
      %3635 = vmatpush2.bf16.msra.mxu0 %v3181
      %3636 = vmatprep.subr.bf16.mxu0 0
      %3637 = vmatpush2.bf16.msra.mxu0 %v3180
      %3638 = vmatprep.subr.bf16.mxu0 0
      %3639 = vmatpush2.bf16.msra.mxu0 %v3179
      %3640 = vmatprep.subr.bf16.mxu0 0
      %3641 = vmatpush2.bf16.msra.mxu0 %v3178
      %3642 = vmatprep.subr.bf16.mxu0 0
      %3643 = vmatpush2.bf16.msra.mxu0 %v3177
      %3644 = vmatprep.subr.bf16.mxu0 0
      %3645 = vmatpush2.bf16.msra.mxu0 %v3176
      %3646 = vmatprep.subr.bf16.mxu0 0
      %3647 = vmatpush2.bf16.msra.mxu0 %v3175
      %3648 = vmatprep.mubr.bf16.mxu0 %v2098
      %3649 = vmatmul.mubr.bf16.gmra.mxu0 %v2097
      %v3650 = vpop.f32.mrf.mxu0
      %v3651 = vadd.f32 %v3362, %v3650
      %v3652 = vpop.f32.mrf.mxu0
      %v3653 = vpop.f32.mrf.mxu0
      %v3654 = vadd.f32 %v3365, %v3653
      %v3655 = vpop.f32.mrf.mxu0
      %3656 = vmatprep.mubr.bf16.mxu0 %v2109
      %3657 = vmatmul.mubr.bf16.gmra.mxu0 %v2108
      %v3658 = vpop.f32.mrf.mxu0
      %v3659 = vadd.f32 %v3370, %v3658
      %v3660 = vpop.f32.mrf.mxu0
      %v3661 = vpop.f32.mrf.mxu0
      %v3662 = vadd.f32 %v3373, %v3661
      %v3663 = vpop.f32.mrf.mxu0
      %3664 = vmatprep.mubr.bf16.mxu0 %v2120
      %3665 = vmatmul.mubr.bf16.gmra.mxu0 %v2119
      %v3666 = vpop.f32.mrf.mxu0
      %v3667 = vadd.f32 %v3378, %v3666
      %v3668 = vpop.f32.mrf.mxu0
      %v3669 = vpop.f32.mrf.mxu0
      %v3670 = vadd.f32 %v3381, %v3669
      %v3671 = vpop.f32.mrf.mxu0
      %3672 = vmatprep.mubr.bf16.mxu0 %v2131
      %3673 = vmatmul.mubr.bf16.gmra.mxu0 %v2130
      %v3674 = vpop.f32.mrf.mxu0
      %v3675 = vadd.f32 %v3386, %v3674
      %v3676 = vpop.f32.mrf.mxu0
      %v3677 = vpop.f32.mrf.mxu0
      %v3678 = vadd.f32 %v3389, %v3677
      %v3679 = vpop.f32.mrf.mxu0
      %3680 = vmatprep.mubr.bf16.mxu0 %v2142
      %3681 = vmatmul.mubr.bf16.gmra.mxu0 %v2141
      %v3682 = vpop.f32.mrf.mxu0
      %v3683 = vadd.f32 %v3394, %v3682
      %v3684 = vpop.f32.mrf.mxu0
      %v3685 = vpop.f32.mrf.mxu0
      %v3686 = vadd.f32 %v3397, %v3685
      %v3687 = vpop.f32.mrf.mxu0
      %3688 = vmatprep.mubr.bf16.mxu0 %v2153
      %3689 = vmatmul.mubr.bf16.gmra.mxu0 %v2152
      %v3690 = vpop.f32.mrf.mxu0
      %v3691 = vadd.f32 %v3402, %v3690
      %v3692 = vpop.f32.mrf.mxu0
      %v3693 = vpop.f32.mrf.mxu0
      %v3694 = vadd.f32 %v3405, %v3693
      %v3695 = vpop.f32.mrf.mxu0
      %3696 = vmatprep.mubr.bf16.mxu0 %v2164
      %3697 = vmatmul.mubr.bf16.gmra.mxu0 %v2163
      %v3698 = vpop.f32.mrf.mxu0
      %v3699 = vadd.f32 %v3410, %v3698
      %v3700 = vpop.f32.mrf.mxu0
      %v3701 = vpop.f32.mrf.mxu0
      %v3702 = vadd.f32 %v3413, %v3701
      %v3703 = vpop.f32.mrf.mxu0
      %3704 = vmatprep.mubr.bf16.mxu0 %v2175
      %3705 = vmatmul.mubr.bf16.gmra.mxu0 %v2174
      %v3706 = vpop.f32.mrf.mxu0
      %v3707 = vadd.f32 %v3418, %v3706
      %v3708 = vpop.f32.mrf.mxu0
      %v3709 = vpop.f32.mrf.mxu0
      %v3710 = vadd.f32 %v3421, %v3709
      %v3711 = vpop.f32.mrf.mxu0
      %3712 = vmatprep.mubr.bf16.mxu0 %v2186
      %3713 = vmatmul.mubr.bf16.gmra.mxu0 %v2185
      %v3714 = vpop.f32.mrf.mxu0
      %v3715 = vadd.f32 %v3426, %v3714
      %v3716 = vpop.f32.mrf.mxu0
      %v3717 = vpop.f32.mrf.mxu0
      %v3718 = vadd.f32 %v3429, %v3717
      %v3719 = vpop.f32.mrf.mxu0
      %3720 = vmatprep.mubr.bf16.mxu0 %v2197
      %3721 = vmatmul.mubr.bf16.gmra.mxu0 %v2196
      %v3722 = vpop.f32.mrf.mxu0
      %v3723 = vadd.f32 %v3434, %v3722
      %v3724 = vpop.f32.mrf.mxu0
      %v3725 = vpop.f32.mrf.mxu0
      %v3726 = vadd.f32 %v3437, %v3725
      %v3727 = vpop.f32.mrf.mxu0
      %3728 = vmatprep.mubr.bf16.mxu0 %v2208
      %3729 = vmatmul.mubr.bf16.gmra.mxu0 %v2207
      %v3730 = vpop.f32.mrf.mxu0
      %v3731 = vadd.f32 %v3442, %v3730
      %v3732 = vpop.f32.mrf.mxu0
      %v3733 = vpop.f32.mrf.mxu0
      %v3734 = vadd.f32 %v3445, %v3733
      %v3735 = vpop.f32.mrf.mxu0
      %3736 = vmatprep.mubr.bf16.mxu0 %v2219
      %3737 = vmatmul.mubr.bf16.gmra.mxu0 %v2218
      %v3738 = vpop.f32.mrf.mxu0
      %v3739 = vadd.f32 %v3450, %v3738
      %v3740 = vpop.f32.mrf.mxu0
      %v3741 = vpop.f32.mrf.mxu0
      %v3742 = vadd.f32 %v3453, %v3741
      %v3743 = vpop.f32.mrf.mxu0
      %3744 = vmatprep.mubr.bf16.mxu0 %v2230
      %3745 = vmatmul.mubr.bf16.gmra.mxu0 %v2229
      %v3746 = vpop.f32.mrf.mxu0
      %v3747 = vadd.f32 %v3458, %v3746
      %v3748 = vpop.f32.mrf.mxu0
      %v3749 = vpop.f32.mrf.mxu0
      %v3750 = vadd.f32 %v3461, %v3749
      %v3751 = vpop.f32.mrf.mxu0
      %3752 = vmatprep.mubr.bf16.mxu0 %v2241
      %3753 = vmatmul.mubr.bf16.gmra.mxu0 %v2240
      %v3754 = vpop.f32.mrf.mxu0
      %v3755 = vadd.f32 %v3466, %v3754
      %v3756 = vpop.f32.mrf.mxu0
      %v3757 = vpop.f32.mrf.mxu0
      %v3758 = vadd.f32 %v3469, %v3757
      %v3759 = vpop.f32.mrf.mxu0
      %3760 = vmatprep.mubr.bf16.mxu0 %v2252
      %3761 = vmatmul.mubr.bf16.gmra.mxu0 %v2251
      %v3762 = vpop.f32.mrf.mxu0
      %v3763 = vadd.f32 %v3474, %v3762
      %v3764 = vpop.f32.mrf.mxu0
      %v3765 = vpop.f32.mrf.mxu0
      %v3766 = vadd.f32 %v3477, %v3765
      %v3767 = vpop.f32.mrf.mxu0
      %3768 = vmatprep.mubr.bf16.mxu0 %v2263
      %3769 = vmatmul.mubr.bf16.gmra.mxu0 %v2262
      %v3770 = vpop.f32.mrf.mxu0
      %v3771 = vadd.f32 %v3482, %v3770
      %v3772 = vpop.f32.mrf.mxu0
      %v3773 = vpop.f32.mrf.mxu0
      %v3774 = vadd.f32 %v3485, %v3773
      %v3775 = vpop.f32.mrf.mxu0
      %3776 = vmatprep.mubr.bf16.mxu0 %v2274
      %3777 = vmatmul.mubr.bf16.gmra.mxu0 %v2273
      %v3778 = vpop.f32.mrf.mxu0
      %v3779 = vadd.f32 %v3490, %v3778
      %v3780 = vpop.f32.mrf.mxu0
      %v3781 = vpop.f32.mrf.mxu0
      %v3782 = vadd.f32 %v3493, %v3781
      %v3783 = vpop.f32.mrf.mxu0
      %3784 = vmatprep.mubr.bf16.mxu0 %v2285
      %3785 = vmatmul.mubr.bf16.gmra.mxu0 %v2284
      %v3786 = vpop.f32.mrf.mxu0
      %v3787 = vadd.f32 %v3498, %v3786
      %v3788 = vpop.f32.mrf.mxu0
      %v3789 = vpop.f32.mrf.mxu0
      %v3790 = vadd.f32 %v3501, %v3789
      %v3791 = vpop.f32.mrf.mxu0
      %3792 = vmatprep.mubr.bf16.mxu0 %v2296
      %3793 = vmatmul.mubr.bf16.gmra.mxu0 %v2295
      %v3794 = vpop.f32.mrf.mxu0
      %v3795 = vadd.f32 %v3506, %v3794
      %v3796 = vpop.f32.mrf.mxu0
      %v3797 = vpop.f32.mrf.mxu0
      %v3798 = vadd.f32 %v3509, %v3797
      %v3799 = vpop.f32.mrf.mxu0
      %3800 = vmatprep.mubr.bf16.mxu0 %v2307
      %3801 = vmatmul.mubr.bf16.gmra.mxu0 %v2306
      %v3802 = vpop.f32.mrf.mxu0
      %v3803 = vadd.f32 %v3514, %v3802
      %v3804 = vpop.f32.mrf.mxu0
      %v3805 = vpop.f32.mrf.mxu0
      %v3806 = vadd.f32 %v3517, %v3805
      %v3807 = vpop.f32.mrf.mxu0
      %3808 = vmatprep.mubr.bf16.mxu0 %v2318
      %3809 = vmatmul.mubr.bf16.gmra.mxu0 %v2317
      %v3810 = vpop.f32.mrf.mxu0
      %v3811 = vadd.f32 %v3522, %v3810
      %v3812 = vpop.f32.mrf.mxu0
      %v3813 = vpop.f32.mrf.mxu0
      %v3814 = vadd.f32 %v3525, %v3813
      %v3815 = vpop.f32.mrf.mxu0
      %3816 = vmatprep.mubr.bf16.mxu0 %v2329
      %3817 = vmatmul.mubr.bf16.gmra.mxu0 %v2328
      %v3818 = vpop.f32.mrf.mxu0
      %v3819 = vadd.f32 %v3530, %v3818
      %v3820 = vpop.f32.mrf.mxu0
      %v3821 = vpop.f32.mrf.mxu0
      %v3822 = vadd.f32 %v3533, %v3821
      %v3823 = vpop.f32.mrf.mxu0
      %3824 = vmatprep.mubr.bf16.mxu0 %v2340
      %3825 = vmatmul.mubr.bf16.gmra.mxu0 %v2339
      %v3826 = vpop.f32.mrf.mxu0
      %v3827 = vadd.f32 %v3538, %v3826
      %v3828 = vpop.f32.mrf.mxu0
      %v3829 = vpop.f32.mrf.mxu0
      %v3830 = vadd.f32 %v3541, %v3829
      %v3831 = vpop.f32.mrf.mxu0
      %3832 = vmatprep.mubr.bf16.mxu0 %v2351
      %3833 = vmatmul.mubr.bf16.gmra.mxu0 %v2350
      %v3834 = vpop.f32.mrf.mxu0
      %v3835 = vadd.f32 %v3546, %v3834
      %v3836 = vpop.f32.mrf.mxu0
      %v3837 = vpop.f32.mrf.mxu0
      %v3838 = vadd.f32 %v3549, %v3837
      %v3839 = vpop.f32.mrf.mxu0
      %3840 = vmatprep.mubr.bf16.mxu0 %v2362
      %3841 = vmatmul.mubr.bf16.gmra.mxu0 %v2361
      %v3842 = vpop.f32.mrf.mxu0
      %v3843 = vadd.f32 %v3554, %v3842
      %v3844 = vpop.f32.mrf.mxu0
      %v3845 = vpop.f32.mrf.mxu0
      %v3846 = vadd.f32 %v3557, %v3845
      %v3847 = vpop.f32.mrf.mxu0
      %3848 = vmatprep.mubr.bf16.mxu0 %v2373
      %3849 = vmatmul.mubr.bf16.gmra.mxu0 %v2372
      %v3850 = vpop.f32.mrf.mxu0
      %v3851 = vadd.f32 %v3562, %v3850
      %v3852 = vpop.f32.mrf.mxu0
      %v3853 = vpop.f32.mrf.mxu0
      %v3854 = vadd.f32 %v3565, %v3853
      %v3855 = vpop.f32.mrf.mxu0
      %3856 = vmatprep.mubr.bf16.mxu0 %v2384
      %3857 = vmatmul.mubr.bf16.gmra.mxu0 %v2383
      %v3858 = vpop.f32.mrf.mxu0
      %v3859 = vadd.f32 %v3570, %v3858
      %v3860 = vpop.f32.mrf.mxu0
      %v3861 = vpop.f32.mrf.mxu0
      %v3862 = vadd.f32 %v3573, %v3861
      %v3863 = vpop.f32.mrf.mxu0
      %3864 = vmatprep.mubr.bf16.mxu0 %v2395
      %3865 = vmatmul.mubr.bf16.gmra.mxu0 %v2394
      %v3866 = vpop.f32.mrf.mxu0
      %v3867 = vadd.f32 %v3578, %v3866
      %v3868 = vpop.f32.mrf.mxu0
      %v3869 = vpop.f32.mrf.mxu0
      %v3870 = vadd.f32 %v3581, %v3869
      %v3871 = vpop.f32.mrf.mxu0
      %3872 = vmatprep.mubr.bf16.mxu0 %v2406
      %3873 = vmatmul.mubr.bf16.gmra.mxu0 %v2405
      %v3874 = vpop.f32.mrf.mxu0
      %v3875 = vadd.f32 %v3586, %v3874
      %v3876 = vpop.f32.mrf.mxu0
      %v3877 = vpop.f32.mrf.mxu0
      %v3878 = vadd.f32 %v3589, %v3877
      %v3879 = vpop.f32.mrf.mxu0
      %3880 = vmatprep.mubr.bf16.mxu0 %v2417
      %3881 = vmatmul.mubr.bf16.gmra.mxu0 %v2416
      %v3882 = vpop.f32.mrf.mxu0
      %v3883 = vadd.f32 %v3594, %v3882
      %v3884 = vpop.f32.mrf.mxu0
      %v3885 = vpop.f32.mrf.mxu0
      %v3886 = vadd.f32 %v3597, %v3885
      %v3887 = vpop.f32.mrf.mxu0
      %3888 = vmatprep.mubr.bf16.mxu0 %v2428
      %3889 = vmatmul.mubr.bf16.gmra.mxu0 %v2427
      %v3890 = vpop.f32.mrf.mxu0
      %v3891 = vadd.f32 %v3602, %v3890
      %v3892 = vpop.f32.mrf.mxu0
      %v3893 = vpop.f32.mrf.mxu0
      %v3894 = vadd.f32 %v3605, %v3893
      %v3895 = vpop.f32.mrf.mxu0
      %3896 = vmatprep.mubr.bf16.mxu0 %v2439
      %3897 = vmatmul.mubr.bf16.gmra.mxu0 %v2438
      %v3898 = vpop.f32.mrf.mxu0
      %v3899 = vadd.f32 %v3610, %v3898
      %v3900 = vpop.f32.mrf.mxu0
      %v3901 = vpop.f32.mrf.mxu0
      %v3902 = vadd.f32 %v3613, %v3901
      %v3903 = vpop.f32.mrf.mxu0
      %3904 = vdwg.mxu0
      %3905 = vmatprep.subr.bf16.mxu0 0
      %3906 = vmatpush1.bf16.msra.mxu0 %v3190
      %3907 = vmatprep.subr.bf16.mxu0 0
      %3908 = vmatpush1.bf16.msra.mxu0 %v3189
      %3909 = vmatprep.subr.bf16.mxu0 0
      %3910 = vmatpush1.bf16.msra.mxu0 %v3188
      %3911 = vmatprep.subr.bf16.mxu0 0
      %3912 = vmatpush1.bf16.msra.mxu0 %v3187
      %3913 = vmatprep.subr.bf16.mxu0 0
      %3914 = vmatpush1.bf16.msra.mxu0 %v3186
      %3915 = vmatprep.subr.bf16.mxu0 0
      %3916 = vmatpush1.bf16.msra.mxu0 %v3185
      %3917 = vmatprep.subr.bf16.mxu0 0
      %3918 = vmatpush1.bf16.msra.mxu0 %v3184
      %3919 = vmatprep.subr.bf16.mxu0 0
      %3920 = vmatpush1.bf16.msra.mxu0 %v3183
      %3921 = vmatprep.subr.bf16.mxu0 0
      %3922 = vmatpush2.bf16.msra.mxu0 %v3198
      %3923 = vmatprep.subr.bf16.mxu0 0
      %3924 = vmatpush2.bf16.msra.mxu0 %v3197
      %3925 = vmatprep.subr.bf16.mxu0 0
      %3926 = vmatpush2.bf16.msra.mxu0 %v3196
      %3927 = vmatprep.subr.bf16.mxu0 0
      %3928 = vmatpush2.bf16.msra.mxu0 %v3195
      %3929 = vmatprep.subr.bf16.mxu0 0
      %3930 = vmatpush2.bf16.msra.mxu0 %v3194
      %3931 = vmatprep.subr.bf16.mxu0 0
      %3932 = vmatpush2.bf16.msra.mxu0 %v3193
      %3933 = vmatprep.subr.bf16.mxu0 0
      %3934 = vmatpush2.bf16.msra.mxu0 %v3192
      %3935 = vmatprep.subr.bf16.mxu0 0
      %3936 = vmatpush2.bf16.msra.mxu0 %v3191
      %3937 = vmatprep.mubr.bf16.mxu0 %v2100
      %3938 = vmatmul.mubr.bf16.gmra.mxu0 %v2099
      %v3939 = vpop.f32.mrf.mxu0
      %v3940 = vadd.f32 %v3651, %v3939
      %v3941 = vpop.f32.mrf.mxu0
      %v3942 = vpop.f32.mrf.mxu0
      %v3943 = vadd.f32 %v3654, %v3942
      %v3944 = vpop.f32.mrf.mxu0
      %3945 = vmatprep.mubr.bf16.mxu0 %v2111
      %3946 = vmatmul.mubr.bf16.gmra.mxu0 %v2110
      %v3947 = vpop.f32.mrf.mxu0
      %v3948 = vadd.f32 %v3659, %v3947
      %v3949 = vpop.f32.mrf.mxu0
      %v3950 = vpop.f32.mrf.mxu0
      %v3951 = vadd.f32 %v3662, %v3950
      %v3952 = vpop.f32.mrf.mxu0
      %3953 = vmatprep.mubr.bf16.mxu0 %v2122
      %3954 = vmatmul.mubr.bf16.gmra.mxu0 %v2121
      %v3955 = vpop.f32.mrf.mxu0
      %v3956 = vadd.f32 %v3667, %v3955
      %v3957 = vpop.f32.mrf.mxu0
      %v3958 = vpop.f32.mrf.mxu0
      %v3959 = vadd.f32 %v3670, %v3958
      %v3960 = vpop.f32.mrf.mxu0
      %3961 = vmatprep.mubr.bf16.mxu0 %v2133
      %3962 = vmatmul.mubr.bf16.gmra.mxu0 %v2132
      %v3963 = vpop.f32.mrf.mxu0
      %v3964 = vadd.f32 %v3675, %v3963
      %v3965 = vpop.f32.mrf.mxu0
      %v3966 = vpop.f32.mrf.mxu0
      %v3967 = vadd.f32 %v3678, %v3966
      %v3968 = vpop.f32.mrf.mxu0
      %3969 = vmatprep.mubr.bf16.mxu0 %v2144
      %3970 = vmatmul.mubr.bf16.gmra.mxu0 %v2143
      %v3971 = vpop.f32.mrf.mxu0
      %v3972 = vadd.f32 %v3683, %v3971
      %v3973 = vpop.f32.mrf.mxu0
      %v3974 = vpop.f32.mrf.mxu0
      %v3975 = vadd.f32 %v3686, %v3974
      %v3976 = vpop.f32.mrf.mxu0
      %3977 = vmatprep.mubr.bf16.mxu0 %v2155
      %3978 = vmatmul.mubr.bf16.gmra.mxu0 %v2154
      %v3979 = vpop.f32.mrf.mxu0
      %v3980 = vadd.f32 %v3691, %v3979
      %v3981 = vpop.f32.mrf.mxu0
      %v3982 = vpop.f32.mrf.mxu0
      %v3983 = vadd.f32 %v3694, %v3982
      %v3984 = vpop.f32.mrf.mxu0
      %3985 = vmatprep.mubr.bf16.mxu0 %v2166
      %3986 = vmatmul.mubr.bf16.gmra.mxu0 %v2165
      %v3987 = vpop.f32.mrf.mxu0
      %v3988 = vadd.f32 %v3699, %v3987
      %v3989 = vpop.f32.mrf.mxu0
      %v3990 = vpop.f32.mrf.mxu0
      %v3991 = vadd.f32 %v3702, %v3990
      %v3992 = vpop.f32.mrf.mxu0
      %3993 = vmatprep.mubr.bf16.mxu0 %v2177
      %3994 = vmatmul.mubr.bf16.gmra.mxu0 %v2176
      %v3995 = vpop.f32.mrf.mxu0
      %v3996 = vadd.f32 %v3707, %v3995
      %v3997 = vpop.f32.mrf.mxu0
      %v3998 = vpop.f32.mrf.mxu0
      %v3999 = vadd.f32 %v3710, %v3998
      %v4000 = vpop.f32.mrf.mxu0
      %4001 = vmatprep.mubr.bf16.mxu0 %v2188
      %4002 = vmatmul.mubr.bf16.gmra.mxu0 %v2187
      %v4003 = vpop.f32.mrf.mxu0
      %v4004 = vadd.f32 %v3715, %v4003
      %v4005 = vpop.f32.mrf.mxu0
      %v4006 = vpop.f32.mrf.mxu0
      %v4007 = vadd.f32 %v3718, %v4006
      %v4008 = vpop.f32.mrf.mxu0
      %4009 = vmatprep.mubr.bf16.mxu0 %v2199
      %4010 = vmatmul.mubr.bf16.gmra.mxu0 %v2198
      %v4011 = vpop.f32.mrf.mxu0
      %v4012 = vadd.f32 %v3723, %v4011
      %v4013 = vpop.f32.mrf.mxu0
      %v4014 = vpop.f32.mrf.mxu0
      %v4015 = vadd.f32 %v3726, %v4014
      %v4016 = vpop.f32.mrf.mxu0
      %4017 = vmatprep.mubr.bf16.mxu0 %v2210
      %4018 = vmatmul.mubr.bf16.gmra.mxu0 %v2209
      %v4019 = vpop.f32.mrf.mxu0
      %v4020 = vadd.f32 %v3731, %v4019
      %v4021 = vpop.f32.mrf.mxu0
      %v4022 = vpop.f32.mrf.mxu0
      %v4023 = vadd.f32 %v3734, %v4022
      %v4024 = vpop.f32.mrf.mxu0
      %4025 = vmatprep.mubr.bf16.mxu0 %v2221
      %4026 = vmatmul.mubr.bf16.gmra.mxu0 %v2220
      %v4027 = vpop.f32.mrf.mxu0
      %v4028 = vadd.f32 %v3739, %v4027
      %v4029 = vpop.f32.mrf.mxu0
      %v4030 = vpop.f32.mrf.mxu0
      %v4031 = vadd.f32 %v3742, %v4030
      %v4032 = vpop.f32.mrf.mxu0
      %4033 = vmatprep.mubr.bf16.mxu0 %v2232
      %4034 = vmatmul.mubr.bf16.gmra.mxu0 %v2231
      %v4035 = vpop.f32.mrf.mxu0
      %v4036 = vadd.f32 %v3747, %v4035
      %v4037 = vpop.f32.mrf.mxu0
      %v4038 = vpop.f32.mrf.mxu0
      %v4039 = vadd.f32 %v3750, %v4038
      %v4040 = vpop.f32.mrf.mxu0
      %4041 = vmatprep.mubr.bf16.mxu0 %v2243
      %4042 = vmatmul.mubr.bf16.gmra.mxu0 %v2242
      %v4043 = vpop.f32.mrf.mxu0
      %v4044 = vadd.f32 %v3755, %v4043
      %v4045 = vpop.f32.mrf.mxu0
      %v4046 = vpop.f32.mrf.mxu0
      %v4047 = vadd.f32 %v3758, %v4046
      %v4048 = vpop.f32.mrf.mxu0
      %4049 = vmatprep.mubr.bf16.mxu0 %v2254
      %4050 = vmatmul.mubr.bf16.gmra.mxu0 %v2253
      %v4051 = vpop.f32.mrf.mxu0
      %v4052 = vadd.f32 %v3763, %v4051
      %v4053 = vpop.f32.mrf.mxu0
      %v4054 = vpop.f32.mrf.mxu0
      %v4055 = vadd.f32 %v3766, %v4054
      %v4056 = vpop.f32.mrf.mxu0
      %4057 = vmatprep.mubr.bf16.mxu0 %v2265
      %4058 = vmatmul.mubr.bf16.gmra.mxu0 %v2264
      %v4059 = vpop.f32.mrf.mxu0
      %v4060 = vadd.f32 %v3771, %v4059
      %v4061 = vpop.f32.mrf.mxu0
      %v4062 = vpop.f32.mrf.mxu0
      %v4063 = vadd.f32 %v3774, %v4062
      %v4064 = vpop.f32.mrf.mxu0
      %4065 = vmatprep.mubr.bf16.mxu0 %v2276
      %4066 = vmatmul.mubr.bf16.gmra.mxu0 %v2275
      %v4067 = vpop.f32.mrf.mxu0
      %v4068 = vadd.f32 %v3779, %v4067
      %v4069 = vpop.f32.mrf.mxu0
      %v4070 = vpop.f32.mrf.mxu0
      %v4071 = vadd.f32 %v3782, %v4070
      %v4072 = vpop.f32.mrf.mxu0
      %4073 = vmatprep.mubr.bf16.mxu0 %v2287
      %4074 = vmatmul.mubr.bf16.gmra.mxu0 %v2286
      %v4075 = vpop.f32.mrf.mxu0
      %v4076 = vadd.f32 %v3787, %v4075
      %v4077 = vpop.f32.mrf.mxu0
      %v4078 = vpop.f32.mrf.mxu0
      %v4079 = vadd.f32 %v3790, %v4078
      %v4080 = vpop.f32.mrf.mxu0
      %4081 = vmatprep.mubr.bf16.mxu0 %v2298
      %4082 = vmatmul.mubr.bf16.gmra.mxu0 %v2297
      %v4083 = vpop.f32.mrf.mxu0
      %v4084 = vadd.f32 %v3795, %v4083
      %v4085 = vpop.f32.mrf.mxu0
      %v4086 = vpop.f32.mrf.mxu0
      %v4087 = vadd.f32 %v3798, %v4086
      %v4088 = vpop.f32.mrf.mxu0
      %4089 = vmatprep.mubr.bf16.mxu0 %v2309
      %4090 = vmatmul.mubr.bf16.gmra.mxu0 %v2308
      %v4091 = vpop.f32.mrf.mxu0
      %v4092 = vadd.f32 %v3803, %v4091
      %v4093 = vpop.f32.mrf.mxu0
      %v4094 = vpop.f32.mrf.mxu0
      %v4095 = vadd.f32 %v3806, %v4094
      %v4096 = vpop.f32.mrf.mxu0
      %4097 = vmatprep.mubr.bf16.mxu0 %v2320
      %4098 = vmatmul.mubr.bf16.gmra.mxu0 %v2319
      %v4099 = vpop.f32.mrf.mxu0
      %v4100 = vadd.f32 %v3811, %v4099
      %v4101 = vpop.f32.mrf.mxu0
      %v4102 = vpop.f32.mrf.mxu0
      %v4103 = vadd.f32 %v3814, %v4102
      %v4104 = vpop.f32.mrf.mxu0
      %4105 = vmatprep.mubr.bf16.mxu0 %v2331
      %4106 = vmatmul.mubr.bf16.gmra.mxu0 %v2330
      %v4107 = vpop.f32.mrf.mxu0
      %v4108 = vadd.f32 %v3819, %v4107
      %v4109 = vpop.f32.mrf.mxu0
      %v4110 = vpop.f32.mrf.mxu0
      %v4111 = vadd.f32 %v3822, %v4110
      %v4112 = vpop.f32.mrf.mxu0
      %4113 = vmatprep.mubr.bf16.mxu0 %v2342
      %4114 = vmatmul.mubr.bf16.gmra.mxu0 %v2341
      %v4115 = vpop.f32.mrf.mxu0
      %v4116 = vadd.f32 %v3827, %v4115
      %v4117 = vpop.f32.mrf.mxu0
      %v4118 = vpop.f32.mrf.mxu0
      %v4119 = vadd.f32 %v3830, %v4118
      %v4120 = vpop.f32.mrf.mxu0
      %4121 = vmatprep.mubr.bf16.mxu0 %v2353
      %4122 = vmatmul.mubr.bf16.gmra.mxu0 %v2352
      %v4123 = vpop.f32.mrf.mxu0
      %v4124 = vadd.f32 %v3835, %v4123
      %v4125 = vpop.f32.mrf.mxu0
      %v4126 = vpop.f32.mrf.mxu0
      %v4127 = vadd.f32 %v3838, %v4126
      %v4128 = vpop.f32.mrf.mxu0
      %4129 = vmatprep.mubr.bf16.mxu0 %v2364
      %4130 = vmatmul.mubr.bf16.gmra.mxu0 %v2363
      %v4131 = vpop.f32.mrf.mxu0
      %v4132 = vadd.f32 %v3843, %v4131
      %v4133 = vpop.f32.mrf.mxu0
      %v4134 = vpop.f32.mrf.mxu0
      %v4135 = vadd.f32 %v3846, %v4134
      %v4136 = vpop.f32.mrf.mxu0
      %4137 = vmatprep.mubr.bf16.mxu0 %v2375
      %4138 = vmatmul.mubr.bf16.gmra.mxu0 %v2374
      %v4139 = vpop.f32.mrf.mxu0
      %v4140 = vadd.f32 %v3851, %v4139
      %v4141 = vpop.f32.mrf.mxu0
      %v4142 = vpop.f32.mrf.mxu0
      %v4143 = vadd.f32 %v3854, %v4142
      %v4144 = vpop.f32.mrf.mxu0
      %4145 = vmatprep.mubr.bf16.mxu0 %v2386
      %4146 = vmatmul.mubr.bf16.gmra.mxu0 %v2385
      %v4147 = vpop.f32.mrf.mxu0
      %v4148 = vadd.f32 %v3859, %v4147
      %v4149 = vpop.f32.mrf.mxu0
      %v4150 = vpop.f32.mrf.mxu0
      %v4151 = vadd.f32 %v3862, %v4150
      %v4152 = vpop.f32.mrf.mxu0
      %4153 = vmatprep.mubr.bf16.mxu0 %v2397
      %4154 = vmatmul.mubr.bf16.gmra.mxu0 %v2396
      %v4155 = vpop.f32.mrf.mxu0
      %v4156 = vadd.f32 %v3867, %v4155
      %v4157 = vpop.f32.mrf.mxu0
      %v4158 = vpop.f32.mrf.mxu0
      %v4159 = vadd.f32 %v3870, %v4158
      %v4160 = vpop.f32.mrf.mxu0
      %4161 = vmatprep.mubr.bf16.mxu0 %v2408
      %4162 = vmatmul.mubr.bf16.gmra.mxu0 %v2407
      %v4163 = vpop.f32.mrf.mxu0
      %v4164 = vadd.f32 %v3875, %v4163
      %v4165 = vpop.f32.mrf.mxu0
      %v4166 = vpop.f32.mrf.mxu0
      %v4167 = vadd.f32 %v3878, %v4166
      %v4168 = vpop.f32.mrf.mxu0
      %4169 = vmatprep.mubr.bf16.mxu0 %v2419
      %4170 = vmatmul.mubr.bf16.gmra.mxu0 %v2418
      %v4171 = vpop.f32.mrf.mxu0
      %v4172 = vadd.f32 %v3883, %v4171
      %v4173 = vpop.f32.mrf.mxu0
      %v4174 = vpop.f32.mrf.mxu0
      %v4175 = vadd.f32 %v3886, %v4174
      %v4176 = vpop.f32.mrf.mxu0
      %4177 = vmatprep.mubr.bf16.mxu0 %v2430
      %4178 = vmatmul.mubr.bf16.gmra.mxu0 %v2429
      %v4179 = vpop.f32.mrf.mxu0
      %v4180 = vadd.f32 %v3891, %v4179
      %v4181 = vpop.f32.mrf.mxu0
      %v4182 = vpop.f32.mrf.mxu0
      %v4183 = vadd.f32 %v3894, %v4182
      %v4184 = vpop.f32.mrf.mxu0
      %4185 = vmatprep.mubr.bf16.mxu0 %v2441
      %4186 = vmatmul.mubr.bf16.gmra.mxu0 %v2440
      %v4187 = vpop.f32.mrf.mxu0
      %v4188 = vadd.f32 %v3899, %v4187
      %v4189 = vpop.f32.mrf.mxu0
      %v4190 = vpop.f32.mrf.mxu0
      %v4191 = vadd.f32 %v3902, %v4190
      %v4192 = vpop.f32.mrf.mxu0
      %4193 = vdwg.mxu0
      %4194 = vmatprep.subr.bf16.mxu0 0
      %4195 = vmatpush1.bf16.msra.mxu0 %v3206
      %4196 = vmatprep.subr.bf16.mxu0 0
      %4197 = vmatpush1.bf16.msra.mxu0 %v3205
      %4198 = vmatprep.subr.bf16.mxu0 0
      %4199 = vmatpush1.bf16.msra.mxu0 %v3204
      %4200 = vmatprep.subr.bf16.mxu0 0
      %4201 = vmatpush1.bf16.msra.mxu0 %v3203
      %4202 = vmatprep.subr.bf16.mxu0 0
      %4203 = vmatpush1.bf16.msra.mxu0 %v3202
      %4204 = vmatprep.subr.bf16.mxu0 0
      %4205 = vmatpush1.bf16.msra.mxu0 %v3201
      %4206 = vmatprep.subr.bf16.mxu0 0
      %4207 = vmatpush1.bf16.msra.mxu0 %v3200
      %4208 = vmatprep.subr.bf16.mxu0 0
      %4209 = vmatpush1.bf16.msra.mxu0 %v3199
      %4210 = vmatprep.subr.bf16.mxu0 0
      %4211 = vmatpush2.bf16.msra.mxu0 %v3214
      %4212 = vmatprep.subr.bf16.mxu0 0
      %4213 = vmatpush2.bf16.msra.mxu0 %v3213
      %4214 = vmatprep.subr.bf16.mxu0 0
      %4215 = vmatpush2.bf16.msra.mxu0 %v3212
      %4216 = vmatprep.subr.bf16.mxu0 0
      %4217 = vmatpush2.bf16.msra.mxu0 %v3211
      %4218 = vmatprep.subr.bf16.mxu0 0
      %4219 = vmatpush2.bf16.msra.mxu0 %v3210
      %4220 = vmatprep.subr.bf16.mxu0 0
      %4221 = vmatpush2.bf16.msra.mxu0 %v3209
      %4222 = vmatprep.subr.bf16.mxu0 0
      %4223 = vmatpush2.bf16.msra.mxu0 %v3208
      %4224 = vmatprep.subr.bf16.mxu0 0
      %4225 = vmatpush2.bf16.msra.mxu0 %v3207
      %4226 = vmatprep.mubr.bf16.mxu0 %v2102
      %4227 = vmatmul.mubr.bf16.gmra.mxu0 %v2101
      %v4228 = vpop.f32.mrf.mxu0
      %v4229 = vadd.f32 %v3940, %v4228
      %v4230 = vpop.f32.mrf.mxu0
      %v4231 = vpop.f32.mrf.mxu0
      %v4232 = vadd.f32 %v3943, %v4231
      %v4233 = vpop.f32.mrf.mxu0
      %4234 = vmatprep.mubr.bf16.mxu0 %v2113
      %4235 = vmatmul.mubr.bf16.gmra.mxu0 %v2112
      %v4236 = vpop.f32.mrf.mxu0
      %v4237 = vadd.f32 %v3948, %v4236
      %v4238 = vpop.f32.mrf.mxu0
      %v4239 = vpop.f32.mrf.mxu0
      %v4240 = vadd.f32 %v3951, %v4239
      %v4241 = vpop.f32.mrf.mxu0
      %4242 = vmatprep.mubr.bf16.mxu0 %v2124
      %4243 = vmatmul.mubr.bf16.gmra.mxu0 %v2123
      %v4244 = vpop.f32.mrf.mxu0
      %v4245 = vadd.f32 %v3956, %v4244
      %v4246 = vpop.f32.mrf.mxu0
      %v4247 = vpop.f32.mrf.mxu0
      %v4248 = vadd.f32 %v3959, %v4247
      %v4249 = vpop.f32.mrf.mxu0
      %4250 = vmatprep.mubr.bf16.mxu0 %v2135
      %4251 = vmatmul.mubr.bf16.gmra.mxu0 %v2134
      %v4252 = vpop.f32.mrf.mxu0
      %v4253 = vadd.f32 %v3964, %v4252
      %v4254 = vpop.f32.mrf.mxu0
      %v4255 = vpop.f32.mrf.mxu0
      %v4256 = vadd.f32 %v3967, %v4255
      %v4257 = vpop.f32.mrf.mxu0
      %4258 = vmatprep.mubr.bf16.mxu0 %v2146
      %4259 = vmatmul.mubr.bf16.gmra.mxu0 %v2145
      %v4260 = vpop.f32.mrf.mxu0
      %v4261 = vadd.f32 %v3972, %v4260
      %v4262 = vpop.f32.mrf.mxu0
      %v4263 = vpop.f32.mrf.mxu0
      %v4264 = vadd.f32 %v3975, %v4263
      %v4265 = vpop.f32.mrf.mxu0
      %4266 = vmatprep.mubr.bf16.mxu0 %v2157
      %4267 = vmatmul.mubr.bf16.gmra.mxu0 %v2156
      %v4268 = vpop.f32.mrf.mxu0
      %v4269 = vadd.f32 %v3980, %v4268
      %v4270 = vpop.f32.mrf.mxu0
      %v4271 = vpop.f32.mrf.mxu0
      %v4272 = vadd.f32 %v3983, %v4271
      %v4273 = vpop.f32.mrf.mxu0
      %4274 = vmatprep.mubr.bf16.mxu0 %v2168
      %4275 = vmatmul.mubr.bf16.gmra.mxu0 %v2167
      %v4276 = vpop.f32.mrf.mxu0
      %v4277 = vadd.f32 %v3988, %v4276
      %v4278 = vpop.f32.mrf.mxu0
      %v4279 = vpop.f32.mrf.mxu0
      %v4280 = vadd.f32 %v3991, %v4279
      %v4281 = vpop.f32.mrf.mxu0
      %4282 = vmatprep.mubr.bf16.mxu0 %v2179
      %4283 = vmatmul.mubr.bf16.gmra.mxu0 %v2178
      %v4284 = vpop.f32.mrf.mxu0
      %v4285 = vadd.f32 %v3996, %v4284
      %v4286 = vpop.f32.mrf.mxu0
      %v4287 = vpop.f32.mrf.mxu0
      %v4288 = vadd.f32 %v3999, %v4287
      %v4289 = vpop.f32.mrf.mxu0
      %4290 = vmatprep.mubr.bf16.mxu0 %v2190
      %4291 = vmatmul.mubr.bf16.gmra.mxu0 %v2189
      %v4292 = vpop.f32.mrf.mxu0
      %v4293 = vadd.f32 %v4004, %v4292
      %v4294 = vpop.f32.mrf.mxu0
      %v4295 = vpop.f32.mrf.mxu0
      %v4296 = vadd.f32 %v4007, %v4295
      %v4297 = vpop.f32.mrf.mxu0
      %4298 = vmatprep.mubr.bf16.mxu0 %v2201
      %4299 = vmatmul.mubr.bf16.gmra.mxu0 %v2200
      %v4300 = vpop.f32.mrf.mxu0
      %v4301 = vadd.f32 %v4012, %v4300
      %v4302 = vpop.f32.mrf.mxu0
      %v4303 = vpop.f32.mrf.mxu0
      %v4304 = vadd.f32 %v4015, %v4303
      %v4305 = vpop.f32.mrf.mxu0
      %4306 = vmatprep.mubr.bf16.mxu0 %v2212
      %4307 = vmatmul.mubr.bf16.gmra.mxu0 %v2211
      %v4308 = vpop.f32.mrf.mxu0
      %v4309 = vadd.f32 %v4020, %v4308
      %v4310 = vpop.f32.mrf.mxu0
      %v4311 = vpop.f32.mrf.mxu0
      %v4312 = vadd.f32 %v4023, %v4311
      %v4313 = vpop.f32.mrf.mxu0
      %4314 = vmatprep.mubr.bf16.mxu0 %v2223
      %4315 = vmatmul.mubr.bf16.gmra.mxu0 %v2222
      %v4316 = vpop.f32.mrf.mxu0
      %v4317 = vadd.f32 %v4028, %v4316
      %v4318 = vpop.f32.mrf.mxu0
      %v4319 = vpop.f32.mrf.mxu0
      %v4320 = vadd.f32 %v4031, %v4319
      %v4321 = vpop.f32.mrf.mxu0
      %4322 = vmatprep.mubr.bf16.mxu0 %v2234
      %4323 = vmatmul.mubr.bf16.gmra.mxu0 %v2233
      %v4324 = vpop.f32.mrf.mxu0
      %v4325 = vadd.f32 %v4036, %v4324
      %v4326 = vpop.f32.mrf.mxu0
      %v4327 = vpop.f32.mrf.mxu0
      %v4328 = vadd.f32 %v4039, %v4327
      %v4329 = vpop.f32.mrf.mxu0
      %4330 = vmatprep.mubr.bf16.mxu0 %v2245
      %4331 = vmatmul.mubr.bf16.gmra.mxu0 %v2244
      %v4332 = vpop.f32.mrf.mxu0
      %v4333 = vadd.f32 %v4044, %v4332
      %v4334 = vpop.f32.mrf.mxu0
      %v4335 = vpop.f32.mrf.mxu0
      %v4336 = vadd.f32 %v4047, %v4335
      %v4337 = vpop.f32.mrf.mxu0
      %4338 = vmatprep.mubr.bf16.mxu0 %v2256
      %4339 = vmatmul.mubr.bf16.gmra.mxu0 %v2255
      %v4340 = vpop.f32.mrf.mxu0
      %v4341 = vadd.f32 %v4052, %v4340
      %v4342 = vpop.f32.mrf.mxu0
      %v4343 = vpop.f32.mrf.mxu0
      %v4344 = vadd.f32 %v4055, %v4343
      %v4345 = vpop.f32.mrf.mxu0
      %4346 = vmatprep.mubr.bf16.mxu0 %v2267
      %4347 = vmatmul.mubr.bf16.gmra.mxu0 %v2266
      %v4348 = vpop.f32.mrf.mxu0
      %v4349 = vadd.f32 %v4060, %v4348
      %v4350 = vpop.f32.mrf.mxu0
      %v4351 = vpop.f32.mrf.mxu0
      %v4352 = vadd.f32 %v4063, %v4351
      %v4353 = vpop.f32.mrf.mxu0
      %4354 = vmatprep.mubr.bf16.mxu0 %v2278
      %4355 = vmatmul.mubr.bf16.gmra.mxu0 %v2277
      %v4356 = vpop.f32.mrf.mxu0
      %v4357 = vadd.f32 %v4068, %v4356
      %v4358 = vpop.f32.mrf.mxu0
      %v4359 = vpop.f32.mrf.mxu0
      %v4360 = vadd.f32 %v4071, %v4359
      %v4361 = vpop.f32.mrf.mxu0
      %4362 = vmatprep.mubr.bf16.mxu0 %v2289
      %4363 = vmatmul.mubr.bf16.gmra.mxu0 %v2288
      %v4364 = vpop.f32.mrf.mxu0
      %v4365 = vadd.f32 %v4076, %v4364
      %v4366 = vpop.f32.mrf.mxu0
      %v4367 = vpop.f32.mrf.mxu0
      %v4368 = vadd.f32 %v4079, %v4367
      %v4369 = vpop.f32.mrf.mxu0
      %4370 = vmatprep.mubr.bf16.mxu0 %v2300
      %4371 = vmatmul.mubr.bf16.gmra.mxu0 %v2299
      %v4372 = vpop.f32.mrf.mxu0
      %v4373 = vadd.f32 %v4084, %v4372
      %v4374 = vpop.f32.mrf.mxu0
      %v4375 = vpop.f32.mrf.mxu0
      %v4376 = vadd.f32 %v4087, %v4375
      %v4377 = vpop.f32.mrf.mxu0
      %4378 = vmatprep.mubr.bf16.mxu0 %v2311
      %4379 = vmatmul.mubr.bf16.gmra.mxu0 %v2310
      %v4380 = vpop.f32.mrf.mxu0
      %v4381 = vadd.f32 %v4092, %v4380
      %v4382 = vpop.f32.mrf.mxu0
      %v4383 = vpop.f32.mrf.mxu0
      %v4384 = vadd.f32 %v4095, %v4383
      %v4385 = vpop.f32.mrf.mxu0
      %4386 = vmatprep.mubr.bf16.mxu0 %v2322
      %4387 = vmatmul.mubr.bf16.gmra.mxu0 %v2321
      %v4388 = vpop.f32.mrf.mxu0
      %v4389 = vadd.f32 %v4100, %v4388
      %v4390 = vpop.f32.mrf.mxu0
      %v4391 = vpop.f32.mrf.mxu0
      %v4392 = vadd.f32 %v4103, %v4391
      %v4393 = vpop.f32.mrf.mxu0
      %4394 = vmatprep.mubr.bf16.mxu0 %v2333
      %4395 = vmatmul.mubr.bf16.gmra.mxu0 %v2332
      %v4396 = vpop.f32.mrf.mxu0
      %v4397 = vadd.f32 %v4108, %v4396
      %v4398 = vpop.f32.mrf.mxu0
      %v4399 = vpop.f32.mrf.mxu0
      %v4400 = vadd.f32 %v4111, %v4399
      %v4401 = vpop.f32.mrf.mxu0
      %4402 = vmatprep.mubr.bf16.mxu0 %v2344
      %4403 = vmatmul.mubr.bf16.gmra.mxu0 %v2343
      %v4404 = vpop.f32.mrf.mxu0
      %v4405 = vadd.f32 %v4116, %v4404
      %v4406 = vpop.f32.mrf.mxu0
      %v4407 = vpop.f32.mrf.mxu0
      %v4408 = vadd.f32 %v4119, %v4407
      %v4409 = vpop.f32.mrf.mxu0
      %4410 = vmatprep.mubr.bf16.mxu0 %v2355
      %4411 = vmatmul.mubr.bf16.gmra.mxu0 %v2354
      %v4412 = vpop.f32.mrf.mxu0
      %v4413 = vadd.f32 %v4124, %v4412
      %v4414 = vpop.f32.mrf.mxu0
      %v4415 = vpop.f32.mrf.mxu0
      %v4416 = vadd.f32 %v4127, %v4415
      %v4417 = vpop.f32.mrf.mxu0
      %4418 = vmatprep.mubr.bf16.mxu0 %v2366
      %4419 = vmatmul.mubr.bf16.gmra.mxu0 %v2365
      %v4420 = vpop.f32.mrf.mxu0
      %v4421 = vadd.f32 %v4132, %v4420
      %v4422 = vpop.f32.mrf.mxu0
      %v4423 = vpop.f32.mrf.mxu0
      %v4424 = vadd.f32 %v4135, %v4423
      %v4425 = vpop.f32.mrf.mxu0
      %4426 = vmatprep.mubr.bf16.mxu0 %v2377
      %4427 = vmatmul.mubr.bf16.gmra.mxu0 %v2376
      %v4428 = vpop.f32.mrf.mxu0
      %v4429 = vadd.f32 %v4140, %v4428
      %v4430 = vpop.f32.mrf.mxu0
      %v4431 = vpop.f32.mrf.mxu0
      %v4432 = vadd.f32 %v4143, %v4431
      %v4433 = vpop.f32.mrf.mxu0
      %4434 = vmatprep.mubr.bf16.mxu0 %v2388
      %4435 = vmatmul.mubr.bf16.gmra.mxu0 %v2387
      %v4436 = vpop.f32.mrf.mxu0
      %v4437 = vadd.f32 %v4148, %v4436
      %v4438 = vpop.f32.mrf.mxu0
      %v4439 = vpop.f32.mrf.mxu0
      %v4440 = vadd.f32 %v4151, %v4439
      %v4441 = vpop.f32.mrf.mxu0
      %4442 = vmatprep.mubr.bf16.mxu0 %v2399
      %4443 = vmatmul.mubr.bf16.gmra.mxu0 %v2398
      %v4444 = vpop.f32.mrf.mxu0
      %v4445 = vadd.f32 %v4156, %v4444
      %v4446 = vpop.f32.mrf.mxu0
      %v4447 = vpop.f32.mrf.mxu0
      %v4448 = vadd.f32 %v4159, %v4447
      %v4449 = vpop.f32.mrf.mxu0
      %4450 = vmatprep.mubr.bf16.mxu0 %v2410
      %4451 = vmatmul.mubr.bf16.gmra.mxu0 %v2409
      %v4452 = vpop.f32.mrf.mxu0
      %v4453 = vadd.f32 %v4164, %v4452
      %v4454 = vpop.f32.mrf.mxu0
      %v4455 = vpop.f32.mrf.mxu0
      %v4456 = vadd.f32 %v4167, %v4455
      %v4457 = vpop.f32.mrf.mxu0
      %4458 = vmatprep.mubr.bf16.mxu0 %v2421
      %4459 = vmatmul.mubr.bf16.gmra.mxu0 %v2420
      %v4460 = vpop.f32.mrf.mxu0
      %v4461 = vadd.f32 %v4172, %v4460
      %v4462 = vpop.f32.mrf.mxu0
      %v4463 = vpop.f32.mrf.mxu0
      %v4464 = vadd.f32 %v4175, %v4463
      %v4465 = vpop.f32.mrf.mxu0
      %4466 = vmatprep.mubr.bf16.mxu0 %v2432
      %4467 = vmatmul.mubr.bf16.gmra.mxu0 %v2431
      %v4468 = vpop.f32.mrf.mxu0
      %v4469 = vadd.f32 %v4180, %v4468
      %v4470 = vpop.f32.mrf.mxu0
      %v4471 = vpop.f32.mrf.mxu0
      %v4472 = vadd.f32 %v4183, %v4471
      %v4473 = vpop.f32.mrf.mxu0
      %4474 = vmatprep.mubr.bf16.mxu0 %v2443
      %4475 = vmatmul.mubr.bf16.gmra.mxu0 %v2442
      %v4476 = vpop.f32.mrf.mxu0
      %v4477 = vadd.f32 %v4188, %v4476
      %v4478 = vpop.f32.mrf.mxu0
      %v4479 = vpop.f32.mrf.mxu0
      %v4480 = vadd.f32 %v4191, %v4479
      %v4481 = vpop.f32.mrf.mxu0
      %4482 = vdwg.mxu0
      %4483 = vmatprep.subr.bf16.mxu0 0
      %4484 = vmatpush1.bf16.msra.mxu0 %v3222
      %4485 = vmatprep.subr.bf16.mxu0 0
      %4486 = vmatpush1.bf16.msra.mxu0 %v3221
      %4487 = vmatprep.subr.bf16.mxu0 0
      %4488 = vmatpush1.bf16.msra.mxu0 %v3220
      %4489 = vmatprep.subr.bf16.mxu0 0
      %4490 = vmatpush1.bf16.msra.mxu0 %v3219
      %4491 = vmatprep.subr.bf16.mxu0 0
      %4492 = vmatpush1.bf16.msra.mxu0 %v3218
      %4493 = vmatprep.subr.bf16.mxu0 0
      %4494 = vmatpush1.bf16.msra.mxu0 %v3217
      %4495 = vmatprep.subr.bf16.mxu0 0
      %4496 = vmatpush1.bf16.msra.mxu0 %v3216
      %4497 = vmatprep.subr.bf16.mxu0 0
      %4498 = vmatpush1.bf16.msra.mxu0 %v3215
      %4499 = vmatprep.subr.bf16.mxu0 0
      %4500 = vmatpush2.bf16.msra.mxu0 %v3230
      %4501 = vmatprep.subr.bf16.mxu0 0
      %4502 = vmatpush2.bf16.msra.mxu0 %v3229
      %4503 = vmatprep.subr.bf16.mxu0 0
      %4504 = vmatpush2.bf16.msra.mxu0 %v3228
      %4505 = vmatprep.subr.bf16.mxu0 0
      %4506 = vmatpush2.bf16.msra.mxu0 %v3227
      %4507 = vmatprep.subr.bf16.mxu0 0
      %4508 = vmatpush2.bf16.msra.mxu0 %v3226
      %4509 = vmatprep.subr.bf16.mxu0 0
      %4510 = vmatpush2.bf16.msra.mxu0 %v3225
      %4511 = vmatprep.subr.bf16.mxu0 0
      %4512 = vmatpush2.bf16.msra.mxu0 %v3224
      %4513 = vmatprep.subr.bf16.mxu0 0
      %4514 = vmatpush2.bf16.msra.mxu0 %v3223
      %4515 = vmatprep.mubr.bf16.mxu0 %v2104
      %4516 = vmatmul.mubr.bf16.gmra.mxu0 %v2103
      %v4517 = vpop.f32.mrf.mxu0
      %v4518 = vadd.f32 %v4229, %v4517
      %v4519 = vpop.f32.mrf.mxu0
      %v4520 = vpop.f32.mrf.mxu0
      %v4521 = vadd.f32 %v4232, %v4520
      %v4522 = vpop.f32.mrf.mxu0
      %4523 = vmatprep.mubr.bf16.mxu0 %v2115
      %4524 = vmatmul.mubr.bf16.gmra.mxu0 %v2114
      %v4525 = vpop.f32.mrf.mxu0
      %v4526 = vadd.f32 %v4237, %v4525
      %v4527 = vpop.f32.mrf.mxu0
      %v4528 = vpop.f32.mrf.mxu0
      %v4529 = vadd.f32 %v4240, %v4528
      %v4530 = vpop.f32.mrf.mxu0
      %4531 = vmatprep.mubr.bf16.mxu0 %v2126
      %4532 = vmatmul.mubr.bf16.gmra.mxu0 %v2125
      %v4533 = vpop.f32.mrf.mxu0
      %v4534 = vadd.f32 %v4245, %v4533
      %v4535 = vpop.f32.mrf.mxu0
      %v4536 = vpop.f32.mrf.mxu0
      %v4537 = vadd.f32 %v4248, %v4536
      %v4538 = vpop.f32.mrf.mxu0
      %4539 = vmatprep.mubr.bf16.mxu0 %v2137
      %4540 = vmatmul.mubr.bf16.gmra.mxu0 %v2136
      %v4541 = vpop.f32.mrf.mxu0
      %v4542 = vadd.f32 %v4253, %v4541
      %v4543 = vpop.f32.mrf.mxu0
      %v4544 = vpop.f32.mrf.mxu0
      %v4545 = vadd.f32 %v4256, %v4544
      %v4546 = vpop.f32.mrf.mxu0
      %4547 = vmatprep.mubr.bf16.mxu0 %v2148
      %4548 = vmatmul.mubr.bf16.gmra.mxu0 %v2147
      %v4549 = vpop.f32.mrf.mxu0
      %v4550 = vadd.f32 %v4261, %v4549
      %v4551 = vpop.f32.mrf.mxu0
      %v4552 = vpop.f32.mrf.mxu0
      %v4553 = vadd.f32 %v4264, %v4552
      %v4554 = vpop.f32.mrf.mxu0
      %4555 = vmatprep.mubr.bf16.mxu0 %v2159
      %4556 = vmatmul.mubr.bf16.gmra.mxu0 %v2158
      %v4557 = vpop.f32.mrf.mxu0
      %v4558 = vadd.f32 %v4269, %v4557
      %v4559 = vpop.f32.mrf.mxu0
      %v4560 = vpop.f32.mrf.mxu0
      %v4561 = vadd.f32 %v4272, %v4560
      %v4562 = vpop.f32.mrf.mxu0
      %4563 = vmatprep.mubr.bf16.mxu0 %v2170
      %4564 = vmatmul.mubr.bf16.gmra.mxu0 %v2169
      %v4565 = vpop.f32.mrf.mxu0
      %v4566 = vadd.f32 %v4277, %v4565
      %v4567 = vpop.f32.mrf.mxu0
      %v4568 = vpop.f32.mrf.mxu0
      %v4569 = vadd.f32 %v4280, %v4568
      %v4570 = vpop.f32.mrf.mxu0
      %4571 = vmatprep.mubr.bf16.mxu0 %v2181
      %4572 = vmatmul.mubr.bf16.gmra.mxu0 %v2180
      %v4573 = vpop.f32.mrf.mxu0
      %v4574 = vadd.f32 %v4285, %v4573
      %v4575 = vpop.f32.mrf.mxu0
      %v4576 = vpop.f32.mrf.mxu0
      %v4577 = vadd.f32 %v4288, %v4576
      %v4578 = vpop.f32.mrf.mxu0
      %4579 = vmatprep.mubr.bf16.mxu0 %v2192
      %4580 = vmatmul.mubr.bf16.gmra.mxu0 %v2191
      %v4581 = vpop.f32.mrf.mxu0
      %v4582 = vadd.f32 %v4293, %v4581
      %v4583 = vpop.f32.mrf.mxu0
      %v4584 = vpop.f32.mrf.mxu0
      %v4585 = vadd.f32 %v4296, %v4584
      %v4586 = vpop.f32.mrf.mxu0
      %4587 = vmatprep.mubr.bf16.mxu0 %v2203
      %4588 = vmatmul.mubr.bf16.gmra.mxu0 %v2202
      %v4589 = vpop.f32.mrf.mxu0
      %v4590 = vadd.f32 %v4301, %v4589
      %v4591 = vpop.f32.mrf.mxu0
      %v4592 = vpop.f32.mrf.mxu0
      %v4593 = vadd.f32 %v4304, %v4592
      %v4594 = vpop.f32.mrf.mxu0
      %4595 = vmatprep.mubr.bf16.mxu0 %v2214
      %4596 = vmatmul.mubr.bf16.gmra.mxu0 %v2213
      %v4597 = vpop.f32.mrf.mxu0
      %v4598 = vadd.f32 %v4309, %v4597
      %v4599 = vpop.f32.mrf.mxu0
      %v4600 = vpop.f32.mrf.mxu0
      %v4601 = vadd.f32 %v4312, %v4600
      %v4602 = vpop.f32.mrf.mxu0
      %4603 = vmatprep.mubr.bf16.mxu0 %v2225
      %4604 = vmatmul.mubr.bf16.gmra.mxu0 %v2224
      %v4605 = vpop.f32.mrf.mxu0
      %v4606 = vadd.f32 %v4317, %v4605
      %v4607 = vpop.f32.mrf.mxu0
      %v4608 = vpop.f32.mrf.mxu0
      %v4609 = vadd.f32 %v4320, %v4608
      %v4610 = vpop.f32.mrf.mxu0
      %4611 = vmatprep.mubr.bf16.mxu0 %v2236
      %4612 = vmatmul.mubr.bf16.gmra.mxu0 %v2235
      %v4613 = vpop.f32.mrf.mxu0
      %v4614 = vadd.f32 %v4325, %v4613
      %v4615 = vpop.f32.mrf.mxu0
      %v4616 = vpop.f32.mrf.mxu0
      %v4617 = vadd.f32 %v4328, %v4616
      %v4618 = vpop.f32.mrf.mxu0
      %4619 = vmatprep.mubr.bf16.mxu0 %v2247
      %4620 = vmatmul.mubr.bf16.gmra.mxu0 %v2246
      %v4621 = vpop.f32.mrf.mxu0
      %v4622 = vadd.f32 %v4333, %v4621
      %v4623 = vpop.f32.mrf.mxu0
      %v4624 = vpop.f32.mrf.mxu0
      %v4625 = vadd.f32 %v4336, %v4624
      %v4626 = vpop.f32.mrf.mxu0
      %4627 = vmatprep.mubr.bf16.mxu0 %v2258
      %4628 = vmatmul.mubr.bf16.gmra.mxu0 %v2257
      %v4629 = vpop.f32.mrf.mxu0
      %v4630 = vadd.f32 %v4341, %v4629
      %v4631 = vpop.f32.mrf.mxu0
      %v4632 = vpop.f32.mrf.mxu0
      %v4633 = vadd.f32 %v4344, %v4632
      %v4634 = vpop.f32.mrf.mxu0
      %4635 = vmatprep.mubr.bf16.mxu0 %v2269
      %4636 = vmatmul.mubr.bf16.gmra.mxu0 %v2268
      %v4637 = vpop.f32.mrf.mxu0
      %v4638 = vadd.f32 %v4349, %v4637
      %v4639 = vpop.f32.mrf.mxu0
      %v4640 = vpop.f32.mrf.mxu0
      %v4641 = vadd.f32 %v4352, %v4640
      %v4642 = vpop.f32.mrf.mxu0
      %4643 = vmatprep.mubr.bf16.mxu0 %v2280
      %4644 = vmatmul.mubr.bf16.gmra.mxu0 %v2279
      %v4645 = vpop.f32.mrf.mxu0
      %v4646 = vadd.f32 %v4357, %v4645
      %v4647 = vpop.f32.mrf.mxu0
      %v4648 = vpop.f32.mrf.mxu0
      %v4649 = vadd.f32 %v4360, %v4648
      %v4650 = vpop.f32.mrf.mxu0
      %4651 = vmatprep.mubr.bf16.mxu0 %v2291
      %4652 = vmatmul.mubr.bf16.gmra.mxu0 %v2290
      %v4653 = vpop.f32.mrf.mxu0
      %v4654 = vadd.f32 %v4365, %v4653
      %v4655 = vpop.f32.mrf.mxu0
      %v4656 = vpop.f32.mrf.mxu0
      %v4657 = vadd.f32 %v4368, %v4656
      %v4658 = vpop.f32.mrf.mxu0
      %4659 = vmatprep.mubr.bf16.mxu0 %v2302
      %4660 = vmatmul.mubr.bf16.gmra.mxu0 %v2301
      %v4661 = vpop.f32.mrf.mxu0
      %v4662 = vadd.f32 %v4373, %v4661
      %v4663 = vpop.f32.mrf.mxu0
      %v4664 = vpop.f32.mrf.mxu0
      %v4665 = vadd.f32 %v4376, %v4664
      %v4666 = vpop.f32.mrf.mxu0
      %4667 = vmatprep.mubr.bf16.mxu0 %v2313
      %4668 = vmatmul.mubr.bf16.gmra.mxu0 %v2312
      %v4669 = vpop.f32.mrf.mxu0
      %v4670 = vadd.f32 %v4381, %v4669
      %v4671 = vpop.f32.mrf.mxu0
      %v4672 = vpop.f32.mrf.mxu0
      %v4673 = vadd.f32 %v4384, %v4672
      %v4674 = vpop.f32.mrf.mxu0
      %4675 = vmatprep.mubr.bf16.mxu0 %v2324
      %4676 = vmatmul.mubr.bf16.gmra.mxu0 %v2323
      %v4677 = vpop.f32.mrf.mxu0
      %v4678 = vadd.f32 %v4389, %v4677
      %v4679 = vpop.f32.mrf.mxu0
      %v4680 = vpop.f32.mrf.mxu0
      %v4681 = vadd.f32 %v4392, %v4680
      %v4682 = vpop.f32.mrf.mxu0
      %4683 = vmatprep.mubr.bf16.mxu0 %v2335
      %4684 = vmatmul.mubr.bf16.gmra.mxu0 %v2334
      %v4685 = vpop.f32.mrf.mxu0
      %v4686 = vadd.f32 %v4397, %v4685
      %v4687 = vpop.f32.mrf.mxu0
      %v4688 = vpop.f32.mrf.mxu0
      %v4689 = vadd.f32 %v4400, %v4688
      %v4690 = vpop.f32.mrf.mxu0
      %4691 = vmatprep.mubr.bf16.mxu0 %v2346
      %4692 = vmatmul.mubr.bf16.gmra.mxu0 %v2345
      %v4693 = vpop.f32.mrf.mxu0
      %v4694 = vadd.f32 %v4405, %v4693
      %v4695 = vpop.f32.mrf.mxu0
      %v4696 = vpop.f32.mrf.mxu0
      %v4697 = vadd.f32 %v4408, %v4696
      %v4698 = vpop.f32.mrf.mxu0
      %4699 = vmatprep.mubr.bf16.mxu0 %v2357
      %4700 = vmatmul.mubr.bf16.gmra.mxu0 %v2356
      %v4701 = vpop.f32.mrf.mxu0
      %v4702 = vadd.f32 %v4413, %v4701
      %v4703 = vpop.f32.mrf.mxu0
      %v4704 = vpop.f32.mrf.mxu0
      %v4705 = vadd.f32 %v4416, %v4704
      %v4706 = vpop.f32.mrf.mxu0
      %4707 = vmatprep.mubr.bf16.mxu0 %v2368
      %4708 = vmatmul.mubr.bf16.gmra.mxu0 %v2367
      %v4709 = vpop.f32.mrf.mxu0
      %v4710 = vadd.f32 %v4421, %v4709
      %v4711 = vpop.f32.mrf.mxu0
      %v4712 = vpop.f32.mrf.mxu0
      %v4713 = vadd.f32 %v4424, %v4712
      %v4714 = vpop.f32.mrf.mxu0
      %4715 = vmatprep.mubr.bf16.mxu0 %v2379
      %4716 = vmatmul.mubr.bf16.gmra.mxu0 %v2378
      %v4717 = vpop.f32.mrf.mxu0
      %v4718 = vadd.f32 %v4429, %v4717
      %v4719 = vpop.f32.mrf.mxu0
      %v4720 = vpop.f32.mrf.mxu0
      %v4721 = vadd.f32 %v4432, %v4720
      %v4722 = vpop.f32.mrf.mxu0
      %4723 = vmatprep.mubr.bf16.mxu0 %v2390
      %4724 = vmatmul.mubr.bf16.gmra.mxu0 %v2389
      %v4725 = vpop.f32.mrf.mxu0
      %v4726 = vadd.f32 %v4437, %v4725
      %v4727 = vpop.f32.mrf.mxu0
      %v4728 = vpop.f32.mrf.mxu0
      %v4729 = vadd.f32 %v4440, %v4728
      %v4730 = vpop.f32.mrf.mxu0
      %4731 = vmatprep.mubr.bf16.mxu0 %v2401
      %4732 = vmatmul.mubr.bf16.gmra.mxu0 %v2400
      %v4733 = vpop.f32.mrf.mxu0
      %v4734 = vadd.f32 %v4445, %v4733
      %v4735 = vpop.f32.mrf.mxu0
      %v4736 = vpop.f32.mrf.mxu0
      %v4737 = vadd.f32 %v4448, %v4736
      %v4738 = vpop.f32.mrf.mxu0
      %4739 = vmatprep.mubr.bf16.mxu0 %v2412
      %4740 = vmatmul.mubr.bf16.gmra.mxu0 %v2411
      %v4741 = vpop.f32.mrf.mxu0
      %v4742 = vadd.f32 %v4453, %v4741
      %v4743 = vpop.f32.mrf.mxu0
      %v4744 = vpop.f32.mrf.mxu0
      %v4745 = vadd.f32 %v4456, %v4744
      %v4746 = vpop.f32.mrf.mxu0
      %4747 = vmatprep.mubr.bf16.mxu0 %v2423
      %4748 = vmatmul.mubr.bf16.gmra.mxu0 %v2422
      %v4749 = vpop.f32.mrf.mxu0
      %v4750 = vadd.f32 %v4461, %v4749
      %v4751 = vpop.f32.mrf.mxu0
      %v4752 = vpop.f32.mrf.mxu0
      %v4753 = vadd.f32 %v4464, %v4752
      %v4754 = vpop.f32.mrf.mxu0
      %4755 = vmatprep.mubr.bf16.mxu0 %v2434
      %4756 = vmatmul.mubr.bf16.gmra.mxu0 %v2433
      %v4757 = vpop.f32.mrf.mxu0
      %v4758 = vadd.f32 %v4469, %v4757
      %v4759 = vpop.f32.mrf.mxu0
      %v4760 = vpop.f32.mrf.mxu0
      %v4761 = vadd.f32 %v4472, %v4760
      %v4762 = vpop.f32.mrf.mxu0
      %4763 = vmatprep.mubr.bf16.mxu0 %v2445
      %4764 = vmatmul.mubr.bf16.gmra.mxu0 %v2444
      %v4765 = vpop.f32.mrf.mxu0
      %v4766 = vadd.f32 %v4477, %v4765
      %v4767 = vpop.f32.mrf.mxu0
      %v4768 = vpop.f32.mrf.mxu0
      %v4769 = vadd.f32 %v4480, %v4768
      %v4770 = vpop.f32.mrf.mxu0
      %4771 = vdwg.mxu0
      %4772 = vmatprep.subr.bf16.mxu0 0
      %4773 = vmatpush1.bf16.msra.mxu0 %v3238
      %4774 = vmatprep.subr.bf16.mxu0 0
      %4775 = vmatpush1.bf16.msra.mxu0 %v3237
      %4776 = vmatprep.subr.bf16.mxu0 0
      %4777 = vmatpush1.bf16.msra.mxu0 %v3236
      %4778 = vmatprep.subr.bf16.mxu0 0
      %4779 = vmatpush1.bf16.msra.mxu0 %v3235
      %4780 = vmatprep.subr.bf16.mxu0 0
      %4781 = vmatpush1.bf16.msra.mxu0 %v3234
      %4782 = vmatprep.subr.bf16.mxu0 0
      %4783 = vmatpush1.bf16.msra.mxu0 %v3233
      %4784 = vmatprep.subr.bf16.mxu0 0
      %4785 = vmatpush1.bf16.msra.mxu0 %v3232
      %4786 = vmatprep.subr.bf16.mxu0 0
      %4787 = vmatpush1.bf16.msra.mxu0 %v3231
      %4788 = vmatprep.subr.bf16.mxu0 0
      %4789 = vmatpush2.bf16.msra.mxu0 0
      %4790 = vmatprep.subr.bf16.mxu0 0
      %4791 = vmatpush2.bf16.msra.mxu0 0
      %4792 = vmatprep.subr.bf16.mxu0 0
      %4793 = vmatpush2.bf16.msra.mxu0 0
      %4794 = vmatprep.subr.bf16.mxu0 0
      %4795 = vmatpush2.bf16.msra.mxu0 0
      %4796 = vmatprep.subr.bf16.mxu0 0
      %4797 = vmatpush2.bf16.msra.mxu0 0
      %4798 = vmatprep.subr.bf16.mxu0 0
      %4799 = vmatpush2.bf16.msra.mxu0 0
      %4800 = vmatprep.subr.bf16.mxu0 0
      %4801 = vmatpush2.bf16.msra.mxu0 0
      %4802 = vmatprep.subr.bf16.mxu0 0
      %4803 = vmatpush2.bf16.msra.mxu0 0
      %4804 = vmatprep.mubr.bf16.mxu0 0
      %4805 = vmatmul.mubr.bf16.gmra.mxu0 %v2105
      %v4806 = vpop.f32.mrf.mxu0
      %v4807 = vadd.f32 %v4518, %v4806
      %v4808 = vpop.f32.mrf.mxu0
      %v4809 = vpop.f32.mrf.mxu0
      %v4810 = vadd.f32 %v4521, %v4809
      %v4811 = vpop.f32.mrf.mxu0
      %4812 = vmatprep.mubr.bf16.mxu0 0
      %4813 = vmatmul.mubr.bf16.gmra.mxu0 %v2116
      %v4814 = vpop.f32.mrf.mxu0
      %v4815 = vadd.f32 %v4526, %v4814
      %v4816 = vpop.f32.mrf.mxu0
      %v4817 = vpop.f32.mrf.mxu0
      %v4818 = vadd.f32 %v4529, %v4817
      %v4819 = vpop.f32.mrf.mxu0
      %4820 = vmatprep.mubr.bf16.mxu0 0
      %4821 = vmatmul.mubr.bf16.gmra.mxu0 %v2127
      %v4822 = vpop.f32.mrf.mxu0
      %v4823 = vadd.f32 %v4534, %v4822
      %v4824 = vpop.f32.mrf.mxu0
      %v4825 = vpop.f32.mrf.mxu0
      %v4826 = vadd.f32 %v4537, %v4825
      %v4827 = vpop.f32.mrf.mxu0
      %4828 = vmatprep.mubr.bf16.mxu0 0
      %4829 = vmatmul.mubr.bf16.gmra.mxu0 %v2138
      %v4830 = vpop.f32.mrf.mxu0
      %v4831 = vadd.f32 %v4542, %v4830
      %v4832 = vpop.f32.mrf.mxu0
      %v4833 = vpop.f32.mrf.mxu0
      %v4834 = vadd.f32 %v4545, %v4833
      %v4835 = vpop.f32.mrf.mxu0
      %4836 = vmatprep.mubr.bf16.mxu0 0
      %4837 = vmatmul.mubr.bf16.gmra.mxu0 %v2149
      %v4838 = vpop.f32.mrf.mxu0
      %v4839 = vadd.f32 %v4550, %v4838
      %v4840 = vpop.f32.mrf.mxu0
      %v4841 = vpop.f32.mrf.mxu0
      %v4842 = vadd.f32 %v4553, %v4841
      %v4843 = vpop.f32.mrf.mxu0
      %4844 = vmatprep.mubr.bf16.mxu0 0
      %4845 = vmatmul.mubr.bf16.gmra.mxu0 %v2160
      %v4846 = vpop.f32.mrf.mxu0
      %v4847 = vadd.f32 %v4558, %v4846
      %v4848 = vpop.f32.mrf.mxu0
      %v4849 = vpop.f32.mrf.mxu0
      %v4850 = vadd.f32 %v4561, %v4849
      %v4851 = vpop.f32.mrf.mxu0
      %4852 = vmatprep.mubr.bf16.mxu0 0
      %4853 = vmatmul.mubr.bf16.gmra.mxu0 %v2171
      %v4854 = vpop.f32.mrf.mxu0
      %v4855 = vadd.f32 %v4566, %v4854
      %v4856 = vpop.f32.mrf.mxu0
      %v4857 = vpop.f32.mrf.mxu0
      %v4858 = vadd.f32 %v4569, %v4857
      %v4859 = vpop.f32.mrf.mxu0
      %4860 = vmatprep.mubr.bf16.mxu0 0
      %4861 = vmatmul.mubr.bf16.gmra.mxu0 %v2182
      %v4862 = vpop.f32.mrf.mxu0
      %v4863 = vadd.f32 %v4574, %v4862
      %v4864 = vpop.f32.mrf.mxu0
      %v4865 = vpop.f32.mrf.mxu0
      %v4866 = vadd.f32 %v4577, %v4865
      %v4867 = vpop.f32.mrf.mxu0
      %4868 = vmatprep.mubr.bf16.mxu0 0
      %4869 = vmatmul.mubr.bf16.gmra.mxu0 %v2193
      %v4870 = vpop.f32.mrf.mxu0
      %v4871 = vadd.f32 %v4582, %v4870
      %v4872 = vpop.f32.mrf.mxu0
      %v4873 = vpop.f32.mrf.mxu0
      %v4874 = vadd.f32 %v4585, %v4873
      %v4875 = vpop.f32.mrf.mxu0
      %4876 = vmatprep.mubr.bf16.mxu0 0
      %4877 = vmatmul.mubr.bf16.gmra.mxu0 %v2204
      %v4878 = vpop.f32.mrf.mxu0
      %v4879 = vadd.f32 %v4590, %v4878
      %v4880 = vpop.f32.mrf.mxu0
      %v4881 = vpop.f32.mrf.mxu0
      %v4882 = vadd.f32 %v4593, %v4881
      %v4883 = vpop.f32.mrf.mxu0
      %4884 = vmatprep.mubr.bf16.mxu0 0
      %4885 = vmatmul.mubr.bf16.gmra.mxu0 %v2215
      %v4886 = vpop.f32.mrf.mxu0
      %v4887 = vadd.f32 %v4598, %v4886
      %v4888 = vpop.f32.mrf.mxu0
      %v4889 = vpop.f32.mrf.mxu0
      %v4890 = vadd.f32 %v4601, %v4889
      %v4891 = vpop.f32.mrf.mxu0
      %4892 = vmatprep.mubr.bf16.mxu0 0
      %4893 = vmatmul.mubr.bf16.gmra.mxu0 %v2226
      %v4894 = vpop.f32.mrf.mxu0
      %v4895 = vadd.f32 %v4606, %v4894
      %v4896 = vpop.f32.mrf.mxu0
      %v4897 = vpop.f32.mrf.mxu0
      %v4898 = vadd.f32 %v4609, %v4897
      %v4899 = vpop.f32.mrf.mxu0
      %4900 = vmatprep.mubr.bf16.mxu0 0
      %4901 = vmatmul.mubr.bf16.gmra.mxu0 %v2237
      %v4902 = vpop.f32.mrf.mxu0
      %v4903 = vadd.f32 %v4614, %v4902
      %v4904 = vpop.f32.mrf.mxu0
      %v4905 = vpop.f32.mrf.mxu0
      %v4906 = vadd.f32 %v4617, %v4905
      %v4907 = vpop.f32.mrf.mxu0
      %4908 = vmatprep.mubr.bf16.mxu0 0
      %4909 = vmatmul.mubr.bf16.gmra.mxu0 %v2248
      %v4910 = vpop.f32.mrf.mxu0
      %v4911 = vadd.f32 %v4622, %v4910
      %v4912 = vpop.f32.mrf.mxu0
      %v4913 = vpop.f32.mrf.mxu0
      %v4914 = vadd.f32 %v4625, %v4913
      %v4915 = vpop.f32.mrf.mxu0
      %4916 = vmatprep.mubr.bf16.mxu0 0
      %4917 = vmatmul.mubr.bf16.gmra.mxu0 %v2259
      %v4918 = vpop.f32.mrf.mxu0
      %v4919 = vadd.f32 %v4630, %v4918
      %v4920 = vpop.f32.mrf.mxu0
      %v4921 = vpop.f32.mrf.mxu0
      %v4922 = vadd.f32 %v4633, %v4921
      %v4923 = vpop.f32.mrf.mxu0
      %4924 = vmatprep.mubr.bf16.mxu0 0
      %4925 = vmatmul.mubr.bf16.gmra.mxu0 %v2270
      %v4926 = vpop.f32.mrf.mxu0
      %v4927 = vadd.f32 %v4638, %v4926
      %v4928 = vpop.f32.mrf.mxu0
      %v4929 = vpop.f32.mrf.mxu0
      %v4930 = vadd.f32 %v4641, %v4929
      %v4931 = vpop.f32.mrf.mxu0
      %4932 = vmatprep.mubr.bf16.mxu0 0
      %4933 = vmatmul.mubr.bf16.gmra.mxu0 %v2281
      %v4934 = vpop.f32.mrf.mxu0
      %v4935 = vadd.f32 %v4646, %v4934
      %v4936 = vpop.f32.mrf.mxu0
      %v4937 = vpop.f32.mrf.mxu0
      %v4938 = vadd.f32 %v4649, %v4937
      %v4939 = vpop.f32.mrf.mxu0
      %4940 = vmatprep.mubr.bf16.mxu0 0
      %4941 = vmatmul.mubr.bf16.gmra.mxu0 %v2292
      %v4942 = vpop.f32.mrf.mxu0
      %v4943 = vadd.f32 %v4654, %v4942
      %v4944 = vpop.f32.mrf.mxu0
      %v4945 = vpop.f32.mrf.mxu0
      %v4946 = vadd.f32 %v4657, %v4945
      %v4947 = vpop.f32.mrf.mxu0
      %4948 = vmatprep.mubr.bf16.mxu0 0
      %4949 = vmatmul.mubr.bf16.gmra.mxu0 %v2303
      %v4950 = vpop.f32.mrf.mxu0
      %v4951 = vadd.f32 %v4662, %v4950
      %v4952 = vpop.f32.mrf.mxu0
      %v4953 = vpop.f32.mrf.mxu0
      %v4954 = vadd.f32 %v4665, %v4953
      %v4955 = vpop.f32.mrf.mxu0
      %4956 = vmatprep.mubr.bf16.mxu0 0
      %4957 = vmatmul.mubr.bf16.gmra.mxu0 %v2314
      %v4958 = vpop.f32.mrf.mxu0
      %v4959 = vadd.f32 %v4670, %v4958
      %v4960 = vpop.f32.mrf.mxu0
      %v4961 = vpop.f32.mrf.mxu0
      %v4962 = vadd.f32 %v4673, %v4961
      %v4963 = vpop.f32.mrf.mxu0
      %4964 = vmatprep.mubr.bf16.mxu0 0
      %4965 = vmatmul.mubr.bf16.gmra.mxu0 %v2325
      %v4966 = vpop.f32.mrf.mxu0
      %v4967 = vadd.f32 %v4678, %v4966
      %v4968 = vpop.f32.mrf.mxu0
      %v4969 = vpop.f32.mrf.mxu0
      %v4970 = vadd.f32 %v4681, %v4969
      %v4971 = vpop.f32.mrf.mxu0
      %4972 = vmatprep.mubr.bf16.mxu0 0
      %4973 = vmatmul.mubr.bf16.gmra.mxu0 %v2336
      %v4974 = vpop.f32.mrf.mxu0
      %v4975 = vadd.f32 %v4686, %v4974
      %v4976 = vpop.f32.mrf.mxu0
      %v4977 = vpop.f32.mrf.mxu0
      %v4978 = vadd.f32 %v4689, %v4977
      %v4979 = vpop.f32.mrf.mxu0
      %4980 = vmatprep.mubr.bf16.mxu0 0
      %4981 = vmatmul.mubr.bf16.gmra.mxu0 %v2347
      %v4982 = vpop.f32.mrf.mxu0
      %v4983 = vadd.f32 %v4694, %v4982
      %v4984 = vpop.f32.mrf.mxu0
      %v4985 = vpop.f32.mrf.mxu0
      %v4986 = vadd.f32 %v4697, %v4985
      %v4987 = vpop.f32.mrf.mxu0
      %4988 = vmatprep.mubr.bf16.mxu0 0
      %4989 = vmatmul.mubr.bf16.gmra.mxu0 %v2358
      %v4990 = vpop.f32.mrf.mxu0
      %v4991 = vadd.f32 %v4702, %v4990
      %v4992 = vpop.f32.mrf.mxu0
      %v4993 = vpop.f32.mrf.mxu0
      %v4994 = vadd.f32 %v4705, %v4993
      %v4995 = vpop.f32.mrf.mxu0
      %4996 = vmatprep.mubr.bf16.mxu0 0
      %4997 = vmatmul.mubr.bf16.gmra.mxu0 %v2369
      %v4998 = vpop.f32.mrf.mxu0
      %v4999 = vadd.f32 %v4710, %v4998
      %v5000 = vpop.f32.mrf.mxu0
      %v5001 = vpop.f32.mrf.mxu0
      %v5002 = vadd.f32 %v4713, %v5001
      %v5003 = vpop.f32.mrf.mxu0
      %5004 = vmatprep.mubr.bf16.mxu0 0
      %5005 = vmatmul.mubr.bf16.gmra.mxu0 %v2380
      %v5006 = vpop.f32.mrf.mxu0
      %v5007 = vadd.f32 %v4718, %v5006
      %v5008 = vpop.f32.mrf.mxu0
      %v5009 = vpop.f32.mrf.mxu0
      %v5010 = vadd.f32 %v4721, %v5009
      %v5011 = vpop.f32.mrf.mxu0
      %5012 = vmatprep.mubr.bf16.mxu0 0
      %5013 = vmatmul.mubr.bf16.gmra.mxu0 %v2391
      %v5014 = vpop.f32.mrf.mxu0
      %v5015 = vadd.f32 %v4726, %v5014
      %v5016 = vpop.f32.mrf.mxu0
      %v5017 = vpop.f32.mrf.mxu0
      %v5018 = vadd.f32 %v4729, %v5017
      %v5019 = vpop.f32.mrf.mxu0
      %5020 = vmatprep.mubr.bf16.mxu0 0
      %5021 = vmatmul.mubr.bf16.gmra.mxu0 %v2402
      %v5022 = vpop.f32.mrf.mxu0
      %v5023 = vadd.f32 %v4734, %v5022
      %v5024 = vpop.f32.mrf.mxu0
      %v5025 = vpop.f32.mrf.mxu0
      %v5026 = vadd.f32 %v4737, %v5025
      %v5027 = vpop.f32.mrf.mxu0
      %5028 = vmatprep.mubr.bf16.mxu0 0
      %5029 = vmatmul.mubr.bf16.gmra.mxu0 %v2413
      %v5030 = vpop.f32.mrf.mxu0
      %v5031 = vadd.f32 %v4742, %v5030
      %v5032 = vpop.f32.mrf.mxu0
      %v5033 = vpop.f32.mrf.mxu0
      %v5034 = vadd.f32 %v4745, %v5033
      %v5035 = vpop.f32.mrf.mxu0
      %5036 = vmatprep.mubr.bf16.mxu0 0
      %5037 = vmatmul.mubr.bf16.gmra.mxu0 %v2424
      %v5038 = vpop.f32.mrf.mxu0
      %v5039 = vadd.f32 %v4750, %v5038
      %v5040 = vpop.f32.mrf.mxu0
      %v5041 = vpop.f32.mrf.mxu0
      %v5042 = vadd.f32 %v4753, %v5041
      %v5043 = vpop.f32.mrf.mxu0
      %5044 = vmatprep.mubr.bf16.mxu0 0
      %5045 = vmatmul.mubr.bf16.gmra.mxu0 %v2435
      %v5046 = vpop.f32.mrf.mxu0
      %v5047 = vadd.f32 %v4758, %v5046
      %v5048 = vpop.f32.mrf.mxu0
      %v5049 = vpop.f32.mrf.mxu0
      %v5050 = vadd.f32 %v4761, %v5049
      %v5051 = vpop.f32.mrf.mxu0
      %5052 = vmatprep.mubr.bf16.mxu0 0
      %5053 = vmatmul.mubr.bf16.gmra.mxu0 %v2446
      %v5054 = vpop.f32.mrf.mxu0
      %v5055 = vadd.f32 %v4766, %v5054
      %v5056 = vpop.f32.mrf.mxu0
      %v5057 = vpop.f32.mrf.mxu0
      %v5058 = vadd.f32 %v4769, %v5057
      %v5059 = vpop.f32.mrf.mxu0
      %5060 = vdwg.mxu0
      %v5061 = vadd.f32 %v383, %v4807
      %v5062 = vadd.f32 %v384, %v4810
      %v5063 = vadd.f32 %v385, %v4815
      %v5064 = vadd.f32 %v386, %v4818
      %v5065 = vadd.f32 %v387, %v4823
      %v5066 = vadd.f32 %v388, %v4826
      %v5067 = vadd.f32 %v389, %v4831
      %v5068 = vadd.f32 %v390, %v4834
      %v5069 = vadd.f32 %v391, %v4839
      %v5070 = vadd.f32 %v392, %v4842
      %v5071 = vadd.f32 %v393, %v4847
      %v5072 = vadd.f32 %v394, %v4850
      %v5073 = vadd.f32 %v395, %v4855
      %v5074 = vadd.f32 %v396, %v4858
      %v5075 = vadd.f32 %v397, %v4863
      %v5076 = vadd.f32 %v398, %v4866
      %v5077 = vadd.f32 %v399, %v4871
      %v5078 = vadd.f32 %v400, %v4874
      %v5079 = vadd.f32 %v401, %v4879
      %v5080 = vadd.f32 %v402, %v4882
      %v5081 = vadd.f32 %v403, %v4887
      %v5082 = vadd.f32 %v404, %v4890
      %v5083 = vadd.f32 %v405, %v4895
      %v5084 = vadd.f32 %v406, %v4898
      %v5085 = vadd.f32 %v407, %v4903
      %v5086 = vadd.f32 %v408, %v4906
      %v5087 = vadd.f32 %v409, %v4911
      %v5088 = vadd.f32 %v410, %v4914
      %v5089 = vadd.f32 %v411, %v4919
      %v5090 = vadd.f32 %v412, %v4922
      %v5091 = vadd.f32 %v413, %v4927
      %v5092 = vadd.f32 %v414, %v4930
      %v5093 = vadd.f32 %v415, %v4935
      %v5094 = vadd.f32 %v416, %v4938
      %v5095 = vadd.f32 %v417, %v4943
      %v5096 = vadd.f32 %v418, %v4946
      %v5097 = vadd.f32 %v419, %v4951
      %v5098 = vadd.f32 %v420, %v4954
      %v5099 = vadd.f32 %v421, %v4959
      %v5100 = vadd.f32 %v422, %v4962
      %v5101 = vadd.f32 %v423, %v4967
      %v5102 = vadd.f32 %v424, %v4970
      %v5103 = vadd.f32 %v425, %v4975
      %v5104 = vadd.f32 %v426, %v4978
      %v5105 = vadd.f32 %v427, %v4983
      %v5106 = vadd.f32 %v428, %v4986
      %v5107 = vadd.f32 %v429, %v4991
      %v5108 = vadd.f32 %v430, %v4994
      %v5109 = vadd.f32 %v431, %v4999
      %v5110 = vadd.f32 %v432, %v5002
      %v5111 = vadd.f32 %v433, %v5007
      %v5112 = vadd.f32 %v434, %v5010
      %v5113 = vadd.f32 %v435, %v5015
      %v5114 = vadd.f32 %v436, %v5018
      %v5115 = vadd.f32 %v437, %v5023
      %v5116 = vadd.f32 %v438, %v5026
      %v5117 = vadd.f32 %v439, %v5031
      %v5118 = vadd.f32 %v440, %v5034
      %v5119 = vadd.f32 %v441, %v5039
      %v5120 = vadd.f32 %v442, %v5042
      %v5121 = vadd.f32 %v443, %v5047
      %v5122 = vadd.f32 %v444, %v5050
      %v5123 = vadd.f32 %v445, %v5055
      %v5124 = vadd.f32 %v446, %v5058
      %vm5125 = vcmask 261120
      %5126 = vst.msk [vmem:[%s247] sm:$0xff] %vm5125, %v5061
      %5127 = vst.msk [vmem:[%s247 + $0x8] sm:$0xff] %vm5125, %v5062
      %5128 = vst.msk [vmem:[%s247 + $0x10] sm:$0xff] %vm5125, %v5063
      %5129 = vst.msk [vmem:[%s247 + $0x18] sm:$0xff] %vm5125, %v5064
      %5130 = vst.msk [vmem:[%s247 + $0x20] sm:$0xff] %vm5125, %v5065
      %5131 = vst.msk [vmem:[%s247 + $0x28] sm:$0xff] %vm5125, %v5066
      %5132 = vst.msk [vmem:[%s247 + $0x30] sm:$0xff] %vm5125, %v5067
      %5133 = vst.msk [vmem:[%s247 + $0x38] sm:$0xff] %vm5125, %v5068
      %5134 = vst.msk [vmem:[%s247 + $0x40] sm:$0xff] %vm5125, %v5069
      %5135 = vst.msk [vmem:[%s247 + $0x48] sm:$0xff] %vm5125, %v5070
      %5136 = vst.msk [vmem:[%s247 + $0x50] sm:$0xff] %vm5125, %v5071
      %5137 = vst.msk [vmem:[%s247 + $0x58] sm:$0xff] %vm5125, %v5072
      %5138 = vst.msk [vmem:[%s247 + $0x60] sm:$0xff] %vm5125, %v5073
      %5139 = vst.msk [vmem:[%s247 + $0x68] sm:$0xff] %vm5125, %v5074
      %5140 = vst.msk [vmem:[%s247 + $0x70] sm:$0xff] %vm5125, %v5075
      %5141 = vst.msk [vmem:[%s247 + $0x78] sm:$0xff] %vm5125, %v5076
      %5142 = vst.msk [vmem:[%s247 + $0x80] sm:$0xff] %vm5125, %v5077
      %5143 = vst.msk [vmem:[%s247 + $0x88] sm:$0xff] %vm5125, %v5078
      %5144 = vst.msk [vmem:[%s247 + $0x90] sm:$0xff] %vm5125, %v5079
      %5145 = vst.msk [vmem:[%s247 + $0x98] sm:$0xff] %vm5125, %v5080
      %5146 = vst.msk [vmem:[%s247 + $0xa0] sm:$0xff] %vm5125, %v5081
      %5147 = vst.msk [vmem:[%s247 + $0xa8] sm:$0xff] %vm5125, %v5082
      %5148 = vst.msk [vmem:[%s247 + $0xb0] sm:$0xff] %vm5125, %v5083
      %5149 = vst.msk [vmem:[%s247 + $0xb8] sm:$0xff] %vm5125, %v5084
      %5150 = vst.msk [vmem:[%s247 + $0xc0] sm:$0xff] %vm5125, %v5085
      %5151 = vst.msk [vmem:[%s247 + $0xc8] sm:$0xff] %vm5125, %v5086
      %5152 = vst.msk [vmem:[%s247 + $0xd0] sm:$0xff] %vm5125, %v5087
      %5153 = vst.msk [vmem:[%s247 + $0xd8] sm:$0xff] %vm5125, %v5088
      %5154 = vst.msk [vmem:[%s247 + $0xe0] sm:$0xff] %vm5125, %v5089
      %5155 = vst.msk [vmem:[%s247 + $0xe8] sm:$0xff] %vm5125, %v5090
      %5156 = vst.msk [vmem:[%s247 + $0xf0] sm:$0xff] %vm5125, %v5091
      %5157 = vst.msk [vmem:[%s247 + $0xf8] sm:$0xff] %vm5125, %v5092
      %5158 = vst.msk [vmem:[%s247 + $0x100] sm:$0xff] %vm5125, %v5093
      %5159 = vst.msk [vmem:[%s247 + $0x108] sm:$0xff] %vm5125, %v5094
      %5160 = vst.msk [vmem:[%s247 + $0x110] sm:$0xff] %vm5125, %v5095
      %5161 = vst.msk [vmem:[%s247 + $0x118] sm:$0xff] %vm5125, %v5096
      %5162 = vst.msk [vmem:[%s247 + $0x120] sm:$0xff] %vm5125, %v5097
      %5163 = vst.msk [vmem:[%s247 + $0x128] sm:$0xff] %vm5125, %v5098
      %5164 = vst.msk [vmem:[%s247 + $0x130] sm:$0xff] %vm5125, %v5099
      %5165 = vst.msk [vmem:[%s247 + $0x138] sm:$0xff] %vm5125, %v5100
      %5166 = vst.msk [vmem:[%s247 + $0x140] sm:$0xff] %vm5125, %v5101
      %5167 = vst.msk [vmem:[%s247 + $0x148] sm:$0xff] %vm5125, %v5102
      %5168 = vst.msk [vmem:[%s247 + $0x150] sm:$0xff] %vm5125, %v5103
      %5169 = vst.msk [vmem:[%s247 + $0x158] sm:$0xff] %vm5125, %v5104
      %5170 = vst.msk [vmem:[%s247 + $0x160] sm:$0xff] %vm5125, %v5105
      %5171 = vst.msk [vmem:[%s247 + $0x168] sm:$0xff] %vm5125, %v5106
      %5172 = vst.msk [vmem:[%s247 + $0x170] sm:$0xff] %vm5125, %v5107
      %5173 = vst.msk [vmem:[%s247 + $0x178] sm:$0xff] %vm5125, %v5108
      %5174 = vst.msk [vmem:[%s247 + $0x180] sm:$0xff] %vm5125, %v5109
      %5175 = vst.msk [vmem:[%s247 + $0x188] sm:$0xff] %vm5125, %v5110
      %5176 = vst.msk [vmem:[%s247 + $0x190] sm:$0xff] %vm5125, %v5111
      %5177 = vst.msk [vmem:[%s247 + $0x198] sm:$0xff] %vm5125, %v5112
      %5178 = vst.msk [vmem:[%s247 + $0x1a0] sm:$0xff] %vm5125, %v5113
      %5179 = vst.msk [vmem:[%s247 + $0x1a8] sm:$0xff] %vm5125, %v5114
      %5180 = vst.msk [vmem:[%s247 + $0x1b0] sm:$0xff] %vm5125, %v5115
      %5181 = vst.msk [vmem:[%s247 + $0x1b8] sm:$0xff] %vm5125, %v5116
      %5182 = vst.msk [vmem:[%s247 + $0x1c0] sm:$0xff] %vm5125, %v5117
      %5183 = vst.msk [vmem:[%s247 + $0x1c8] sm:$0xff] %vm5125, %v5118
      %5184 = vst.msk [vmem:[%s247 + $0x1d0] sm:$0xff] %vm5125, %v5119
      %5185 = vst.msk [vmem:[%s247 + $0x1d8] sm:$0xff] %vm5125, %v5120
      %5186 = vst.msk [vmem:[%s247 + $0x1e0] sm:$0xff] %vm5125, %v5121
      %5187 = vst.msk [vmem:[%s247 + $0x1e8] sm:$0xff] %vm5125, %v5122
      %5188 = vst.msk [vmem:[%s247 + $0x1f0] sm:$0xff] %vm5125, %v5123
      %5189 = vst.msk [vmem:[%s247 + $0x1f8] sm:$0xff] %vm5125, %v5124
      %s5190 = smul.u32 64, %s18
      %p5191 = scmp.lt.s32.totalorder %s5190, 127
      %s5192 = scalar_select %p5191, %s5190, 127
      %s5193 = smul.addr %s5192, 8
      %s5194 = scalar_lea.vmem %s3, %s5193
      // Predicated region
      $region37: #{mfunit_add1_forward.6} parent=31 // pred_check
        %p5195 = pneg %p124
      $region38: #{mfunit_add1_forward.6} parent=31 // pred_check_branch
        %5197 = sbr.rel (%p5195) target = $region40
      $region39: #{mfunit_add1_forward.6} parent=31 // pred_region
        %s5198 = smul.u32 64, %s18
      $region40: #{mfunit_add1_forward.6} parent=31 // pred_fallthru
        _
    $region32: #{mfunit_add1_forward.6} parent=5 // pred_fallthru
      _
    %p5199 = scmp.le.s32.totalorder 2, %s9
    // Predicated region
    $region41: #{mfunit_add1_forward.6} parent=5 // pred_check
      %p5200 = pneg %p5199
    $region42: #{mfunit_add1_forward.6} parent=5 // pred_check_branch
      %5202 = sbr.rel (%p5200) target = $region44
    $region43: #{mfunit_add1_forward.6} parent=5 // pred_region
      %s5203 = ssub.s32 %s9, 2
      // Predicated region
      $region45: #{mfunit_add1_forward.6} parent=43 // pred_check
        %p5204 = pneg %p130
      $region46: #{mfunit_add1_forward.6} parent=43 // pred_check_branch
        %5206 = sbr.rel (%p5204) target = $region48
      $region47: #{mfunit_add1_forward.6} parent=43 // pred_region
        %s5207 = smul.u32 64, %s20
        %p5208 = scmp.lt.s32.totalorder %s5207, 127
        %s5209 = scalar_select %p5208, %s5207, 127
        %s5210 = smul.addr %s5209, 8
        %s5211 = scalar_lea.vmem %s3, %s5210
      $region48: #{mfunit_add1_forward.6} parent=43 // pred_fallthru
        _
    $region44: #{mfunit_add1_forward.6} parent=5 // pred_fallthru
      _
  $region6: #{mfunit_add1_forward.6} parent=0 // loop_footer
    %s13 = sadd.s32 1, %s9
  $region7: #{mfunit_add1_forward.6} parent=0 // loop_footer_branch
    %8 = sbr.rel target = $region3
  $region8: #{mfunit_add1_forward.6} parent=0 // loop_exit
    _

// kernel: mfunit_add1_forward.7
$region0: #{mfunit_add1_forward.7}
  #allocation0 [shape = 'u32[]', space=smem, size = 0x4, offset = 0x4, fixed_abs, tag = 'smem constant byte address 0x4 - core index']
  #allocation1 [shape = 'u32[144,128]{1,0:T(1,128)}', space=vmem, size = 0x12000, scoped, tag = 'internal scratch']
  %s0 = inlined_call_operand.vmem [shape: f32[1024,32], index: 0, kind: input, shape index: {}]
  %s1 = inlined_call_operand.vmem [shape: bf16[1024,384], index: 1, kind: input, shape index: {}]
  %s2 = inlined_call_operand.vmem [shape: bf16[384,32], index: 2, kind: input, shape index: {}]
  %s3 = inlined_call_operand.hbm [shape: f32[1024,32], index: 3, kind: output, shape index: {}]
  %s4 = sld [smem:[#allocation0]]
  $region49: #{mfunit_add1_forward.7} parent=0
    _
  %s6 = ssub.s32 1, %s4
  %s7 = scalar_select 0, %s6, %s4
  $region1: #{mfunit_add1_forward.7} parent=0
    #allocation2 [shape = 'u8[524288]{0}', space=vmem, size = 0x80000, scoped, tag = 'output window, operand 0']
    #allocation3 [shape = 's32[2]{0}', space=sflag, size = 0x8, scoped, tag = 'scoped memory for mfunit_add1_forward.7']
    %8 = vsyncpa [#allocation3], 0
    %s9 = scalar_lea.sflag [#allocation3], 1
    %10 = vsyncpa %s9, 0
    loop: start=0, step=1, limit=4
    $region2: #{mfunit_add1_forward.7} parent=1 // loop_pre_header
      _
    $region3: #{mfunit_add1_forward.7} parent=1 // loop_header
      %s12 = sphi 0, %s16
      %p13 = scmp.ge.s32.totalorder %s12, 4
      %s19 = sphi 0, %s31
      %s20 = sphi 0, %s27
      %s21 = sphi 0, %s19
      %s22 = sphi 0, %s20
      %s23 = sphi 0, %s21
      %s24 = sphi 0, %s22
      %s34 = sphi 0, %s36
      %s37 = sphi 0, %s34
      %s38 = sphi 0, %s37
      %s54 = sphi 0, %s38
      %s62 = sphi 0, %s64
      %s65 = sphi 0, %s62
      %s66 = sphi 0, %s65
      %s82 = sphi 0, %s66
      %s88 = sphi 0, %s90
      %s91 = sphi 0, %s88
      %s92 = sphi 0, %s91
      %s108 = sphi 0, %s92
      %s114 = sphi 0, %s116
      %s117 = sphi 0, %s114
      %s118 = sphi 0, %s117
      %s134 = sphi 0, %s118
    $region4: #{mfunit_add1_forward.7} parent=1 // loop_header_branch
      %15 = sbr.rel (%p13) target = $region8
    $region5: #{mfunit_add1_forward.7} parent=1 // loop_body
      %s17 = ssub.s32 %s12, 1
      %s18 = ssub.s32 %s12, 2
      %s25 = sadd.s32 1, %s20
      %p26 = scmp.ge.s32.totalorder %s25, 1
      %s27 = scalar_select %p26, 0, %s25
      %s28 = sadd.s32 1, %s19
      %s29 = scalar_select %p26, %s28, %s19
      %p30 = scmp.ge.s32.totalorder %s29, 2
      %s31 = scalar_select %p30, 0, %s29
      %s32 = ssub.s32 %s19, %s31
      %p33 = scmp.eq.s32.totalorder %s32, 0
      %s35 = sadd.s32 %s34, 1
      %s36 = scalar_select %p33, %s34, %s35
      %p39 = pneg %p33
      %p40 = scmp.eq.s32.totalorder %s12, 1
      %p41 = por %p39, %p40
      %p42 = scmp.ne.s32.totalorder %s34, %s37
      %p43 = scmp.eq.s32.totalorder %s12, 0
      %p44 = por %p42, %p43
      %p45 = scmp.ne.s32.totalorder %s34, %s37
      %p46 = scmp.eq.s32.totalorder %s17, 1
      %p47 = por %p45, %p46
      %p48 = scmp.ne.s32.totalorder %s37, %s38
      %p49 = scmp.eq.s32.totalorder %s17, 0
      %p50 = por %p48, %p49
      %p51 = scmp.ne.s32.totalorder %s37, %s38
      %p52 = scmp.eq.s32.totalorder %s18, 1
      %p53 = por %p51, %p52
      %p55 = scmp.ne.s32.totalorder %s38, %s54
      %p56 = scmp.eq.s32.totalorder %s18, 0
      %p57 = por %p55, %p56
      %s58 = ssub.s32 %s19, %s31
      %s59 = ssub.s32 %s20, %s27
      %s60 = sor.u32 %s58, %s59
      %p61 = scmp.eq.s32.totalorder %s60, 0
      %s63 = sadd.s32 %s62, 1
      %s64 = scalar_select %p61, %s62, %s63
      %p67 = pneg %p61
      %p68 = scmp.eq.s32.totalorder %s12, 1
      %p69 = por %p67, %p68
      %p70 = scmp.ne.s32.totalorder %s62, %s65
      %p71 = scmp.eq.s32.totalorder %s12, 0
      %p72 = por %p70, %p71
      %p73 = scmp.ne.s32.totalorder %s62, %s65
      %p74 = scmp.eq.s32.totalorder %s17, 1
      %p75 = por %p73, %p74
      %p76 = scmp.ne.s32.totalorder %s65, %s66
      %p77 = scmp.eq.s32.totalorder %s17, 0
      %p78 = por %p76, %p77
      %p79 = scmp.ne.s32.totalorder %s65, %s66
      %p80 = scmp.eq.s32.totalorder %s18, 1
      %p81 = por %p79, %p80
      %p83 = scmp.ne.s32.totalorder %s66, %s82
      %p84 = scmp.eq.s32.totalorder %s18, 0
      %p85 = por %p83, %p84
      %s86 = ssub.s32 %s20, %s27
      %p87 = scmp.eq.s32.totalorder %s86, 0
      %s89 = sadd.s32 %s88, 1
      %s90 = scalar_select %p87, %s88, %s89
      %p93 = pneg %p87
      %p94 = scmp.eq.s32.totalorder %s12, 1
      %p95 = por %p93, %p94
      %p96 = scmp.ne.s32.totalorder %s88, %s91
      %p97 = scmp.eq.s32.totalorder %s12, 0
      %p98 = por %p96, %p97
      %p99 = scmp.ne.s32.totalorder %s88, %s91
      %p100 = scmp.eq.s32.totalorder %s17, 1
      %p101 = por %p99, %p100
      %p102 = scmp.ne.s32.totalorder %s91, %s92
      %p103 = scmp.eq.s32.totalorder %s17, 0
      %p104 = por %p102, %p103
      %p105 = scmp.ne.s32.totalorder %s91, %s92
      %p106 = scmp.eq.s32.totalorder %s18, 1
      %p107 = por %p105, %p106
      %p109 = scmp.ne.s32.totalorder %s92, %s108
      %p110 = scmp.eq.s32.totalorder %s18, 0
      %p111 = por %p109, %p110
      %s112 = ssub.s32 %s19, %s31
      %p113 = scmp.eq.s32.totalorder %s112, 0
      %s115 = sadd.s32 %s114, 1
      %s116 = scalar_select %p113, %s114, %s115
      %p119 = pneg %p113
      %p120 = scmp.eq.s32.totalorder %s12, 1
      %p121 = por %p119, %p120
      %p122 = scmp.ne.s32.totalorder %s114, %s117
      %p123 = scmp.eq.s32.totalorder %s12, 0
      %p124 = por %p122, %p123
      %p125 = scmp.ne.s32.totalorder %s114, %s117
      %p126 = scmp.eq.s32.totalorder %s17, 1
      %p127 = por %p125, %p126
      %p128 = scmp.ne.s32.totalorder %s117, %s118
      %p129 = scmp.eq.s32.totalorder %s17, 0
      %p130 = por %p128, %p129
      %p131 = scmp.ne.s32.totalorder %s117, %s118
      %p132 = scmp.eq.s32.totalorder %s18, 1
      %p133 = por %p131, %p132
      %p135 = scmp.ne.s32.totalorder %s118, %s134
      %p136 = scmp.eq.s32.totalorder %s18, 0
      %p137 = por %p135, %p136
      %p138 = scmp.le.s32.totalorder 1, %s12
      %p139 = scmp.lt.s32.totalorder %s12, 3
      %p140 = pnand %p138, %p139
      %p141 = pneg %p140
      // Predicated region
      $region9: #{mfunit_add1_forward.7} parent=5 // pred_check
        _
      $region10: #{mfunit_add1_forward.7} parent=5 // pred_check_branch
        %143 = sbr.rel (%p140) target = $region12
      $region11: #{mfunit_add1_forward.7} parent=5 // pred_region
        %s144 = ssub.s32 %s12, 1
        // Predicated region
        $region13: #{mfunit_add1_forward.7} parent=11 // pred_check
          %p145 = pneg %p104
        $region14: #{mfunit_add1_forward.7} parent=11 // pred_check_branch
          %147 = sbr.rel (%p145) target = $region16
        $region15: #{mfunit_add1_forward.7} parent=11 // pred_region
          %s148 = smul.u32 48, %s22
          %p149 = scmp.lt.s32.totalorder %s148, 47
          %s150 = scalar_select %p149, %s148, 47
          %s151 = smul.addr %s150, 4
          %s152 = scalar_lea.vmem %s2, %s151
          %s153 = smul.u32 48, %s22
        $region16: #{mfunit_add1_forward.7} parent=11 // pred_fallthru
          _
      $region12: #{mfunit_add1_forward.7} parent=5 // pred_fallthru
        _
      %p154 = scmp.lt.s32.totalorder %s12, 2
      // Predicated region
      $region17: #{mfunit_add1_forward.7} parent=5 // pred_check
        %p155 = pneg %p154
      $region18: #{mfunit_add1_forward.7} parent=5 // pred_check_branch
        %157 = sbr.rel (%p155) target = $region20
      $region19: #{mfunit_add1_forward.7} parent=5 // pred_region
        // Predicated region
        $region21: #{mfunit_add1_forward.7} parent=19 // pred_check
          %p158 = pneg %p44
        $region22: #{mfunit_add1_forward.7} parent=19 // pred_check_branch
          %160 = sbr.rel (%p158) target = $region24
        $region23: #{mfunit_add1_forward.7} parent=19 // pred_region
          %s161 = smul.u32 64, %s19
          %p162 = scmp.lt.s32.totalorder %s161, 127
          %s163 = scalar_select %p162, %s161, 127
          %s164 = smul.addr %s163, 8
          %s165 = scalar_lea.vmem %s0, %s164
          %s166 = smul.u32 64, %s19
        $region24: #{mfunit_add1_forward.7} parent=19 // pred_fallthru
          _
        // Predicated region
        $region25: #{mfunit_add1_forward.7} parent=19 // pred_check
          %p167 = pneg %p72
        $region26: #{mfunit_add1_forward.7} parent=19 // pred_check_branch
          %169 = sbr.rel (%p167) target = $region28
        $region27: #{mfunit_add1_forward.7} parent=19 // pred_region
          %s170 = smul.u32 64, %s19
          %s171 = smul.u32 3, %s20
          %p172 = scmp.lt.s32.totalorder %s170, 127
          %s173 = scalar_select %p172, %s170, 127
          %p174 = scmp.lt.s32.totalorder %s171, 2
          %s175 = scalar_select %p174, %s171, 2
          %s176 = smul.addr %s173, 3
          %s177 = sadd.s32 %s175, %s176
          %s178 = smul.addr %s177, 4
          %s179 = scalar_lea.vmem %s1, %s178
          %s180 = smul.u32 64, %s19
          %s181 = smul.u32 3, %s20
        $region28: #{mfunit_add1_forward.7} parent=19 // pred_fallthru
          _
      $region20: #{mfunit_add1_forward.7} parent=5 // pred_fallthru
        _
      %p182 = scmp.le.s32.totalorder 1, %s12
      %p183 = scmp.lt.s32.totalorder %s12, 3
      %p184 = pnand %p182, %p183
      %p185 = pneg %p184
      // Predicated region
      $region29: #{mfunit_add1_forward.7} parent=5 // pred_check
        _
      $region30: #{mfunit_add1_forward.7} parent=5 // pred_check_branch
        %187 = sbr.rel (%p184) target = $region32
      $region31: #{mfunit_add1_forward.7} parent=5 // pred_region
        %s188 = ssub.s32 %s12, 1
        %s189 = smul.u32 64, %s21
        %p190 = scmp.lt.s32.totalorder %s189, 127
        %s191 = scalar_select %p190, %s189, 127
        %s192 = smul.addr %s191, 8
        %s193 = scalar_lea.vmem %s0, %s192
        %p194 = pneg %p50
        %p195 = pneg %p47
        %s196 = smul.u32 64, %s21
        %s197 = smul.u32 3, %s22
        %p198 = scmp.lt.s32.totalorder %s196, 127
        %s199 = scalar_select %p198, %s196, 127
        %p200 = scmp.lt.s32.totalorder %s197, 2
        %s201 = scalar_select %p200, %s197, 2
        %s202 = smul.addr %s199, 3
        %s203 = sadd.s32 %s201, %s202
        %s204 = smul.addr %s203, 4
        %s205 = scalar_lea.vmem %s1, %s204
        %p206 = pneg %p78
        %p207 = pneg %p75
        %s208 = smul.u32 48, %s22
        %p209 = scmp.lt.s32.totalorder %s208, 47
        %s210 = scalar_select %p209, %s208, 47
        %s211 = smul.addr %s210, 4
        %s212 = scalar_lea.vmem %s2, %s211
        %p213 = pneg %p104
        %p214 = pneg %p101
        %p215 = pneg %p130
        %p216 = pneg %p127
        %s217 = sand.u32 %s117, 1
        %s218 = scalar_lea.sflag [#allocation3], %s217
        %s219 = sand.u32 %s117, 1
        %s220 = smul.addr %s219, 512
        %s221 = scalar_lea.vmem [#allocation2], %s220
        %s222 = smul.u32 64, %s21
        %p223 = scmp.lt.s32.totalorder %s222, 127
        %s224 = scalar_select %p223, %s222, 127
        %s225 = smul.addr %s224, 8
        %s226 = scalar_lea.vmem %s0, %s225
        %s227 = smul.u32 64, %s21
        %s228 = smul.u32 64, %s21
        %s229 = smul.u32 3, %s22
        %p230 = scmp.lt.s32.totalorder %s228, 127
        %s231 = scalar_select %p230, %s228, 127
        %p232 = scmp.lt.s32.totalorder %s229, 2
        %s233 = scalar_select %p232, %s229, 2
        %s234 = smul.addr %s231, 3
        %s235 = sadd.s32 %s233, %s234
        %s236 = smul.addr %s235, 4
        %s237 = scalar_lea.vmem %s1, %s236
        %s238 = smul.u32 64, %s21
        %s239 = smul.u32 3, %s22
        %s240 = smul.u32 48, %s22
        %p241 = scmp.lt.s32.totalorder %s240, 47
        %s242 = scalar_select %p241, %s240, 47
        %s243 = smul.addr %s242, 4
        %s244 = scalar_lea.vmem %s2, %s243
        %s245 = smul.u32 48, %s22
        %s246 = smul.u32 64, %s21
        %p248 = scmp.eq.s32.totalorder %s22, 0
        // Predicated region
        $region33: #{mfunit_add1_forward.7} parent=31 // pred_check
          %p249 = pneg %p248
        $region34: #{mfunit_add1_forward.7} parent=31 // pred_check_branch
          %251 = sbr.rel (%p249) target = $region36
        $region35: #{mfunit_add1_forward.7} parent=31 // pred_region
          %v252 = vld [vmem:[%s226] sm:$0xff]
          %v253 = vld [vmem:[%s226 + $0x8] sm:$0xff]
          %v254 = vld [vmem:[%s226 + $0x10] sm:$0xff]
          %v255 = vld [vmem:[%s226 + $0x18] sm:$0xff]
          %v256 = vld [vmem:[%s226 + $0x20] sm:$0xff]
          %v257 = vld [vmem:[%s226 + $0x28] sm:$0xff]
          %v258 = vld [vmem:[%s226 + $0x30] sm:$0xff]
          %v259 = vld [vmem:[%s226 + $0x38] sm:$0xff]
          %v260 = vld [vmem:[%s226 + $0x40] sm:$0xff]
          %v261 = vld [vmem:[%s226 + $0x48] sm:$0xff]
          %v262 = vld [vmem:[%s226 + $0x50] sm:$0xff]
          %v263 = vld [vmem:[%s226 + $0x58] sm:$0xff]
          %v264 = vld [vmem:[%s226 + $0x60] sm:$0xff]
          %v265 = vld [vmem:[%s226 + $0x68] sm:$0xff]
          %v266 = vld [vmem:[%s226 + $0x70] sm:$0xff]
          %v267 = vld [vmem:[%s226 + $0x78] sm:$0xff]
          %v268 = vld [vmem:[%s226 + $0x80] sm:$0xff]
          %v269 = vld [vmem:[%s226 + $0x88] sm:$0xff]
          %v270 = vld [vmem:[%s226 + $0x90] sm:$0xff]
          %v271 = vld [vmem:[%s226 + $0x98] sm:$0xff]
          %v272 = vld [vmem:[%s226 + $0xa0] sm:$0xff]
          %v273 = vld [vmem:[%s226 + $0xa8] sm:$0xff]
          %v274 = vld [vmem:[%s226 + $0xb0] sm:$0xff]
          %v275 = vld [vmem:[%s226 + $0xb8] sm:$0xff]
          %v276 = vld [vmem:[%s226 + $0xc0] sm:$0xff]
          %v277 = vld [vmem:[%s226 + $0xc8] sm:$0xff]
          %v278 = vld [vmem:[%s226 + $0xd0] sm:$0xff]
          %v279 = vld [vmem:[%s226 + $0xd8] sm:$0xff]
          %v280 = vld [vmem:[%s226 + $0xe0] sm:$0xff]
          %v281 = vld [vmem:[%s226 + $0xe8] sm:$0xff]
          %v282 = vld [vmem:[%s226 + $0xf0] sm:$0xff]
          %v283 = vld [vmem:[%s226 + $0xf8] sm:$0xff]
          %v284 = vld [vmem:[%s226 + $0x100] sm:$0xff]
          %v285 = vld [vmem:[%s226 + $0x108] sm:$0xff]
          %v286 = vld [vmem:[%s226 + $0x110] sm:$0xff]
          %v287 = vld [vmem:[%s226 + $0x118] sm:$0xff]
          %v288 = vld [vmem:[%s226 + $0x120] sm:$0xff]
          %v289 = vld [vmem:[%s226 + $0x128] sm:$0xff]
          %v290 = vld [vmem:[%s226 + $0x130] sm:$0xff]
          %v291 = vld [vmem:[%s226 + $0x138] sm:$0xff]
          %v292 = vld [vmem:[%s226 + $0x140] sm:$0xff]
          %v293 = vld [vmem:[%s226 + $0x148] sm:$0xff]
          %v294 = vld [vmem:[%s226 + $0x150] sm:$0xff]
          %v295 = vld [vmem:[%s226 + $0x158] sm:$0xff]
          %v296 = vld [vmem:[%s226 + $0x160] sm:$0xff]
          %v297 = vld [vmem:[%s226 + $0x168] sm:$0xff]
          %v298 = vld [vmem:[%s226 + $0x170] sm:$0xff]
          %v299 = vld [vmem:[%s226 + $0x178] sm:$0xff]
          %v300 = vld [vmem:[%s226 + $0x180] sm:$0xff]
          %v301 = vld [vmem:[%s226 + $0x188] sm:$0xff]
          %v302 = vld [vmem:[%s226 + $0x190] sm:$0xff]
          %v303 = vld [vmem:[%s226 + $0x198] sm:$0xff]
          %v304 = vld [vmem:[%s226 + $0x1a0] sm:$0xff]
          %v305 = vld [vmem:[%s226 + $0x1a8] sm:$0xff]
          %v306 = vld [vmem:[%s226 + $0x1b0] sm:$0xff]
          %v307 = vld [vmem:[%s226 + $0x1b8] sm:$0xff]
          %v308 = vld [vmem:[%s226 + $0x1c0] sm:$0xff]
          %v309 = vld [vmem:[%s226 + $0x1c8] sm:$0xff]
          %v310 = vld [vmem:[%s226 + $0x1d0] sm:$0xff]
          %v311 = vld [vmem:[%s226 + $0x1d8] sm:$0xff]
          %v312 = vld [vmem:[%s226 + $0x1e0] sm:$0xff]
          %v313 = vld [vmem:[%s226 + $0x1e8] sm:$0xff]
          %v314 = vld [vmem:[%s226 + $0x1f0] sm:$0xff]
          %v315 = vld [vmem:[%s226 + $0x1f8] sm:$0xff]
          %vm316 = vcmask 261120
          %317 = vst.msk [vmem:[%s221] sm:$0xff] %vm316, %v252
          %318 = vst.msk [vmem:[%s221 + $0x8] sm:$0xff] %vm316, %v253
          %319 = vst.msk [vmem:[%s221 + $0x10] sm:$0xff] %vm316, %v254
          %320 = vst.msk [vmem:[%s221 + $0x18] sm:$0xff] %vm316, %v255
          %321 = vst.msk [vmem:[%s221 + $0x20] sm:$0xff] %vm316, %v256
          %322 = vst.msk [vmem:[%s221 + $0x28] sm:$0xff] %vm316, %v257
          %323 = vst.msk [vmem:[%s221 + $0x30] sm:$0xff] %vm316, %v258
          %324 = vst.msk [vmem:[%s221 + $0x38] sm:$0xff] %vm316, %v259
          %325 = vst.msk [vmem:[%s221 + $0x40] sm:$0xff] %vm316, %v260
          %326 = vst.msk [vmem:[%s221 + $0x48] sm:$0xff] %vm316, %v261
          %327 = vst.msk [vmem:[%s221 + $0x50] sm:$0xff] %vm316, %v262
          %328 = vst.msk [vmem:[%s221 + $0x58] sm:$0xff] %vm316, %v263
          %329 = vst.msk [vmem:[%s221 + $0x60] sm:$0xff] %vm316, %v264
          %330 = vst.msk [vmem:[%s221 + $0x68] sm:$0xff] %vm316, %v265
          %331 = vst.msk [vmem:[%s221 + $0x70] sm:$0xff] %vm316, %v266
          %332 = vst.msk [vmem:[%s221 + $0x78] sm:$0xff] %vm316, %v267
          %333 = vst.msk [vmem:[%s221 + $0x80] sm:$0xff] %vm316, %v268
          %334 = vst.msk [vmem:[%s221 + $0x88] sm:$0xff] %vm316, %v269
          %335 = vst.msk [vmem:[%s221 + $0x90] sm:$0xff] %vm316, %v270
          %336 = vst.msk [vmem:[%s221 + $0x98] sm:$0xff] %vm316, %v271
          %337 = vst.msk [vmem:[%s221 + $0xa0] sm:$0xff] %vm316, %v272
          %338 = vst.msk [vmem:[%s221 + $0xa8] sm:$0xff] %vm316, %v273
          %339 = vst.msk [vmem:[%s221 + $0xb0] sm:$0xff] %vm316, %v274
          %340 = vst.msk [vmem:[%s221 + $0xb8] sm:$0xff] %vm316, %v275
          %341 = vst.msk [vmem:[%s221 + $0xc0] sm:$0xff] %vm316, %v276
          %342 = vst.msk [vmem:[%s221 + $0xc8] sm:$0xff] %vm316, %v277
          %343 = vst.msk [vmem:[%s221 + $0xd0] sm:$0xff] %vm316, %v278
          %344 = vst.msk [vmem:[%s221 + $0xd8] sm:$0xff] %vm316, %v279
          %345 = vst.msk [vmem:[%s221 + $0xe0] sm:$0xff] %vm316, %v280
          %346 = vst.msk [vmem:[%s221 + $0xe8] sm:$0xff] %vm316, %v281
          %347 = vst.msk [vmem:[%s221 + $0xf0] sm:$0xff] %vm316, %v282
          %348 = vst.msk [vmem:[%s221 + $0xf8] sm:$0xff] %vm316, %v283
          %349 = vst.msk [vmem:[%s221 + $0x100] sm:$0xff] %vm316, %v284
          %350 = vst.msk [vmem:[%s221 + $0x108] sm:$0xff] %vm316, %v285
          %351 = vst.msk [vmem:[%s221 + $0x110] sm:$0xff] %vm316, %v286
          %352 = vst.msk [vmem:[%s221 + $0x118] sm:$0xff] %vm316, %v287
          %353 = vst.msk [vmem:[%s221 + $0x120] sm:$0xff] %vm316, %v288
          %354 = vst.msk [vmem:[%s221 + $0x128] sm:$0xff] %vm316, %v289
          %355 = vst.msk [vmem:[%s221 + $0x130] sm:$0xff] %vm316, %v290
          %356 = vst.msk [vmem:[%s221 + $0x138] sm:$0xff] %vm316, %v291
          %357 = vst.msk [vmem:[%s221 + $0x140] sm:$0xff] %vm316, %v292
          %358 = vst.msk [vmem:[%s221 + $0x148] sm:$0xff] %vm316, %v293
          %359 = vst.msk [vmem:[%s221 + $0x150] sm:$0xff] %vm316, %v294
          %360 = vst.msk [vmem:[%s221 + $0x158] sm:$0xff] %vm316, %v295
          %361 = vst.msk [vmem:[%s221 + $0x160] sm:$0xff] %vm316, %v296
          %362 = vst.msk [vmem:[%s221 + $0x168] sm:$0xff] %vm316, %v297
          %363 = vst.msk [vmem:[%s221 + $0x170] sm:$0xff] %vm316, %v298
          %364 = vst.msk [vmem:[%s221 + $0x178] sm:$0xff] %vm316, %v299
          %365 = vst.msk [vmem:[%s221 + $0x180] sm:$0xff] %vm316, %v300
          %366 = vst.msk [vmem:[%s221 + $0x188] sm:$0xff] %vm316, %v301
          %367 = vst.msk [vmem:[%s221 + $0x190] sm:$0xff] %vm316, %v302
          %368 = vst.msk [vmem:[%s221 + $0x198] sm:$0xff] %vm316, %v303
          %369 = vst.msk [vmem:[%s221 + $0x1a0] sm:$0xff] %vm316, %v304
          %370 = vst.msk [vmem:[%s221 + $0x1a8] sm:$0xff] %vm316, %v305
          %371 = vst.msk [vmem:[%s221 + $0x1b0] sm:$0xff] %vm316, %v306
          %372 = vst.msk [vmem:[%s221 + $0x1b8] sm:$0xff] %vm316, %v307
          %373 = vst.msk [vmem:[%s221 + $0x1c0] sm:$0xff] %vm316, %v308
          %374 = vst.msk [vmem:[%s221 + $0x1c8] sm:$0xff] %vm316, %v309
          %375 = vst.msk [vmem:[%s221 + $0x1d0] sm:$0xff] %vm316, %v310
          %376 = vst.msk [vmem:[%s221 + $0x1d8] sm:$0xff] %vm316, %v311
          %377 = vst.msk [vmem:[%s221 + $0x1e0] sm:$0xff] %vm316, %v312
          %378 = vst.msk [vmem:[%s221 + $0x1e8] sm:$0xff] %vm316, %v313
          %379 = vst.msk [vmem:[%s221 + $0x1f0] sm:$0xff] %vm316, %v314
          %380 = vst.msk [vmem:[%s221 + $0x1f8] sm:$0xff] %vm316, %v315
        $region36: #{mfunit_add1_forward.7} parent=31 // pred_fallthru
          _
        %v381 = vld [vmem:[%s221] sm:$0xff]
        %v382 = vld [vmem:[%s221 + $0x8] sm:$0xff]
        %v383 = vld [vmem:[%s221 + $0x10] sm:$0xff]
        %v384 = vld [vmem:[%s221 + $0x18] sm:$0xff]
        %v385 = vld [vmem:[%s221 + $0x20] sm:$0xff]
        %v386 = vld [vmem:[%s221 + $0x28] sm:$0xff]
        %v387 = vld [vmem:[%s221 + $0x30] sm:$0xff]
        %v388 = vld [vmem:[%s221 + $0x38] sm:$0xff]
        %v389 = vld [vmem:[%s221 + $0x40] sm:$0xff]
        %v390 = vld [vmem:[%s221 + $0x48] sm:$0xff]
        %v391 = vld [vmem:[%s221 + $0x50] sm:$0xff]
        %v392 = vld [vmem:[%s221 + $0x58] sm:$0xff]
        %v393 = vld [vmem:[%s221 + $0x60] sm:$0xff]
        %v394 = vld [vmem:[%s221 + $0x68] sm:$0xff]
        %v395 = vld [vmem:[%s221 + $0x70] sm:$0xff]
        %v396 = vld [vmem:[%s221 + $0x78] sm:$0xff]
        %v397 = vld [vmem:[%s221 + $0x80] sm:$0xff]
        %v398 = vld [vmem:[%s221 + $0x88] sm:$0xff]
        %v399 = vld [vmem:[%s221 + $0x90] sm:$0xff]
        %v400 = vld [vmem:[%s221 + $0x98] sm:$0xff]
        %v401 = vld [vmem:[%s221 + $0xa0] sm:$0xff]
        %v402 = vld [vmem:[%s221 + $0xa8] sm:$0xff]
        %v403 = vld [vmem:[%s221 + $0xb0] sm:$0xff]
        %v404 = vld [vmem:[%s221 + $0xb8] sm:$0xff]
        %v405 = vld [vmem:[%s221 + $0xc0] sm:$0xff]
        %v406 = vld [vmem:[%s221 + $0xc8] sm:$0xff]
        %v407 = vld [vmem:[%s221 + $0xd0] sm:$0xff]
        %v408 = vld [vmem:[%s221 + $0xd8] sm:$0xff]
        %v409 = vld [vmem:[%s221 + $0xe0] sm:$0xff]
        %v410 = vld [vmem:[%s221 + $0xe8] sm:$0xff]
        %v411 = vld [vmem:[%s221 + $0xf0] sm:$0xff]
        %v412 = vld [vmem:[%s221 + $0xf8] sm:$0xff]
        %v413 = vld [vmem:[%s221 + $0x100] sm:$0xff]
        %v414 = vld [vmem:[%s221 + $0x108] sm:$0xff]
        %v415 = vld [vmem:[%s221 + $0x110] sm:$0xff]
        %v416 = vld [vmem:[%s221 + $0x118] sm:$0xff]
        %v417 = vld [vmem:[%s221 + $0x120] sm:$0xff]
        %v418 = vld [vmem:[%s221 + $0x128] sm:$0xff]
        %v419 = vld [vmem:[%s221 + $0x130] sm:$0xff]
        %v420 = vld [vmem:[%s221 + $0x138] sm:$0xff]
        %v421 = vld [vmem:[%s221 + $0x140] sm:$0xff]
        %v422 = vld [vmem:[%s221 + $0x148] sm:$0xff]
        %v423 = vld [vmem:[%s221 + $0x150] sm:$0xff]
        %v424 = vld [vmem:[%s221 + $0x158] sm:$0xff]
        %v425 = vld [vmem:[%s221 + $0x160] sm:$0xff]
        %v426 = vld [vmem:[%s221 + $0x168] sm:$0xff]
        %v427 = vld [vmem:[%s221 + $0x170] sm:$0xff]
        %v428 = vld [vmem:[%s221 + $0x178] sm:$0xff]
        %v429 = vld [vmem:[%s221 + $0x180] sm:$0xff]
        %v430 = vld [vmem:[%s221 + $0x188] sm:$0xff]
        %v431 = vld [vmem:[%s221 + $0x190] sm:$0xff]
        %v432 = vld [vmem:[%s221 + $0x198] sm:$0xff]
        %v433 = vld [vmem:[%s221 + $0x1a0] sm:$0xff]
        %v434 = vld [vmem:[%s221 + $0x1a8] sm:$0xff]
        %v435 = vld [vmem:[%s221 + $0x1b0] sm:$0xff]
        %v436 = vld [vmem:[%s221 + $0x1b8] sm:$0xff]
        %v437 = vld [vmem:[%s221 + $0x1c0] sm:$0xff]
        %v438 = vld [vmem:[%s221 + $0x1c8] sm:$0xff]
        %v439 = vld [vmem:[%s221 + $0x1d0] sm:$0xff]
        %v440 = vld [vmem:[%s221 + $0x1d8] sm:$0xff]
        %v441 = vld [vmem:[%s221 + $0x1e0] sm:$0xff]
        %v442 = vld [vmem:[%s221 + $0x1e8] sm:$0xff]
        %v443 = vld [vmem:[%s221 + $0x1f0] sm:$0xff]
        %v444 = vld [vmem:[%s221 + $0x1f8] sm:$0xff]
        %v445 = vld [vmem:[%s237] sm:$0xff]
        %v446 = vld [vmem:[%s237 + $0x8] sm:$0xf]
        %v447 = vld [vmem:[%s237 + $0xc] sm:$0xff]
        %v448 = vld [vmem:[%s237 + $0x14] sm:$0xf]
        %v449 = vld [vmem:[%s237 + $0x18] sm:$0xff]
        %v450 = vld [vmem:[%s237 + $0x20] sm:$0xf]
        %v451 = vld [vmem:[%s237 + $0x24] sm:$0xff]
        %v452 = vld [vmem:[%s237 + $0x2c] sm:$0xf]
        %v453 = vld [vmem:[%s237 + $0x30] sm:$0xff]
        %v454 = vld [vmem:[%s237 + $0x38] sm:$0xf]
        %v455 = vld [vmem:[%s237 + $0x3c] sm:$0xff]
        %v456 = vld [vmem:[%s237 + $0x44] sm:$0xf]
        %v457 = vld [vmem:[%s237 + $0x48] sm:$0xff]
        %v458 = vld [vmem:[%s237 + $0x50] sm:$0xf]
        %v459 = vld [vmem:[%s237 + $0x54] sm:$0xff]
        %v460 = vld [vmem:[%s237 + $0x5c] sm:$0xf]
        %v461 = vld [vmem:[%s237 + $0x60] sm:$0xff]
        %v462 = vld [vmem:[%s237 + $0x68] sm:$0xf]
        %v463 = vld [vmem:[%s237 + $0x6c] sm:$0xff]
        %v464 = vld [vmem:[%s237 + $0x74] sm:$0xf]
        %v465 = vld [vmem:[%s237 + $0x78] sm:$0xff]
        %v466 = vld [vmem:[%s237 + $0x80] sm:$0xf]
        %v467 = vld [vmem:[%s237 + $0x84] sm:$0xff]
        %v468 = vld [vmem:[%s237 + $0x8c] sm:$0xf]
        %v469 = vld [vmem:[%s237 + $0x90] sm:$0xff]
        %v470 = vld [vmem:[%s237 + $0x98] sm:$0xf]
        %v471 = vld [vmem:[%s237 + $0x9c] sm:$0xff]
        %v472 = vld [vmem:[%s237 + $0xa4] sm:$0xf]
        %v473 = vld [vmem:[%s237 + $0xa8] sm:$0xff]
        %v474 = vld [vmem:[%s237 + $0xb0] sm:$0xf]
        %v475 = vld [vmem:[%s237 + $0xb4] sm:$0xff]
        %v476 = vld [vmem:[%s237 + $0xbc] sm:$0xf]
        %v477 = vld [vmem:[%s237 + $0xc0] sm:$0xff]
        %v478 = vld [vmem:[%s237 + $0xc8] sm:$0xf]
        %v479 = vld [vmem:[%s237 + $0xcc] sm:$0xff]
        %v480 = vld [vmem:[%s237 + $0xd4] sm:$0xf]
        %v481 = vld [vmem:[%s237 + $0xd8] sm:$0xff]
        %v482 = vld [vmem:[%s237 + $0xe0] sm:$0xf]
        %v483 = vld [vmem:[%s237 + $0xe4] sm:$0xff]
        %v484 = vld [vmem:[%s237 + $0xec] sm:$0xf]
        %v485 = vld [vmem:[%s237 + $0xf0] sm:$0xff]
        %v486 = vld [vmem:[%s237 + $0xf8] sm:$0xf]
        %v487 = vld [vmem:[%s237 + $0xfc] sm:$0xff]
        %v488 = vld [vmem:[%s237 + $0x104] sm:$0xf]
        %v489 = vld [vmem:[%s237 + $0x108] sm:$0xff]
        %v490 = vld [vmem:[%s237 + $0x110] sm:$0xf]
        %v491 = vld [vmem:[%s237 + $0x114] sm:$0xff]
        %v492 = vld [vmem:[%s237 + $0x11c] sm:$0xf]
        %v493 = vld [vmem:[%s237 + $0x120] sm:$0xff]
        %v494 = vld [vmem:[%s237 + $0x128] sm:$0xf]
        %v495 = vld [vmem:[%s237 + $0x12c] sm:$0xff]
        %v496 = vld [vmem:[%s237 + $0x134] sm:$0xf]
        %v497 = vld [vmem:[%s237 + $0x138] sm:$0xff]
        %v498 = vld [vmem:[%s237 + $0x140] sm:$0xf]
        %v499 = vld [vmem:[%s237 + $0x144] sm:$0xff]
        %v500 = vld [vmem:[%s237 + $0x14c] sm:$0xf]
        %v501 = vld [vmem:[%s237 + $0x150] sm:$0xff]
        %v502 = vld [vmem:[%s237 + $0x158] sm:$0xf]
        %v503 = vld [vmem:[%s237 + $0x15c] sm:$0xff]
        %v504 = vld [vmem:[%s237 + $0x164] sm:$0xf]
        %v505 = vld [vmem:[%s237 + $0x168] sm:$0xff]
        %v506 = vld [vmem:[%s237 + $0x170] sm:$0xf]
        %v507 = vld [vmem:[%s237 + $0x174] sm:$0xff]
        %v508 = vld [vmem:[%s237 + $0x17c] sm:$0xf]
        %v509 = vld [vmem:[%s237 + $0x180] sm:$0xff]
        %v510 = vld [vmem:[%s237 + $0x188] sm:$0xf]
        %v511 = vld [vmem:[%s237 + $0x18c] sm:$0xff]
        %v512 = vld [vmem:[%s237 + $0x194] sm:$0xf]
        %v513 = vld [vmem:[%s237 + $0x198] sm:$0xff]
        %v514 = vld [vmem:[%s237 + $0x1a0] sm:$0xf]
        %v515 = vld [vmem:[%s237 + $0x1a4] sm:$0xff]
        %v516 = vld [vmem:[%s237 + $0x1ac] sm:$0xf]
        %v517 = vld [vmem:[%s237 + $0x1b0] sm:$0xff]
        %v518 = vld [vmem:[%s237 + $0x1b8] sm:$0xf]
        %v519 = vld [vmem:[%s237 + $0x1bc] sm:$0xff]
        %v520 = vld [vmem:[%s237 + $0x1c4] sm:$0xf]
        %v521 = vld [vmem:[%s237 + $0x1c8] sm:$0xff]
        %v522 = vld [vmem:[%s237 + $0x1d0] sm:$0xf]
        %v523 = vld [vmem:[%s237 + $0x1d4] sm:$0xff]
        %v524 = vld [vmem:[%s237 + $0x1dc] sm:$0xf]
        %v525 = vld [vmem:[%s237 + $0x1e0] sm:$0xff]
        %v526 = vld [vmem:[%s237 + $0x1e8] sm:$0xf]
        %v527 = vld [vmem:[%s237 + $0x1ec] sm:$0xff]
        %v528 = vld [vmem:[%s237 + $0x1f4] sm:$0xf]
        %v529 = vld [vmem:[%s237 + $0x1f8] sm:$0xff]
        %v530 = vld [vmem:[%s237 + $0x200] sm:$0xf]
        %v531 = vld [vmem:[%s237 + $0x204] sm:$0xff]
        %v532 = vld [vmem:[%s237 + $0x20c] sm:$0xf]
        %v533 = vld [vmem:[%s237 + $0x210] sm:$0xff]
        %v534 = vld [vmem:[%s237 + $0x218] sm:$0xf]
        %v535 = vld [vmem:[%s237 + $0x21c] sm:$0xff]
        %v536 = vld [vmem:[%s237 + $0x224] sm:$0xf]
        %v537 = vld [vmem:[%s237 + $0x228] sm:$0xff]
        %v538 = vld [vmem:[%s237 + $0x230] sm:$0xf]
        %v539 = vld [vmem:[%s237 + $0x234] sm:$0xff]
        %v540 = vld [vmem:[%s237 + $0x23c] sm:$0xf]
        %v541 = vld [vmem:[%s237 + $0x240] sm:$0xff]
        %v542 = vld [vmem:[%s237 + $0x248] sm:$0xf]
        %v543 = vld [vmem:[%s237 + $0x24c] sm:$0xff]
        %v544 = vld [vmem:[%s237 + $0x254] sm:$0xf]
        %v545 = vld [vmem:[%s237 + $0x258] sm:$0xff]
        %v546 = vld [vmem:[%s237 + $0x260] sm:$0xf]
        %v547 = vld [vmem:[%s237 + $0x264] sm:$0xff]
        %v548 = vld [vmem:[%s237 + $0x26c] sm:$0xf]
        %v549 = vld [vmem:[%s237 + $0x270] sm:$0xff]
        %v550 = vld [vmem:[%s237 + $0x278] sm:$0xf]
        %v551 = vld [vmem:[%s237 + $0x27c] sm:$0xff]
        %v552 = vld [vmem:[%s237 + $0x284] sm:$0xf]
        %v553 = vld [vmem:[%s237 + $0x288] sm:$0xff]
        %v554 = vld [vmem:[%s237 + $0x290] sm:$0xf]
        %v555 = vld [vmem:[%s237 + $0x294] sm:$0xff]
        %v556 = vld [vmem:[%s237 + $0x29c] sm:$0xf]
        %v557 = vld [vmem:[%s237 + $0x2a0] sm:$0xff]
        %v558 = vld [vmem:[%s237 + $0x2a8] sm:$0xf]
        %v559 = vld [vmem:[%s237 + $0x2ac] sm:$0xff]
        %v560 = vld [vmem:[%s237 + $0x2b4] sm:$0xf]
        %v561 = vld [vmem:[%s237 + $0x2b8] sm:$0xff]
        %v562 = vld [vmem:[%s237 + $0x2c0] sm:$0xf]
        %v563 = vld [vmem:[%s237 + $0x2c4] sm:$0xff]
        %v564 = vld [vmem:[%s237 + $0x2cc] sm:$0xf]
        %v565 = vld [vmem:[%s237 + $0x2d0] sm:$0xff]
        %v566 = vld [vmem:[%s237 + $0x2d8] sm:$0xf]
        %v567 = vld [vmem:[%s237 + $0x2dc] sm:$0xff]
        %v568 = vld [vmem:[%s237 + $0x2e4] sm:$0xf]
        %v569 = vld [vmem:[%s237 + $0x2e8] sm:$0xff]
        %v570 = vld [vmem:[%s237 + $0x2f0] sm:$0xf]
        %v571 = vld [vmem:[%s237 + $0x2f4] sm:$0xff]
        %v572 = vld [vmem:[%s237 + $0x2fc] sm:$0xf]
        %v573 = vld [vmem:[%s244] sm:$0xf]
        %v574 = vld [vmem:[%s244 + $0x4] sm:$0xf]
        %v575 = vld [vmem:[%s244 + $0x8] sm:$0xf]
        %v576 = vld [vmem:[%s244 + $0xc] sm:$0xf]
        %v577 = vld [vmem:[%s244 + $0x10] sm:$0xf]
        %v578 = vld [vmem:[%s244 + $0x14] sm:$0xf]
        %v579 = vld [vmem:[%s244 + $0x18] sm:$0xf]
        %v580 = vld [vmem:[%s244 + $0x1c] sm:$0xf]
        %v581 = vld [vmem:[%s244 + $0x20] sm:$0xf]
        %v582 = vld [vmem:[%s244 + $0x24] sm:$0xf]
        %v583 = vld [vmem:[%s244 + $0x28] sm:$0xf]
        %v584 = vld [vmem:[%s244 + $0x2c] sm:$0xf]
        %v585 = vld [vmem:[%s244 + $0x30] sm:$0xf]
        %v586 = vld [vmem:[%s244 + $0x34] sm:$0xf]
        %v587 = vld [vmem:[%s244 + $0x38] sm:$0xf]
        %v588 = vld [vmem:[%s244 + $0x3c] sm:$0xf]
        %v589 = vld [vmem:[%s244 + $0x40] sm:$0xf]
        %v590 = vld [vmem:[%s244 + $0x44] sm:$0xf]
        %v591 = vld [vmem:[%s244 + $0x48] sm:$0xf]
        %v592 = vld [vmem:[%s244 + $0x4c] sm:$0xf]
        %v593 = vld [vmem:[%s244 + $0x50] sm:$0xf]
        %v594 = vld [vmem:[%s244 + $0x54] sm:$0xf]
        %v595 = vld [vmem:[%s244 + $0x58] sm:$0xf]
        %v596 = vld [vmem:[%s244 + $0x5c] sm:$0xf]
        %v597 = vld [vmem:[%s244 + $0x60] sm:$0xf]
        %v598 = vld [vmem:[%s244 + $0x64] sm:$0xf]
        %v599 = vld [vmem:[%s244 + $0x68] sm:$0xf]
        %v600 = vld [vmem:[%s244 + $0x6c] sm:$0xf]
        %v601 = vld [vmem:[%s244 + $0x70] sm:$0xf]
        %v602 = vld [vmem:[%s244 + $0x74] sm:$0xf]
        %v603 = vld [vmem:[%s244 + $0x78] sm:$0xf]
        %v604 = vld [vmem:[%s244 + $0x7c] sm:$0xf]
        %v605 = vld [vmem:[%s244 + $0x80] sm:$0xf]
        %v606 = vld [vmem:[%s244 + $0x84] sm:$0xf]
        %v607 = vld [vmem:[%s244 + $0x88] sm:$0xf]
        %v608 = vld [vmem:[%s244 + $0x8c] sm:$0xf]
        %v609 = vld [vmem:[%s244 + $0x90] sm:$0xf]
        %v610 = vld [vmem:[%s244 + $0x94] sm:$0xf]
        %v611 = vld [vmem:[%s244 + $0x98] sm:$0xf]
        %v612 = vld [vmem:[%s244 + $0x9c] sm:$0xf]
        %v613 = vld [vmem:[%s244 + $0xa0] sm:$0xf]
        %v614 = vld [vmem:[%s244 + $0xa4] sm:$0xf]
        %v615 = vld [vmem:[%s244 + $0xa8] sm:$0xf]
        %v616 = vld [vmem:[%s244 + $0xac] sm:$0xf]
        %v617 = vld [vmem:[%s244 + $0xb0] sm:$0xf]
        %v618 = vld [vmem:[%s244 + $0xb4] sm:$0xf]
        %v619 = vld [vmem:[%s244 + $0xb8] sm:$0xf]
        %v620 = vld [vmem:[%s244 + $0xbc] sm:$0xf]
        %v749 = vunpack.c.l.b16 %v445
        %v750 = vunpack.c.h.b16 %v445
        %v751 = vunpack.c.l.b16 %v446
        %v752 = vunpack.c.l.b16 %v447
        %v753 = vunpack.c.h.b16 %v447
        %v754 = vunpack.c.l.b16 %v448
        %v755 = vunpack.c.l.b16 %v449
        %v756 = vunpack.c.h.b16 %v449
        %v757 = vunpack.c.l.b16 %v450
        %v758 = vunpack.c.l.b16 %v451
        %v759 = vunpack.c.h.b16 %v451
        %v760 = vunpack.c.l.b16 %v452
        %v761 = vunpack.c.l.b16 %v453
        %v762 = vunpack.c.h.b16 %v453
        %v763 = vunpack.c.l.b16 %v454
        %v764 = vunpack.c.l.b16 %v455
        %v765 = vunpack.c.h.b16 %v455
        %v766 = vunpack.c.l.b16 %v456
        %v767 = vunpack.c.l.b16 %v457
        %v768 = vunpack.c.h.b16 %v457
        %v769 = vunpack.c.l.b16 %v458
        %v770 = vunpack.c.l.b16 %v459
        %v771 = vunpack.c.h.b16 %v459
        %v772 = vunpack.c.l.b16 %v460
        %v773 = vunpack.c.l.b16 %v461
        %v774 = vunpack.c.h.b16 %v461
        %v775 = vunpack.c.l.b16 %v462
        %v776 = vunpack.c.l.b16 %v463
        %v777 = vunpack.c.h.b16 %v463
        %v778 = vunpack.c.l.b16 %v464
        %v779 = vunpack.c.l.b16 %v465
        %v780 = vunpack.c.h.b16 %v465
        %v781 = vunpack.c.l.b16 %v466
        %v782 = vunpack.c.l.b16 %v467
        %v783 = vunpack.c.h.b16 %v467
        %v784 = vunpack.c.l.b16 %v468
        %v785 = vunpack.c.l.b16 %v469
        %v786 = vunpack.c.h.b16 %v469
        %v787 = vunpack.c.l.b16 %v470
        %v788 = vunpack.c.l.b16 %v471
        %v789 = vunpack.c.h.b16 %v471
        %v790 = vunpack.c.l.b16 %v472
        %v791 = vunpack.c.l.b16 %v473
        %v792 = vunpack.c.h.b16 %v473
        %v793 = vunpack.c.l.b16 %v474
        %v794 = vunpack.c.l.b16 %v475
        %v795 = vunpack.c.h.b16 %v475
        %v796 = vunpack.c.l.b16 %v476
        %v797 = vunpack.c.l.b16 %v477
        %v798 = vunpack.c.h.b16 %v477
        %v799 = vunpack.c.l.b16 %v478
        %v800 = vunpack.c.l.b16 %v479
        %v801 = vunpack.c.h.b16 %v479
        %v802 = vunpack.c.l.b16 %v480
        %v803 = vunpack.c.l.b16 %v481
        %v804 = vunpack.c.h.b16 %v481
        %v805 = vunpack.c.l.b16 %v482
        %v806 = vunpack.c.l.b16 %v483
        %v807 = vunpack.c.h.b16 %v483
        %v808 = vunpack.c.l.b16 %v484
        %v809 = vunpack.c.l.b16 %v485
        %v810 = vunpack.c.h.b16 %v485
        %v811 = vunpack.c.l.b16 %v486
        %v812 = vunpack.c.l.b16 %v487
        %v813 = vunpack.c.h.b16 %v487
        %v814 = vunpack.c.l.b16 %v488
        %v815 = vunpack.c.l.b16 %v489
        %v816 = vunpack.c.h.b16 %v489
        %v817 = vunpack.c.l.b16 %v490
        %v818 = vunpack.c.l.b16 %v491
        %v819 = vunpack.c.h.b16 %v491
        %v820 = vunpack.c.l.b16 %v492
        %v821 = vunpack.c.l.b16 %v493
        %v822 = vunpack.c.h.b16 %v493
        %v823 = vunpack.c.l.b16 %v494
        %v824 = vunpack.c.l.b16 %v495
        %v825 = vunpack.c.h.b16 %v495
        %v826 = vunpack.c.l.b16 %v496
        %v827 = vunpack.c.l.b16 %v497
        %v828 = vunpack.c.h.b16 %v497
        %v829 = vunpack.c.l.b16 %v498
        %v830 = vunpack.c.l.b16 %v499
        %v831 = vunpack.c.h.b16 %v499
        %v832 = vunpack.c.l.b16 %v500
        %v833 = vunpack.c.l.b16 %v501
        %v834 = vunpack.c.h.b16 %v501
        %v835 = vunpack.c.l.b16 %v502
        %v836 = vunpack.c.l.b16 %v503
        %v837 = vunpack.c.h.b16 %v503
        %v838 = vunpack.c.l.b16 %v504
        %v839 = vunpack.c.l.b16 %v505
        %v840 = vunpack.c.h.b16 %v505
        %v841 = vunpack.c.l.b16 %v506
        %v842 = vunpack.c.l.b16 %v507
        %v843 = vunpack.c.h.b16 %v507
        %v844 = vunpack.c.l.b16 %v508
        %v845 = vunpack.c.l.b16 %v509
        %v846 = vunpack.c.h.b16 %v509
        %v847 = vunpack.c.l.b16 %v510
        %v848 = vunpack.c.l.b16 %v511
        %v849 = vunpack.c.h.b16 %v511
        %v850 = vunpack.c.l.b16 %v512
        %v851 = vunpack.c.l.b16 %v513
        %v852 = vunpack.c.h.b16 %v513
        %v853 = vunpack.c.l.b16 %v514
        %v854 = vunpack.c.l.b16 %v515
        %v855 = vunpack.c.h.b16 %v515
        %v856 = vunpack.c.l.b16 %v516
        %v857 = vunpack.c.l.b16 %v517
        %v858 = vunpack.c.h.b16 %v517
        %v859 = vunpack.c.l.b16 %v518
        %v860 = vunpack.c.l.b16 %v519
        %v861 = vunpack.c.h.b16 %v519
        %v862 = vunpack.c.l.b16 %v520
        %v863 = vunpack.c.l.b16 %v521
        %v864 = vunpack.c.h.b16 %v521
        %v865 = vunpack.c.l.b16 %v522
        %v866 = vunpack.c.l.b16 %v523
        %v867 = vunpack.c.h.b16 %v523
        %v868 = vunpack.c.l.b16 %v524
        %v869 = vunpack.c.l.b16 %v525
        %v870 = vunpack.c.h.b16 %v525
        %v871 = vunpack.c.l.b16 %v526
        %v872 = vunpack.c.l.b16 %v527
        %v873 = vunpack.c.h.b16 %v527
        %v874 = vunpack.c.l.b16 %v528
        %v875 = vunpack.c.l.b16 %v529
        %v876 = vunpack.c.h.b16 %v529
        %v877 = vunpack.c.l.b16 %v530
        %v878 = vunpack.c.l.b16 %v531
        %v879 = vunpack.c.h.b16 %v531
        %v880 = vunpack.c.l.b16 %v532
        %v881 = vunpack.c.l.b16 %v533
        %v882 = vunpack.c.h.b16 %v533
        %v883 = vunpack.c.l.b16 %v534
        %v884 = vunpack.c.l.b16 %v535
        %v885 = vunpack.c.h.b16 %v535
        %v886 = vunpack.c.l.b16 %v536
        %v887 = vunpack.c.l.b16 %v537
        %v888 = vunpack.c.h.b16 %v537
        %v889 = vunpack.c.l.b16 %v538
        %v890 = vunpack.c.l.b16 %v539
        %v891 = vunpack.c.h.b16 %v539
        %v892 = vunpack.c.l.b16 %v540
        %v893 = vunpack.c.l.b16 %v541
        %v894 = vunpack.c.h.b16 %v541
        %v895 = vunpack.c.l.b16 %v542
        %v896 = vunpack.c.l.b16 %v543
        %v897 = vunpack.c.h.b16 %v543
        %v898 = vunpack.c.l.b16 %v544
        %v899 = vunpack.c.l.b16 %v545
        %v900 = vunpack.c.h.b16 %v545
        %v901 = vunpack.c.l.b16 %v546
        %v902 = vunpack.c.l.b16 %v547
        %v903 = vunpack.c.h.b16 %v547
        %v904 = vunpack.c.l.b16 %v548
        %v905 = vunpack.c.l.b16 %v549
        %v906 = vunpack.c.h.b16 %v549
        %v907 = vunpack.c.l.b16 %v550
        %v908 = vunpack.c.l.b16 %v551
        %v909 = vunpack.c.h.b16 %v551
        %v910 = vunpack.c.l.b16 %v552
        %v911 = vunpack.c.l.b16 %v553
        %v912 = vunpack.c.h.b16 %v553
        %v913 = vunpack.c.l.b16 %v554
        %v914 = vunpack.c.l.b16 %v555
        %v915 = vunpack.c.h.b16 %v555
        %v916 = vunpack.c.l.b16 %v556
        %v917 = vunpack.c.l.b16 %v557
        %v918 = vunpack.c.h.b16 %v557
        %v919 = vunpack.c.l.b16 %v558
        %v920 = vunpack.c.l.b16 %v559
        %v921 = vunpack.c.h.b16 %v559
        %v922 = vunpack.c.l.b16 %v560
        %v923 = vunpack.c.l.b16 %v561
        %v924 = vunpack.c.h.b16 %v561
        %v925 = vunpack.c.l.b16 %v562
        %v926 = vunpack.c.l.b16 %v563
        %v927 = vunpack.c.h.b16 %v563
        %v928 = vunpack.c.l.b16 %v564
        %v929 = vunpack.c.l.b16 %v565
        %v930 = vunpack.c.h.b16 %v565
        %v931 = vunpack.c.l.b16 %v566
        %v932 = vunpack.c.l.b16 %v567
        %v933 = vunpack.c.h.b16 %v567
        %v934 = vunpack.c.l.b16 %v568
        %v935 = vunpack.c.l.b16 %v569
        %v936 = vunpack.c.h.b16 %v569
        %v937 = vunpack.c.l.b16 %v570
        %v938 = vunpack.c.l.b16 %v571
        %v939 = vunpack.c.h.b16 %v571
        %v940 = vunpack.c.l.b16 %v572
        %v941 = vpack.c.b16 %v752, %v749
        %v942 = vpack.c.b16 %v753, %v750
        %v943 = vpack.c.b16 %v754, %v751
        %v944 = vpack.c.b16 %v758, %v755
        %v945 = vpack.c.b16 %v759, %v756
        %v946 = vpack.c.b16 %v760, %v757
        %v947 = vpack.c.b16 %v764, %v761
        %v948 = vpack.c.b16 %v765, %v762
        %v949 = vpack.c.b16 %v766, %v763
        %v950 = vpack.c.b16 %v770, %v767
        %v951 = vpack.c.b16 %v771, %v768
        %v952 = vpack.c.b16 %v772, %v769
        %v953 = vpack.c.b16 %v776, %v773
        %v954 = vpack.c.b16 %v777, %v774
        %v955 = vpack.c.b16 %v778, %v775
        %v956 = vpack.c.b16 %v782, %v779
        %v957 = vpack.c.b16 %v783, %v780
        %v958 = vpack.c.b16 %v784, %v781
        %v959 = vpack.c.b16 %v788, %v785
        %v960 = vpack.c.b16 %v789, %v786
        %v961 = vpack.c.b16 %v790, %v787
        %v962 = vpack.c.b16 %v794, %v791
        %v963 = vpack.c.b16 %v795, %v792
        %v964 = vpack.c.b16 %v796, %v793
        %v965 = vpack.c.b16 %v800, %v797
        %v966 = vpack.c.b16 %v801, %v798
        %v967 = vpack.c.b16 %v802, %v799
        %v968 = vpack.c.b16 %v806, %v803
        %v969 = vpack.c.b16 %v807, %v804
        %v970 = vpack.c.b16 %v808, %v805
        %v971 = vpack.c.b16 %v812, %v809
        %v972 = vpack.c.b16 %v813, %v810
        %v973 = vpack.c.b16 %v814, %v811
        %v974 = vpack.c.b16 %v818, %v815
        %v975 = vpack.c.b16 %v819, %v816
        %v976 = vpack.c.b16 %v820, %v817
        %v977 = vpack.c.b16 %v824, %v821
        %v978 = vpack.c.b16 %v825, %v822
        %v979 = vpack.c.b16 %v826, %v823
        %v980 = vpack.c.b16 %v830, %v827
        %v981 = vpack.c.b16 %v831, %v828
        %v982 = vpack.c.b16 %v832, %v829
        %v983 = vpack.c.b16 %v836, %v833
        %v984 = vpack.c.b16 %v837, %v834
        %v985 = vpack.c.b16 %v838, %v835
        %v986 = vpack.c.b16 %v842, %v839
        %v987 = vpack.c.b16 %v843, %v840
        %v988 = vpack.c.b16 %v844, %v841
        %v989 = vpack.c.b16 %v848, %v845
        %v990 = vpack.c.b16 %v849, %v846
        %v991 = vpack.c.b16 %v850, %v847
        %v992 = vpack.c.b16 %v854, %v851
        %v993 = vpack.c.b16 %v855, %v852
        %v994 = vpack.c.b16 %v856, %v853
        %v995 = vpack.c.b16 %v860, %v857
        %v996 = vpack.c.b16 %v861, %v858
        %v997 = vpack.c.b16 %v862, %v859
        %v998 = vpack.c.b16 %v866, %v863
        %v999 = vpack.c.b16 %v867, %v864
        %v1000 = vpack.c.b16 %v868, %v865
        %v1001 = vpack.c.b16 %v872, %v869
        %v1002 = vpack.c.b16 %v873, %v870
        %v1003 = vpack.c.b16 %v874, %v871
        %v1004 = vpack.c.b16 %v878, %v875
        %v1005 = vpack.c.b16 %v879, %v876
        %v1006 = vpack.c.b16 %v880, %v877
        %v1007 = vpack.c.b16 %v884, %v881
        %v1008 = vpack.c.b16 %v885, %v882
        %v1009 = vpack.c.b16 %v886, %v883
        %v1010 = vpack.c.b16 %v890, %v887
        %v1011 = vpack.c.b16 %v891, %v888
        %v1012 = vpack.c.b16 %v892, %v889
        %v1013 = vpack.c.b16 %v896, %v893
        %v1014 = vpack.c.b16 %v897, %v894
        %v1015 = vpack.c.b16 %v898, %v895
        %v1016 = vpack.c.b16 %v902, %v899
        %v1017 = vpack.c.b16 %v903, %v900
        %v1018 = vpack.c.b16 %v904, %v901
        %v1019 = vpack.c.b16 %v908, %v905
        %v1020 = vpack.c.b16 %v909, %v906
        %v1021 = vpack.c.b16 %v910, %v907
        %v1022 = vpack.c.b16 %v914, %v911
        %v1023 = vpack.c.b16 %v915, %v912
        %v1024 = vpack.c.b16 %v916, %v913
        %v1025 = vpack.c.b16 %v920, %v917
        %v1026 = vpack.c.b16 %v921, %v918
        %v1027 = vpack.c.b16 %v922, %v919
        %v1028 = vpack.c.b16 %v926, %v923
        %v1029 = vpack.c.b16 %v927, %v924
        %v1030 = vpack.c.b16 %v928, %v925
        %v1031 = vpack.c.b16 %v932, %v929
        %v1032 = vpack.c.b16 %v933, %v930
        %v1033 = vpack.c.b16 %v934, %v931
        %v1034 = vpack.c.b16 %v938, %v935
        %v1035 = vpack.c.b16 %v939, %v936
        %v1036 = vpack.c.b16 %v940, %v937
        %v1181 = vunpack.c.l.b16 %v573
        %v1182 = vunpack.c.l.b16 %v574
        %v1183 = vunpack.c.l.b16 %v575
        %v1184 = vunpack.c.l.b16 %v576
        %v1185 = vunpack.c.l.b16 %v577
        %v1186 = vunpack.c.l.b16 %v578
        %v1187 = vunpack.c.l.b16 %v579
        %v1188 = vunpack.c.l.b16 %v580
        %v1189 = vunpack.c.l.b16 %v581
        %v1190 = vunpack.c.l.b16 %v582
        %v1191 = vunpack.c.l.b16 %v583
        %v1192 = vunpack.c.l.b16 %v584
        %v1193 = vunpack.c.l.b16 %v585
        %v1194 = vunpack.c.l.b16 %v586
        %v1195 = vunpack.c.l.b16 %v587
        %v1196 = vunpack.c.l.b16 %v588
        %v1197 = vunpack.c.l.b16 %v589
        %v1198 = vunpack.c.l.b16 %v590
        %v1199 = vunpack.c.l.b16 %v591
        %v1200 = vunpack.c.l.b16 %v592
        %v1201 = vunpack.c.l.b16 %v593
        %v1202 = vunpack.c.l.b16 %v594
        %v1203 = vunpack.c.l.b16 %v595
        %v1204 = vunpack.c.l.b16 %v596
        %v1205 = vunpack.c.l.b16 %v597
        %v1206 = vunpack.c.l.b16 %v598
        %v1207 = vunpack.c.l.b16 %v599
        %v1208 = vunpack.c.l.b16 %v600
        %v1209 = vunpack.c.l.b16 %v601
        %v1210 = vunpack.c.l.b16 %v602
        %v1211 = vunpack.c.l.b16 %v603
        %v1212 = vunpack.c.l.b16 %v604
        %v1213 = vunpack.c.l.b16 %v605
        %v1214 = vunpack.c.l.b16 %v606
        %v1215 = vunpack.c.l.b16 %v607
        %v1216 = vunpack.c.l.b16 %v608
        %v1217 = vunpack.c.l.b16 %v609
        %v1218 = vunpack.c.l.b16 %v610
        %v1219 = vunpack.c.l.b16 %v611
        %v1220 = vunpack.c.l.b16 %v612
        %v1221 = vunpack.c.l.b16 %v613
        %v1222 = vunpack.c.l.b16 %v614
        %v1223 = vunpack.c.l.b16 %v615
        %v1224 = vunpack.c.l.b16 %v616
        %v1225 = vunpack.c.l.b16 %v617
        %v1226 = vunpack.c.l.b16 %v618
        %v1227 = vunpack.c.l.b16 %v619
        %v1228 = vunpack.c.l.b16 %v620
        %v1229 = vpack.c.b16 %v1182, %v1181
        %v1230 = vpack.c.b16 %v1184, %v1183
        %v1231 = vpack.c.b16 %v1186, %v1185
        %v1232 = vpack.c.b16 %v1188, %v1187
        %v1233 = vpack.c.b16 %v1190, %v1189
        %v1234 = vpack.c.b16 %v1192, %v1191
        %v1235 = vpack.c.b16 %v1194, %v1193
        %v1236 = vpack.c.b16 %v1196, %v1195
        %v1237 = vpack.c.b16 %v1198, %v1197
        %v1238 = vpack.c.b16 %v1200, %v1199
        %v1239 = vpack.c.b16 %v1202, %v1201
        %v1240 = vpack.c.b16 %v1204, %v1203
        %v1241 = vpack.c.b16 %v1206, %v1205
        %v1242 = vpack.c.b16 %v1208, %v1207
        %v1243 = vpack.c.b16 %v1210, %v1209
        %v1244 = vpack.c.b16 %v1212, %v1211
        %v1245 = vpack.c.b16 %v1214, %v1213
        %v1246 = vpack.c.b16 %v1216, %v1215
        %v1247 = vpack.c.b16 %v1218, %v1217
        %v1248 = vpack.c.b16 %v1220, %v1219
        %v1249 = vpack.c.b16 %v1222, %v1221
        %v1250 = vpack.c.b16 %v1224, %v1223
        %v1251 = vpack.c.b16 %v1226, %v1225
        %v1252 = vpack.c.b16 %v1228, %v1227
        %1277 = vmatprep.subr.bf16.mxu0 0
        %1278 = vmatpush1.bf16.msra.mxu0 %v1236
        %1279 = vmatprep.subr.bf16.mxu0 0
        %1280 = vmatpush1.bf16.msra.mxu0 %v1235
        %1281 = vmatprep.subr.bf16.mxu0 0
        %1282 = vmatpush1.bf16.msra.mxu0 %v1234
        %1283 = vmatprep.subr.bf16.mxu0 0
        %1284 = vmatpush1.bf16.msra.mxu0 %v1233
        %1285 = vmatprep.subr.bf16.mxu0 0
        %1286 = vmatpush1.bf16.msra.mxu0 %v1232
        %1287 = vmatprep.subr.bf16.mxu0 0
        %1288 = vmatpush1.bf16.msra.mxu0 %v1231
        %1289 = vmatprep.subr.bf16.mxu0 0
        %1290 = vmatpush1.bf16.msra.mxu0 %v1230
        %1291 = vmatprep.subr.bf16.mxu0 0
        %1292 = vmatpush1.bf16.msra.mxu0 %v1229
        %1293 = vmatprep.subr.bf16.mxu0 0
        %1294 = vmatpush2.bf16.msra.mxu0 %v1244
        %1295 = vmatprep.subr.bf16.mxu0 0
        %1296 = vmatpush2.bf16.msra.mxu0 %v1243
        %1297 = vmatprep.subr.bf16.mxu0 0
        %1298 = vmatpush2.bf16.msra.mxu0 %v1242
        %1299 = vmatprep.subr.bf16.mxu0 0
        %1300 = vmatpush2.bf16.msra.mxu0 %v1241
        %1301 = vmatprep.subr.bf16.mxu0 0
        %1302 = vmatpush2.bf16.msra.mxu0 %v1240
        %1303 = vmatprep.subr.bf16.mxu0 0
        %1304 = vmatpush2.bf16.msra.mxu0 %v1239
        %1305 = vmatprep.subr.bf16.mxu0 0
        %1306 = vmatpush2.bf16.msra.mxu0 %v1238
        %1307 = vmatprep.subr.bf16.mxu0 0
        %1308 = vmatpush2.bf16.msra.mxu0 %v1237
        %1309 = vmatprep.mubr.bf16.mxu0 %v942
        %1310 = vmatmul.mubr.bf16.gmra.mxu0 %v941
        %v1311 = vpop.f32.mrf.mxu0
        %v1312 = vadd.f32 0.0, %v1311
        %v1313 = vpop.f32.mrf.mxu0
        %v1314 = vpop.f32.mrf.mxu0
        %v1315 = vadd.f32 0.0, %v1314
        %v1316 = vpop.f32.mrf.mxu0
        %1317 = vmatprep.mubr.bf16.mxu0 %v945
        %1318 = vmatmul.mubr.bf16.gmra.mxu0 %v944
        %v1319 = vpop.f32.mrf.mxu0
        %v1320 = vadd.f32 0.0, %v1319
        %v1321 = vpop.f32.mrf.mxu0
        %v1322 = vpop.f32.mrf.mxu0
        %v1323 = vadd.f32 0.0, %v1322
        %v1324 = vpop.f32.mrf.mxu0
        %1325 = vmatprep.mubr.bf16.mxu0 %v948
        %1326 = vmatmul.mubr.bf16.gmra.mxu0 %v947
        %v1327 = vpop.f32.mrf.mxu0
        %v1328 = vadd.f32 0.0, %v1327
        %v1329 = vpop.f32.mrf.mxu0
        %v1330 = vpop.f32.mrf.mxu0
        %v1331 = vadd.f32 0.0, %v1330
        %v1332 = vpop.f32.mrf.mxu0
        %1333 = vmatprep.mubr.bf16.mxu0 %v951
        %1334 = vmatmul.mubr.bf16.gmra.mxu0 %v950
        %v1335 = vpop.f32.mrf.mxu0
        %v1336 = vadd.f32 0.0, %v1335
        %v1337 = vpop.f32.mrf.mxu0
        %v1338 = vpop.f32.mrf.mxu0
        %v1339 = vadd.f32 0.0, %v1338
        %v1340 = vpop.f32.mrf.mxu0
        %1341 = vmatprep.mubr.bf16.mxu0 %v954
        %1342 = vmatmul.mubr.bf16.gmra.mxu0 %v953
        %v1343 = vpop.f32.mrf.mxu0
        %v1344 = vadd.f32 0.0, %v1343
        %v1345 = vpop.f32.mrf.mxu0
        %v1346 = vpop.f32.mrf.mxu0
        %v1347 = vadd.f32 0.0, %v1346
        %v1348 = vpop.f32.mrf.mxu0
        %1349 = vmatprep.mubr.bf16.mxu0 %v957
        %1350 = vmatmul.mubr.bf16.gmra.mxu0 %v956
        %v1351 = vpop.f32.mrf.mxu0
        %v1352 = vadd.f32 0.0, %v1351
        %v1353 = vpop.f32.mrf.mxu0
        %v1354 = vpop.f32.mrf.mxu0
        %v1355 = vadd.f32 0.0, %v1354
        %v1356 = vpop.f32.mrf.mxu0
        %1357 = vmatprep.mubr.bf16.mxu0 %v960
        %1358 = vmatmul.mubr.bf16.gmra.mxu0 %v959
        %v1359 = vpop.f32.mrf.mxu0
        %v1360 = vadd.f32 0.0, %v1359
        %v1361 = vpop.f32.mrf.mxu0
        %v1362 = vpop.f32.mrf.mxu0
        %v1363 = vadd.f32 0.0, %v1362
        %v1364 = vpop.f32.mrf.mxu0
        %1365 = vmatprep.mubr.bf16.mxu0 %v963
        %1366 = vmatmul.mubr.bf16.gmra.mxu0 %v962
        %v1367 = vpop.f32.mrf.mxu0
        %v1368 = vadd.f32 0.0, %v1367
        %v1369 = vpop.f32.mrf.mxu0
        %v1370 = vpop.f32.mrf.mxu0
        %v1371 = vadd.f32 0.0, %v1370
        %v1372 = vpop.f32.mrf.mxu0
        %1373 = vmatprep.mubr.bf16.mxu0 %v966
        %1374 = vmatmul.mubr.bf16.gmra.mxu0 %v965
        %v1375 = vpop.f32.mrf.mxu0
        %v1376 = vadd.f32 0.0, %v1375
        %v1377 = vpop.f32.mrf.mxu0
        %v1378 = vpop.f32.mrf.mxu0
        %v1379 = vadd.f32 0.0, %v1378
        %v1380 = vpop.f32.mrf.mxu0
        %1381 = vmatprep.mubr.bf16.mxu0 %v969
        %1382 = vmatmul.mubr.bf16.gmra.mxu0 %v968
        %v1383 = vpop.f32.mrf.mxu0
        %v1384 = vadd.f32 0.0, %v1383
        %v1385 = vpop.f32.mrf.mxu0
        %v1386 = vpop.f32.mrf.mxu0
        %v1387 = vadd.f32 0.0, %v1386
        %v1388 = vpop.f32.mrf.mxu0
        %1389 = vmatprep.mubr.bf16.mxu0 %v972
        %1390 = vmatmul.mubr.bf16.gmra.mxu0 %v971
        %v1391 = vpop.f32.mrf.mxu0
        %v1392 = vadd.f32 0.0, %v1391
        %v1393 = vpop.f32.mrf.mxu0
        %v1394 = vpop.f32.mrf.mxu0
        %v1395 = vadd.f32 0.0, %v1394
        %v1396 = vpop.f32.mrf.mxu0
        %1397 = vmatprep.mubr.bf16.mxu0 %v975
        %1398 = vmatmul.mubr.bf16.gmra.mxu0 %v974
        %v1399 = vpop.f32.mrf.mxu0
        %v1400 = vadd.f32 0.0, %v1399
        %v1401 = vpop.f32.mrf.mxu0
        %v1402 = vpop.f32.mrf.mxu0
        %v1403 = vadd.f32 0.0, %v1402
        %v1404 = vpop.f32.mrf.mxu0
        %1405 = vmatprep.mubr.bf16.mxu0 %v978
        %1406 = vmatmul.mubr.bf16.gmra.mxu0 %v977
        %v1407 = vpop.f32.mrf.mxu0
        %v1408 = vadd.f32 0.0, %v1407
        %v1409 = vpop.f32.mrf.mxu0
        %v1410 = vpop.f32.mrf.mxu0
        %v1411 = vadd.f32 0.0, %v1410
        %v1412 = vpop.f32.mrf.mxu0
        %1413 = vmatprep.mubr.bf16.mxu0 %v981
        %1414 = vmatmul.mubr.bf16.gmra.mxu0 %v980
        %v1415 = vpop.f32.mrf.mxu0
        %v1416 = vadd.f32 0.0, %v1415
        %v1417 = vpop.f32.mrf.mxu0
        %v1418 = vpop.f32.mrf.mxu0
        %v1419 = vadd.f32 0.0, %v1418
        %v1420 = vpop.f32.mrf.mxu0
        %1421 = vmatprep.mubr.bf16.mxu0 %v984
        %1422 = vmatmul.mubr.bf16.gmra.mxu0 %v983
        %v1423 = vpop.f32.mrf.mxu0
        %v1424 = vadd.f32 0.0, %v1423
        %v1425 = vpop.f32.mrf.mxu0
        %v1426 = vpop.f32.mrf.mxu0
        %v1427 = vadd.f32 0.0, %v1426
        %v1428 = vpop.f32.mrf.mxu0
        %1429 = vmatprep.mubr.bf16.mxu0 %v987
        %1430 = vmatmul.mubr.bf16.gmra.mxu0 %v986
        %v1431 = vpop.f32.mrf.mxu0
        %v1432 = vadd.f32 0.0, %v1431
        %v1433 = vpop.f32.mrf.mxu0
        %v1434 = vpop.f32.mrf.mxu0
        %v1435 = vadd.f32 0.0, %v1434
        %v1436 = vpop.f32.mrf.mxu0
        %1437 = vmatprep.mubr.bf16.mxu0 %v990
        %1438 = vmatmul.mubr.bf16.gmra.mxu0 %v989
        %v1439 = vpop.f32.mrf.mxu0
        %v1440 = vadd.f32 0.0, %v1439
        %v1441 = vpop.f32.mrf.mxu0
        %v1442 = vpop.f32.mrf.mxu0
        %v1443 = vadd.f32 0.0, %v1442
        %v1444 = vpop.f32.mrf.mxu0
        %1445 = vmatprep.mubr.bf16.mxu0 %v993
        %1446 = vmatmul.mubr.bf16.gmra.mxu0 %v992
        %v1447 = vpop.f32.mrf.mxu0
        %v1448 = vadd.f32 0.0, %v1447
        %v1449 = vpop.f32.mrf.mxu0
        %v1450 = vpop.f32.mrf.mxu0
        %v1451 = vadd.f32 0.0, %v1450
        %v1452 = vpop.f32.mrf.mxu0
        %1453 = vmatprep.mubr.bf16.mxu0 %v996
        %1454 = vmatmul.mubr.bf16.gmra.mxu0 %v995
        %v1455 = vpop.f32.mrf.mxu0
        %v1456 = vadd.f32 0.0, %v1455
        %v1457 = vpop.f32.mrf.mxu0
        %v1458 = vpop.f32.mrf.mxu0
        %v1459 = vadd.f32 0.0, %v1458
        %v1460 = vpop.f32.mrf.mxu0
        %1461 = vmatprep.mubr.bf16.mxu0 %v999
        %1462 = vmatmul.mubr.bf16.gmra.mxu0 %v998
        %v1463 = vpop.f32.mrf.mxu0
        %v1464 = vadd.f32 0.0, %v1463
        %v1465 = vpop.f32.mrf.mxu0
        %v1466 = vpop.f32.mrf.mxu0
        %v1467 = vadd.f32 0.0, %v1466
        %v1468 = vpop.f32.mrf.mxu0
        %1469 = vmatprep.mubr.bf16.mxu0 %v1002
        %1470 = vmatmul.mubr.bf16.gmra.mxu0 %v1001
        %v1471 = vpop.f32.mrf.mxu0
        %v1472 = vadd.f32 0.0, %v1471
        %v1473 = vpop.f32.mrf.mxu0
        %v1474 = vpop.f32.mrf.mxu0
        %v1475 = vadd.f32 0.0, %v1474
        %v1476 = vpop.f32.mrf.mxu0
        %1477 = vmatprep.mubr.bf16.mxu0 %v1005
        %1478 = vmatmul.mubr.bf16.gmra.mxu0 %v1004
        %v1479 = vpop.f32.mrf.mxu0
        %v1480 = vadd.f32 0.0, %v1479
        %v1481 = vpop.f32.mrf.mxu0
        %v1482 = vpop.f32.mrf.mxu0
        %v1483 = vadd.f32 0.0, %v1482
        %v1484 = vpop.f32.mrf.mxu0
        %1485 = vmatprep.mubr.bf16.mxu0 %v1008
        %1486 = vmatmul.mubr.bf16.gmra.mxu0 %v1007
        %v1487 = vpop.f32.mrf.mxu0
        %v1488 = vadd.f32 0.0, %v1487
        %v1489 = vpop.f32.mrf.mxu0
        %v1490 = vpop.f32.mrf.mxu0
        %v1491 = vadd.f32 0.0, %v1490
        %v1492 = vpop.f32.mrf.mxu0
        %1493 = vmatprep.mubr.bf16.mxu0 %v1011
        %1494 = vmatmul.mubr.bf16.gmra.mxu0 %v1010
        %v1495 = vpop.f32.mrf.mxu0
        %v1496 = vadd.f32 0.0, %v1495
        %v1497 = vpop.f32.mrf.mxu0
        %v1498 = vpop.f32.mrf.mxu0
        %v1499 = vadd.f32 0.0, %v1498
        %v1500 = vpop.f32.mrf.mxu0
        %1501 = vmatprep.mubr.bf16.mxu0 %v1014
        %1502 = vmatmul.mubr.bf16.gmra.mxu0 %v1013
        %v1503 = vpop.f32.mrf.mxu0
        %v1504 = vadd.f32 0.0, %v1503
        %v1505 = vpop.f32.mrf.mxu0
        %v1506 = vpop.f32.mrf.mxu0
        %v1507 = vadd.f32 0.0, %v1506
        %v1508 = vpop.f32.mrf.mxu0
        %1509 = vmatprep.mubr.bf16.mxu0 %v1017
        %1510 = vmatmul.mubr.bf16.gmra.mxu0 %v1016
        %v1511 = vpop.f32.mrf.mxu0
        %v1512 = vadd.f32 0.0, %v1511
        %v1513 = vpop.f32.mrf.mxu0
        %v1514 = vpop.f32.mrf.mxu0
        %v1515 = vadd.f32 0.0, %v1514
        %v1516 = vpop.f32.mrf.mxu0
        %1517 = vmatprep.mubr.bf16.mxu0 %v1020
        %1518 = vmatmul.mubr.bf16.gmra.mxu0 %v1019
        %v1519 = vpop.f32.mrf.mxu0
        %v1520 = vadd.f32 0.0, %v1519
        %v1521 = vpop.f32.mrf.mxu0
        %v1522 = vpop.f32.mrf.mxu0
        %v1523 = vadd.f32 0.0, %v1522
        %v1524 = vpop.f32.mrf.mxu0
        %1525 = vmatprep.mubr.bf16.mxu0 %v1023
        %1526 = vmatmul.mubr.bf16.gmra.mxu0 %v1022
        %v1527 = vpop.f32.mrf.mxu0
        %v1528 = vadd.f32 0.0, %v1527
        %v1529 = vpop.f32.mrf.mxu0
        %v1530 = vpop.f32.mrf.mxu0
        %v1531 = vadd.f32 0.0, %v1530
        %v1532 = vpop.f32.mrf.mxu0
        %1533 = vmatprep.mubr.bf16.mxu0 %v1026
        %1534 = vmatmul.mubr.bf16.gmra.mxu0 %v1025
        %v1535 = vpop.f32.mrf.mxu0
        %v1536 = vadd.f32 0.0, %v1535
        %v1537 = vpop.f32.mrf.mxu0
        %v1538 = vpop.f32.mrf.mxu0
        %v1539 = vadd.f32 0.0, %v1538
        %v1540 = vpop.f32.mrf.mxu0
        %1541 = vmatprep.mubr.bf16.mxu0 %v1029
        %1542 = vmatmul.mubr.bf16.gmra.mxu0 %v1028
        %v1543 = vpop.f32.mrf.mxu0
        %v1544 = vadd.f32 0.0, %v1543
        %v1545 = vpop.f32.mrf.mxu0
        %v1546 = vpop.f32.mrf.mxu0
        %v1547 = vadd.f32 0.0, %v1546
        %v1548 = vpop.f32.mrf.mxu0
        %1549 = vmatprep.mubr.bf16.mxu0 %v1032
        %1550 = vmatmul.mubr.bf16.gmra.mxu0 %v1031
        %v1551 = vpop.f32.mrf.mxu0
        %v1552 = vadd.f32 0.0, %v1551
        %v1553 = vpop.f32.mrf.mxu0
        %v1554 = vpop.f32.mrf.mxu0
        %v1555 = vadd.f32 0.0, %v1554
        %v1556 = vpop.f32.mrf.mxu0
        %1557 = vmatprep.mubr.bf16.mxu0 %v1035
        %1558 = vmatmul.mubr.bf16.gmra.mxu0 %v1034
        %v1559 = vpop.f32.mrf.mxu0
        %v1560 = vadd.f32 0.0, %v1559
        %v1561 = vpop.f32.mrf.mxu0
        %v1562 = vpop.f32.mrf.mxu0
        %v1563 = vadd.f32 0.0, %v1562
        %v1564 = vpop.f32.mrf.mxu0
        %1565 = vdwg.mxu0
        %1566 = vmatprep.subr.bf16.mxu0 0
        %1567 = vmatpush1.bf16.msra.mxu0 %v1252
        %1568 = vmatprep.subr.bf16.mxu0 0
        %1569 = vmatpush1.bf16.msra.mxu0 %v1251
        %1570 = vmatprep.subr.bf16.mxu0 0
        %1571 = vmatpush1.bf16.msra.mxu0 %v1250
        %1572 = vmatprep.subr.bf16.mxu0 0
        %1573 = vmatpush1.bf16.msra.mxu0 %v1249
        %1574 = vmatprep.subr.bf16.mxu0 0
        %1575 = vmatpush1.bf16.msra.mxu0 %v1248
        %1576 = vmatprep.subr.bf16.mxu0 0
        %1577 = vmatpush1.bf16.msra.mxu0 %v1247
        %1578 = vmatprep.subr.bf16.mxu0 0
        %1579 = vmatpush1.bf16.msra.mxu0 %v1246
        %1580 = vmatprep.subr.bf16.mxu0 0
        %1581 = vmatpush1.bf16.msra.mxu0 %v1245
        %1582 = vmatprep.subr.bf16.mxu0 0
        %1583 = vmatpush2.bf16.msra.mxu0 0
        %1584 = vmatprep.subr.bf16.mxu0 0
        %1585 = vmatpush2.bf16.msra.mxu0 0
        %1586 = vmatprep.subr.bf16.mxu0 0
        %1587 = vmatpush2.bf16.msra.mxu0 0
        %1588 = vmatprep.subr.bf16.mxu0 0
        %1589 = vmatpush2.bf16.msra.mxu0 0
        %1590 = vmatprep.subr.bf16.mxu0 0
        %1591 = vmatpush2.bf16.msra.mxu0 0
        %1592 = vmatprep.subr.bf16.mxu0 0
        %1593 = vmatpush2.bf16.msra.mxu0 0
        %1594 = vmatprep.subr.bf16.mxu0 0
        %1595 = vmatpush2.bf16.msra.mxu0 0
        %1596 = vmatprep.subr.bf16.mxu0 0
        %1597 = vmatpush2.bf16.msra.mxu0 0
        %1598 = vmatprep.mubr.bf16.mxu0 0
        %1599 = vmatmul.mubr.bf16.gmra.mxu0 %v943
        %v1600 = vpop.f32.mrf.mxu0
        %v1601 = vadd.f32 %v1312, %v1600
        %v1602 = vpop.f32.mrf.mxu0
        %v1603 = vpop.f32.mrf.mxu0
        %v1604 = vadd.f32 %v1315, %v1603
        %v1605 = vpop.f32.mrf.mxu0
        %1606 = vmatprep.mubr.bf16.mxu0 0
        %1607 = vmatmul.mubr.bf16.gmra.mxu0 %v946
        %v1608 = vpop.f32.mrf.mxu0
        %v1609 = vadd.f32 %v1320, %v1608
        %v1610 = vpop.f32.mrf.mxu0
        %v1611 = vpop.f32.mrf.mxu0
        %v1612 = vadd.f32 %v1323, %v1611
        %v1613 = vpop.f32.mrf.mxu0
        %1614 = vmatprep.mubr.bf16.mxu0 0
        %1615 = vmatmul.mubr.bf16.gmra.mxu0 %v949
        %v1616 = vpop.f32.mrf.mxu0
        %v1617 = vadd.f32 %v1328, %v1616
        %v1618 = vpop.f32.mrf.mxu0
        %v1619 = vpop.f32.mrf.mxu0
        %v1620 = vadd.f32 %v1331, %v1619
        %v1621 = vpop.f32.mrf.mxu0
        %1622 = vmatprep.mubr.bf16.mxu0 0
        %1623 = vmatmul.mubr.bf16.gmra.mxu0 %v952
        %v1624 = vpop.f32.mrf.mxu0
        %v1625 = vadd.f32 %v1336, %v1624
        %v1626 = vpop.f32.mrf.mxu0
        %v1627 = vpop.f32.mrf.mxu0
        %v1628 = vadd.f32 %v1339, %v1627
        %v1629 = vpop.f32.mrf.mxu0
        %1630 = vmatprep.mubr.bf16.mxu0 0
        %1631 = vmatmul.mubr.bf16.gmra.mxu0 %v955
        %v1632 = vpop.f32.mrf.mxu0
        %v1633 = vadd.f32 %v1344, %v1632
        %v1634 = vpop.f32.mrf.mxu0
        %v1635 = vpop.f32.mrf.mxu0
        %v1636 = vadd.f32 %v1347, %v1635
        %v1637 = vpop.f32.mrf.mxu0
        %1638 = vmatprep.mubr.bf16.mxu0 0
        %1639 = vmatmul.mubr.bf16.gmra.mxu0 %v958
        %v1640 = vpop.f32.mrf.mxu0
        %v1641 = vadd.f32 %v1352, %v1640
        %v1642 = vpop.f32.mrf.mxu0
        %v1643 = vpop.f32.mrf.mxu0
        %v1644 = vadd.f32 %v1355, %v1643
        %v1645 = vpop.f32.mrf.mxu0
        %1646 = vmatprep.mubr.bf16.mxu0 0
        %1647 = vmatmul.mubr.bf16.gmra.mxu0 %v961
        %v1648 = vpop.f32.mrf.mxu0
        %v1649 = vadd.f32 %v1360, %v1648
        %v1650 = vpop.f32.mrf.mxu0
        %v1651 = vpop.f32.mrf.mxu0
        %v1652 = vadd.f32 %v1363, %v1651
        %v1653 = vpop.f32.mrf.mxu0
        %1654 = vmatprep.mubr.bf16.mxu0 0
        %1655 = vmatmul.mubr.bf16.gmra.mxu0 %v964
        %v1656 = vpop.f32.mrf.mxu0
        %v1657 = vadd.f32 %v1368, %v1656
        %v1658 = vpop.f32.mrf.mxu0
        %v1659 = vpop.f32.mrf.mxu0
        %v1660 = vadd.f32 %v1371, %v1659
        %v1661 = vpop.f32.mrf.mxu0
        %1662 = vmatprep.mubr.bf16.mxu0 0
        %1663 = vmatmul.mubr.bf16.gmra.mxu0 %v967
        %v1664 = vpop.f32.mrf.mxu0
        %v1665 = vadd.f32 %v1376, %v1664
        %v1666 = vpop.f32.mrf.mxu0
        %v1667 = vpop.f32.mrf.mxu0
        %v1668 = vadd.f32 %v1379, %v1667
        %v1669 = vpop.f32.mrf.mxu0
        %1670 = vmatprep.mubr.bf16.mxu0 0
        %1671 = vmatmul.mubr.bf16.gmra.mxu0 %v970
        %v1672 = vpop.f32.mrf.mxu0
        %v1673 = vadd.f32 %v1384, %v1672
        %v1674 = vpop.f32.mrf.mxu0
        %v1675 = vpop.f32.mrf.mxu0
        %v1676 = vadd.f32 %v1387, %v1675
        %v1677 = vpop.f32.mrf.mxu0
        %1678 = vmatprep.mubr.bf16.mxu0 0
        %1679 = vmatmul.mubr.bf16.gmra.mxu0 %v973
        %v1680 = vpop.f32.mrf.mxu0
        %v1681 = vadd.f32 %v1392, %v1680
        %v1682 = vpop.f32.mrf.mxu0
        %v1683 = vpop.f32.mrf.mxu0
        %v1684 = vadd.f32 %v1395, %v1683
        %v1685 = vpop.f32.mrf.mxu0
        %1686 = vmatprep.mubr.bf16.mxu0 0
        %1687 = vmatmul.mubr.bf16.gmra.mxu0 %v976
        %v1688 = vpop.f32.mrf.mxu0
        %v1689 = vadd.f32 %v1400, %v1688
        %v1690 = vpop.f32.mrf.mxu0
        %v1691 = vpop.f32.mrf.mxu0
        %v1692 = vadd.f32 %v1403, %v1691
        %v1693 = vpop.f32.mrf.mxu0
        %1694 = vmatprep.mubr.bf16.mxu0 0
        %1695 = vmatmul.mubr.bf16.gmra.mxu0 %v979
        %v1696 = vpop.f32.mrf.mxu0
        %v1697 = vadd.f32 %v1408, %v1696
        %v1698 = vpop.f32.mrf.mxu0
        %v1699 = vpop.f32.mrf.mxu0
        %v1700 = vadd.f32 %v1411, %v1699
        %v1701 = vpop.f32.mrf.mxu0
        %1702 = vmatprep.mubr.bf16.mxu0 0
        %1703 = vmatmul.mubr.bf16.gmra.mxu0 %v982
        %v1704 = vpop.f32.mrf.mxu0
        %v1705 = vadd.f32 %v1416, %v1704
        %v1706 = vpop.f32.mrf.mxu0
        %v1707 = vpop.f32.mrf.mxu0
        %v1708 = vadd.f32 %v1419, %v1707
        %v1709 = vpop.f32.mrf.mxu0
        %1710 = vmatprep.mubr.bf16.mxu0 0
        %1711 = vmatmul.mubr.bf16.gmra.mxu0 %v985
        %v1712 = vpop.f32.mrf.mxu0
        %v1713 = vadd.f32 %v1424, %v1712
        %v1714 = vpop.f32.mrf.mxu0
        %v1715 = vpop.f32.mrf.mxu0
        %v1716 = vadd.f32 %v1427, %v1715
        %v1717 = vpop.f32.mrf.mxu0
        %1718 = vmatprep.mubr.bf16.mxu0 0
        %1719 = vmatmul.mubr.bf16.gmra.mxu0 %v988
        %v1720 = vpop.f32.mrf.mxu0
        %v1721 = vadd.f32 %v1432, %v1720
        %v1722 = vpop.f32.mrf.mxu0
        %v1723 = vpop.f32.mrf.mxu0
        %v1724 = vadd.f32 %v1435, %v1723
        %v1725 = vpop.f32.mrf.mxu0
        %1726 = vmatprep.mubr.bf16.mxu0 0
        %1727 = vmatmul.mubr.bf16.gmra.mxu0 %v991
        %v1728 = vpop.f32.mrf.mxu0
        %v1729 = vadd.f32 %v1440, %v1728
        %v1730 = vpop.f32.mrf.mxu0
        %v1731 = vpop.f32.mrf.mxu0
        %v1732 = vadd.f32 %v1443, %v1731
        %v1733 = vpop.f32.mrf.mxu0
        %1734 = vmatprep.mubr.bf16.mxu0 0
        %1735 = vmatmul.mubr.bf16.gmra.mxu0 %v994
        %v1736 = vpop.f32.mrf.mxu0
        %v1737 = vadd.f32 %v1448, %v1736
        %v1738 = vpop.f32.mrf.mxu0
        %v1739 = vpop.f32.mrf.mxu0
        %v1740 = vadd.f32 %v1451, %v1739
        %v1741 = vpop.f32.mrf.mxu0
        %1742 = vmatprep.mubr.bf16.mxu0 0
        %1743 = vmatmul.mubr.bf16.gmra.mxu0 %v997
        %v1744 = vpop.f32.mrf.mxu0
        %v1745 = vadd.f32 %v1456, %v1744
        %v1746 = vpop.f32.mrf.mxu0
        %v1747 = vpop.f32.mrf.mxu0
        %v1748 = vadd.f32 %v1459, %v1747
        %v1749 = vpop.f32.mrf.mxu0
        %1750 = vmatprep.mubr.bf16.mxu0 0
        %1751 = vmatmul.mubr.bf16.gmra.mxu0 %v1000
        %v1752 = vpop.f32.mrf.mxu0
        %v1753 = vadd.f32 %v1464, %v1752
        %v1754 = vpop.f32.mrf.mxu0
        %v1755 = vpop.f32.mrf.mxu0
        %v1756 = vadd.f32 %v1467, %v1755
        %v1757 = vpop.f32.mrf.mxu0
        %1758 = vmatprep.mubr.bf16.mxu0 0
        %1759 = vmatmul.mubr.bf16.gmra.mxu0 %v1003
        %v1760 = vpop.f32.mrf.mxu0
        %v1761 = vadd.f32 %v1472, %v1760
        %v1762 = vpop.f32.mrf.mxu0
        %v1763 = vpop.f32.mrf.mxu0
        %v1764 = vadd.f32 %v1475, %v1763
        %v1765 = vpop.f32.mrf.mxu0
        %1766 = vmatprep.mubr.bf16.mxu0 0
        %1767 = vmatmul.mubr.bf16.gmra.mxu0 %v1006
        %v1768 = vpop.f32.mrf.mxu0
        %v1769 = vadd.f32 %v1480, %v1768
        %v1770 = vpop.f32.mrf.mxu0
        %v1771 = vpop.f32.mrf.mxu0
        %v1772 = vadd.f32 %v1483, %v1771
        %v1773 = vpop.f32.mrf.mxu0
        %1774 = vmatprep.mubr.bf16.mxu0 0
        %1775 = vmatmul.mubr.bf16.gmra.mxu0 %v1009
        %v1776 = vpop.f32.mrf.mxu0
        %v1777 = vadd.f32 %v1488, %v1776
        %v1778 = vpop.f32.mrf.mxu0
        %v1779 = vpop.f32.mrf.mxu0
        %v1780 = vadd.f32 %v1491, %v1779
        %v1781 = vpop.f32.mrf.mxu0
        %1782 = vmatprep.mubr.bf16.mxu0 0
        %1783 = vmatmul.mubr.bf16.gmra.mxu0 %v1012
        %v1784 = vpop.f32.mrf.mxu0
        %v1785 = vadd.f32 %v1496, %v1784
        %v1786 = vpop.f32.mrf.mxu0
        %v1787 = vpop.f32.mrf.mxu0
        %v1788 = vadd.f32 %v1499, %v1787
        %v1789 = vpop.f32.mrf.mxu0
        %1790 = vmatprep.mubr.bf16.mxu0 0
        %1791 = vmatmul.mubr.bf16.gmra.mxu0 %v1015
        %v1792 = vpop.f32.mrf.mxu0
        %v1793 = vadd.f32 %v1504, %v1792
        %v1794 = vpop.f32.mrf.mxu0
        %v1795 = vpop.f32.mrf.mxu0
        %v1796 = vadd.f32 %v1507, %v1795
        %v1797 = vpop.f32.mrf.mxu0
        %1798 = vmatprep.mubr.bf16.mxu0 0
        %1799 = vmatmul.mubr.bf16.gmra.mxu0 %v1018
        %v1800 = vpop.f32.mrf.mxu0
        %v1801 = vadd.f32 %v1512, %v1800
        %v1802 = vpop.f32.mrf.mxu0
        %v1803 = vpop.f32.mrf.mxu0
        %v1804 = vadd.f32 %v1515, %v1803
        %v1805 = vpop.f32.mrf.mxu0
        %1806 = vmatprep.mubr.bf16.mxu0 0
        %1807 = vmatmul.mubr.bf16.gmra.mxu0 %v1021
        %v1808 = vpop.f32.mrf.mxu0
        %v1809 = vadd.f32 %v1520, %v1808
        %v1810 = vpop.f32.mrf.mxu0
        %v1811 = vpop.f32.mrf.mxu0
        %v1812 = vadd.f32 %v1523, %v1811
        %v1813 = vpop.f32.mrf.mxu0
        %1814 = vmatprep.mubr.bf16.mxu0 0
        %1815 = vmatmul.mubr.bf16.gmra.mxu0 %v1024
        %v1816 = vpop.f32.mrf.mxu0
        %v1817 = vadd.f32 %v1528, %v1816
        %v1818 = vpop.f32.mrf.mxu0
        %v1819 = vpop.f32.mrf.mxu0
        %v1820 = vadd.f32 %v1531, %v1819
        %v1821 = vpop.f32.mrf.mxu0
        %1822 = vmatprep.mubr.bf16.mxu0 0
        %1823 = vmatmul.mubr.bf16.gmra.mxu0 %v1027
        %v1824 = vpop.f32.mrf.mxu0
        %v1825 = vadd.f32 %v1536, %v1824
        %v1826 = vpop.f32.mrf.mxu0
        %v1827 = vpop.f32.mrf.mxu0
        %v1828 = vadd.f32 %v1539, %v1827
        %v1829 = vpop.f32.mrf.mxu0
        %1830 = vmatprep.mubr.bf16.mxu0 0
        %1831 = vmatmul.mubr.bf16.gmra.mxu0 %v1030
        %v1832 = vpop.f32.mrf.mxu0
        %v1833 = vadd.f32 %v1544, %v1832
        %v1834 = vpop.f32.mrf.mxu0
        %v1835 = vpop.f32.mrf.mxu0
        %v1836 = vadd.f32 %v1547, %v1835
        %v1837 = vpop.f32.mrf.mxu0
        %1838 = vmatprep.mubr.bf16.mxu0 0
        %1839 = vmatmul.mubr.bf16.gmra.mxu0 %v1033
        %v1840 = vpop.f32.mrf.mxu0
        %v1841 = vadd.f32 %v1552, %v1840
        %v1842 = vpop.f32.mrf.mxu0
        %v1843 = vpop.f32.mrf.mxu0
        %v1844 = vadd.f32 %v1555, %v1843
        %v1845 = vpop.f32.mrf.mxu0
        %1846 = vmatprep.mubr.bf16.mxu0 0
        %1847 = vmatmul.mubr.bf16.gmra.mxu0 %v1036
        %v1848 = vpop.f32.mrf.mxu0
        %v1849 = vadd.f32 %v1560, %v1848
        %v1850 = vpop.f32.mrf.mxu0
        %v1851 = vpop.f32.mrf.mxu0
        %v1852 = vadd.f32 %v1563, %v1851
        %v1853 = vpop.f32.mrf.mxu0
        %1854 = vdwg.mxu0
        %v1855 = vadd.f32 %v381, %v1601
        %v1856 = vadd.f32 %v382, %v1604
        %v1857 = vadd.f32 %v383, %v1609
        %v1858 = vadd.f32 %v384, %v1612
        %v1859 = vadd.f32 %v385, %v1617
        %v1860 = vadd.f32 %v386, %v1620
        %v1861 = vadd.f32 %v387, %v1625
        %v1862 = vadd.f32 %v388, %v1628
        %v1863 = vadd.f32 %v389, %v1633
        %v1864 = vadd.f32 %v390, %v1636
        %v1865 = vadd.f32 %v391, %v1641
        %v1866 = vadd.f32 %v392, %v1644
        %v1867 = vadd.f32 %v393, %v1649
        %v1868 = vadd.f32 %v394, %v1652
        %v1869 = vadd.f32 %v395, %v1657
        %v1870 = vadd.f32 %v396, %v1660
        %v1871 = vadd.f32 %v397, %v1665
        %v1872 = vadd.f32 %v398, %v1668
        %v1873 = vadd.f32 %v399, %v1673
        %v1874 = vadd.f32 %v400, %v1676
        %v1875 = vadd.f32 %v401, %v1681
        %v1876 = vadd.f32 %v402, %v1684
        %v1877 = vadd.f32 %v403, %v1689
        %v1878 = vadd.f32 %v404, %v1692
        %v1879 = vadd.f32 %v405, %v1697
        %v1880 = vadd.f32 %v406, %v1700
        %v1881 = vadd.f32 %v407, %v1705
        %v1882 = vadd.f32 %v408, %v1708
        %v1883 = vadd.f32 %v409, %v1713
        %v1884 = vadd.f32 %v410, %v1716
        %v1885 = vadd.f32 %v411, %v1721
        %v1886 = vadd.f32 %v412, %v1724
        %v1887 = vadd.f32 %v413, %v1729
        %v1888 = vadd.f32 %v414, %v1732
        %v1889 = vadd.f32 %v415, %v1737
        %v1890 = vadd.f32 %v416, %v1740
        %v1891 = vadd.f32 %v417, %v1745
        %v1892 = vadd.f32 %v418, %v1748
        %v1893 = vadd.f32 %v419, %v1753
        %v1894 = vadd.f32 %v420, %v1756
        %v1895 = vadd.f32 %v421, %v1761
        %v1896 = vadd.f32 %v422, %v1764
        %v1897 = vadd.f32 %v423, %v1769
        %v1898 = vadd.f32 %v424, %v1772
        %v1899 = vadd.f32 %v425, %v1777
        %v1900 = vadd.f32 %v426, %v1780
        %v1901 = vadd.f32 %v427, %v1785
        %v1902 = vadd.f32 %v428, %v1788
        %v1903 = vadd.f32 %v429, %v1793
        %v1904 = vadd.f32 %v430, %v1796
        %v1905 = vadd.f32 %v431, %v1801
        %v1906 = vadd.f32 %v432, %v1804
        %v1907 = vadd.f32 %v433, %v1809
        %v1908 = vadd.f32 %v434, %v1812
        %v1909 = vadd.f32 %v435, %v1817
        %v1910 = vadd.f32 %v436, %v1820
        %v1911 = vadd.f32 %v437, %v1825
        %v1912 = vadd.f32 %v438, %v1828
        %v1913 = vadd.f32 %v439, %v1833
        %v1914 = vadd.f32 %v440, %v1836
        %v1915 = vadd.f32 %v441, %v1841
        %v1916 = vadd.f32 %v442, %v1844
        %v1917 = vadd.f32 %v443, %v1849
        %v1918 = vadd.f32 %v444, %v1852
        %vm1919 = vcmask 261120
        %1920 = vst.msk [vmem:[%s221] sm:$0xff] %vm1919, %v1855
        %1921 = vst.msk [vmem:[%s221 + $0x8] sm:$0xff] %vm1919, %v1856
        %1922 = vst.msk [vmem:[%s221 + $0x10] sm:$0xff] %vm1919, %v1857
        %1923 = vst.msk [vmem:[%s221 + $0x18] sm:$0xff] %vm1919, %v1858
        %1924 = vst.msk [vmem:[%s221 + $0x20] sm:$0xff] %vm1919, %v1859
        %1925 = vst.msk [vmem:[%s221 + $0x28] sm:$0xff] %vm1919, %v1860
        %1926 = vst.msk [vmem:[%s221 + $0x30] sm:$0xff] %vm1919, %v1861
        %1927 = vst.msk [vmem:[%s221 + $0x38] sm:$0xff] %vm1919, %v1862
        %1928 = vst.msk [vmem:[%s221 + $0x40] sm:$0xff] %vm1919, %v1863
        %1929 = vst.msk [vmem:[%s221 + $0x48] sm:$0xff] %vm1919, %v1864
        %1930 = vst.msk [vmem:[%s221 + $0x50] sm:$0xff] %vm1919, %v1865
        %1931 = vst.msk [vmem:[%s221 + $0x58] sm:$0xff] %vm1919, %v1866
        %1932 = vst.msk [vmem:[%s221 + $0x60] sm:$0xff] %vm1919, %v1867
        %1933 = vst.msk [vmem:[%s221 + $0x68] sm:$0xff] %vm1919, %v1868
        %1934 = vst.msk [vmem:[%s221 + $0x70] sm:$0xff] %vm1919, %v1869
        %1935 = vst.msk [vmem:[%s221 + $0x78] sm:$0xff] %vm1919, %v1870
        %1936 = vst.msk [vmem:[%s221 + $0x80] sm:$0xff] %vm1919, %v1871
        %1937 = vst.msk [vmem:[%s221 + $0x88] sm:$0xff] %vm1919, %v1872
        %1938 = vst.msk [vmem:[%s221 + $0x90] sm:$0xff] %vm1919, %v1873
        %1939 = vst.msk [vmem:[%s221 + $0x98] sm:$0xff] %vm1919, %v1874
        %1940 = vst.msk [vmem:[%s221 + $0xa0] sm:$0xff] %vm1919, %v1875
        %1941 = vst.msk [vmem:[%s221 + $0xa8] sm:$0xff] %vm1919, %v1876
        %1942 = vst.msk [vmem:[%s221 + $0xb0] sm:$0xff] %vm1919, %v1877
        %1943 = vst.msk [vmem:[%s221 + $0xb8] sm:$0xff] %vm1919, %v1878
        %1944 = vst.msk [vmem:[%s221 + $0xc0] sm:$0xff] %vm1919, %v1879
        %1945 = vst.msk [vmem:[%s221 + $0xc8] sm:$0xff] %vm1919, %v1880
        %1946 = vst.msk [vmem:[%s221 + $0xd0] sm:$0xff] %vm1919, %v1881
        %1947 = vst.msk [vmem:[%s221 + $0xd8] sm:$0xff] %vm1919, %v1882
        %1948 = vst.msk [vmem:[%s221 + $0xe0] sm:$0xff] %vm1919, %v1883
        %1949 = vst.msk [vmem:[%s221 + $0xe8] sm:$0xff] %vm1919, %v1884
        %1950 = vst.msk [vmem:[%s221 + $0xf0] sm:$0xff] %vm1919, %v1885
        %1951 = vst.msk [vmem:[%s221 + $0xf8] sm:$0xff] %vm1919, %v1886
        %1952 = vst.msk [vmem:[%s221 + $0x100] sm:$0xff] %vm1919, %v1887
        %1953 = vst.msk [vmem:[%s221 + $0x108] sm:$0xff] %vm1919, %v1888
        %1954 = vst.msk [vmem:[%s221 + $0x110] sm:$0xff] %vm1919, %v1889
        %1955 = vst.msk [vmem:[%s221 + $0x118] sm:$0xff] %vm1919, %v1890
        %1956 = vst.msk [vmem:[%s221 + $0x120] sm:$0xff] %vm1919, %v1891
        %1957 = vst.msk [vmem:[%s221 + $0x128] sm:$0xff] %vm1919, %v1892
        %1958 = vst.msk [vmem:[%s221 + $0x130] sm:$0xff] %vm1919, %v1893
        %1959 = vst.msk [vmem:[%s221 + $0x138] sm:$0xff] %vm1919, %v1894
        %1960 = vst.msk [vmem:[%s221 + $0x140] sm:$0xff] %vm1919, %v1895
        %1961 = vst.msk [vmem:[%s221 + $0x148] sm:$0xff] %vm1919, %v1896
        %1962 = vst.msk [vmem:[%s221 + $0x150] sm:$0xff] %vm1919, %v1897
        %1963 = vst.msk [vmem:[%s221 + $0x158] sm:$0xff] %vm1919, %v1898
        %1964 = vst.msk [vmem:[%s221 + $0x160] sm:$0xff] %vm1919, %v1899
        %1965 = vst.msk [vmem:[%s221 + $0x168] sm:$0xff] %vm1919, %v1900
        %1966 = vst.msk [vmem:[%s221 + $0x170] sm:$0xff] %vm1919, %v1901
        %1967 = vst.msk [vmem:[%s221 + $0x178] sm:$0xff] %vm1919, %v1902
        %1968 = vst.msk [vmem:[%s221 + $0x180] sm:$0xff] %vm1919, %v1903
        %1969 = vst.msk [vmem:[%s221 + $0x188] sm:$0xff] %vm1919, %v1904
        %1970 = vst.msk [vmem:[%s221 + $0x190] sm:$0xff] %vm1919, %v1905
        %1971 = vst.msk [vmem:[%s221 + $0x198] sm:$0xff] %vm1919, %v1906
        %1972 = vst.msk [vmem:[%s221 + $0x1a0] sm:$0xff] %vm1919, %v1907
        %1973 = vst.msk [vmem:[%s221 + $0x1a8] sm:$0xff] %vm1919, %v1908
        %1974 = vst.msk [vmem:[%s221 + $0x1b0] sm:$0xff] %vm1919, %v1909
        %1975 = vst.msk [vmem:[%s221 + $0x1b8] sm:$0xff] %vm1919, %v1910
        %1976 = vst.msk [vmem:[%s221 + $0x1c0] sm:$0xff] %vm1919, %v1911
        %1977 = vst.msk [vmem:[%s221 + $0x1c8] sm:$0xff] %vm1919, %v1912
        %1978 = vst.msk [vmem:[%s221 + $0x1d0] sm:$0xff] %vm1919, %v1913
        %1979 = vst.msk [vmem:[%s221 + $0x1d8] sm:$0xff] %vm1919, %v1914
        %1980 = vst.msk [vmem:[%s221 + $0x1e0] sm:$0xff] %vm1919, %v1915
        %1981 = vst.msk [vmem:[%s221 + $0x1e8] sm:$0xff] %vm1919, %v1916
        %1982 = vst.msk [vmem:[%s221 + $0x1f0] sm:$0xff] %vm1919, %v1917
        %1983 = vst.msk [vmem:[%s221 + $0x1f8] sm:$0xff] %vm1919, %v1918
        %s1984 = sand.u32 %s117, 1
        %s1985 = scalar_lea.sflag [#allocation3], %s1984
        %s1986 = sand.u32 %s117, 1
        %s1987 = smul.addr %s1986, 512
        %s1988 = scalar_lea.vmem [#allocation2], %s1987
        // Predicated region
        $region37: #{mfunit_add1_forward.7} parent=31 // pred_check
          %p1989 = pneg %p127
        $region38: #{mfunit_add1_forward.7} parent=31 // pred_check_branch
          %1991 = sbr.rel (%p1989) target = $region40
        $region39: #{mfunit_add1_forward.7} parent=31 // pred_region
          %s1992 = smul.u32 64, %s21
          %s1994 = ssub.s32 8192, 8192
          %1995 = vsyncadd %s1985, %s1994
          %s1996 = smul.addr %s1992, 128
          %s1997 = scalar_lea.hbm %s3, %s1996
          %s1998 = sshll.u32 %s1988, 4
          %s1999 = int_to_ptr.vmem [resolvable:$true] %s1998
          %2004 = dma.vmem_to_hbm [thread:$0]  %s1999, 8192, %s1997, %s1985, 128, 128, 8
        $region40: #{mfunit_add1_forward.7} parent=31 // pred_fallthru
          _
      $region32: #{mfunit_add1_forward.7} parent=5 // pred_fallthru
        _
      %p2005 = scmp.le.s32.totalorder 2, %s12
      // Predicated region
      $region41: #{mfunit_add1_forward.7} parent=5 // pred_check
        %p2006 = pneg %p2005
      $region42: #{mfunit_add1_forward.7} parent=5 // pred_check_branch
        %2008 = sbr.rel (%p2006) target = $region44
      $region43: #{mfunit_add1_forward.7} parent=5 // pred_region
        %s2009 = ssub.s32 %s12, 2
        // Predicated region
        $region45: #{mfunit_add1_forward.7} parent=43 // pred_check
          %p2010 = pneg %p133
        $region46: #{mfunit_add1_forward.7} parent=43 // pred_check_branch
          %2012 = sbr.rel (%p2010) target = $region48
        $region47: #{mfunit_add1_forward.7} parent=43 // pred_region
          %s2013 = sand.u32 %s118, 1
          %s2014 = scalar_lea.sflag [#allocation3], %s2013
          %s2015 = sand.u32 %s118, 1
          %s2016 = smul.addr %s2015, 512
          %s2017 = scalar_lea.vmem [#allocation2], %s2016
          %2018 = dma.done %s2014, 8192
        $region48: #{mfunit_add1_forward.7} parent=43 // pred_fallthru
          _
      $region44: #{mfunit_add1_forward.7} parent=5 // pred_fallthru
        _
    $region6: #{mfunit_add1_forward.7} parent=1 // loop_footer
      %s16 = sadd.s32 1, %s12
    $region7: #{mfunit_add1_forward.7} parent=1 // loop_footer_branch
      %11 = sbr.rel target = $region3
    $region8: #{mfunit_add1_forward.7} parent=1 // loop_exit
      _
    %2019 = vsyncpa [#allocation3], 1
    %s2020 = scalar_lea.sflag [#allocation3], 1
    %2021 = vsyncpa %s2020, 1

</llo_original>
